<compile_context>
chip_gen: v7x
topology: tpu7x:2x2x1
jax: 0.10.0
libtpu: 0.0.40
codegen_flags: <defaults>
</compile_context>

<pallas_src>
import numpy as np
import jax
import jax.numpy as jnp
from jax.experimental import pallas as pl
from jax.experimental.pallas import tpu as pltpu

V = 778                     # MANO vertex count
V_PAD = 784                 # padded to a multiple of 8 (sublane)
NSPLIT = 2                  # vertex-dimension grid split (v7x: one block per TensorCore)
V_BLK = V_PAD // NSPLIT     # 392
NJ = 16                     # joints / transforms
NPOSE = 15 * 9              # 135 pose-blend features
NSHAPE = 10                 # shape coefficients
FEAT = NPOSE + NSHAPE       # 145 (v_template handled as an f32 add in-kernel)
FEAT_PAD = 256              # padded contraction depth (could drop to 160 for v5e)
TB = 256                    # batch elements per grid step (lane width, fills 256-wide MXU)

TIPS_RIGHT = [745, 317, 444, 556, 673]
JOINT_REORDER = [0, 13, 14, 15, 16, 1, 2, 3, 17, 4, 5, 6, 18, 10, 11, 12, 19, 7, 8, 9, 20]
TRANSF_REORDER = [0, 1, 6, 11, 2, 7, 12, 3, 8, 13, 4, 9, 14, 5, 10, 15]
LEV1 = [1, 4, 7, 10, 13]
LEV2 = [2, 5, 8, 11, 14]
LEV3 = [3, 6, 9, 12, 15]


# ----------------------------------------------------------------------------
# Pallas kernel: fused blend-shape GEMM + linear blend skinning.
# Grid point (s, b): vertex split s (parallel), batch tile b (parallel).
# ----------------------------------------------------------------------------
def _mano_lbs_kernel(feat_ref, gp_ref, blend_ref, tmpl_ref, w_ref, out_ref):
    # feat_ref : (1, FEAT_PAD, TB)      bf16  [pose_feat(135); betas(10); 0-pad] per batch column
    # gp_ref   : (1, NJ, 12*TB)         f32   column e*TB+b holds G'_k[b, j, i, k], e = i*4+k
    # blend_ref: (1, 3*V_BLK, FEAT_PAD) bf16  rows [x-block; y-block; z-block] of this vertex split
    # tmpl_ref : (1, 3*V_BLK, 1)        f32   v_template, same row layout
    # w_ref    : (V_BLK, NJ)            f32   skinning weights of this vertex split
    # out_ref  : (1, 1, 3*V_BLK, TB)    f32   rows [vx-block; vy-block; vz-block]
    feat = feat_ref[0]                                     # (FEAT_PAD, TB)
    gp = gp_ref[0]                                         # (NJ, 12*TB)

    # Shaped + posed template for all 3 coordinates of this vertex split:
    # one bf16 MXU GEMM with f32 accumulation, plus an exact f32 template add.
    tph3 = (jnp.dot(blend_ref[0], feat, preferred_element_type=jnp.float32)
            + tmpl_ref[0])                                 # (3*V_BLK, TB)
    tx = tph3[0 * V_BLK:1 * V_BLK]
    ty = tph3[1 * V_BLK:2 * V_BLK]
    tz = tph3[2 * V_BLK:3 * V_BLK]

    w = w_ref[...]                                         # (V_BLK, NJ) f32
    for i in range(3):
        base = 4 * i
        # Per-coordinate skinning GEMM (K=16) consumed immediately: peak live f32
        # intermediate is (V_BLK, 4*TB) instead of (V_PAD, 12*TB).
        m_i = jnp.dot(w, gp[:, base * TB:(base + 4) * TB],
                      preferred_element_type=jnp.float32)  # (V_BLK, 4*TB)
        # verts_i[v,b] = sum_k M_{i,k}[v,b] * TPh_k[v,b]   (TPh_3 == 1)
        v_i = (m_i[:, 0 * TB:1 * TB] * tx
               + m_i[:, 1 * TB:2 * TB] * ty
               + m_i[:, 2 * TB:3 * TB] * tz
               + m_i[:, 3 * TB:4 * TB])
        out_ref[0, 0, i * V_BLK:(i + 1) * V_BLK, :] = v_i


def lbs_pallas(feat_tiles, gp_tiles, blend, tmpl, w_lbs):
    n_tiles = feat_tiles.shape[0]
    return pl.pallas_call(
        _mano_lbs_kernel,
        out_shape=jax.ShapeDtypeStruct((n_tiles, NSPLIT, 3 * V_BLK, TB), jnp.float32),
        grid_spec=pltpu.PrefetchScalarGridSpec(
            num_scalar_prefetch=0,
            grid=(NSPLIT, n_tiles),
            in_specs=[
                pl.BlockSpec((1, FEAT_PAD, TB), lambda s, b: (b, 0, 0)),
                pl.BlockSpec((1, NJ, 12 * TB), lambda s, b: (b, 0, 0)),
                pl.BlockSpec((1, 3 * V_BLK, FEAT_PAD), lambda s, b: (s, 0, 0)),
                pl.BlockSpec((1, 3 * V_BLK, 1), lambda s, b: (s, 0, 0)),
                pl.BlockSpec((V_BLK, NJ), lambda s, b: (s, 0)),
            ],
            out_specs=pl.BlockSpec((1, 1, 3 * V_BLK, TB), lambda s, b: (b, s, 0, 0)),
        ),
        compiler_params=pltpu.CompilerParams(
            dimension_semantics=("parallel", "parallel"),
            vmem_limit_bytes=48 * 1024 * 1024,   # ~9 MiB actually used; headroom < v7x 64 MiB
        ),
    )(feat_tiles, gp_tiles, blend, tmpl, w_lbs)


# ----------------------------------------------------------------------------
# One-time constant preparation (moved out of the per-forward path)
# ----------------------------------------------------------------------------
def prepare_lbs_constants(shapedirs, posedirs, v_template, weights):
    # bf16 blend matrix: [posedirs | shapedirs] per coordinate, vertex-split outer.
    blend = jnp.zeros((3, V_PAD, FEAT_PAD), jnp.float32)
    blend = blend.at[:, :V, :NPOSE].set(jnp.transpose(posedirs, (1, 0, 2)))
    blend = blend.at[:, :V, NPOSE:NPOSE + NSHAPE].set(jnp.transpose(shapedirs, (1, 0, 2)))
    blend = (blend.reshape(3, NSPLIT, V_BLK, FEAT_PAD)
                  .transpose(1, 0, 2, 3)
                  .reshape(NSPLIT, 3 * V_BLK, FEAT_PAD)
                  .astype(jnp.bfloat16))
    # f32 template term, same row layout as the blend output.
    tmpl = jnp.zeros((3, V_PAD), jnp.float32).at[:, :V].set(v_template.T)
    tmpl = (tmpl.reshape(3, NSPLIT, V_BLK)
                .transpose(1, 0, 2)
                .reshape(NSPLIT, 3 * V_BLK, 1))
    # f32 skinning weights, zero-padded rows.
    w_lbs = jnp.zeros((V_PAD, NJ), jnp.float32).at[:V].set(weights)
    return {"lbs_blend": blend, "lbs_tmpl": tmpl, "lbs_weights": w_lbs}


# ----------------------------------------------------------------------------
# Plain-JAX glue (rotations, joint regression, kinematic chain, output assembly)
# ----------------------------------------------------------------------------
def axis_angle_to_matrix(aa):
    # aa: (N, 3) -> (N, 3, 3), Rodrigues with small-angle Taylor fallback.
    theta2 = jnp.sum(aa * aa, axis=-1)
    theta = jnp.sqrt(theta2 + 1e-30)
    small = theta < 1e-4
    a = jnp.where(small, 1.0 - theta2 / 6.0, jnp.sin(theta) / theta)
    b = jnp.where(small, 0.5 - theta2 / 24.0,
                  (1.0 - jnp.cos(theta)) / jnp.maximum(theta2, 1e-30))
    x, y, z = aa[..., 0], aa[..., 1], aa[..., 2]
    zero = jnp.zeros_like(x)
    K = jnp.stack([zero, -z, y, z, zero, -x, -y, x, zero], axis=-1)
    K = K.reshape(aa.shape[:-1] + (3, 3))
    I = jnp.eye(3, dtype=aa.dtype)
    return I + a[..., None, None] * K + b[..., None, None] * (K @ K)


def _with_zeros(rot, t):
    # rot: (..., 3, 3), t: (..., 3) -> (..., 4, 4) with bottom row [0,0,0,1]
    top = jnp.concatenate([rot, t[..., None]], axis=-1)
    bot = jnp.broadcast_to(jnp.array([0.0, 0.0, 0.0, 1.0], dtype=rot.dtype),
                           top.shape[:-2] + (1, 4))
    return jnp.concatenate([top, bot], axis=-2)


def mano_forward(params, pose_coeffs, betas):
    B = pose_coeffs.shape[0]
    shapedirs = params["shapedirs"]      # (V, 3, 10)
    v_template = params["v_template"]    # (V, 3)
    J_reg = params["J_regressor"]        # (16, V)
    hands_mean = params["hands_mean"]    # (45,)

    # rotation_by_axisang
    root_pose = pose_coeffs[:, :3]
    hand_pose = pose_coeffs[:, 3:]
    full_poses = jnp.concatenate([root_pose, hands_mean[None] + hand_pose], axis=1)  # (B,48)
    full_rots = axis_angle_to_matrix(full_poses.reshape(-1, 3)).reshape(B, 16, 3, 3)
    root_rot = full_rots[:, 0]
    hand_rot = full_rots[:, 1:]                                                       # (B,15,3,3)

    # shape blend + joint regression (tiny; needed for the kinematic chain)
    B_S = jnp.einsum("vcs,bs->bvc", shapedirs, betas)
    J = jnp.einsum("jv,bvc->bjc", J_reg, v_template[None] + B_S)                      # (B,16,3)

    # pose-blend feature: (R - I) flattened
    pose_feat = (hand_rot - jnp.eye(3, dtype=hand_rot.dtype)).reshape(B, NPOSE)

    # kinematic chain
    lev1 = jnp.array(LEV1)
    lev2 = jnp.array(LEV2)
    lev3 = jnp.array(LEV3)
    root_transf = _with_zeros(root_rot, J[:, 0])                                      # (B,4,4)
    lev1_rel = _with_zeros(hand_rot[:, lev1 - 1], J[:, lev1] - J[:, 0:1])
    lev1_abs = jnp.matmul(root_transf[:, None], lev1_rel)
    lev2_rel = _with_zeros(hand_rot[:, lev2 - 1], J[:, lev2] - J[:, lev1])
    lev2_abs = jnp.matmul(lev1_abs, lev2_rel)
    lev3_rel = _with_zeros(hand_rot[:, lev3 - 1], J[:, lev3] - J[:, lev2])
    lev3_abs = jnp.matmul(lev2_abs, lev3_rel)
    G_k = jnp.concatenate([root_transf[:, None], lev1_abs, lev2_abs, lev3_abs], axis=1)
    G_k = G_k[:, jnp.array(TRANSF_REORDER)]                                           # (B,16,4,4)

    # G'_k = G_k - [0 | G_k @ [J;0]]
    joint_h = jnp.concatenate([J, jnp.zeros((B, NJ, 1), dtype=J.dtype)], axis=-1)     # (B,16,4)
    tmp2 = jnp.einsum("bjik,bjk->bji", G_k, joint_h)
    Gp = G_k - jnp.concatenate(
        [jnp.zeros((B, NJ, 4, 3), dtype=G_k.dtype), tmp2[..., None]], axis=-1)        # (B,16,4,4)

    # ---------------- Pallas hot-path inputs (padded, batch-on-lanes) ----------------
    n_tiles = -(-B // TB)          # ceil(B / TB)
    B_pad = n_tiles * TB

    # feat: [pose_feat(135) | betas(10) | zero-pad] -> (n_tiles, FEAT_PAD, TB), bf16
    feat = jnp.concatenate([pose_feat, betas], axis=1)                                # (B, FEAT)
    feat_pad = jnp.zeros((B_pad, FEAT_PAD), jnp.float32).at[:B, :FEAT].set(feat)
    feat_tiles = (feat_pad.reshape(n_tiles, TB, FEAT_PAD)
                          .transpose(0, 2, 1)
                          .astype(jnp.bfloat16))

    # gp: the 12 relevant entries (i=0..2, k=0..3) of G'_k, column = e*TB + b_local, f32
    gp12 = Gp[:, :, :3, :].reshape(B, NJ, 12)                                         # e = i*4 + k
    gp_pad = jnp.zeros((B_pad, NJ, 12), jnp.float32).at[:B].set(gp12)
    gp_tiles = (gp_pad.reshape(n_tiles, TB, NJ, 12)
                      .transpose(0, 2, 3, 1)
                      .reshape(n_tiles, NJ, 12 * TB))

    lbs_out = lbs_pallas(feat_tiles, gp_tiles,
                         params["lbs_blend"], params["lbs_tmpl"], params["lbs_weights"])
    # lbs_out: (n_tiles, NSPLIT, 3*V_BLK, TB) f32, lane-dense (batch on lanes).

    # Fingertips gathered straight from the lane-dense kernel layout, so the joints
    # path does not wait on the big layout transpose below.
    tip_idx = np.asarray(TIPS_RIGHT)
    tip_s = tip_idx // V_BLK                                                          # (5,)
    tip_rows = np.arange(3)[None, :] * V_BLK + (tip_idx % V_BLK)[:, None]             # (5,3)
    tips = lbs_out[:, tip_s[:, None], tip_rows, :]                                    # (n_tiles,5,3,TB)
    tips = tips.transpose(0, 3, 1, 2).reshape(B_pad, 5, 3)[:B]

    # (B, V, 3) verts are required by the module's output contract: one layout transpose.
    verts = (lbs_out.reshape(n_tiles, NSPLIT, 3, V_BLK, TB)
                    .transpose(0, 4, 1, 3, 2)
                    .reshape(B_pad, V_PAD, 3)[:B, :V])                                # (B, V, 3)

    # joints: 16 from the transforms + 5 finger tips, reordered
    joints16 = G_k[:, :, :3, 3]
    joints = jnp.concatenate([joints16, tips], axis=1)
    joints = joints[:, jnp.array(JOINT_REORDER)]                                      # (B,21,3)

    # center_idx is None -> center_joint = zeros
    center_joint = jnp.zeros_like(joints[:, 0:1])                                     # (B,1,3)
    joints = joints - center_joint
    verts_out = verts - center_joint

    global_rot = G_k[:, :, :3, :3]
    global_tsl = G_k[:, :, :3, 3:] - center_joint[..., None]                          # (B,16,3,1)
    global_transf = _with_zeros(global_rot, global_tsl[..., 0])                       # (B,16,4,4)

    return {
        "verts": verts_out,
        "joints": joints,
        "center_joint": center_joint,
        "full_poses": full_poses,
        "betas": betas,
        "transforms_abs": global_transf,
        "_Gp": Gp,  # kept for the in-script reference check
        "_B_S": B_S,
        "_pose_feat": pose_feat,
    }


# ----------------------------------------------------------------------------
# Deterministic synthetic MANO parameters (shapes match the real assets)
# ----------------------------------------------------------------------------
def make_params():
    kp = jax.random.PRNGKey(42)
    k1, k2, k3, k4, k5 = jax.random.split(kp, 5)
    shapedirs = 0.01 * jax.random.normal(k1, (V, 3, NSHAPE), dtype=jnp.float32)
    posedirs = 0.001 * jax.random.normal(k2, (V, 3, NPOSE), dtype=jnp.float32)
    v_template = 0.1 * jax.random.normal(k3, (V, 3), dtype=jnp.float32)
    J_regressor = jax.nn.softmax(jax.random.normal(k4, (NJ, V), dtype=jnp.float32), axis=-1)
    weights = jax.nn.softmax(2.0 * jax.random.normal(k5, (V, NJ), dtype=jnp.float32), axis=-1)
    hands_mean = jnp.zeros((45,), dtype=jnp.float32)  # flat_hand_mean=True
    params = {
        "shapedirs": shapedirs,
        "posedirs": posedirs,
        "v_template": v_template,
        "J_regressor": J_regressor,
        "weights": weights,
        "hands_mean": hands_mean,
    }
    # Kernel constants built ONCE here (not per forward pass).
    params.update(prepare_lbs_constants(shapedirs, posedirs, v_template, weights))
    return params


if __name__ == "__main__":
    B = 2
    params = make_params()

    key = jax.random.PRNGKey(0)
    kpose, kbeta = jax.random.split(key)
    pose_coeffs = 0.2 * jax.random.normal(kpose, (B, 48), dtype=jnp.float32)
    betas = 0.5 * jax.random.normal(kbeta, (B, NSHAPE), dtype=jnp.float32)

    fwd = jax.jit(mano_forward)
    out = fwd(params, pose_coeffs, betas)
    jax.block_until_ready(out)

    # Pure-JAX f32 reference for the Pallas hot path (blend shapes + LBS).
    hp = jax.lax.Precision.HIGHEST
    T_P = (params["v_template"][None]
           + out["_B_S"]
           + jnp.einsum("vcf,bf->bvc", params["posedirs"], out["_pose_feat"], precision=hp))
    TPh = jnp.concatenate([T_P, jnp.ones((B, V, 1), dtype=jnp.float32)], axis=-1)
    verts_ref = jnp.einsum("bjik,vj,bvk->bvi", out["_Gp"], params["weights"], TPh,
                           precision=hp)[..., :3]
    # Only the pose/shape blend GEMM is bf16; template / weights / transforms are f32.
    assert np.allclose(np.asarray(out["verts"]), np.asarray(verts_ref),
                       rtol=1e-2, atol=2e-3), "Pallas verts mismatch vs JAX reference"

    assert out["verts"].shape == (B, V, 3)
    assert out["joints"].shape == (B, 21, 3)
    assert out["transforms_abs"].shape == (B, 16, 4, 4)
    assert out["full_poses"].shape == (B, 48)
    assert np.isfinite(np.asarray(out["verts"])).all()
    assert np.isfinite(np.asarray(out["joints"])).all()

    print("KERNEL_OK")
</pallas_src>

<mosaic_0001>
module attributes {stable_mosaic.version = 11 : i64} {
  func.func @_mano_lbs_kernel(%arg0: i32, %arg1: i32, %arg2: memref<1x256x256xbf16, #tpu.memory_space<vmem>>, %arg3: memref<1x16x3072xf32, #tpu.memory_space<vmem>>, %arg4: memref<1x1176x256xbf16, #tpu.memory_space<vmem>>, %arg5: memref<1x1176x1xf32, #tpu.memory_space<vmem>>, %arg6: memref<392x16xf32, #tpu.memory_space<vmem>>, %arg7: memref<1x1x1176x256xf32, #tpu.memory_space<vmem>>) attributes {dimension_semantics = [#tpu.dimension_semantics<parallel>, #tpu.dimension_semantics<parallel>], iteration_bounds = array<i64: 2, 1>, scalar_prefetch = 0 : i64, scratch_operands = 0 : i64, tpu.core_type = #tpu.core_type<tc>, window_params = [{transform_indices = @transform_0, window_bounds = array<i64: 1, 256, 256>}, {transform_indices = @transform_1, window_bounds = array<i64: 1, 16, 3072>}, {transform_indices = @transform_2, window_bounds = array<i64: 1, 1176, 256>}, {transform_indices = @transform_3, window_bounds = array<i64: 1, 1176, 1>}, {transform_indices = @transform_4, window_bounds = array<i64: 392, 16>}, {transform_indices = @transform_5, window_bounds = array<i64: 1, 1, 1176, 256>}]} {
    %c0 = arith.constant 0 : index
    %c0_0 = arith.constant 0 : index
    %c0_1 = arith.constant 0 : index
    %0 = vector.load %arg2[%c0, %c0_0, %c0_1] : memref<1x256x256xbf16, #tpu.memory_space<vmem>>, vector<1x256x256xbf16>
    %1 = vector.shape_cast %0 : vector<1x256x256xbf16> to vector<256x256xbf16>
    %c0_2 = arith.constant 0 : index
    %c0_3 = arith.constant 0 : index
    %c0_4 = arith.constant 0 : index
    %2 = vector.load %arg3[%c0_2, %c0_3, %c0_4] : memref<1x16x3072xf32, #tpu.memory_space<vmem>>, vector<1x16x3072xf32>
    %3 = vector.shape_cast %2 : vector<1x16x3072xf32> to vector<16x3072xf32>
    %c0_5 = arith.constant 0 : index
    %c0_6 = arith.constant 0 : index
    %c0_7 = arith.constant 0 : index
    %4 = vector.load %arg4[%c0_5, %c0_6, %c0_7] : memref<1x1176x256xbf16, #tpu.memory_space<vmem>>, vector<1x1176x256xbf16>
    %5 = vector.shape_cast %4 : vector<1x1176x256xbf16> to vector<1176x256xbf16>
    %cst = arith.constant dense<0.000000e+00> : vector<1176x256xf32>
    %6 = tpu.matmul %5, %1, %cst {dimension_numbers = #tpu.dot_dimension_numbers<[1], [0], [0], [1], [0, 0, 1, 1], [], []>} : vector<1176x256xbf16>, vector<256x256xbf16>, vector<1176x256xf32> -> vector<1176x256xf32>
    %c0_8 = arith.constant 0 : index
    %c0_9 = arith.constant 0 : index
    %c0_10 = arith.constant 0 : index
    %7 = vector.load %arg5[%c0_8, %c0_9, %c0_10] : memref<1x1176x1xf32, #tpu.memory_space<vmem>>, vector<1x1176x1xf32>
    %8 = vector.shape_cast %7 : vector<1x1176x1xf32> to vector<1176x1xf32>
    %9 = vector.broadcast %8 : vector<1176x1xf32> to vector<1176x256xf32>
    %10 = arith.addf %6, %9 : vector<1176x256xf32>
    %11 = vector.extract_strided_slice %10 {offsets = [0, 0], sizes = [392, 256], strides = [1, 1]} : vector<1176x256xf32> to vector<392x256xf32>
    %12 = vector.extract_strided_slice %10 {offsets = [392, 0], sizes = [392, 256], strides = [1, 1]} : vector<1176x256xf32> to vector<392x256xf32>
    %13 = vector.extract_strided_slice %10 {offsets = [784, 0], sizes = [392, 256], strides = [1, 1]} : vector<1176x256xf32> to vector<392x256xf32>
    %c0_11 = arith.constant 0 : index
    %c0_12 = arith.constant 0 : index
    %14 = vector.load %arg6[%c0_11, %c0_12] : memref<392x16xf32, #tpu.memory_space<vmem>>, vector<392x16xf32>
    %15 = vector.extract_strided_slice %3 {offsets = [0, 0], sizes = [16, 1024], strides = [1, 1]} : vector<16x3072xf32> to vector<16x1024xf32>
    %cst_13 = arith.constant dense<0.000000e+00> : vector<392x1024xf32>
    %16 = tpu.matmul %14, %15, %cst_13 {dimension_numbers = #tpu.dot_dimension_numbers<[1], [0], [0], [1], [0, 0, 1, 1], [], []>} : vector<392x16xf32>, vector<16x1024xf32>, vector<392x1024xf32> -> vector<392x1024xf32>
    %17 = vector.extract_strided_slice %16 {offsets = [0, 0], sizes = [392, 256], strides = [1, 1]} : vector<392x1024xf32> to vector<392x256xf32>
    %18 = arith.mulf %17, %11 : vector<392x256xf32>
    %19 = vector.extract_strided_slice %16 {offsets = [0, 256], sizes = [392, 256], strides = [1, 1]} : vector<392x1024xf32> to vector<392x256xf32>
    %20 = arith.mulf %19, %12 : vector<392x256xf32>
    %21 = arith.addf %18, %20 : vector<392x256xf32>
    %22 = vector.extract_strided_slice %16 {offsets = [0, 512], sizes = [392, 256], strides = [1, 1]} : vector<392x1024xf32> to vector<392x256xf32>
    %23 = arith.mulf %22, %13 : vector<392x256xf32>
    %24 = arith.addf %21, %23 : vector<392x256xf32>
    %25 = vector.extract_strided_slice %16 {offsets = [0, 768], sizes = [392, 256], strides = [1, 1]} : vector<392x1024xf32> to vector<392x256xf32>
    %26 = arith.addf %24, %25 : vector<392x256xf32>
    %c0_14 = arith.constant 0 : index
    %c0_15 = arith.constant 0 : index
    %c0_16 = arith.constant 0 : index
    %c0_17 = arith.constant 0 : index
    %27 = vector.load %arg7[%c0_14, %c0_15, %c0_16, %c0_17] : memref<1x1x1176x256xf32, #tpu.memory_space<vmem>>, vector<1x1x392x256xf32>
    %28 = vector.shape_cast %27 : vector<1x1x392x256xf32> to vector<392x256xf32>
    %29 = vector.shape_cast %26 : vector<392x256xf32> to vector<1x1x392x256xf32>
    tpu.vector_store %arg7[%c0_14, %c0_15, %c0_16, %c0_17], %29 {strides = array<i32>} : memref<1x1x1176x256xf32, #tpu.memory_space<vmem>>, vector<1x1x392x256xf32>,
    %30 = vector.extract_strided_slice %3 {offsets = [0, 1024], sizes = [16, 1024], strides = [1, 1]} : vector<16x3072xf32> to vector<16x1024xf32>
    %cst_18 = arith.constant dense<0.000000e+00> : vector<392x1024xf32>
    %31 = tpu.matmul %14, %30, %cst_18 {dimension_numbers = #tpu.dot_dimension_numbers<[1], [0], [0], [1], [0, 0, 1, 1], [], []>} : vector<392x16xf32>, vector<16x1024xf32>, vector<392x1024xf32> -> vector<392x1024xf32>
    %32 = vector.extract_strided_slice %31 {offsets = [0, 0], sizes = [392, 256], strides = [1, 1]} : vector<392x1024xf32> to vector<392x256xf32>
    %33 = arith.mulf %32, %11 : vector<392x256xf32>
    %34 = vector.extract_strided_slice %31 {offsets = [0, 256], sizes = [392, 256], strides = [1, 1]} : vector<392x1024xf32> to vector<392x256xf32>
    %35 = arith.mulf %34, %12 : vector<392x256xf32>
    %36 = arith.addf %33, %35 : vector<392x256xf32>
    %37 = vector.extract_strided_slice %31 {offsets = [0, 512], sizes = [392, 256], strides = [1, 1]} : vector<392x1024xf32> to vector<392x256xf32>
    %38 = arith.mulf %37, %13 : vector<392x256xf32>
    %39 = arith.addf %36, %38 : vector<392x256xf32>
    %40 = vector.extract_strided_slice %31 {offsets = [0, 768], sizes = [392, 256], strides = [1, 1]} : vector<392x1024xf32> to vector<392x256xf32>
    %41 = arith.addf %39, %40 : vector<392x256xf32>
    %c0_19 = arith.constant 0 : index
    %c0_20 = arith.constant 0 : index
    %c392 = arith.constant 392 : index
    %c0_21 = arith.constant 0 : index
    %42 = vector.load %arg7[%c0_19, %c0_20, %c392, %c0_21] : memref<1x1x1176x256xf32, #tpu.memory_space<vmem>>, vector<1x1x392x256xf32>
    %43 = vector.shape_cast %42 : vector<1x1x392x256xf32> to vector<392x256xf32>
    %44 = vector.shape_cast %41 : vector<392x256xf32> to vector<1x1x392x256xf32>
    tpu.vector_store %arg7[%c0_19, %c0_20, %c392, %c0_21], %44 {strides = array<i32>} : memref<1x1x1176x256xf32, #tpu.memory_space<vmem>>, vector<1x1x392x256xf32>,
    %45 = vector.extract_strided_slice %3 {offsets = [0, 2048], sizes = [16, 1024], strides = [1, 1]} : vector<16x3072xf32> to vector<16x1024xf32>
    %cst_22 = arith.constant dense<0.000000e+00> : vector<392x1024xf32>
    %46 = tpu.matmul %14, %45, %cst_22 {dimension_numbers = #tpu.dot_dimension_numbers<[1], [0], [0], [1], [0, 0, 1, 1], [], []>} : vector<392x16xf32>, vector<16x1024xf32>, vector<392x1024xf32> -> vector<392x1024xf32>
    %47 = vector.extract_strided_slice %46 {offsets = [0, 0], sizes = [392, 256], strides = [1, 1]} : vector<392x1024xf32> to vector<392x256xf32>
    %48 = arith.mulf %47, %11 : vector<392x256xf32>
    %49 = vector.extract_strided_slice %46 {offsets = [0, 256], sizes = [392, 256], strides = [1, 1]} : vector<392x1024xf32> to vector<392x256xf32>
    %50 = arith.mulf %49, %12 : vector<392x256xf32>
    %51 = arith.addf %48, %50 : vector<392x256xf32>
    %52 = vector.extract_strided_slice %46 {offsets = [0, 512], sizes = [392, 256], strides = [1, 1]} : vector<392x1024xf32> to vector<392x256xf32>
    %53 = arith.mulf %52, %13 : vector<392x256xf32>
    %54 = arith.addf %51, %53 : vector<392x256xf32>
    %55 = vector.extract_strided_slice %46 {offsets = [0, 768], sizes = [392, 256], strides = [1, 1]} : vector<392x1024xf32> to vector<392x256xf32>
    %56 = arith.addf %54, %55 : vector<392x256xf32>
    %c0_23 = arith.constant 0 : index
    %c0_24 = arith.constant 0 : index
    %c784 = arith.constant 784 : index
    %c0_25 = arith.constant 0 : index
    %57 = vector.load %arg7[%c0_23, %c0_24, %c784, %c0_25] : memref<1x1x1176x256xf32, #tpu.memory_space<vmem>>, vector<1x1x392x256xf32>
    %58 = vector.shape_cast %57 : vector<1x1x392x256xf32> to vector<392x256xf32>
    %59 = vector.shape_cast %56 : vector<392x256xf32> to vector<1x1x392x256xf32>
    tpu.vector_store %arg7[%c0_23, %c0_24, %c784, %c0_25], %59 {strides = array<i32>} : memref<1x1x1176x256xf32, #tpu.memory_space<vmem>>, vector<1x1x392x256xf32>,
    return
  }
  func.func @transform_0(%arg0: i32, %arg1: i32) -> (i32, i32, i32) {
    %c0_i32 = arith.constant 0 : i32
    %c0_i32_0 = arith.constant 0 : i32
    %c0_i32_1 = arith.constant 0 : i32
    return %arg1, %c0_i32, %c0_i32_0 : i32, i32, i32
  }
  func.func @transform_1(%arg0: i32, %arg1: i32) -> (i32, i32, i32) {
    %c0_i32 = arith.constant 0 : i32
    %c0_i32_0 = arith.constant 0 : i32
    %c0_i32_1 = arith.constant 0 : i32
    return %arg1, %c0_i32, %c0_i32_0 : i32, i32, i32
  }
  func.func @transform_2(%arg0: i32, %arg1: i32) -> (i32, i32, i32) {
    %c0_i32 = arith.constant 0 : i32
    %c0_i32_0 = arith.constant 0 : i32
    %c0_i32_1 = arith.constant 0 : i32
    return %arg0, %c0_i32, %c0_i32_0 : i32, i32, i32
  }
  func.func @transform_3(%arg0: i32, %arg1: i32) -> (i32, i32, i32) {
    %c0_i32 = arith.constant 0 : i32
    %c0_i32_0 = arith.constant 0 : i32
    %c0_i32_1 = arith.constant 0 : i32
    return %arg0, %c0_i32, %c0_i32_0 : i32, i32, i32
  }
  func.func @transform_4(%arg0: i32, %arg1: i32) -> (i32, i32) {
    %c0_i32 = arith.constant 0 : i32
    %c0_i32_0 = arith.constant 0 : i32
    return %arg0, %c0_i32 : i32, i32
  }
  func.func @transform_5(%arg0: i32, %arg1: i32) -> (i32, i32, i32, i32) {
    %c0_i32 = arith.constant 0 : i32
    %c0_i32_0 = arith.constant 0 : i32
    %c0_i32_1 = arith.constant 0 : i32
    return %arg1, %arg0, %c0_i32, %c0_i32_0 : i32, i32, i32, i32
  }
}

</mosaic_0001>

<llo_original>
// kernel: mano_forward.1
$region0: #{mano_forward.1}
  #allocation0 [shape = 'u32[]', space=smem, size = 0x4, offset = 0x4, fixed_abs, tag = 'smem constant byte address 0x4 - core index']
  #allocation1 [shape = 'u32[144,128]{1,0:T(1,128)}', space=vmem, size = 0x12000, scoped, tag = 'internal scratch']
  %s0 = inlined_call_operand.vmem [shape: bf16[1,256,256], index: 0, kind: input, shape index: {}]
  %s1 = inlined_call_operand.vmem [shape: f32[1,16,3072], index: 1, kind: input, shape index: {}]
  %s2 = inlined_call_operand.vmem [shape: bf16[2,1176,256], index: 2, kind: input, shape index: {}]
  %s3 = inlined_call_operand.vmem [shape: f32[2,1176,1], index: 3, kind: input, shape index: {}]
  %s4 = inlined_call_operand.vmem [shape: f32[784,16], index: 4, kind: input, shape index: {}]
  %s5 = inlined_call_operand.vmem [shape: f32[1,2,1176,256], index: 5, kind: output, shape index: {}]
  %s6 = sld [smem:[#allocation0]]
  $region53: #{mano_forward.1} parent=0
    _
  %s8 = ssub.s32 1, %s6
  %s9 = scalar_select 0, %s8, %s6
  loop: start=0, step=1, limit=4
  $region2: #{mano_forward.1} parent=0 // loop_pre_header
    _
  $region3: #{mano_forward.1} parent=0 // loop_header
    %s11 = sphi 0, %s15
    %p12 = scmp.ge.s32.totalorder %s11, 4
    %s18 = sphi 0, %s30
    %s19 = sphi 0, %s26
    %s20 = sphi 0, %s18
    %s21 = sphi 0, %s19
    %s22 = sphi 0, %s20
    %s23 = sphi 0, %s21
    %s33 = sphi 0, %s35
    %s36 = sphi 0, %s33
    %s37 = sphi 0, %s36
    %s53 = sphi 0, %s37
    %s59 = sphi 0, %s61
    %s62 = sphi 0, %s59
    %s63 = sphi 0, %s62
    %s79 = sphi 0, %s63
    %s85 = sphi 0, %s87
    %s88 = sphi 0, %s85
    %s89 = sphi 0, %s88
    %s105 = sphi 0, %s89
    %s111 = sphi 0, %s113
    %s114 = sphi 0, %s111
    %s115 = sphi 0, %s114
    %s131 = sphi 0, %s115
    %s137 = sphi 0, %s139
    %s140 = sphi 0, %s137
    %s141 = sphi 0, %s140
    %s157 = sphi 0, %s141
    %s165 = sphi 0, %s167
    %s168 = sphi 0, %s165
    %s169 = sphi 0, %s168
    %s185 = sphi 0, %s169
  $region4: #{mano_forward.1} parent=0 // loop_header_branch
    %14 = sbr.rel (%p12) target = $region8
  $region5: #{mano_forward.1} parent=0 // loop_body
    %s16 = ssub.s32 %s11, 1
    %s17 = ssub.s32 %s11, 2
    %s24 = sadd.s32 1, %s19
    %p25 = scmp.ge.s32.totalorder %s24, 1
    %s26 = scalar_select %p25, 0, %s24
    %s27 = sadd.s32 1, %s18
    %s28 = scalar_select %p25, %s27, %s18
    %p29 = scmp.ge.s32.totalorder %s28, 2
    %s30 = scalar_select %p29, 0, %s28
    %s31 = ssub.s32 %s19, %s26
    %p32 = scmp.eq.s32.totalorder %s31, 0
    %s34 = sadd.s32 %s33, 1
    %s35 = scalar_select %p32, %s33, %s34
    %p38 = pneg %p32
    %p39 = scmp.eq.s32.totalorder %s11, 1
    %p40 = por %p38, %p39
    %p41 = scmp.ne.s32.totalorder %s33, %s36
    %p42 = scmp.eq.s32.totalorder %s11, 0
    %p43 = por %p41, %p42
    %p44 = scmp.ne.s32.totalorder %s33, %s36
    %p45 = scmp.eq.s32.totalorder %s16, 1
    %p46 = por %p44, %p45
    %p47 = scmp.ne.s32.totalorder %s36, %s37
    %p48 = scmp.eq.s32.totalorder %s16, 0
    %p49 = por %p47, %p48
    %p50 = scmp.ne.s32.totalorder %s36, %s37
    %p51 = scmp.eq.s32.totalorder %s17, 1
    %p52 = por %p50, %p51
    %p54 = scmp.ne.s32.totalorder %s37, %s53
    %p55 = scmp.eq.s32.totalorder %s17, 0
    %p56 = por %p54, %p55
    %s57 = ssub.s32 %s19, %s26
    %p58 = scmp.eq.s32.totalorder %s57, 0
    %s60 = sadd.s32 %s59, 1
    %s61 = scalar_select %p58, %s59, %s60
    %p64 = pneg %p58
    %p65 = scmp.eq.s32.totalorder %s11, 1
    %p66 = por %p64, %p65
    %p67 = scmp.ne.s32.totalorder %s59, %s62
    %p68 = scmp.eq.s32.totalorder %s11, 0
    %p69 = por %p67, %p68
    %p70 = scmp.ne.s32.totalorder %s59, %s62
    %p71 = scmp.eq.s32.totalorder %s16, 1
    %p72 = por %p70, %p71
    %p73 = scmp.ne.s32.totalorder %s62, %s63
    %p74 = scmp.eq.s32.totalorder %s16, 0
    %p75 = por %p73, %p74
    %p76 = scmp.ne.s32.totalorder %s62, %s63
    %p77 = scmp.eq.s32.totalorder %s17, 1
    %p78 = por %p76, %p77
    %p80 = scmp.ne.s32.totalorder %s63, %s79
    %p81 = scmp.eq.s32.totalorder %s17, 0
    %p82 = por %p80, %p81
    %s83 = ssub.s32 %s18, %s30
    %p84 = scmp.eq.s32.totalorder %s83, 0
    %s86 = sadd.s32 %s85, 1
    %s87 = scalar_select %p84, %s85, %s86
    %p90 = pneg %p84
    %p91 = scmp.eq.s32.totalorder %s11, 1
    %p92 = por %p90, %p91
    %p93 = scmp.ne.s32.totalorder %s85, %s88
    %p94 = scmp.eq.s32.totalorder %s11, 0
    %p95 = por %p93, %p94
    %p96 = scmp.ne.s32.totalorder %s85, %s88
    %p97 = scmp.eq.s32.totalorder %s16, 1
    %p98 = por %p96, %p97
    %p99 = scmp.ne.s32.totalorder %s88, %s89
    %p100 = scmp.eq.s32.totalorder %s16, 0
    %p101 = por %p99, %p100
    %p102 = scmp.ne.s32.totalorder %s88, %s89
    %p103 = scmp.eq.s32.totalorder %s17, 1
    %p104 = por %p102, %p103
    %p106 = scmp.ne.s32.totalorder %s89, %s105
    %p107 = scmp.eq.s32.totalorder %s17, 0
    %p108 = por %p106, %p107
    %s109 = ssub.s32 %s18, %s30
    %p110 = scmp.eq.s32.totalorder %s109, 0
    %s112 = sadd.s32 %s111, 1
    %s113 = scalar_select %p110, %s111, %s112
    %p116 = pneg %p110
    %p117 = scmp.eq.s32.totalorder %s11, 1
    %p118 = por %p116, %p117
    %p119 = scmp.ne.s32.totalorder %s111, %s114
    %p120 = scmp.eq.s32.totalorder %s11, 0
    %p121 = por %p119, %p120
    %p122 = scmp.ne.s32.totalorder %s111, %s114
    %p123 = scmp.eq.s32.totalorder %s16, 1
    %p124 = por %p122, %p123
    %p125 = scmp.ne.s32.totalorder %s114, %s115
    %p126 = scmp.eq.s32.totalorder %s16, 0
    %p127 = por %p125, %p126
    %p128 = scmp.ne.s32.totalorder %s114, %s115
    %p129 = scmp.eq.s32.totalorder %s17, 1
    %p130 = por %p128, %p129
    %p132 = scmp.ne.s32.totalorder %s115, %s131
    %p133 = scmp.eq.s32.totalorder %s17, 0
    %p134 = por %p132, %p133
    %s135 = ssub.s32 %s18, %s30
    %p136 = scmp.eq.s32.totalorder %s135, 0
    %s138 = sadd.s32 %s137, 1
    %s139 = scalar_select %p136, %s137, %s138
    %p142 = pneg %p136
    %p143 = scmp.eq.s32.totalorder %s11, 1
    %p144 = por %p142, %p143
    %p145 = scmp.ne.s32.totalorder %s137, %s140
    %p146 = scmp.eq.s32.totalorder %s11, 0
    %p147 = por %p145, %p146
    %p148 = scmp.ne.s32.totalorder %s137, %s140
    %p149 = scmp.eq.s32.totalorder %s16, 1
    %p150 = por %p148, %p149
    %p151 = scmp.ne.s32.totalorder %s140, %s141
    %p152 = scmp.eq.s32.totalorder %s16, 0
    %p153 = por %p151, %p152
    %p154 = scmp.ne.s32.totalorder %s140, %s141
    %p155 = scmp.eq.s32.totalorder %s17, 1
    %p156 = por %p154, %p155
    %p158 = scmp.ne.s32.totalorder %s141, %s157
    %p159 = scmp.eq.s32.totalorder %s17, 0
    %p160 = por %p158, %p159
    %s161 = ssub.s32 %s19, %s26
    %s162 = ssub.s32 %s18, %s30
    %s163 = sor.u32 %s161, %s162
    %p164 = scmp.eq.s32.totalorder %s163, 0
    %s166 = sadd.s32 %s165, 1
    %s167 = scalar_select %p164, %s165, %s166
    %p170 = pneg %p164
    %p171 = scmp.eq.s32.totalorder %s11, 1
    %p172 = por %p170, %p171
    %p173 = scmp.ne.s32.totalorder %s165, %s168
    %p174 = scmp.eq.s32.totalorder %s11, 0
    %p175 = por %p173, %p174
    %p176 = scmp.ne.s32.totalorder %s165, %s168
    %p177 = scmp.eq.s32.totalorder %s16, 1
    %p178 = por %p176, %p177
    %p179 = scmp.ne.s32.totalorder %s168, %s169
    %p180 = scmp.eq.s32.totalorder %s16, 0
    %p181 = por %p179, %p180
    %p182 = scmp.ne.s32.totalorder %s168, %s169
    %p183 = scmp.eq.s32.totalorder %s17, 1
    %p184 = por %p182, %p183
    %p186 = scmp.ne.s32.totalorder %s169, %s185
    %p187 = scmp.eq.s32.totalorder %s17, 0
    %p188 = por %p186, %p187
    %p189 = scmp.le.s32.totalorder 1, %s11
    %p190 = scmp.lt.s32.totalorder %s11, 3
    %p191 = pnand %p189, %p190
    %p192 = pneg %p191
    // Predicated region
    $region9: #{mano_forward.1} parent=5 // pred_check
      _
    $region10: #{mano_forward.1} parent=5 // pred_check_branch
      %194 = sbr.rel (%p191) target = $region12
    $region11: #{mano_forward.1} parent=5 // pred_region
      %s195 = ssub.s32 %s11, 1
      // Predicated region
      $region13: #{mano_forward.1} parent=11 // pred_check
        %p196 = pneg %p49
      $region14: #{mano_forward.1} parent=11 // pred_check_branch
        %198 = sbr.rel (%p196) target = $region16
      $region15: #{mano_forward.1} parent=11 // pred_region
        %p199 = scmp.lt.s32.totalorder %s21, 0
        %s200 = scalar_select %p199, %s21, 0
        %s201 = smul.addr %s200, 64
        %s202 = smul.addr %s201, 4
        %s203 = scalar_lea.vmem %s0, %s202
      $region16: #{mano_forward.1} parent=11 // pred_fallthru
        _
      // Predicated region
      $region17: #{mano_forward.1} parent=11 // pred_check
        %p204 = pneg %p75
      $region18: #{mano_forward.1} parent=11 // pred_check_branch
        %206 = sbr.rel (%p204) target = $region20
      $region19: #{mano_forward.1} parent=11 // pred_region
        %p207 = scmp.lt.s32.totalorder %s21, 0
        %s208 = scalar_select %p207, %s21, 0
        %s209 = smul.addr %s208, 48
        %s210 = smul.addr %s209, 8
        %s211 = scalar_lea.vmem %s1, %s210
      $region20: #{mano_forward.1} parent=11 // pred_fallthru
        _
    $region12: #{mano_forward.1} parent=5 // pred_fallthru
      _
    %p212 = scmp.lt.s32.totalorder %s11, 2
    // Predicated region
    $region21: #{mano_forward.1} parent=5 // pred_check
      %p213 = pneg %p212
    $region22: #{mano_forward.1} parent=5 // pred_check_branch
      %215 = sbr.rel (%p213) target = $region24
    $region23: #{mano_forward.1} parent=5 // pred_region
      // Predicated region
      $region25: #{mano_forward.1} parent=23 // pred_check
        %p216 = pneg %p95
      $region26: #{mano_forward.1} parent=23 // pred_check_branch
        %218 = sbr.rel (%p216) target = $region28
      $region27: #{mano_forward.1} parent=23 // pred_region
        %p219 = scmp.lt.s32.totalorder %s18, 1
        %s220 = scalar_select %p219, %s18, 1
        %s221 = smul.addr %s220, 294
        %s222 = smul.addr %s221, 4
        %s223 = scalar_lea.vmem %s2, %s222
      $region28: #{mano_forward.1} parent=23 // pred_fallthru
        _
      // Predicated region
      $region29: #{mano_forward.1} parent=23 // pred_check
        %p224 = pneg %p121
      $region30: #{mano_forward.1} parent=23 // pred_check_branch
        %226 = sbr.rel (%p224) target = $region32
      $region31: #{mano_forward.1} parent=23 // pred_region
        %p227 = scmp.lt.s32.totalorder %s18, 1
        %s228 = scalar_select %p227, %s18, 1
        %s229 = smul.addr %s228, 147
        %s230 = smul.addr %s229, 8
        %s231 = scalar_lea.vmem %s3, %s230
      $region32: #{mano_forward.1} parent=23 // pred_fallthru
        _
      // Predicated region
      $region33: #{mano_forward.1} parent=23 // pred_check
        %p232 = pneg %p147
      $region34: #{mano_forward.1} parent=23 // pred_check_branch
        %234 = sbr.rel (%p232) target = $region36
      $region35: #{mano_forward.1} parent=23 // pred_region
        %s235 = smul.u32 49, %s18
        %p236 = scmp.lt.s32.totalorder %s235, 97
        %s237 = scalar_select %p236, %s235, 97
        %s238 = smul.addr %s237, 8
        %s239 = scalar_lea.vmem %s4, %s238
        %s240 = smul.u32 49, %s18
      $region36: #{mano_forward.1} parent=23 // pred_fallthru
        _
    $region24: #{mano_forward.1} parent=5 // pred_fallthru
      _
    %p241 = scmp.le.s32.totalorder 1, %s11
    %p242 = scmp.lt.s32.totalorder %s11, 3
    %p243 = pnand %p241, %p242
    %p244 = pneg %p243
    // Predicated region
    $region37: #{mano_forward.1} parent=5 // pred_check
      _
    $region38: #{mano_forward.1} parent=5 // pred_check_branch
      %246 = sbr.rel (%p243) target = $region40
    $region39: #{mano_forward.1} parent=5 // pred_region
      %s247 = ssub.s32 %s11, 1
      %p248 = scmp.lt.s32.totalorder %s21, 0
      %s249 = scalar_select %p248, %s21, 0
      %s250 = smul.addr %s249, 64
      %s251 = smul.addr %s250, 4
      %s252 = scalar_lea.vmem %s0, %s251
      %p253 = pneg %p49
      %p254 = pneg %p46
      %p255 = scmp.lt.s32.totalorder %s21, 0
      %s256 = scalar_select %p255, %s21, 0
      %s257 = smul.addr %s256, 48
      %s258 = smul.addr %s257, 8
      %s259 = scalar_lea.vmem %s1, %s258
      %p260 = pneg %p75
      %p261 = pneg %p72
      %p262 = scmp.lt.s32.totalorder %s20, 1
      %s263 = scalar_select %p262, %s20, 1
      %s264 = smul.addr %s263, 294
      %s265 = smul.addr %s264, 4
      %s266 = scalar_lea.vmem %s2, %s265
      %p267 = pneg %p101
      %p268 = pneg %p98
      %p269 = scmp.lt.s32.totalorder %s20, 1
      %s270 = scalar_select %p269, %s20, 1
      %s271 = smul.addr %s270, 147
      %s272 = smul.addr %s271, 8
      %s273 = scalar_lea.vmem %s3, %s272
      %p274 = pneg %p127
      %p275 = pneg %p124
      %s276 = smul.u32 49, %s20
      %p277 = scmp.lt.s32.totalorder %s276, 97
      %s278 = scalar_select %p277, %s276, 97
      %s279 = smul.addr %s278, 8
      %s280 = scalar_lea.vmem %s4, %s279
      %p281 = pneg %p153
      %p282 = pneg %p150
      %p283 = pneg %p181
      %p284 = pneg %p178
      %p285 = scmp.lt.s32.totalorder %s21, 0
      %s286 = scalar_select %p285, %s21, 0
      %p287 = scmp.lt.s32.totalorder %s20, 1
      %s288 = scalar_select %p287, %s20, 1
      %s289 = smul.addr %s288, 294
      %s290 = smul.addr %s286, 588
      %s291 = sadd.s32 %s289, %s290
      %s292 = smul.addr %s291, 8
      %s293 = scalar_lea.vmem %s5, %s292
      %p294 = scmp.lt.s32.totalorder %s21, 0
      %s295 = scalar_select %p294, %s21, 0
      %s296 = smul.addr %s295, 64
      %s297 = smul.addr %s296, 4
      %s298 = scalar_lea.vmem %s0, %s297
      %p299 = scmp.lt.s32.totalorder %s21, 0
      %s300 = scalar_select %p299, %s21, 0
      %s301 = smul.addr %s300, 48
      %s302 = smul.addr %s301, 8
      %s303 = scalar_lea.vmem %s1, %s302
      %p304 = scmp.lt.s32.totalorder %s20, 1
      %s305 = scalar_select %p304, %s20, 1
      %s306 = smul.addr %s305, 294
      %s307 = smul.addr %s306, 4
      %s308 = scalar_lea.vmem %s2, %s307
      %p309 = scmp.lt.s32.totalorder %s20, 1
      %s310 = scalar_select %p309, %s20, 1
      %s311 = smul.addr %s310, 147
      %s312 = smul.addr %s311, 8
      %s313 = scalar_lea.vmem %s3, %s312
      %s314 = smul.u32 49, %s20
      %p315 = scmp.lt.s32.totalorder %s314, 97
      %s316 = scalar_select %p315, %s314, 97
      %s317 = smul.addr %s316, 8
      %s318 = scalar_lea.vmem %s4, %s317
      %s319 = smul.u32 49, %s20
      %p320 = scmp.lt.s32.totalorder %s21, 0
      %s321 = scalar_select %p320, %s21, 0
      %p322 = scmp.lt.s32.totalorder %s20, 1
      %s323 = scalar_select %p322, %s20, 1
      %s324 = smul.addr %s323, 294
      %s325 = smul.addr %s321, 588
      %s326 = sadd.s32 %s324, %s325
      %s327 = smul.addr %s326, 8
      %s328 = scalar_lea.vmem %s5, %s327
      %v329 = vld [vmem:[%s298] sm:$0xff]
      %v330 = vld [vmem:[%s298 + $0x8] sm:$0xff]
      %v331 = vld [vmem:[%s298 + $0x10] sm:$0xff]
      %v332 = vld [vmem:[%s298 + $0x18] sm:$0xff]
      %v333 = vld [vmem:[%s298 + $0x20] sm:$0xff]
      %v334 = vld [vmem:[%s298 + $0x28] sm:$0xff]
      %v335 = vld [vmem:[%s298 + $0x30] sm:$0xff]
      %v336 = vld [vmem:[%s298 + $0x38] sm:$0xff]
      %v337 = vld [vmem:[%s298 + $0x40] sm:$0xff]
      %v338 = vld [vmem:[%s298 + $0x48] sm:$0xff]
      %v339 = vld [vmem:[%s298 + $0x50] sm:$0xff]
      %v340 = vld [vmem:[%s298 + $0x58] sm:$0xff]
      %v341 = vld [vmem:[%s298 + $0x60] sm:$0xff]
      %v342 = vld [vmem:[%s298 + $0x68] sm:$0xff]
      %v343 = vld [vmem:[%s298 + $0x70] sm:$0xff]
      %v344 = vld [vmem:[%s298 + $0x78] sm:$0xff]
      %v345 = vld [vmem:[%s298 + $0x80] sm:$0xff]
      %v346 = vld [vmem:[%s298 + $0x88] sm:$0xff]
      %v347 = vld [vmem:[%s298 + $0x90] sm:$0xff]
      %v348 = vld [vmem:[%s298 + $0x98] sm:$0xff]
      %v349 = vld [vmem:[%s298 + $0xa0] sm:$0xff]
      %v350 = vld [vmem:[%s298 + $0xa8] sm:$0xff]
      %v351 = vld [vmem:[%s298 + $0xb0] sm:$0xff]
      %v352 = vld [vmem:[%s298 + $0xb8] sm:$0xff]
      %v353 = vld [vmem:[%s298 + $0xc0] sm:$0xff]
      %v354 = vld [vmem:[%s298 + $0xc8] sm:$0xff]
      %v355 = vld [vmem:[%s298 + $0xd0] sm:$0xff]
      %v356 = vld [vmem:[%s298 + $0xd8] sm:$0xff]
      %v357 = vld [vmem:[%s298 + $0xe0] sm:$0xff]
      %v358 = vld [vmem:[%s298 + $0xe8] sm:$0xff]
      %v359 = vld [vmem:[%s298 + $0xf0] sm:$0xff]
      %v360 = vld [vmem:[%s298 + $0xf8] sm:$0xff]
      %v361 = vld [vmem:[%s303] sm:$0xff]
      %v362 = vld [vmem:[%s303 + $0x8] sm:$0xff]
      %v363 = vld [vmem:[%s303 + $0x10] sm:$0xff]
      %v364 = vld [vmem:[%s303 + $0x18] sm:$0xff]
      %v365 = vld [vmem:[%s303 + $0x20] sm:$0xff]
      %v366 = vld [vmem:[%s303 + $0x28] sm:$0xff]
      %v367 = vld [vmem:[%s303 + $0x30] sm:$0xff]
      %v368 = vld [vmem:[%s303 + $0x38] sm:$0xff]
      %v369 = vld [vmem:[%s303 + $0x40] sm:$0xff]
      %v370 = vld [vmem:[%s303 + $0x48] sm:$0xff]
      %v371 = vld [vmem:[%s303 + $0x50] sm:$0xff]
      %v372 = vld [vmem:[%s303 + $0x58] sm:$0xff]
      %v373 = vld [vmem:[%s303 + $0x60] sm:$0xff]
      %v374 = vld [vmem:[%s303 + $0x68] sm:$0xff]
      %v375 = vld [vmem:[%s303 + $0x70] sm:$0xff]
      %v376 = vld [vmem:[%s303 + $0x78] sm:$0xff]
      %v377 = vld [vmem:[%s303 + $0x80] sm:$0xff]
      %v378 = vld [vmem:[%s303 + $0x88] sm:$0xff]
      %v379 = vld [vmem:[%s303 + $0x90] sm:$0xff]
      %v380 = vld [vmem:[%s303 + $0x98] sm:$0xff]
      %v381 = vld [vmem:[%s303 + $0xa0] sm:$0xff]
      %v382 = vld [vmem:[%s303 + $0xa8] sm:$0xff]
      %v383 = vld [vmem:[%s303 + $0xb0] sm:$0xff]
      %v384 = vld [vmem:[%s303 + $0xb8] sm:$0xff]
      %v385 = vld [vmem:[%s303 + $0xc0] sm:$0xff]
      %v386 = vld [vmem:[%s303 + $0xc8] sm:$0xff]
      %v387 = vld [vmem:[%s303 + $0xd0] sm:$0xff]
      %v388 = vld [vmem:[%s303 + $0xd8] sm:$0xff]
      %v389 = vld [vmem:[%s303 + $0xe0] sm:$0xff]
      %v390 = vld [vmem:[%s303 + $0xe8] sm:$0xff]
      %v391 = vld [vmem:[%s303 + $0xf0] sm:$0xff]
      %v392 = vld [vmem:[%s303 + $0xf8] sm:$0xff]
      %v393 = vld [vmem:[%s303 + $0x100] sm:$0xff]
      %v394 = vld [vmem:[%s303 + $0x108] sm:$0xff]
      %v395 = vld [vmem:[%s303 + $0x110] sm:$0xff]
      %v396 = vld [vmem:[%s303 + $0x118] sm:$0xff]
      %v397 = vld [vmem:[%s303 + $0x120] sm:$0xff]
      %v398 = vld [vmem:[%s303 + $0x128] sm:$0xff]
      %v399 = vld [vmem:[%s303 + $0x130] sm:$0xff]
      %v400 = vld [vmem:[%s303 + $0x138] sm:$0xff]
      %v401 = vld [vmem:[%s303 + $0x140] sm:$0xff]
      %v402 = vld [vmem:[%s303 + $0x148] sm:$0xff]
      %v403 = vld [vmem:[%s303 + $0x150] sm:$0xff]
      %v404 = vld [vmem:[%s303 + $0x158] sm:$0xff]
      %v405 = vld [vmem:[%s303 + $0x160] sm:$0xff]
      %v406 = vld [vmem:[%s303 + $0x168] sm:$0xff]
      %v407 = vld [vmem:[%s303 + $0x170] sm:$0xff]
      %v408 = vld [vmem:[%s303 + $0x178] sm:$0xff]
      %v409 = vld [vmem:[%s308] sm:$0xff]
      %v410 = vld [vmem:[%s308 + $0x8] sm:$0xff]
      %v411 = vld [vmem:[%s308 + $0x10] sm:$0xff]
      %v412 = vld [vmem:[%s308 + $0x18] sm:$0xff]
      %v413 = vld [vmem:[%s308 + $0x20] sm:$0xff]
      %v414 = vld [vmem:[%s308 + $0x28] sm:$0xff]
      %v415 = vld [vmem:[%s308 + $0x30] sm:$0xff]
      %v416 = vld [vmem:[%s308 + $0x38] sm:$0xff]
      %v417 = vld [vmem:[%s308 + $0x40] sm:$0xff]
      %v418 = vld [vmem:[%s308 + $0x48] sm:$0xff]
      %v419 = vld [vmem:[%s308 + $0x50] sm:$0xff]
      %v420 = vld [vmem:[%s308 + $0x58] sm:$0xff]
      %v421 = vld [vmem:[%s308 + $0x60] sm:$0xff]
      %v422 = vld [vmem:[%s308 + $0x68] sm:$0xff]
      %v423 = vld [vmem:[%s308 + $0x70] sm:$0xff]
      %v424 = vld [vmem:[%s308 + $0x78] sm:$0xff]
      %v425 = vld [vmem:[%s308 + $0x80] sm:$0xff]
      %v426 = vld [vmem:[%s308 + $0x88] sm:$0xff]
      %v427 = vld [vmem:[%s308 + $0x90] sm:$0xff]
      %v428 = vld [vmem:[%s308 + $0x98] sm:$0xff]
      %v429 = vld [vmem:[%s308 + $0xa0] sm:$0xff]
      %v430 = vld [vmem:[%s308 + $0xa8] sm:$0xff]
      %v431 = vld [vmem:[%s308 + $0xb0] sm:$0xff]
      %v432 = vld [vmem:[%s308 + $0xb8] sm:$0xff]
      %v433 = vld [vmem:[%s308 + $0xc0] sm:$0xff]
      %v434 = vld [vmem:[%s308 + $0xc8] sm:$0xff]
      %v435 = vld [vmem:[%s308 + $0xd0] sm:$0xff]
      %v436 = vld [vmem:[%s308 + $0xd8] sm:$0xff]
      %v437 = vld [vmem:[%s308 + $0xe0] sm:$0xff]
      %v438 = vld [vmem:[%s308 + $0xe8] sm:$0xff]
      %v439 = vld [vmem:[%s308 + $0xf0] sm:$0xff]
      %v440 = vld [vmem:[%s308 + $0xf8] sm:$0xff]
      %v441 = vld [vmem:[%s308 + $0x100] sm:$0xff]
      %v442 = vld [vmem:[%s308 + $0x108] sm:$0xff]
      %v443 = vld [vmem:[%s308 + $0x110] sm:$0xff]
      %v444 = vld [vmem:[%s308 + $0x118] sm:$0xff]
      %v445 = vld [vmem:[%s308 + $0x120] sm:$0xff]
      %v446 = vld [vmem:[%s308 + $0x128] sm:$0xff]
      %v447 = vld [vmem:[%s308 + $0x130] sm:$0xff]
      %v448 = vld [vmem:[%s308 + $0x138] sm:$0xff]
      %v449 = vld [vmem:[%s308 + $0x140] sm:$0xff]
      %v450 = vld [vmem:[%s308 + $0x148] sm:$0xff]
      %v451 = vld [vmem:[%s308 + $0x150] sm:$0xff]
      %v452 = vld [vmem:[%s308 + $0x158] sm:$0xff]
      %v453 = vld [vmem:[%s308 + $0x160] sm:$0xff]
      %v454 = vld [vmem:[%s308 + $0x168] sm:$0xff]
      %v455 = vld [vmem:[%s308 + $0x170] sm:$0xff]
      %v456 = vld [vmem:[%s308 + $0x178] sm:$0xff]
      %v457 = vld [vmem:[%s308 + $0x180] sm:$0xff]
      %v458 = vld [vmem:[%s308 + $0x188] sm:$0xff]
      %v459 = vld [vmem:[%s308 + $0x190] sm:$0xff]
      %v460 = vld [vmem:[%s308 + $0x198] sm:$0xff]
      %v461 = vld [vmem:[%s308 + $0x1a0] sm:$0xff]
      %v462 = vld [vmem:[%s308 + $0x1a8] sm:$0xff]
      %v463 = vld [vmem:[%s308 + $0x1b0] sm:$0xff]
      %v464 = vld [vmem:[%s308 + $0x1b8] sm:$0xff]
      %v465 = vld [vmem:[%s308 + $0x1c0] sm:$0xff]
      %v466 = vld [vmem:[%s308 + $0x1c8] sm:$0xff]
      %v467 = vld [vmem:[%s308 + $0x1d0] sm:$0xff]
      %v468 = vld [vmem:[%s308 + $0x1d8] sm:$0xff]
      %v469 = vld [vmem:[%s308 + $0x1e0] sm:$0xff]
      %v470 = vld [vmem:[%s308 + $0x1e8] sm:$0xff]
      %v471 = vld [vmem:[%s308 + $0x1f0] sm:$0xff]
      %v472 = vld [vmem:[%s308 + $0x1f8] sm:$0xff]
      %v473 = vld [vmem:[%s308 + $0x200] sm:$0xff]
      %v474 = vld [vmem:[%s308 + $0x208] sm:$0xff]
      %v475 = vld [vmem:[%s308 + $0x210] sm:$0xff]
      %v476 = vld [vmem:[%s308 + $0x218] sm:$0xff]
      %v477 = vld [vmem:[%s308 + $0x220] sm:$0xff]
      %v478 = vld [vmem:[%s308 + $0x228] sm:$0xff]
      %v479 = vld [vmem:[%s308 + $0x230] sm:$0xff]
      %v480 = vld [vmem:[%s308 + $0x238] sm:$0xff]
      %v481 = vld [vmem:[%s308 + $0x240] sm:$0xff]
      %v482 = vld [vmem:[%s308 + $0x248] sm:$0xff]
      %v483 = vld [vmem:[%s308 + $0x250] sm:$0xff]
      %v484 = vld [vmem:[%s308 + $0x258] sm:$0xff]
      %v485 = vld [vmem:[%s308 + $0x260] sm:$0xff]
      %v486 = vld [vmem:[%s308 + $0x268] sm:$0xff]
      %v487 = vld [vmem:[%s308 + $0x270] sm:$0xff]
      %v488 = vld [vmem:[%s308 + $0x278] sm:$0xff]
      %v489 = vld [vmem:[%s308 + $0x280] sm:$0xff]
      %v490 = vld [vmem:[%s308 + $0x288] sm:$0xff]
      %v491 = vld [vmem:[%s308 + $0x290] sm:$0xff]
      %v492 = vld [vmem:[%s308 + $0x298] sm:$0xff]
      %v493 = vld [vmem:[%s308 + $0x2a0] sm:$0xff]
      %v494 = vld [vmem:[%s308 + $0x2a8] sm:$0xff]
      %v495 = vld [vmem:[%s308 + $0x2b0] sm:$0xff]
      %v496 = vld [vmem:[%s308 + $0x2b8] sm:$0xff]
      %v497 = vld [vmem:[%s308 + $0x2c0] sm:$0xff]
      %v498 = vld [vmem:[%s308 + $0x2c8] sm:$0xff]
      %v499 = vld [vmem:[%s308 + $0x2d0] sm:$0xff]
      %v500 = vld [vmem:[%s308 + $0x2d8] sm:$0xff]
      %v501 = vld [vmem:[%s308 + $0x2e0] sm:$0xff]
      %v502 = vld [vmem:[%s308 + $0x2e8] sm:$0xff]
      %v503 = vld [vmem:[%s308 + $0x2f0] sm:$0xff]
      %v504 = vld [vmem:[%s308 + $0x2f8] sm:$0xff]
      %v505 = vld [vmem:[%s308 + $0x300] sm:$0xff]
      %v506 = vld [vmem:[%s308 + $0x308] sm:$0xff]
      %v507 = vld [vmem:[%s308 + $0x310] sm:$0xff]
      %v508 = vld [vmem:[%s308 + $0x318] sm:$0xff]
      %v509 = vld [vmem:[%s308 + $0x320] sm:$0xff]
      %v510 = vld [vmem:[%s308 + $0x328] sm:$0xff]
      %v511 = vld [vmem:[%s308 + $0x330] sm:$0xff]
      %v512 = vld [vmem:[%s308 + $0x338] sm:$0xff]
      %v513 = vld [vmem:[%s308 + $0x340] sm:$0xff]
      %v514 = vld [vmem:[%s308 + $0x348] sm:$0xff]
      %v515 = vld [vmem:[%s308 + $0x350] sm:$0xff]
      %v516 = vld [vmem:[%s308 + $0x358] sm:$0xff]
      %v517 = vld [vmem:[%s308 + $0x360] sm:$0xff]
      %v518 = vld [vmem:[%s308 + $0x368] sm:$0xff]
      %v519 = vld [vmem:[%s308 + $0x370] sm:$0xff]
      %v520 = vld [vmem:[%s308 + $0x378] sm:$0xff]
      %v521 = vld [vmem:[%s308 + $0x380] sm:$0xff]
      %v522 = vld [vmem:[%s308 + $0x388] sm:$0xff]
      %v523 = vld [vmem:[%s308 + $0x390] sm:$0xff]
      %v524 = vld [vmem:[%s308 + $0x398] sm:$0xff]
      %v525 = vld [vmem:[%s308 + $0x3a0] sm:$0xff]
      %v526 = vld [vmem:[%s308 + $0x3a8] sm:$0xff]
      %v527 = vld [vmem:[%s308 + $0x3b0] sm:$0xff]
      %v528 = vld [vmem:[%s308 + $0x3b8] sm:$0xff]
      %v529 = vld [vmem:[%s308 + $0x3c0] sm:$0xff]
      %v530 = vld [vmem:[%s308 + $0x3c8] sm:$0xff]
      %v531 = vld [vmem:[%s308 + $0x3d0] sm:$0xff]
      %v532 = vld [vmem:[%s308 + $0x3d8] sm:$0xff]
      %v533 = vld [vmem:[%s308 + $0x3e0] sm:$0xff]
      %v534 = vld [vmem:[%s308 + $0x3e8] sm:$0xff]
      %v535 = vld [vmem:[%s308 + $0x3f0] sm:$0xff]
      %v536 = vld [vmem:[%s308 + $0x3f8] sm:$0xff]
      %v537 = vld [vmem:[%s308 + $0x400] sm:$0xff]
      %v538 = vld [vmem:[%s308 + $0x408] sm:$0xff]
      %v539 = vld [vmem:[%s308 + $0x410] sm:$0xff]
      %v540 = vld [vmem:[%s308 + $0x418] sm:$0xff]
      %v541 = vld [vmem:[%s308 + $0x420] sm:$0xff]
      %v542 = vld [vmem:[%s308 + $0x428] sm:$0xff]
      %v543 = vld [vmem:[%s308 + $0x430] sm:$0xff]
      %v544 = vld [vmem:[%s308 + $0x438] sm:$0xff]
      %v545 = vld [vmem:[%s308 + $0x440] sm:$0xff]
      %v546 = vld [vmem:[%s308 + $0x448] sm:$0xff]
      %v547 = vld [vmem:[%s308 + $0x450] sm:$0xff]
      %v548 = vld [vmem:[%s308 + $0x458] sm:$0xff]
      %v549 = vld [vmem:[%s308 + $0x460] sm:$0xff]
      %v550 = vld [vmem:[%s308 + $0x468] sm:$0xff]
      %v551 = vld [vmem:[%s308 + $0x470] sm:$0xff]
      %v552 = vld [vmem:[%s308 + $0x478] sm:$0xff]
      %v553 = vld [vmem:[%s308 + $0x480] sm:$0xff]
      %v554 = vld [vmem:[%s308 + $0x488] sm:$0xff]
      %v555 = vld [vmem:[%s308 + $0x490] sm:$0xff]
      %v556 = vld [vmem:[%s313] sm:$0xff]
      %v557 = vld [vmem:[%s313 + $0x8] sm:$0xff]
      %v558 = vld [vmem:[%s313 + $0x10] sm:$0xff]
      %v559 = vld [vmem:[%s313 + $0x18] sm:$0xff]
      %v560 = vld [vmem:[%s313 + $0x20] sm:$0xff]
      %v561 = vld [vmem:[%s313 + $0x28] sm:$0xff]
      %v562 = vld [vmem:[%s313 + $0x30] sm:$0xff]
      %v563 = vld [vmem:[%s313 + $0x38] sm:$0xff]
      %v564 = vld [vmem:[%s313 + $0x40] sm:$0xff]
      %v565 = vld [vmem:[%s313 + $0x48] sm:$0xff]
      %v566 = vld [vmem:[%s313 + $0x50] sm:$0xff]
      %v567 = vld [vmem:[%s313 + $0x58] sm:$0xff]
      %v568 = vld [vmem:[%s313 + $0x60] sm:$0xff]
      %v569 = vld [vmem:[%s313 + $0x68] sm:$0xff]
      %v570 = vld [vmem:[%s313 + $0x70] sm:$0xff]
      %v571 = vld [vmem:[%s313 + $0x78] sm:$0xff]
      %v572 = vld [vmem:[%s313 + $0x80] sm:$0xff]
      %v573 = vld [vmem:[%s313 + $0x88] sm:$0xff]
      %v574 = vld [vmem:[%s313 + $0x90] sm:$0xff]
      %v575 = vld [vmem:[%s313 + $0x98] sm:$0xff]
      %v576 = vld [vmem:[%s313 + $0xa0] sm:$0xff]
      %v577 = vld [vmem:[%s313 + $0xa8] sm:$0xff]
      %v578 = vld [vmem:[%s313 + $0xb0] sm:$0xff]
      %v579 = vld [vmem:[%s313 + $0xb8] sm:$0xff]
      %v580 = vld [vmem:[%s313 + $0xc0] sm:$0xff]
      %v581 = vld [vmem:[%s313 + $0xc8] sm:$0xff]
      %v582 = vld [vmem:[%s313 + $0xd0] sm:$0xff]
      %v583 = vld [vmem:[%s313 + $0xd8] sm:$0xff]
      %v584 = vld [vmem:[%s313 + $0xe0] sm:$0xff]
      %v585 = vld [vmem:[%s313 + $0xe8] sm:$0xff]
      %v586 = vld [vmem:[%s313 + $0xf0] sm:$0xff]
      %v587 = vld [vmem:[%s313 + $0xf8] sm:$0xff]
      %v588 = vld [vmem:[%s313 + $0x100] sm:$0xff]
      %v589 = vld [vmem:[%s313 + $0x108] sm:$0xff]
      %v590 = vld [vmem:[%s313 + $0x110] sm:$0xff]
      %v591 = vld [vmem:[%s313 + $0x118] sm:$0xff]
      %v592 = vld [vmem:[%s313 + $0x120] sm:$0xff]
      %v593 = vld [vmem:[%s313 + $0x128] sm:$0xff]
      %v594 = vld [vmem:[%s313 + $0x130] sm:$0xff]
      %v595 = vld [vmem:[%s313 + $0x138] sm:$0xff]
      %v596 = vld [vmem:[%s313 + $0x140] sm:$0xff]
      %v597 = vld [vmem:[%s313 + $0x148] sm:$0xff]
      %v598 = vld [vmem:[%s313 + $0x150] sm:$0xff]
      %v599 = vld [vmem:[%s313 + $0x158] sm:$0xff]
      %v600 = vld [vmem:[%s313 + $0x160] sm:$0xff]
      %v601 = vld [vmem:[%s313 + $0x168] sm:$0xff]
      %v602 = vld [vmem:[%s313 + $0x170] sm:$0xff]
      %v603 = vld [vmem:[%s313 + $0x178] sm:$0xff]
      %v604 = vld [vmem:[%s313 + $0x180] sm:$0xff]
      %v605 = vld [vmem:[%s313 + $0x188] sm:$0xff]
      %v606 = vld [vmem:[%s313 + $0x190] sm:$0xff]
      %v607 = vld [vmem:[%s313 + $0x198] sm:$0xff]
      %v608 = vld [vmem:[%s313 + $0x1a0] sm:$0xff]
      %v609 = vld [vmem:[%s313 + $0x1a8] sm:$0xff]
      %v610 = vld [vmem:[%s313 + $0x1b0] sm:$0xff]
      %v611 = vld [vmem:[%s313 + $0x1b8] sm:$0xff]
      %v612 = vld [vmem:[%s313 + $0x1c0] sm:$0xff]
      %v613 = vld [vmem:[%s313 + $0x1c8] sm:$0xff]
      %v614 = vld [vmem:[%s313 + $0x1d0] sm:$0xff]
      %v615 = vld [vmem:[%s313 + $0x1d8] sm:$0xff]
      %v616 = vld [vmem:[%s313 + $0x1e0] sm:$0xff]
      %v617 = vld [vmem:[%s313 + $0x1e8] sm:$0xff]
      %v618 = vld [vmem:[%s313 + $0x1f0] sm:$0xff]
      %v619 = vld [vmem:[%s313 + $0x1f8] sm:$0xff]
      %v620 = vld [vmem:[%s313 + $0x200] sm:$0xff]
      %v621 = vld [vmem:[%s313 + $0x208] sm:$0xff]
      %v622 = vld [vmem:[%s313 + $0x210] sm:$0xff]
      %v623 = vld [vmem:[%s313 + $0x218] sm:$0xff]
      %v624 = vld [vmem:[%s313 + $0x220] sm:$0xff]
      %v625 = vld [vmem:[%s313 + $0x228] sm:$0xff]
      %v626 = vld [vmem:[%s313 + $0x230] sm:$0xff]
      %v627 = vld [vmem:[%s313 + $0x238] sm:$0xff]
      %v628 = vld [vmem:[%s313 + $0x240] sm:$0xff]
      %v629 = vld [vmem:[%s313 + $0x248] sm:$0xff]
      %v630 = vld [vmem:[%s313 + $0x250] sm:$0xff]
      %v631 = vld [vmem:[%s313 + $0x258] sm:$0xff]
      %v632 = vld [vmem:[%s313 + $0x260] sm:$0xff]
      %v633 = vld [vmem:[%s313 + $0x268] sm:$0xff]
      %v634 = vld [vmem:[%s313 + $0x270] sm:$0xff]
      %v635 = vld [vmem:[%s313 + $0x278] sm:$0xff]
      %v636 = vld [vmem:[%s313 + $0x280] sm:$0xff]
      %v637 = vld [vmem:[%s313 + $0x288] sm:$0xff]
      %v638 = vld [vmem:[%s313 + $0x290] sm:$0xff]
      %v639 = vld [vmem:[%s313 + $0x298] sm:$0xff]
      %v640 = vld [vmem:[%s313 + $0x2a0] sm:$0xff]
      %v641 = vld [vmem:[%s313 + $0x2a8] sm:$0xff]
      %v642 = vld [vmem:[%s313 + $0x2b0] sm:$0xff]
      %v643 = vld [vmem:[%s313 + $0x2b8] sm:$0xff]
      %v644 = vld [vmem:[%s313 + $0x2c0] sm:$0xff]
      %v645 = vld [vmem:[%s313 + $0x2c8] sm:$0xff]
      %v646 = vld [vmem:[%s313 + $0x2d0] sm:$0xff]
      %v647 = vld [vmem:[%s313 + $0x2d8] sm:$0xff]
      %v648 = vld [vmem:[%s313 + $0x2e0] sm:$0xff]
      %v649 = vld [vmem:[%s313 + $0x2e8] sm:$0xff]
      %v650 = vld [vmem:[%s313 + $0x2f0] sm:$0xff]
      %v651 = vld [vmem:[%s313 + $0x2f8] sm:$0xff]
      %v652 = vld [vmem:[%s313 + $0x300] sm:$0xff]
      %v653 = vld [vmem:[%s313 + $0x308] sm:$0xff]
      %v654 = vld [vmem:[%s313 + $0x310] sm:$0xff]
      %v655 = vld [vmem:[%s313 + $0x318] sm:$0xff]
      %v656 = vld [vmem:[%s313 + $0x320] sm:$0xff]
      %v657 = vld [vmem:[%s313 + $0x328] sm:$0xff]
      %v658 = vld [vmem:[%s313 + $0x330] sm:$0xff]
      %v659 = vld [vmem:[%s313 + $0x338] sm:$0xff]
      %v660 = vld [vmem:[%s313 + $0x340] sm:$0xff]
      %v661 = vld [vmem:[%s313 + $0x348] sm:$0xff]
      %v662 = vld [vmem:[%s313 + $0x350] sm:$0xff]
      %v663 = vld [vmem:[%s313 + $0x358] sm:$0xff]
      %v664 = vld [vmem:[%s313 + $0x360] sm:$0xff]
      %v665 = vld [vmem:[%s313 + $0x368] sm:$0xff]
      %v666 = vld [vmem:[%s313 + $0x370] sm:$0xff]
      %v667 = vld [vmem:[%s313 + $0x378] sm:$0xff]
      %v668 = vld [vmem:[%s313 + $0x380] sm:$0xff]
      %v669 = vld [vmem:[%s313 + $0x388] sm:$0xff]
      %v670 = vld [vmem:[%s313 + $0x390] sm:$0xff]
      %v671 = vld [vmem:[%s313 + $0x398] sm:$0xff]
      %v672 = vld [vmem:[%s313 + $0x3a0] sm:$0xff]
      %v673 = vld [vmem:[%s313 + $0x3a8] sm:$0xff]
      %v674 = vld [vmem:[%s313 + $0x3b0] sm:$0xff]
      %v675 = vld [vmem:[%s313 + $0x3b8] sm:$0xff]
      %v676 = vld [vmem:[%s313 + $0x3c0] sm:$0xff]
      %v677 = vld [vmem:[%s313 + $0x3c8] sm:$0xff]
      %v678 = vld [vmem:[%s313 + $0x3d0] sm:$0xff]
      %v679 = vld [vmem:[%s313 + $0x3d8] sm:$0xff]
      %v680 = vld [vmem:[%s313 + $0x3e0] sm:$0xff]
      %v681 = vld [vmem:[%s313 + $0x3e8] sm:$0xff]
      %v682 = vld [vmem:[%s313 + $0x3f0] sm:$0xff]
      %v683 = vld [vmem:[%s313 + $0x3f8] sm:$0xff]
      %v684 = vld [vmem:[%s313 + $0x400] sm:$0xff]
      %v685 = vld [vmem:[%s313 + $0x408] sm:$0xff]
      %v686 = vld [vmem:[%s313 + $0x410] sm:$0xff]
      %v687 = vld [vmem:[%s313 + $0x418] sm:$0xff]
      %v688 = vld [vmem:[%s313 + $0x420] sm:$0xff]
      %v689 = vld [vmem:[%s313 + $0x428] sm:$0xff]
      %v690 = vld [vmem:[%s313 + $0x430] sm:$0xff]
      %v691 = vld [vmem:[%s313 + $0x438] sm:$0xff]
      %v692 = vld [vmem:[%s313 + $0x440] sm:$0xff]
      %v693 = vld [vmem:[%s313 + $0x448] sm:$0xff]
      %v694 = vld [vmem:[%s313 + $0x450] sm:$0xff]
      %v695 = vld [vmem:[%s313 + $0x458] sm:$0xff]
      %v696 = vld [vmem:[%s313 + $0x460] sm:$0xff]
      %v697 = vld [vmem:[%s313 + $0x468] sm:$0xff]
      %v698 = vld [vmem:[%s313 + $0x470] sm:$0xff]
      %v699 = vld [vmem:[%s313 + $0x478] sm:$0xff]
      %v700 = vld [vmem:[%s313 + $0x480] sm:$0xff]
      %v701 = vld [vmem:[%s313 + $0x488] sm:$0xff]
      %v702 = vld [vmem:[%s313 + $0x490] sm:$0xff]
      %704 = vset.pattern.permute.xlu0 0
      %705 = vperm.xlu0 %704, %v556
      %v706 = vpop.permute.xlu0 %705
      %709 = vset.pattern.permute.xlu0 0
      %710 = vperm.xlu0 %709, %v557
      %v711 = vpop.permute.xlu0 %710
      %714 = vset.pattern.permute.xlu0 0
      %715 = vperm.xlu0 %714, %v558
      %v716 = vpop.permute.xlu0 %715
      %719 = vset.pattern.permute.xlu0 0
      %720 = vperm.xlu0 %719, %v559
      %v721 = vpop.permute.xlu0 %720
      %724 = vset.pattern.permute.xlu0 0
      %725 = vperm.xlu0 %724, %v560
      %v726 = vpop.permute.xlu0 %725
      %729 = vset.pattern.permute.xlu0 0
      %730 = vperm.xlu0 %729, %v561
      %v731 = vpop.permute.xlu0 %730
      %734 = vset.pattern.permute.xlu0 0
      %735 = vperm.xlu0 %734, %v562
      %v736 = vpop.permute.xlu0 %735
      %739 = vset.pattern.permute.xlu0 0
      %740 = vperm.xlu0 %739, %v563
      %v741 = vpop.permute.xlu0 %740
      %744 = vset.pattern.permute.xlu0 0
      %745 = vperm.xlu0 %744, %v564
      %v746 = vpop.permute.xlu0 %745
      %749 = vset.pattern.permute.xlu0 0
      %750 = vperm.xlu0 %749, %v565
      %v751 = vpop.permute.xlu0 %750
      %754 = vset.pattern.permute.xlu0 0
      %755 = vperm.xlu0 %754, %v566
      %v756 = vpop.permute.xlu0 %755
      %759 = vset.pattern.permute.xlu0 0
      %760 = vperm.xlu0 %759, %v567
      %v761 = vpop.permute.xlu0 %760
      %764 = vset.pattern.permute.xlu0 0
      %765 = vperm.xlu0 %764, %v568
      %v766 = vpop.permute.xlu0 %765
      %769 = vset.pattern.permute.xlu0 0
      %770 = vperm.xlu0 %769, %v569
      %v771 = vpop.permute.xlu0 %770
      %774 = vset.pattern.permute.xlu0 0
      %775 = vperm.xlu0 %774, %v570
      %v776 = vpop.permute.xlu0 %775
      %779 = vset.pattern.permute.xlu0 0
      %780 = vperm.xlu0 %779, %v571
      %v781 = vpop.permute.xlu0 %780
      %784 = vset.pattern.permute.xlu0 0
      %785 = vperm.xlu0 %784, %v572
      %v786 = vpop.permute.xlu0 %785
      %789 = vset.pattern.permute.xlu0 0
      %790 = vperm.xlu0 %789, %v573
      %v791 = vpop.permute.xlu0 %790
      %794 = vset.pattern.permute.xlu0 0
      %795 = vperm.xlu0 %794, %v574
      %v796 = vpop.permute.xlu0 %795
      %799 = vset.pattern.permute.xlu0 0
      %800 = vperm.xlu0 %799, %v575
      %v801 = vpop.permute.xlu0 %800
      %804 = vset.pattern.permute.xlu0 0
      %805 = vperm.xlu0 %804, %v576
      %v806 = vpop.permute.xlu0 %805
      %809 = vset.pattern.permute.xlu0 0
      %810 = vperm.xlu0 %809, %v577
      %v811 = vpop.permute.xlu0 %810
      %814 = vset.pattern.permute.xlu0 0
      %815 = vperm.xlu0 %814, %v578
      %v816 = vpop.permute.xlu0 %815
      %819 = vset.pattern.permute.xlu0 0
      %820 = vperm.xlu0 %819, %v579
      %v821 = vpop.permute.xlu0 %820
      %824 = vset.pattern.permute.xlu0 0
      %825 = vperm.xlu0 %824, %v580
      %v826 = vpop.permute.xlu0 %825
      %829 = vset.pattern.permute.xlu0 0
      %830 = vperm.xlu0 %829, %v581
      %v831 = vpop.permute.xlu0 %830
      %834 = vset.pattern.permute.xlu0 0
      %835 = vperm.xlu0 %834, %v582
      %v836 = vpop.permute.xlu0 %835
      %839 = vset.pattern.permute.xlu0 0
      %840 = vperm.xlu0 %839, %v583
      %v841 = vpop.permute.xlu0 %840
      %844 = vset.pattern.permute.xlu0 0
      %845 = vperm.xlu0 %844, %v584
      %v846 = vpop.permute.xlu0 %845
      %849 = vset.pattern.permute.xlu0 0
      %850 = vperm.xlu0 %849, %v585
      %v851 = vpop.permute.xlu0 %850
      %854 = vset.pattern.permute.xlu0 0
      %855 = vperm.xlu0 %854, %v586
      %v856 = vpop.permute.xlu0 %855
      %859 = vset.pattern.permute.xlu0 0
      %860 = vperm.xlu0 %859, %v587
      %v861 = vpop.permute.xlu0 %860
      %864 = vset.pattern.permute.xlu0 0
      %865 = vperm.xlu0 %864, %v588
      %v866 = vpop.permute.xlu0 %865
      %869 = vset.pattern.permute.xlu0 0
      %870 = vperm.xlu0 %869, %v589
      %v871 = vpop.permute.xlu0 %870
      %874 = vset.pattern.permute.xlu0 0
      %875 = vperm.xlu0 %874, %v590
      %v876 = vpop.permute.xlu0 %875
      %879 = vset.pattern.permute.xlu0 0
      %880 = vperm.xlu0 %879, %v591
      %v881 = vpop.permute.xlu0 %880
      %884 = vset.pattern.permute.xlu0 0
      %885 = vperm.xlu0 %884, %v592
      %v886 = vpop.permute.xlu0 %885
      %889 = vset.pattern.permute.xlu0 0
      %890 = vperm.xlu0 %889, %v593
      %v891 = vpop.permute.xlu0 %890
      %894 = vset.pattern.permute.xlu0 0
      %895 = vperm.xlu0 %894, %v594
      %v896 = vpop.permute.xlu0 %895
      %899 = vset.pattern.permute.xlu0 0
      %900 = vperm.xlu0 %899, %v595
      %v901 = vpop.permute.xlu0 %900
      %904 = vset.pattern.permute.xlu0 0
      %905 = vperm.xlu0 %904, %v596
      %v906 = vpop.permute.xlu0 %905
      %909 = vset.pattern.permute.xlu0 0
      %910 = vperm.xlu0 %909, %v597
      %v911 = vpop.permute.xlu0 %910
      %914 = vset.pattern.permute.xlu0 0
      %915 = vperm.xlu0 %914, %v598
      %v916 = vpop.permute.xlu0 %915
      %919 = vset.pattern.permute.xlu0 0
      %920 = vperm.xlu0 %919, %v599
      %v921 = vpop.permute.xlu0 %920
      %924 = vset.pattern.permute.xlu0 0
      %925 = vperm.xlu0 %924, %v600
      %v926 = vpop.permute.xlu0 %925
      %929 = vset.pattern.permute.xlu0 0
      %930 = vperm.xlu0 %929, %v601
      %v931 = vpop.permute.xlu0 %930
      %934 = vset.pattern.permute.xlu0 0
      %935 = vperm.xlu0 %934, %v602
      %v936 = vpop.permute.xlu0 %935
      %939 = vset.pattern.permute.xlu0 0
      %940 = vperm.xlu0 %939, %v603
      %v941 = vpop.permute.xlu0 %940
      %944 = vset.pattern.permute.xlu0 0
      %945 = vperm.xlu0 %944, %v604
      %v946 = vpop.permute.xlu0 %945
      %949 = vset.pattern.permute.xlu0 0
      %950 = vperm.xlu0 %949, %v605
      %v951 = vpop.permute.xlu0 %950
      %954 = vset.pattern.permute.xlu0 0
      %955 = vperm.xlu0 %954, %v606
      %v956 = vpop.permute.xlu0 %955
      %959 = vset.pattern.permute.xlu0 0
      %960 = vperm.xlu0 %959, %v607
      %v961 = vpop.permute.xlu0 %960
      %964 = vset.pattern.permute.xlu0 0
      %965 = vperm.xlu0 %964, %v608
      %v966 = vpop.permute.xlu0 %965
      %969 = vset.pattern.permute.xlu0 0
      %970 = vperm.xlu0 %969, %v609
      %v971 = vpop.permute.xlu0 %970
      %974 = vset.pattern.permute.xlu0 0
      %975 = vperm.xlu0 %974, %v610
      %v976 = vpop.permute.xlu0 %975
      %979 = vset.pattern.permute.xlu0 0
      %980 = vperm.xlu0 %979, %v611
      %v981 = vpop.permute.xlu0 %980
      %984 = vset.pattern.permute.xlu0 0
      %985 = vperm.xlu0 %984, %v612
      %v986 = vpop.permute.xlu0 %985
      %989 = vset.pattern.permute.xlu0 0
      %990 = vperm.xlu0 %989, %v613
      %v991 = vpop.permute.xlu0 %990
      %994 = vset.pattern.permute.xlu0 0
      %995 = vperm.xlu0 %994, %v614
      %v996 = vpop.permute.xlu0 %995
      %999 = vset.pattern.permute.xlu0 0
      %1000 = vperm.xlu0 %999, %v615
      %v1001 = vpop.permute.xlu0 %1000
      %1004 = vset.pattern.permute.xlu0 0
      %1005 = vperm.xlu0 %1004, %v616
      %v1006 = vpop.permute.xlu0 %1005
      %1009 = vset.pattern.permute.xlu0 0
      %1010 = vperm.xlu0 %1009, %v617
      %v1011 = vpop.permute.xlu0 %1010
      %1014 = vset.pattern.permute.xlu0 0
      %1015 = vperm.xlu0 %1014, %v618
      %v1016 = vpop.permute.xlu0 %1015
      %1019 = vset.pattern.permute.xlu0 0
      %1020 = vperm.xlu0 %1019, %v619
      %v1021 = vpop.permute.xlu0 %1020
      %1024 = vset.pattern.permute.xlu0 0
      %1025 = vperm.xlu0 %1024, %v620
      %v1026 = vpop.permute.xlu0 %1025
      %1029 = vset.pattern.permute.xlu0 0
      %1030 = vperm.xlu0 %1029, %v621
      %v1031 = vpop.permute.xlu0 %1030
      %1034 = vset.pattern.permute.xlu0 0
      %1035 = vperm.xlu0 %1034, %v622
      %v1036 = vpop.permute.xlu0 %1035
      %1039 = vset.pattern.permute.xlu0 0
      %1040 = vperm.xlu0 %1039, %v623
      %v1041 = vpop.permute.xlu0 %1040
      %1044 = vset.pattern.permute.xlu0 0
      %1045 = vperm.xlu0 %1044, %v624
      %v1046 = vpop.permute.xlu0 %1045
      %1049 = vset.pattern.permute.xlu0 0
      %1050 = vperm.xlu0 %1049, %v625
      %v1051 = vpop.permute.xlu0 %1050
      %1054 = vset.pattern.permute.xlu0 0
      %1055 = vperm.xlu0 %1054, %v626
      %v1056 = vpop.permute.xlu0 %1055
      %1059 = vset.pattern.permute.xlu0 0
      %1060 = vperm.xlu0 %1059, %v627
      %v1061 = vpop.permute.xlu0 %1060
      %1064 = vset.pattern.permute.xlu0 0
      %1065 = vperm.xlu0 %1064, %v628
      %v1066 = vpop.permute.xlu0 %1065
      %1069 = vset.pattern.permute.xlu0 0
      %1070 = vperm.xlu0 %1069, %v629
      %v1071 = vpop.permute.xlu0 %1070
      %1074 = vset.pattern.permute.xlu0 0
      %1075 = vperm.xlu0 %1074, %v630
      %v1076 = vpop.permute.xlu0 %1075
      %1079 = vset.pattern.permute.xlu0 0
      %1080 = vperm.xlu0 %1079, %v631
      %v1081 = vpop.permute.xlu0 %1080
      %1084 = vset.pattern.permute.xlu0 0
      %1085 = vperm.xlu0 %1084, %v632
      %v1086 = vpop.permute.xlu0 %1085
      %1089 = vset.pattern.permute.xlu0 0
      %1090 = vperm.xlu0 %1089, %v633
      %v1091 = vpop.permute.xlu0 %1090
      %1094 = vset.pattern.permute.xlu0 0
      %1095 = vperm.xlu0 %1094, %v634
      %v1096 = vpop.permute.xlu0 %1095
      %1099 = vset.pattern.permute.xlu0 0
      %1100 = vperm.xlu0 %1099, %v635
      %v1101 = vpop.permute.xlu0 %1100
      %1104 = vset.pattern.permute.xlu0 0
      %1105 = vperm.xlu0 %1104, %v636
      %v1106 = vpop.permute.xlu0 %1105
      %1109 = vset.pattern.permute.xlu0 0
      %1110 = vperm.xlu0 %1109, %v637
      %v1111 = vpop.permute.xlu0 %1110
      %1114 = vset.pattern.permute.xlu0 0
      %1115 = vperm.xlu0 %1114, %v638
      %v1116 = vpop.permute.xlu0 %1115
      %1119 = vset.pattern.permute.xlu0 0
      %1120 = vperm.xlu0 %1119, %v639
      %v1121 = vpop.permute.xlu0 %1120
      %1124 = vset.pattern.permute.xlu0 0
      %1125 = vperm.xlu0 %1124, %v640
      %v1126 = vpop.permute.xlu0 %1125
      %1129 = vset.pattern.permute.xlu0 0
      %1130 = vperm.xlu0 %1129, %v641
      %v1131 = vpop.permute.xlu0 %1130
      %1134 = vset.pattern.permute.xlu0 0
      %1135 = vperm.xlu0 %1134, %v642
      %v1136 = vpop.permute.xlu0 %1135
      %1139 = vset.pattern.permute.xlu0 0
      %1140 = vperm.xlu0 %1139, %v643
      %v1141 = vpop.permute.xlu0 %1140
      %1144 = vset.pattern.permute.xlu0 0
      %1145 = vperm.xlu0 %1144, %v644
      %v1146 = vpop.permute.xlu0 %1145
      %1149 = vset.pattern.permute.xlu0 0
      %1150 = vperm.xlu0 %1149, %v645
      %v1151 = vpop.permute.xlu0 %1150
      %1154 = vset.pattern.permute.xlu0 0
      %1155 = vperm.xlu0 %1154, %v646
      %v1156 = vpop.permute.xlu0 %1155
      %1159 = vset.pattern.permute.xlu0 0
      %1160 = vperm.xlu0 %1159, %v647
      %v1161 = vpop.permute.xlu0 %1160
      %1164 = vset.pattern.permute.xlu0 0
      %1165 = vperm.xlu0 %1164, %v648
      %v1166 = vpop.permute.xlu0 %1165
      %1169 = vset.pattern.permute.xlu0 0
      %1170 = vperm.xlu0 %1169, %v649
      %v1171 = vpop.permute.xlu0 %1170
      %1174 = vset.pattern.permute.xlu0 0
      %1175 = vperm.xlu0 %1174, %v650
      %v1176 = vpop.permute.xlu0 %1175
      %1179 = vset.pattern.permute.xlu0 0
      %1180 = vperm.xlu0 %1179, %v651
      %v1181 = vpop.permute.xlu0 %1180
      %1184 = vset.pattern.permute.xlu0 0
      %1185 = vperm.xlu0 %1184, %v652
      %v1186 = vpop.permute.xlu0 %1185
      %1189 = vset.pattern.permute.xlu0 0
      %1190 = vperm.xlu0 %1189, %v653
      %v1191 = vpop.permute.xlu0 %1190
      %1194 = vset.pattern.permute.xlu0 0
      %1195 = vperm.xlu0 %1194, %v654
      %v1196 = vpop.permute.xlu0 %1195
      %1199 = vset.pattern.permute.xlu0 0
      %1200 = vperm.xlu0 %1199, %v655
      %v1201 = vpop.permute.xlu0 %1200
      %1204 = vset.pattern.permute.xlu0 0
      %1205 = vperm.xlu0 %1204, %v656
      %v1206 = vpop.permute.xlu0 %1205
      %1209 = vset.pattern.permute.xlu0 0
      %1210 = vperm.xlu0 %1209, %v657
      %v1211 = vpop.permute.xlu0 %1210
      %1214 = vset.pattern.permute.xlu0 0
      %1215 = vperm.xlu0 %1214, %v658
      %v1216 = vpop.permute.xlu0 %1215
      %1219 = vset.pattern.permute.xlu0 0
      %1220 = vperm.xlu0 %1219, %v659
      %v1221 = vpop.permute.xlu0 %1220
      %1224 = vset.pattern.permute.xlu0 0
      %1225 = vperm.xlu0 %1224, %v660
      %v1226 = vpop.permute.xlu0 %1225
      %1229 = vset.pattern.permute.xlu0 0
      %1230 = vperm.xlu0 %1229, %v661
      %v1231 = vpop.permute.xlu0 %1230
      %1234 = vset.pattern.permute.xlu0 0
      %1235 = vperm.xlu0 %1234, %v662
      %v1236 = vpop.permute.xlu0 %1235
      %1239 = vset.pattern.permute.xlu0 0
      %1240 = vperm.xlu0 %1239, %v663
      %v1241 = vpop.permute.xlu0 %1240
      %1244 = vset.pattern.permute.xlu0 0
      %1245 = vperm.xlu0 %1244, %v664
      %v1246 = vpop.permute.xlu0 %1245
      %1249 = vset.pattern.permute.xlu0 0
      %1250 = vperm.xlu0 %1249, %v665
      %v1251 = vpop.permute.xlu0 %1250
      %1254 = vset.pattern.permute.xlu0 0
      %1255 = vperm.xlu0 %1254, %v666
      %v1256 = vpop.permute.xlu0 %1255
      %1259 = vset.pattern.permute.xlu0 0
      %1260 = vperm.xlu0 %1259, %v667
      %v1261 = vpop.permute.xlu0 %1260
      %1264 = vset.pattern.permute.xlu0 0
      %1265 = vperm.xlu0 %1264, %v668
      %v1266 = vpop.permute.xlu0 %1265
      %1269 = vset.pattern.permute.xlu0 0
      %1270 = vperm.xlu0 %1269, %v669
      %v1271 = vpop.permute.xlu0 %1270
      %1274 = vset.pattern.permute.xlu0 0
      %1275 = vperm.xlu0 %1274, %v670
      %v1276 = vpop.permute.xlu0 %1275
      %1279 = vset.pattern.permute.xlu0 0
      %1280 = vperm.xlu0 %1279, %v671
      %v1281 = vpop.permute.xlu0 %1280
      %1284 = vset.pattern.permute.xlu0 0
      %1285 = vperm.xlu0 %1284, %v672
      %v1286 = vpop.permute.xlu0 %1285
      %1289 = vset.pattern.permute.xlu0 0
      %1290 = vperm.xlu0 %1289, %v673
      %v1291 = vpop.permute.xlu0 %1290
      %1294 = vset.pattern.permute.xlu0 0
      %1295 = vperm.xlu0 %1294, %v674
      %v1296 = vpop.permute.xlu0 %1295
      %1299 = vset.pattern.permute.xlu0 0
      %1300 = vperm.xlu0 %1299, %v675
      %v1301 = vpop.permute.xlu0 %1300
      %1304 = vset.pattern.permute.xlu0 0
      %1305 = vperm.xlu0 %1304, %v676
      %v1306 = vpop.permute.xlu0 %1305
      %1309 = vset.pattern.permute.xlu0 0
      %1310 = vperm.xlu0 %1309, %v677
      %v1311 = vpop.permute.xlu0 %1310
      %1314 = vset.pattern.permute.xlu0 0
      %1315 = vperm.xlu0 %1314, %v678
      %v1316 = vpop.permute.xlu0 %1315
      %1319 = vset.pattern.permute.xlu0 0
      %1320 = vperm.xlu0 %1319, %v679
      %v1321 = vpop.permute.xlu0 %1320
      %1324 = vset.pattern.permute.xlu0 0
      %1325 = vperm.xlu0 %1324, %v680
      %v1326 = vpop.permute.xlu0 %1325
      %1329 = vset.pattern.permute.xlu0 0
      %1330 = vperm.xlu0 %1329, %v681
      %v1331 = vpop.permute.xlu0 %1330
      %1334 = vset.pattern.permute.xlu0 0
      %1335 = vperm.xlu0 %1334, %v682
      %v1336 = vpop.permute.xlu0 %1335
      %1339 = vset.pattern.permute.xlu0 0
      %1340 = vperm.xlu0 %1339, %v683
      %v1341 = vpop.permute.xlu0 %1340
      %1344 = vset.pattern.permute.xlu0 0
      %1345 = vperm.xlu0 %1344, %v684
      %v1346 = vpop.permute.xlu0 %1345
      %1349 = vset.pattern.permute.xlu0 0
      %1350 = vperm.xlu0 %1349, %v685
      %v1351 = vpop.permute.xlu0 %1350
      %1354 = vset.pattern.permute.xlu0 0
      %1355 = vperm.xlu0 %1354, %v686
      %v1356 = vpop.permute.xlu0 %1355
      %1359 = vset.pattern.permute.xlu0 0
      %1360 = vperm.xlu0 %1359, %v687
      %v1361 = vpop.permute.xlu0 %1360
      %1364 = vset.pattern.permute.xlu0 0
      %1365 = vperm.xlu0 %1364, %v688
      %v1366 = vpop.permute.xlu0 %1365
      %1369 = vset.pattern.permute.xlu0 0
      %1370 = vperm.xlu0 %1369, %v689
      %v1371 = vpop.permute.xlu0 %1370
      %1374 = vset.pattern.permute.xlu0 0
      %1375 = vperm.xlu0 %1374, %v690
      %v1376 = vpop.permute.xlu0 %1375
      %1379 = vset.pattern.permute.xlu0 0
      %1380 = vperm.xlu0 %1379, %v691
      %v1381 = vpop.permute.xlu0 %1380
      %1384 = vset.pattern.permute.xlu0 0
      %1385 = vperm.xlu0 %1384, %v692
      %v1386 = vpop.permute.xlu0 %1385
      %1389 = vset.pattern.permute.xlu0 0
      %1390 = vperm.xlu0 %1389, %v693
      %v1391 = vpop.permute.xlu0 %1390
      %1394 = vset.pattern.permute.xlu0 0
      %1395 = vperm.xlu0 %1394, %v694
      %v1396 = vpop.permute.xlu0 %1395
      %1399 = vset.pattern.permute.xlu0 0
      %1400 = vperm.xlu0 %1399, %v695
      %v1401 = vpop.permute.xlu0 %1400
      %1404 = vset.pattern.permute.xlu0 0
      %1405 = vperm.xlu0 %1404, %v696
      %v1406 = vpop.permute.xlu0 %1405
      %1409 = vset.pattern.permute.xlu0 0
      %1410 = vperm.xlu0 %1409, %v697
      %v1411 = vpop.permute.xlu0 %1410
      %1414 = vset.pattern.permute.xlu0 0
      %1415 = vperm.xlu0 %1414, %v698
      %v1416 = vpop.permute.xlu0 %1415
      %1419 = vset.pattern.permute.xlu0 0
      %1420 = vperm.xlu0 %1419, %v699
      %v1421 = vpop.permute.xlu0 %1420
      %1424 = vset.pattern.permute.xlu0 0
      %1425 = vperm.xlu0 %1424, %v700
      %v1426 = vpop.permute.xlu0 %1425
      %1429 = vset.pattern.permute.xlu0 0
      %1430 = vperm.xlu0 %1429, %v701
      %v1431 = vpop.permute.xlu0 %1430
      %1434 = vset.pattern.permute.xlu0 0
      %1435 = vperm.xlu0 %1434, %v702
      %v1436 = vpop.permute.xlu0 %1435
      %v1585 = vunpack.c.l.b16 %v409
      %v1586 = vunpack.c.h.b16 %v409
      %v1587 = vunpack.c.l.b16 %v410
      %v1588 = vunpack.c.h.b16 %v410
      %v1589 = vunpack.c.l.b16 %v411
      %v1590 = vunpack.c.h.b16 %v411
      %v1591 = vunpack.c.l.b16 %v412
      %v1592 = vunpack.c.h.b16 %v412
      %v1593 = vunpack.c.l.b16 %v413
      %v1594 = vunpack.c.h.b16 %v413
      %v1595 = vunpack.c.l.b16 %v414
      %v1596 = vunpack.c.h.b16 %v414
      %v1597 = vunpack.c.l.b16 %v415
      %v1598 = vunpack.c.h.b16 %v415
      %v1599 = vunpack.c.l.b16 %v416
      %v1600 = vunpack.c.h.b16 %v416
      %v1601 = vunpack.c.l.b16 %v417
      %v1602 = vunpack.c.h.b16 %v417
      %v1603 = vunpack.c.l.b16 %v418
      %v1604 = vunpack.c.h.b16 %v418
      %v1605 = vunpack.c.l.b16 %v419
      %v1606 = vunpack.c.h.b16 %v419
      %v1607 = vunpack.c.l.b16 %v420
      %v1608 = vunpack.c.h.b16 %v420
      %v1609 = vunpack.c.l.b16 %v421
      %v1610 = vunpack.c.h.b16 %v421
      %v1611 = vunpack.c.l.b16 %v422
      %v1612 = vunpack.c.h.b16 %v422
      %v1613 = vunpack.c.l.b16 %v423
      %v1614 = vunpack.c.h.b16 %v423
      %v1615 = vunpack.c.l.b16 %v424
      %v1616 = vunpack.c.h.b16 %v424
      %v1617 = vunpack.c.l.b16 %v425
      %v1618 = vunpack.c.h.b16 %v425
      %v1619 = vunpack.c.l.b16 %v426
      %v1620 = vunpack.c.h.b16 %v426
      %v1621 = vunpack.c.l.b16 %v427
      %v1622 = vunpack.c.h.b16 %v427
      %v1623 = vunpack.c.l.b16 %v428
      %v1624 = vunpack.c.h.b16 %v428
      %v1625 = vunpack.c.l.b16 %v429
      %v1626 = vunpack.c.h.b16 %v429
      %v1627 = vunpack.c.l.b16 %v430
      %v1628 = vunpack.c.h.b16 %v430
      %v1629 = vunpack.c.l.b16 %v431
      %v1630 = vunpack.c.h.b16 %v431
      %v1631 = vunpack.c.l.b16 %v432
      %v1632 = vunpack.c.h.b16 %v432
      %v1633 = vunpack.c.l.b16 %v433
      %v1634 = vunpack.c.h.b16 %v433
      %v1635 = vunpack.c.l.b16 %v434
      %v1636 = vunpack.c.h.b16 %v434
      %v1637 = vunpack.c.l.b16 %v435
      %v1638 = vunpack.c.h.b16 %v435
      %v1639 = vunpack.c.l.b16 %v436
      %v1640 = vunpack.c.h.b16 %v436
      %v1641 = vunpack.c.l.b16 %v437
      %v1642 = vunpack.c.h.b16 %v437
      %v1643 = vunpack.c.l.b16 %v438
      %v1644 = vunpack.c.h.b16 %v438
      %v1645 = vunpack.c.l.b16 %v439
      %v1646 = vunpack.c.h.b16 %v439
      %v1647 = vunpack.c.l.b16 %v440
      %v1648 = vunpack.c.h.b16 %v440
      %v1649 = vunpack.c.l.b16 %v441
      %v1650 = vunpack.c.h.b16 %v441
      %v1651 = vunpack.c.l.b16 %v442
      %v1652 = vunpack.c.h.b16 %v442
      %v1653 = vunpack.c.l.b16 %v443
      %v1654 = vunpack.c.h.b16 %v443
      %v1655 = vunpack.c.l.b16 %v444
      %v1656 = vunpack.c.h.b16 %v444
      %v1657 = vunpack.c.l.b16 %v445
      %v1658 = vunpack.c.h.b16 %v445
      %v1659 = vunpack.c.l.b16 %v446
      %v1660 = vunpack.c.h.b16 %v446
      %v1661 = vunpack.c.l.b16 %v447
      %v1662 = vunpack.c.h.b16 %v447
      %v1663 = vunpack.c.l.b16 %v448
      %v1664 = vunpack.c.h.b16 %v448
      %v1665 = vunpack.c.l.b16 %v449
      %v1666 = vunpack.c.h.b16 %v449
      %v1667 = vunpack.c.l.b16 %v450
      %v1668 = vunpack.c.h.b16 %v450
      %v1669 = vunpack.c.l.b16 %v451
      %v1670 = vunpack.c.h.b16 %v451
      %v1671 = vunpack.c.l.b16 %v452
      %v1672 = vunpack.c.h.b16 %v452
      %v1673 = vunpack.c.l.b16 %v453
      %v1674 = vunpack.c.h.b16 %v453
      %v1675 = vunpack.c.l.b16 %v454
      %v1676 = vunpack.c.h.b16 %v454
      %v1677 = vunpack.c.l.b16 %v455
      %v1678 = vunpack.c.h.b16 %v455
      %v1679 = vunpack.c.l.b16 %v456
      %v1680 = vunpack.c.h.b16 %v456
      %v1681 = vunpack.c.l.b16 %v457
      %v1682 = vunpack.c.h.b16 %v457
      %v1683 = vunpack.c.l.b16 %v458
      %v1684 = vunpack.c.h.b16 %v458
      %v1685 = vunpack.c.l.b16 %v459
      %v1686 = vunpack.c.h.b16 %v459
      %v1687 = vunpack.c.l.b16 %v460
      %v1688 = vunpack.c.h.b16 %v460
      %v1689 = vunpack.c.l.b16 %v461
      %v1690 = vunpack.c.h.b16 %v461
      %v1691 = vunpack.c.l.b16 %v462
      %v1692 = vunpack.c.h.b16 %v462
      %v1693 = vunpack.c.l.b16 %v463
      %v1694 = vunpack.c.h.b16 %v463
      %v1695 = vunpack.c.l.b16 %v464
      %v1696 = vunpack.c.h.b16 %v464
      %v1697 = vunpack.c.l.b16 %v465
      %v1698 = vunpack.c.h.b16 %v465
      %v1699 = vunpack.c.l.b16 %v466
      %v1700 = vunpack.c.h.b16 %v466
      %v1701 = vunpack.c.l.b16 %v467
      %v1702 = vunpack.c.h.b16 %v467
      %v1703 = vunpack.c.l.b16 %v468
      %v1704 = vunpack.c.h.b16 %v468
      %v1705 = vunpack.c.l.b16 %v469
      %v1706 = vunpack.c.h.b16 %v469
      %v1707 = vunpack.c.l.b16 %v470
      %v1708 = vunpack.c.h.b16 %v470
      %v1709 = vunpack.c.l.b16 %v471
      %v1710 = vunpack.c.h.b16 %v471
      %v1711 = vunpack.c.l.b16 %v472
      %v1712 = vunpack.c.h.b16 %v472
      %v1713 = vunpack.c.l.b16 %v473
      %v1714 = vunpack.c.h.b16 %v473
      %v1715 = vunpack.c.l.b16 %v474
      %v1716 = vunpack.c.h.b16 %v474
      %v1717 = vunpack.c.l.b16 %v475
      %v1718 = vunpack.c.h.b16 %v475
      %v1719 = vunpack.c.l.b16 %v476
      %v1720 = vunpack.c.h.b16 %v476
      %v1721 = vunpack.c.l.b16 %v477
      %v1722 = vunpack.c.h.b16 %v477
      %v1723 = vunpack.c.l.b16 %v478
      %v1724 = vunpack.c.h.b16 %v478
      %v1725 = vunpack.c.l.b16 %v479
      %v1726 = vunpack.c.h.b16 %v479
      %v1727 = vunpack.c.l.b16 %v480
      %v1728 = vunpack.c.h.b16 %v480
      %v1729 = vunpack.c.l.b16 %v481
      %v1730 = vunpack.c.h.b16 %v481
      %v1731 = vunpack.c.l.b16 %v482
      %v1732 = vunpack.c.h.b16 %v482
      %v1733 = vunpack.c.l.b16 %v483
      %v1734 = vunpack.c.h.b16 %v483
      %v1735 = vunpack.c.l.b16 %v484
      %v1736 = vunpack.c.h.b16 %v484
      %v1737 = vunpack.c.l.b16 %v485
      %v1738 = vunpack.c.h.b16 %v485
      %v1739 = vunpack.c.l.b16 %v486
      %v1740 = vunpack.c.h.b16 %v486
      %v1741 = vunpack.c.l.b16 %v487
      %v1742 = vunpack.c.h.b16 %v487
      %v1743 = vunpack.c.l.b16 %v488
      %v1744 = vunpack.c.h.b16 %v488
      %v1745 = vunpack.c.l.b16 %v489
      %v1746 = vunpack.c.h.b16 %v489
      %v1747 = vunpack.c.l.b16 %v490
      %v1748 = vunpack.c.h.b16 %v490
      %v1749 = vunpack.c.l.b16 %v491
      %v1750 = vunpack.c.h.b16 %v491
      %v1751 = vunpack.c.l.b16 %v492
      %v1752 = vunpack.c.h.b16 %v492
      %v1753 = vunpack.c.l.b16 %v493
      %v1754 = vunpack.c.h.b16 %v493
      %v1755 = vunpack.c.l.b16 %v494
      %v1756 = vunpack.c.h.b16 %v494
      %v1757 = vunpack.c.l.b16 %v495
      %v1758 = vunpack.c.h.b16 %v495
      %v1759 = vunpack.c.l.b16 %v496
      %v1760 = vunpack.c.h.b16 %v496
      %v1761 = vunpack.c.l.b16 %v497
      %v1762 = vunpack.c.h.b16 %v497
      %v1763 = vunpack.c.l.b16 %v498
      %v1764 = vunpack.c.h.b16 %v498
      %v1765 = vunpack.c.l.b16 %v499
      %v1766 = vunpack.c.h.b16 %v499
      %v1767 = vunpack.c.l.b16 %v500
      %v1768 = vunpack.c.h.b16 %v500
      %v1769 = vunpack.c.l.b16 %v501
      %v1770 = vunpack.c.h.b16 %v501
      %v1771 = vunpack.c.l.b16 %v502
      %v1772 = vunpack.c.h.b16 %v502
      %v1773 = vunpack.c.l.b16 %v503
      %v1774 = vunpack.c.h.b16 %v503
      %v1775 = vunpack.c.l.b16 %v504
      %v1776 = vunpack.c.h.b16 %v504
      %v1777 = vunpack.c.l.b16 %v505
      %v1778 = vunpack.c.h.b16 %v505
      %v1779 = vunpack.c.l.b16 %v506
      %v1780 = vunpack.c.h.b16 %v506
      %v1781 = vunpack.c.l.b16 %v507
      %v1782 = vunpack.c.h.b16 %v507
      %v1783 = vunpack.c.l.b16 %v508
      %v1784 = vunpack.c.h.b16 %v508
      %v1785 = vunpack.c.l.b16 %v509
      %v1786 = vunpack.c.h.b16 %v509
      %v1787 = vunpack.c.l.b16 %v510
      %v1788 = vunpack.c.h.b16 %v510
      %v1789 = vunpack.c.l.b16 %v511
      %v1790 = vunpack.c.h.b16 %v511
      %v1791 = vunpack.c.l.b16 %v512
      %v1792 = vunpack.c.h.b16 %v512
      %v1793 = vunpack.c.l.b16 %v513
      %v1794 = vunpack.c.h.b16 %v513
      %v1795 = vunpack.c.l.b16 %v514
      %v1796 = vunpack.c.h.b16 %v514
      %v1797 = vunpack.c.l.b16 %v515
      %v1798 = vunpack.c.h.b16 %v515
      %v1799 = vunpack.c.l.b16 %v516
      %v1800 = vunpack.c.h.b16 %v516
      %v1801 = vunpack.c.l.b16 %v517
      %v1802 = vunpack.c.h.b16 %v517
      %v1803 = vunpack.c.l.b16 %v518
      %v1804 = vunpack.c.h.b16 %v518
      %v1805 = vunpack.c.l.b16 %v519
      %v1806 = vunpack.c.h.b16 %v519
      %v1807 = vunpack.c.l.b16 %v520
      %v1808 = vunpack.c.h.b16 %v520
      %v1809 = vunpack.c.l.b16 %v521
      %v1810 = vunpack.c.h.b16 %v521
      %v1811 = vunpack.c.l.b16 %v522
      %v1812 = vunpack.c.h.b16 %v522
      %v1813 = vunpack.c.l.b16 %v523
      %v1814 = vunpack.c.h.b16 %v523
      %v1815 = vunpack.c.l.b16 %v524
      %v1816 = vunpack.c.h.b16 %v524
      %v1817 = vunpack.c.l.b16 %v525
      %v1818 = vunpack.c.h.b16 %v525
      %v1819 = vunpack.c.l.b16 %v526
      %v1820 = vunpack.c.h.b16 %v526
      %v1821 = vunpack.c.l.b16 %v527
      %v1822 = vunpack.c.h.b16 %v527
      %v1823 = vunpack.c.l.b16 %v528
      %v1824 = vunpack.c.h.b16 %v528
      %v1825 = vunpack.c.l.b16 %v529
      %v1826 = vunpack.c.h.b16 %v529
      %v1827 = vunpack.c.l.b16 %v530
      %v1828 = vunpack.c.h.b16 %v530
      %v1829 = vunpack.c.l.b16 %v531
      %v1830 = vunpack.c.h.b16 %v531
      %v1831 = vunpack.c.l.b16 %v532
      %v1832 = vunpack.c.h.b16 %v532
      %v1833 = vunpack.c.l.b16 %v533
      %v1834 = vunpack.c.h.b16 %v533
      %v1835 = vunpack.c.l.b16 %v534
      %v1836 = vunpack.c.h.b16 %v534
      %v1837 = vunpack.c.l.b16 %v535
      %v1838 = vunpack.c.h.b16 %v535
      %v1839 = vunpack.c.l.b16 %v536
      %v1840 = vunpack.c.h.b16 %v536
      %v1841 = vunpack.c.l.b16 %v537
      %v1842 = vunpack.c.h.b16 %v537
      %v1843 = vunpack.c.l.b16 %v538
      %v1844 = vunpack.c.h.b16 %v538
      %v1845 = vunpack.c.l.b16 %v539
      %v1846 = vunpack.c.h.b16 %v539
      %v1847 = vunpack.c.l.b16 %v540
      %v1848 = vunpack.c.h.b16 %v540
      %v1849 = vunpack.c.l.b16 %v541
      %v1850 = vunpack.c.h.b16 %v541
      %v1851 = vunpack.c.l.b16 %v542
      %v1852 = vunpack.c.h.b16 %v542
      %v1853 = vunpack.c.l.b16 %v543
      %v1854 = vunpack.c.h.b16 %v543
      %v1855 = vunpack.c.l.b16 %v544
      %v1856 = vunpack.c.h.b16 %v544
      %v1857 = vunpack.c.l.b16 %v545
      %v1858 = vunpack.c.h.b16 %v545
      %v1859 = vunpack.c.l.b16 %v546
      %v1860 = vunpack.c.h.b16 %v546
      %v1861 = vunpack.c.l.b16 %v547
      %v1862 = vunpack.c.h.b16 %v547
      %v1863 = vunpack.c.l.b16 %v548
      %v1864 = vunpack.c.h.b16 %v548
      %v1865 = vunpack.c.l.b16 %v549
      %v1866 = vunpack.c.h.b16 %v549
      %v1867 = vunpack.c.l.b16 %v550
      %v1868 = vunpack.c.h.b16 %v550
      %v1869 = vunpack.c.l.b16 %v551
      %v1870 = vunpack.c.h.b16 %v551
      %v1871 = vunpack.c.l.b16 %v552
      %v1872 = vunpack.c.h.b16 %v552
      %v1873 = vunpack.c.l.b16 %v553
      %v1874 = vunpack.c.h.b16 %v553
      %v1875 = vunpack.c.l.b16 %v554
      %v1876 = vunpack.c.h.b16 %v554
      %v1877 = vunpack.c.l.b16 %v555
      %v1878 = vunpack.c.h.b16 %v555
      %v1879 = vpack.c.b16 %v1587, %v1585
      %v1880 = vpack.c.b16 %v1588, %v1586
      %v1881 = vpack.c.b16 %v1591, %v1589
      %v1882 = vpack.c.b16 %v1592, %v1590
      %v1883 = vpack.c.b16 %v1595, %v1593
      %v1884 = vpack.c.b16 %v1596, %v1594
      %v1885 = vpack.c.b16 %v1599, %v1597
      %v1886 = vpack.c.b16 %v1600, %v1598
      %v1887 = vpack.c.b16 %v1603, %v1601
      %v1888 = vpack.c.b16 %v1604, %v1602
      %v1889 = vpack.c.b16 %v1607, %v1605
      %v1890 = vpack.c.b16 %v1608, %v1606
      %v1891 = vpack.c.b16 %v1611, %v1609
      %v1892 = vpack.c.b16 %v1612, %v1610
      %v1893 = vpack.c.b16 %v1615, %v1613
      %v1894 = vpack.c.b16 %v1616, %v1614
      %v1895 = vpack.c.b16 %v1619, %v1617
      %v1896 = vpack.c.b16 %v1620, %v1618
      %v1897 = vpack.c.b16 %v1623, %v1621
      %v1898 = vpack.c.b16 %v1624, %v1622
      %v1899 = vpack.c.b16 %v1627, %v1625
      %v1900 = vpack.c.b16 %v1628, %v1626
      %v1901 = vpack.c.b16 %v1631, %v1629
      %v1902 = vpack.c.b16 %v1632, %v1630
      %v1903 = vpack.c.b16 %v1635, %v1633
      %v1904 = vpack.c.b16 %v1636, %v1634
      %v1905 = vpack.c.b16 %v1639, %v1637
      %v1906 = vpack.c.b16 %v1640, %v1638
      %v1907 = vpack.c.b16 %v1643, %v1641
      %v1908 = vpack.c.b16 %v1644, %v1642
      %v1909 = vpack.c.b16 %v1647, %v1645
      %v1910 = vpack.c.b16 %v1648, %v1646
      %v1911 = vpack.c.b16 %v1651, %v1649
      %v1912 = vpack.c.b16 %v1652, %v1650
      %v1913 = vpack.c.b16 %v1655, %v1653
      %v1914 = vpack.c.b16 %v1656, %v1654
      %v1915 = vpack.c.b16 %v1659, %v1657
      %v1916 = vpack.c.b16 %v1660, %v1658
      %v1917 = vpack.c.b16 %v1663, %v1661
      %v1918 = vpack.c.b16 %v1664, %v1662
      %v1919 = vpack.c.b16 %v1667, %v1665
      %v1920 = vpack.c.b16 %v1668, %v1666
      %v1921 = vpack.c.b16 %v1671, %v1669
      %v1922 = vpack.c.b16 %v1672, %v1670
      %v1923 = vpack.c.b16 %v1675, %v1673
      %v1924 = vpack.c.b16 %v1676, %v1674
      %v1925 = vpack.c.b16 %v1679, %v1677
      %v1926 = vpack.c.b16 %v1680, %v1678
      %v1927 = vpack.c.b16 %v1683, %v1681
      %v1928 = vpack.c.b16 %v1684, %v1682
      %v1929 = vpack.c.b16 %v1687, %v1685
      %v1930 = vpack.c.b16 %v1688, %v1686
      %v1931 = vpack.c.b16 %v1691, %v1689
      %v1932 = vpack.c.b16 %v1692, %v1690
      %v1933 = vpack.c.b16 %v1695, %v1693
      %v1934 = vpack.c.b16 %v1696, %v1694
      %v1935 = vpack.c.b16 %v1699, %v1697
      %v1936 = vpack.c.b16 %v1700, %v1698
      %v1937 = vpack.c.b16 %v1703, %v1701
      %v1938 = vpack.c.b16 %v1704, %v1702
      %v1939 = vpack.c.b16 %v1707, %v1705
      %v1940 = vpack.c.b16 %v1708, %v1706
      %v1941 = vpack.c.b16 %v1711, %v1709
      %v1942 = vpack.c.b16 %v1712, %v1710
      %v1943 = vpack.c.b16 %v1715, %v1713
      %v1944 = vpack.c.b16 %v1716, %v1714
      %v1945 = vpack.c.b16 %v1719, %v1717
      %v1946 = vpack.c.b16 %v1720, %v1718
      %v1947 = vpack.c.b16 %v1723, %v1721
      %v1948 = vpack.c.b16 %v1724, %v1722
      %v1949 = vpack.c.b16 %v1727, %v1725
      %v1950 = vpack.c.b16 %v1728, %v1726
      %v1951 = vpack.c.b16 %v1731, %v1729
      %v1952 = vpack.c.b16 %v1732, %v1730
      %v1953 = vpack.c.b16 %v1735, %v1733
      %v1954 = vpack.c.b16 %v1736, %v1734
      %v1955 = vpack.c.b16 %v1739, %v1737
      %v1956 = vpack.c.b16 %v1740, %v1738
      %v1957 = vpack.c.b16 %v1743, %v1741
      %v1958 = vpack.c.b16 %v1744, %v1742
      %v1959 = vpack.c.b16 %v1747, %v1745
      %v1960 = vpack.c.b16 %v1748, %v1746
      %v1961 = vpack.c.b16 %v1751, %v1749
      %v1962 = vpack.c.b16 %v1752, %v1750
      %v1963 = vpack.c.b16 %v1755, %v1753
      %v1964 = vpack.c.b16 %v1756, %v1754
      %v1965 = vpack.c.b16 %v1759, %v1757
      %v1966 = vpack.c.b16 %v1760, %v1758
      %v1967 = vpack.c.b16 %v1763, %v1761
      %v1968 = vpack.c.b16 %v1764, %v1762
      %v1969 = vpack.c.b16 %v1767, %v1765
      %v1970 = vpack.c.b16 %v1768, %v1766
      %v1971 = vpack.c.b16 %v1771, %v1769
      %v1972 = vpack.c.b16 %v1772, %v1770
      %v1973 = vpack.c.b16 %v1775, %v1773
      %v1974 = vpack.c.b16 %v1776, %v1774
      %v1975 = vpack.c.b16 %v1779, %v1777
      %v1976 = vpack.c.b16 %v1780, %v1778
      %v1977 = vpack.c.b16 %v1783, %v1781
      %v1978 = vpack.c.b16 %v1784, %v1782
      %v1979 = vpack.c.b16 %v1787, %v1785
      %v1980 = vpack.c.b16 %v1788, %v1786
      %v1981 = vpack.c.b16 %v1791, %v1789
      %v1982 = vpack.c.b16 %v1792, %v1790
      %v1983 = vpack.c.b16 %v1795, %v1793
      %v1984 = vpack.c.b16 %v1796, %v1794
      %v1985 = vpack.c.b16 %v1799, %v1797
      %v1986 = vpack.c.b16 %v1800, %v1798
      %v1987 = vpack.c.b16 %v1803, %v1801
      %v1988 = vpack.c.b16 %v1804, %v1802
      %v1989 = vpack.c.b16 %v1807, %v1805
      %v1990 = vpack.c.b16 %v1808, %v1806
      %v1991 = vpack.c.b16 %v1811, %v1809
      %v1992 = vpack.c.b16 %v1812, %v1810
      %v1993 = vpack.c.b16 %v1815, %v1813
      %v1994 = vpack.c.b16 %v1816, %v1814
      %v1995 = vpack.c.b16 %v1819, %v1817
      %v1996 = vpack.c.b16 %v1820, %v1818
      %v1997 = vpack.c.b16 %v1823, %v1821
      %v1998 = vpack.c.b16 %v1824, %v1822
      %v1999 = vpack.c.b16 %v1827, %v1825
      %v2000 = vpack.c.b16 %v1828, %v1826
      %v2001 = vpack.c.b16 %v1831, %v1829
      %v2002 = vpack.c.b16 %v1832, %v1830
      %v2003 = vpack.c.b16 %v1835, %v1833
      %v2004 = vpack.c.b16 %v1836, %v1834
      %v2005 = vpack.c.b16 %v1839, %v1837
      %v2006 = vpack.c.b16 %v1840, %v1838
      %v2007 = vpack.c.b16 %v1843, %v1841
      %v2008 = vpack.c.b16 %v1844, %v1842
      %v2009 = vpack.c.b16 %v1847, %v1845
      %v2010 = vpack.c.b16 %v1848, %v1846
      %v2011 = vpack.c.b16 %v1851, %v1849
      %v2012 = vpack.c.b16 %v1852, %v1850
      %v2013 = vpack.c.b16 %v1855, %v1853
      %v2014 = vpack.c.b16 %v1856, %v1854
      %v2015 = vpack.c.b16 %v1859, %v1857
      %v2016 = vpack.c.b16 %v1860, %v1858
      %v2017 = vpack.c.b16 %v1863, %v1861
      %v2018 = vpack.c.b16 %v1864, %v1862
      %v2019 = vpack.c.b16 %v1867, %v1865
      %v2020 = vpack.c.b16 %v1868, %v1866
      %v2021 = vpack.c.b16 %v1871, %v1869
      %v2022 = vpack.c.b16 %v1872, %v1870
      %v2023 = vpack.c.b16 %v1875, %v1873
      %v2024 = vpack.c.b16 %v1876, %v1874
      %v2025 = vpack.c.b16 %v1877, %v1877
      %v2026 = vpack.c.b16 %v1878, %v1878
      %v2207 = vunpack.c.l.b16 %v329
      %v2208 = vunpack.c.h.b16 %v329
      %v2209 = vunpack.c.l.b16 %v330
      %v2210 = vunpack.c.h.b16 %v330
      %v2211 = vunpack.c.l.b16 %v331
      %v2212 = vunpack.c.h.b16 %v331
      %v2213 = vunpack.c.l.b16 %v332
      %v2214 = vunpack.c.h.b16 %v332
      %v2215 = vunpack.c.l.b16 %v333
      %v2216 = vunpack.c.h.b16 %v333
      %v2217 = vunpack.c.l.b16 %v334
      %v2218 = vunpack.c.h.b16 %v334
      %v2219 = vunpack.c.l.b16 %v335
      %v2220 = vunpack.c.h.b16 %v335
      %v2221 = vunpack.c.l.b16 %v336
      %v2222 = vunpack.c.h.b16 %v336
      %v2223 = vunpack.c.l.b16 %v337
      %v2224 = vunpack.c.h.b16 %v337
      %v2225 = vunpack.c.l.b16 %v338
      %v2226 = vunpack.c.h.b16 %v338
      %v2227 = vunpack.c.l.b16 %v339
      %v2228 = vunpack.c.h.b16 %v339
      %v2229 = vunpack.c.l.b16 %v340
      %v2230 = vunpack.c.h.b16 %v340
      %v2231 = vunpack.c.l.b16 %v341
      %v2232 = vunpack.c.h.b16 %v341
      %v2233 = vunpack.c.l.b16 %v342
      %v2234 = vunpack.c.h.b16 %v342
      %v2235 = vunpack.c.l.b16 %v343
      %v2236 = vunpack.c.h.b16 %v343
      %v2237 = vunpack.c.l.b16 %v344
      %v2238 = vunpack.c.h.b16 %v344
      %v2239 = vunpack.c.l.b16 %v345
      %v2240 = vunpack.c.h.b16 %v345
      %v2241 = vunpack.c.l.b16 %v346
      %v2242 = vunpack.c.h.b16 %v346
      %v2243 = vunpack.c.l.b16 %v347
      %v2244 = vunpack.c.h.b16 %v347
      %v2245 = vunpack.c.l.b16 %v348
      %v2246 = vunpack.c.h.b16 %v348
      %v2247 = vunpack.c.l.b16 %v349
      %v2248 = vunpack.c.h.b16 %v349
      %v2249 = vunpack.c.l.b16 %v350
      %v2250 = vunpack.c.h.b16 %v350
      %v2251 = vunpack.c.l.b16 %v351
      %v2252 = vunpack.c.h.b16 %v351
      %v2253 = vunpack.c.l.b16 %v352
      %v2254 = vunpack.c.h.b16 %v352
      %v2255 = vunpack.c.l.b16 %v353
      %v2256 = vunpack.c.h.b16 %v353
      %v2257 = vunpack.c.l.b16 %v354
      %v2258 = vunpack.c.h.b16 %v354
      %v2259 = vunpack.c.l.b16 %v355
      %v2260 = vunpack.c.h.b16 %v355
      %v2261 = vunpack.c.l.b16 %v356
      %v2262 = vunpack.c.h.b16 %v356
      %v2263 = vunpack.c.l.b16 %v357
      %v2264 = vunpack.c.h.b16 %v357
      %v2265 = vunpack.c.l.b16 %v358
      %v2266 = vunpack.c.h.b16 %v358
      %v2267 = vunpack.c.l.b16 %v359
      %v2268 = vunpack.c.h.b16 %v359
      %v2269 = vunpack.c.l.b16 %v360
      %v2270 = vunpack.c.h.b16 %v360
      %v2271 = vpack.c.b16 %v2209, %v2207
      %v2272 = vpack.c.b16 %v2210, %v2208
      %v2273 = vpack.c.b16 %v2213, %v2211
      %v2274 = vpack.c.b16 %v2214, %v2212
      %v2275 = vpack.c.b16 %v2217, %v2215
      %v2276 = vpack.c.b16 %v2218, %v2216
      %v2277 = vpack.c.b16 %v2221, %v2219
      %v2278 = vpack.c.b16 %v2222, %v2220
      %v2279 = vpack.c.b16 %v2225, %v2223
      %v2280 = vpack.c.b16 %v2226, %v2224
      %v2281 = vpack.c.b16 %v2229, %v2227
      %v2282 = vpack.c.b16 %v2230, %v2228
      %v2283 = vpack.c.b16 %v2233, %v2231
      %v2284 = vpack.c.b16 %v2234, %v2232
      %v2285 = vpack.c.b16 %v2237, %v2235
      %v2286 = vpack.c.b16 %v2238, %v2236
      %v2287 = vpack.c.b16 %v2241, %v2239
      %v2288 = vpack.c.b16 %v2242, %v2240
      %v2289 = vpack.c.b16 %v2245, %v2243
      %v2290 = vpack.c.b16 %v2246, %v2244
      %v2291 = vpack.c.b16 %v2249, %v2247
      %v2292 = vpack.c.b16 %v2250, %v2248
      %v2293 = vpack.c.b16 %v2253, %v2251
      %v2294 = vpack.c.b16 %v2254, %v2252
      %v2295 = vpack.c.b16 %v2257, %v2255
      %v2296 = vpack.c.b16 %v2258, %v2256
      %v2297 = vpack.c.b16 %v2261, %v2259
      %v2298 = vpack.c.b16 %v2262, %v2260
      %v2299 = vpack.c.b16 %v2265, %v2263
      %v2300 = vpack.c.b16 %v2266, %v2264
      %v2301 = vpack.c.b16 %v2269, %v2267
      %v2302 = vpack.c.b16 %v2270, %v2268
      %2335 = vmatprep.subr.bf16.mxu0 %v2272
      %2336 = vmatpush1.bf16.msra.mxu0 %v2271
      %2337 = vmatprep.subr.bf16.mxu0 %v2274
      %2338 = vmatpush1.bf16.msra.mxu0 %v2273
      %2339 = vmatprep.subr.bf16.mxu0 %v2276
      %2340 = vmatpush1.bf16.msra.mxu0 %v2275
      %2341 = vmatprep.subr.bf16.mxu0 %v2278
      %2342 = vmatpush1.bf16.msra.mxu0 %v2277
      %2343 = vmatprep.subr.bf16.mxu0 %v2280
      %2344 = vmatpush1.bf16.msra.mxu0 %v2279
      %2345 = vmatprep.subr.bf16.mxu0 %v2282
      %2346 = vmatpush1.bf16.msra.mxu0 %v2281
      %2347 = vmatprep.subr.bf16.mxu0 %v2284
      %2348 = vmatpush1.bf16.msra.mxu0 %v2283
      %2349 = vmatprep.subr.bf16.mxu0 %v2286
      %2350 = vmatpush1.bf16.msra.mxu0 %v2285
      %2351 = vmatprep.subr.bf16.mxu0 %v2288
      %2352 = vmatpush1.bf16.msra.mxu0 %v2287
      %2353 = vmatprep.subr.bf16.mxu0 %v2290
      %2354 = vmatpush1.bf16.msra.mxu0 %v2289
      %2355 = vmatprep.subr.bf16.mxu0 %v2292
      %2356 = vmatpush1.bf16.msra.mxu0 %v2291
      %2357 = vmatprep.subr.bf16.mxu0 %v2294
      %2358 = vmatpush1.bf16.msra.mxu0 %v2293
      %2359 = vmatprep.subr.bf16.mxu0 %v2296
      %2360 = vmatpush1.bf16.msra.mxu0 %v2295
      %2361 = vmatprep.subr.bf16.mxu0 %v2298
      %2362 = vmatpush1.bf16.msra.mxu0 %v2297
      %2363 = vmatprep.subr.bf16.mxu0 %v2300
      %2364 = vmatpush1.bf16.msra.mxu0 %v2299
      %2365 = vmatprep.subr.bf16.mxu0 %v2302
      %2366 = vmatpush1.bf16.msra.mxu0 %v2301
      %2367 = vmatprep.mubr.bf16.mxu0 %v1880
      %2368 = vmatmul.mubr.bf16.gmra.mrb[0].mxu0 %v1879
      %v2369 = vpop.f32.mrb[0].mxu0
      %v2370 = vadd.f32 %v706, %v2369
      %v2371 = vpop.f32.mrb[0].mxu0
      %v2372 = vadd.f32 %v706, %v2371
      %v2373 = vpop.f32.mrb[0].mxu0
      %v2374 = vadd.f32 %v711, %v2373
      %v2375 = vpop.f32.mrb[0].mxu0
      %v2376 = vadd.f32 %v711, %v2375
      %2377 = vmatprep.mubr.bf16.mxu0 %v1882
      %2378 = vmatmul.mubr.bf16.gmra.mrb[0].mxu0 %v1881
      %v2379 = vpop.f32.mrb[0].mxu0
      %v2380 = vadd.f32 %v716, %v2379
      %v2381 = vpop.f32.mrb[0].mxu0
      %v2382 = vadd.f32 %v716, %v2381
      %v2383 = vpop.f32.mrb[0].mxu0
      %v2384 = vadd.f32 %v721, %v2383
      %v2385 = vpop.f32.mrb[0].mxu0
      %v2386 = vadd.f32 %v721, %v2385
      %2387 = vmatprep.mubr.bf16.mxu0 %v1884
      %2388 = vmatmul.mubr.bf16.gmra.mrb[0].mxu0 %v1883
      %v2389 = vpop.f32.mrb[0].mxu0
      %v2390 = vadd.f32 %v726, %v2389
      %v2391 = vpop.f32.mrb[0].mxu0
      %v2392 = vadd.f32 %v726, %v2391
      %v2393 = vpop.f32.mrb[0].mxu0
      %v2394 = vadd.f32 %v731, %v2393
      %v2395 = vpop.f32.mrb[0].mxu0
      %v2396 = vadd.f32 %v731, %v2395
      %2397 = vmatprep.mubr.bf16.mxu0 %v1886
      %2398 = vmatmul.mubr.bf16.gmra.mrb[0].mxu0 %v1885
      %v2399 = vpop.f32.mrb[0].mxu0
      %v2400 = vadd.f32 %v736, %v2399
      %v2401 = vpop.f32.mrb[0].mxu0
      %v2402 = vadd.f32 %v736, %v2401
      %v2403 = vpop.f32.mrb[0].mxu0
      %v2404 = vadd.f32 %v741, %v2403
      %v2405 = vpop.f32.mrb[0].mxu0
      %v2406 = vadd.f32 %v741, %v2405
      %2407 = vmatprep.mubr.bf16.mxu0 %v1888
      %2408 = vmatmul.mubr.bf16.gmra.mrb[0].mxu0 %v1887
      %v2409 = vpop.f32.mrb[0].mxu0
      %v2410 = vadd.f32 %v746, %v2409
      %v2411 = vpop.f32.mrb[0].mxu0
      %v2412 = vadd.f32 %v746, %v2411
      %v2413 = vpop.f32.mrb[0].mxu0
      %v2414 = vadd.f32 %v751, %v2413
      %v2415 = vpop.f32.mrb[0].mxu0
      %v2416 = vadd.f32 %v751, %v2415
      %2417 = vmatprep.mubr.bf16.mxu0 %v1890
      %2418 = vmatmul.mubr.bf16.gmra.mrb[0].mxu0 %v1889
      %v2419 = vpop.f32.mrb[0].mxu0
      %v2420 = vadd.f32 %v756, %v2419
      %v2421 = vpop.f32.mrb[0].mxu0
      %v2422 = vadd.f32 %v756, %v2421
      %v2423 = vpop.f32.mrb[0].mxu0
      %v2424 = vadd.f32 %v761, %v2423
      %v2425 = vpop.f32.mrb[0].mxu0
      %v2426 = vadd.f32 %v761, %v2425
      %2427 = vmatprep.mubr.bf16.mxu0 %v1892
      %2428 = vmatmul.mubr.bf16.gmra.mrb[0].mxu0 %v1891
      %v2429 = vpop.f32.mrb[0].mxu0
      %v2430 = vadd.f32 %v766, %v2429
      %v2431 = vpop.f32.mrb[0].mxu0
      %v2432 = vadd.f32 %v766, %v2431
      %v2433 = vpop.f32.mrb[0].mxu0
      %v2434 = vadd.f32 %v771, %v2433
      %v2435 = vpop.f32.mrb[0].mxu0
      %v2436 = vadd.f32 %v771, %v2435
      %2437 = vmatprep.mubr.bf16.mxu0 %v1894
      %2438 = vmatmul.mubr.bf16.gmra.mrb[0].mxu0 %v1893
      %v2439 = vpop.f32.mrb[0].mxu0
      %v2440 = vadd.f32 %v776, %v2439
      %v2441 = vpop.f32.mrb[0].mxu0
      %v2442 = vadd.f32 %v776, %v2441
      %v2443 = vpop.f32.mrb[0].mxu0
      %v2444 = vadd.f32 %v781, %v2443
      %v2445 = vpop.f32.mrb[0].mxu0
      %v2446 = vadd.f32 %v781, %v2445
      %2447 = vmatprep.mubr.bf16.mxu0 %v1896
      %2448 = vmatmul.mubr.bf16.gmra.mrb[0].mxu0 %v1895
      %v2449 = vpop.f32.mrb[0].mxu0
      %v2450 = vadd.f32 %v786, %v2449
      %v2451 = vpop.f32.mrb[0].mxu0
      %v2452 = vadd.f32 %v786, %v2451
      %v2453 = vpop.f32.mrb[0].mxu0
      %v2454 = vadd.f32 %v791, %v2453
      %v2455 = vpop.f32.mrb[0].mxu0
      %v2456 = vadd.f32 %v791, %v2455
      %2457 = vmatprep.mubr.bf16.mxu0 %v1898
      %2458 = vmatmul.mubr.bf16.gmra.mrb[0].mxu0 %v1897
      %v2459 = vpop.f32.mrb[0].mxu0
      %v2460 = vadd.f32 %v796, %v2459
      %v2461 = vpop.f32.mrb[0].mxu0
      %v2462 = vadd.f32 %v796, %v2461
      %v2463 = vpop.f32.mrb[0].mxu0
      %v2464 = vadd.f32 %v801, %v2463
      %v2465 = vpop.f32.mrb[0].mxu0
      %v2466 = vadd.f32 %v801, %v2465
      %2467 = vmatprep.mubr.bf16.mxu0 %v1900
      %2468 = vmatmul.mubr.bf16.gmra.mrb[0].mxu0 %v1899
      %v2469 = vpop.f32.mrb[0].mxu0
      %v2470 = vadd.f32 %v806, %v2469
      %v2471 = vpop.f32.mrb[0].mxu0
      %v2472 = vadd.f32 %v806, %v2471
      %v2473 = vpop.f32.mrb[0].mxu0
      %v2474 = vadd.f32 %v811, %v2473
      %v2475 = vpop.f32.mrb[0].mxu0
      %v2476 = vadd.f32 %v811, %v2475
      %2477 = vmatprep.mubr.bf16.mxu0 %v1902
      %2478 = vmatmul.mubr.bf16.gmra.mrb[0].mxu0 %v1901
      %v2479 = vpop.f32.mrb[0].mxu0
      %v2480 = vadd.f32 %v816, %v2479
      %v2481 = vpop.f32.mrb[0].mxu0
      %v2482 = vadd.f32 %v816, %v2481
      %v2483 = vpop.f32.mrb[0].mxu0
      %v2484 = vadd.f32 %v821, %v2483
      %v2485 = vpop.f32.mrb[0].mxu0
      %v2486 = vadd.f32 %v821, %v2485
      %2487 = vmatprep.mubr.bf16.mxu0 %v1904
      %2488 = vmatmul.mubr.bf16.gmra.mrb[0].mxu0 %v1903
      %v2489 = vpop.f32.mrb[0].mxu0
      %v2490 = vadd.f32 %v826, %v2489
      %v2491 = vpop.f32.mrb[0].mxu0
      %v2492 = vadd.f32 %v826, %v2491
      %v2493 = vpop.f32.mrb[0].mxu0
      %v2494 = vadd.f32 %v831, %v2493
      %v2495 = vpop.f32.mrb[0].mxu0
      %v2496 = vadd.f32 %v831, %v2495
      %2497 = vmatprep.mubr.bf16.mxu0 %v1906
      %2498 = vmatmul.mubr.bf16.gmra.mrb[0].mxu0 %v1905
      %v2499 = vpop.f32.mrb[0].mxu0
      %v2500 = vadd.f32 %v836, %v2499
      %v2501 = vpop.f32.mrb[0].mxu0
      %v2502 = vadd.f32 %v836, %v2501
      %v2503 = vpop.f32.mrb[0].mxu0
      %v2504 = vadd.f32 %v841, %v2503
      %v2505 = vpop.f32.mrb[0].mxu0
      %v2506 = vadd.f32 %v841, %v2505
      %2507 = vmatprep.mubr.bf16.mxu0 %v1908
      %2508 = vmatmul.mubr.bf16.gmra.mrb[0].mxu0 %v1907
      %v2509 = vpop.f32.mrb[0].mxu0
      %v2510 = vadd.f32 %v846, %v2509
      %v2511 = vpop.f32.mrb[0].mxu0
      %v2512 = vadd.f32 %v846, %v2511
      %v2513 = vpop.f32.mrb[0].mxu0
      %v2514 = vadd.f32 %v851, %v2513
      %v2515 = vpop.f32.mrb[0].mxu0
      %v2516 = vadd.f32 %v851, %v2515
      %2517 = vmatprep.mubr.bf16.mxu0 %v1910
      %2518 = vmatmul.mubr.bf16.gmra.mrb[0].mxu0 %v1909
      %v2519 = vpop.f32.mrb[0].mxu0
      %v2520 = vadd.f32 %v856, %v2519
      %v2521 = vpop.f32.mrb[0].mxu0
      %v2522 = vadd.f32 %v856, %v2521
      %v2523 = vpop.f32.mrb[0].mxu0
      %v2524 = vadd.f32 %v861, %v2523
      %v2525 = vpop.f32.mrb[0].mxu0
      %v2526 = vadd.f32 %v861, %v2525
      %2527 = vmatprep.mubr.bf16.mxu0 %v1912
      %2528 = vmatmul.mubr.bf16.gmra.mrb[0].mxu0 %v1911
      %v2529 = vpop.f32.mrb[0].mxu0
      %v2530 = vadd.f32 %v866, %v2529
      %v2531 = vpop.f32.mrb[0].mxu0
      %v2532 = vadd.f32 %v866, %v2531
      %v2533 = vpop.f32.mrb[0].mxu0
      %v2534 = vadd.f32 %v871, %v2533
      %v2535 = vpop.f32.mrb[0].mxu0
      %v2536 = vadd.f32 %v871, %v2535
      %2537 = vmatprep.mubr.bf16.mxu0 %v1914
      %2538 = vmatmul.mubr.bf16.gmra.mrb[0].mxu0 %v1913
      %v2539 = vpop.f32.mrb[0].mxu0
      %v2540 = vadd.f32 %v876, %v2539
      %v2541 = vpop.f32.mrb[0].mxu0
      %v2542 = vadd.f32 %v876, %v2541
      %v2543 = vpop.f32.mrb[0].mxu0
      %v2544 = vadd.f32 %v881, %v2543
      %v2545 = vpop.f32.mrb[0].mxu0
      %v2546 = vadd.f32 %v881, %v2545
      %2547 = vmatprep.mubr.bf16.mxu0 %v1916
      %2548 = vmatmul.mubr.bf16.gmra.mrb[0].mxu0 %v1915
      %v2549 = vpop.f32.mrb[0].mxu0
      %v2550 = vadd.f32 %v886, %v2549
      %v2551 = vpop.f32.mrb[0].mxu0
      %v2552 = vadd.f32 %v886, %v2551
      %v2553 = vpop.f32.mrb[0].mxu0
      %v2554 = vadd.f32 %v891, %v2553
      %v2555 = vpop.f32.mrb[0].mxu0
      %v2556 = vadd.f32 %v891, %v2555
      %2557 = vmatprep.mubr.bf16.mxu0 %v1918
      %2558 = vmatmul.mubr.bf16.gmra.mrb[0].mxu0 %v1917
      %v2559 = vpop.f32.mrb[0].mxu0
      %v2560 = vadd.f32 %v896, %v2559
      %v2561 = vpop.f32.mrb[0].mxu0
      %v2562 = vadd.f32 %v896, %v2561
      %v2563 = vpop.f32.mrb[0].mxu0
      %v2564 = vadd.f32 %v901, %v2563
      %v2565 = vpop.f32.mrb[0].mxu0
      %v2566 = vadd.f32 %v901, %v2565
      %2567 = vmatprep.mubr.bf16.mxu0 %v1920
      %2568 = vmatmul.mubr.bf16.gmra.mrb[0].mxu0 %v1919
      %v2569 = vpop.f32.mrb[0].mxu0
      %v2570 = vadd.f32 %v906, %v2569
      %v2571 = vpop.f32.mrb[0].mxu0
      %v2572 = vadd.f32 %v906, %v2571
      %v2573 = vpop.f32.mrb[0].mxu0
      %v2574 = vadd.f32 %v911, %v2573
      %v2575 = vpop.f32.mrb[0].mxu0
      %v2576 = vadd.f32 %v911, %v2575
      %2577 = vmatprep.mubr.bf16.mxu0 %v1922
      %2578 = vmatmul.mubr.bf16.gmra.mrb[0].mxu0 %v1921
      %v2579 = vpop.f32.mrb[0].mxu0
      %v2580 = vadd.f32 %v916, %v2579
      %v2581 = vpop.f32.mrb[0].mxu0
      %v2582 = vadd.f32 %v916, %v2581
      %v2583 = vpop.f32.mrb[0].mxu0
      %v2584 = vadd.f32 %v921, %v2583
      %v2585 = vpop.f32.mrb[0].mxu0
      %v2586 = vadd.f32 %v921, %v2585
      %2587 = vmatprep.mubr.bf16.mxu0 %v1924
      %2588 = vmatmul.mubr.bf16.gmra.mrb[0].mxu0 %v1923
      %v2589 = vpop.f32.mrb[0].mxu0
      %v2590 = vadd.f32 %v926, %v2589
      %v2591 = vpop.f32.mrb[0].mxu0
      %v2592 = vadd.f32 %v926, %v2591
      %v2593 = vpop.f32.mrb[0].mxu0
      %v2594 = vadd.f32 %v931, %v2593
      %v2595 = vpop.f32.mrb[0].mxu0
      %v2596 = vadd.f32 %v931, %v2595
      %2597 = vmatprep.mubr.bf16.mxu0 %v1926
      %2598 = vmatmul.mubr.bf16.gmra.mrb[0].mxu0 %v1925
      %v2599 = vpop.f32.mrb[0].mxu0
      %v2600 = vadd.f32 %v936, %v2599
      %v2601 = vpop.f32.mrb[0].mxu0
      %v2602 = vadd.f32 %v936, %v2601
      %v2603 = vpop.f32.mrb[0].mxu0
      %v2604 = vadd.f32 %v941, %v2603
      %v2605 = vpop.f32.mrb[0].mxu0
      %v2606 = vadd.f32 %v941, %v2605
      %2607 = vmatprep.mubr.bf16.mxu0 %v1928
      %2608 = vmatmul.mubr.bf16.gmra.mrb[0].mxu0 %v1927
      %v2609 = vpop.f32.mrb[0].mxu0
      %v2610 = vadd.f32 %v946, %v2609
      %v2611 = vpop.f32.mrb[0].mxu0
      %v2612 = vadd.f32 %v946, %v2611
      %v2613 = vpop.f32.mrb[0].mxu0
      %v2614 = vadd.f32 %v951, %v2613
      %v2615 = vpop.f32.mrb[0].mxu0
      %v2616 = vadd.f32 %v951, %v2615
      %2617 = vmatprep.mubr.bf16.mxu0 %v1930
      %2618 = vmatmul.mubr.bf16.gmra.mrb[0].mxu0 %v1929
      %v2619 = vpop.f32.mrb[0].mxu0
      %v2620 = vadd.f32 %v956, %v2619
      %v2621 = vpop.f32.mrb[0].mxu0
      %v2622 = vadd.f32 %v956, %v2621
      %v2623 = vpop.f32.mrb[0].mxu0
      %v2624 = vadd.f32 %v961, %v2623
      %v2625 = vpop.f32.mrb[0].mxu0
      %v2626 = vadd.f32 %v961, %v2625
      %2627 = vmatprep.mubr.bf16.mxu0 %v1932
      %2628 = vmatmul.mubr.bf16.gmra.mrb[0].mxu0 %v1931
      %v2629 = vpop.f32.mrb[0].mxu0
      %v2630 = vadd.f32 %v966, %v2629
      %v2631 = vpop.f32.mrb[0].mxu0
      %v2632 = vadd.f32 %v966, %v2631
      %v2633 = vpop.f32.mrb[0].mxu0
      %v2634 = vadd.f32 %v971, %v2633
      %v2635 = vpop.f32.mrb[0].mxu0
      %v2636 = vadd.f32 %v971, %v2635
      %2637 = vmatprep.mubr.bf16.mxu0 %v1934
      %2638 = vmatmul.mubr.bf16.gmra.mrb[0].mxu0 %v1933
      %v2639 = vpop.f32.mrb[0].mxu0
      %v2640 = vadd.f32 %v976, %v2639
      %v2641 = vpop.f32.mrb[0].mxu0
      %v2642 = vadd.f32 %v976, %v2641
      %v2643 = vpop.f32.mrb[0].mxu0
      %v2644 = vadd.f32 %v981, %v2643
      %v2645 = vpop.f32.mrb[0].mxu0
      %v2646 = vadd.f32 %v981, %v2645
      %2647 = vmatprep.mubr.bf16.mxu0 %v1936
      %2648 = vmatmul.mubr.bf16.gmra.mrb[0].mxu0 %v1935
      %v2649 = vpop.f32.mrb[0].mxu0
      %v2650 = vadd.f32 %v986, %v2649
      %v2651 = vpop.f32.mrb[0].mxu0
      %v2652 = vadd.f32 %v986, %v2651
      %v2653 = vpop.f32.mrb[0].mxu0
      %v2654 = vadd.f32 %v991, %v2653
      %v2655 = vpop.f32.mrb[0].mxu0
      %v2656 = vadd.f32 %v991, %v2655
      %2657 = vmatprep.mubr.bf16.mxu0 %v1938
      %2658 = vmatmul.mubr.bf16.gmra.mrb[0].mxu0 %v1937
      %v2659 = vpop.f32.mrb[0].mxu0
      %v2660 = vadd.f32 %v996, %v2659
      %v2661 = vpop.f32.mrb[0].mxu0
      %v2662 = vadd.f32 %v996, %v2661
      %v2663 = vpop.f32.mrb[0].mxu0
      %v2664 = vadd.f32 %v1001, %v2663
      %v2665 = vpop.f32.mrb[0].mxu0
      %v2666 = vadd.f32 %v1001, %v2665
      %2667 = vmatprep.mubr.bf16.mxu0 %v1940
      %2668 = vmatmul.mubr.bf16.gmra.mrb[0].mxu0 %v1939
      %v2669 = vpop.f32.mrb[0].mxu0
      %v2670 = vadd.f32 %v1006, %v2669
      %v2671 = vpop.f32.mrb[0].mxu0
      %v2672 = vadd.f32 %v1006, %v2671
      %v2673 = vpop.f32.mrb[0].mxu0
      %v2674 = vadd.f32 %v1011, %v2673
      %v2675 = vpop.f32.mrb[0].mxu0
      %v2676 = vadd.f32 %v1011, %v2675
      %2677 = vmatprep.mubr.bf16.mxu0 %v1942
      %2678 = vmatmul.mubr.bf16.gmra.mrb[0].mxu0 %v1941
      %v2679 = vpop.f32.mrb[0].mxu0
      %v2680 = vadd.f32 %v1016, %v2679
      %v2681 = vpop.f32.mrb[0].mxu0
      %v2682 = vadd.f32 %v1016, %v2681
      %v2683 = vpop.f32.mrb[0].mxu0
      %v2684 = vadd.f32 %v1021, %v2683
      %v2685 = vpop.f32.mrb[0].mxu0
      %v2686 = vadd.f32 %v1021, %v2685
      %2687 = vmatprep.mubr.bf16.mxu0 %v1944
      %2688 = vmatmul.mubr.bf16.gmra.mrb[0].mxu0 %v1943
      %v2689 = vpop.f32.mrb[0].mxu0
      %v2690 = vadd.f32 %v1026, %v2689
      %v2691 = vpop.f32.mrb[0].mxu0
      %v2692 = vadd.f32 %v1026, %v2691
      %v2693 = vpop.f32.mrb[0].mxu0
      %v2694 = vadd.f32 %v1031, %v2693
      %v2695 = vpop.f32.mrb[0].mxu0
      %v2696 = vadd.f32 %v1031, %v2695
      %2697 = vmatprep.mubr.bf16.mxu0 %v1946
      %2698 = vmatmul.mubr.bf16.gmra.mrb[0].mxu0 %v1945
      %v2699 = vpop.f32.mrb[0].mxu0
      %v2700 = vadd.f32 %v1036, %v2699
      %v2701 = vpop.f32.mrb[0].mxu0
      %v2702 = vadd.f32 %v1036, %v2701
      %v2703 = vpop.f32.mrb[0].mxu0
      %v2704 = vadd.f32 %v1041, %v2703
      %v2705 = vpop.f32.mrb[0].mxu0
      %v2706 = vadd.f32 %v1041, %v2705
      %2707 = vmatprep.mubr.bf16.mxu0 %v1948
      %2708 = vmatmul.mubr.bf16.gmra.mrb[0].mxu0 %v1947
      %v2709 = vpop.f32.mrb[0].mxu0
      %v2710 = vadd.f32 %v1046, %v2709
      %v2711 = vpop.f32.mrb[0].mxu0
      %v2712 = vadd.f32 %v1046, %v2711
      %v2713 = vpop.f32.mrb[0].mxu0
      %v2714 = vadd.f32 %v1051, %v2713
      %v2715 = vpop.f32.mrb[0].mxu0
      %v2716 = vadd.f32 %v1051, %v2715
      %2717 = vmatprep.mubr.bf16.mxu0 %v1950
      %2718 = vmatmul.mubr.bf16.gmra.mrb[0].mxu0 %v1949
      %v2719 = vpop.f32.mrb[0].mxu0
      %v2720 = vadd.f32 %v1056, %v2719
      %v2721 = vpop.f32.mrb[0].mxu0
      %v2722 = vadd.f32 %v1056, %v2721
      %v2723 = vpop.f32.mrb[0].mxu0
      %v2724 = vadd.f32 %v1061, %v2723
      %v2725 = vpop.f32.mrb[0].mxu0
      %v2726 = vadd.f32 %v1061, %v2725
      %2727 = vmatprep.mubr.bf16.mxu0 %v1952
      %2728 = vmatmul.mubr.bf16.gmra.mrb[0].mxu0 %v1951
      %v2729 = vpop.f32.mrb[0].mxu0
      %v2730 = vadd.f32 %v1066, %v2729
      %v2731 = vpop.f32.mrb[0].mxu0
      %v2732 = vadd.f32 %v1066, %v2731
      %v2733 = vpop.f32.mrb[0].mxu0
      %v2734 = vadd.f32 %v1071, %v2733
      %v2735 = vpop.f32.mrb[0].mxu0
      %v2736 = vadd.f32 %v1071, %v2735
      %2737 = vmatprep.mubr.bf16.mxu0 %v1954
      %2738 = vmatmul.mubr.bf16.gmra.mrb[0].mxu0 %v1953
      %v2739 = vpop.f32.mrb[0].mxu0
      %v2740 = vadd.f32 %v1076, %v2739
      %v2741 = vpop.f32.mrb[0].mxu0
      %v2742 = vadd.f32 %v1076, %v2741
      %v2743 = vpop.f32.mrb[0].mxu0
      %v2744 = vadd.f32 %v1081, %v2743
      %v2745 = vpop.f32.mrb[0].mxu0
      %v2746 = vadd.f32 %v1081, %v2745
      %2747 = vmatprep.mubr.bf16.mxu0 %v1956
      %2748 = vmatmul.mubr.bf16.gmra.mrb[0].mxu0 %v1955
      %v2749 = vpop.f32.mrb[0].mxu0
      %v2750 = vadd.f32 %v1086, %v2749
      %v2751 = vpop.f32.mrb[0].mxu0
      %v2752 = vadd.f32 %v1086, %v2751
      %v2753 = vpop.f32.mrb[0].mxu0
      %v2754 = vadd.f32 %v1091, %v2753
      %v2755 = vpop.f32.mrb[0].mxu0
      %v2756 = vadd.f32 %v1091, %v2755
      %2757 = vmatprep.mubr.bf16.mxu0 %v1958
      %2758 = vmatmul.mubr.bf16.gmra.mrb[0].mxu0 %v1957
      %v2759 = vpop.f32.mrb[0].mxu0
      %v2760 = vadd.f32 %v1096, %v2759
      %v2761 = vpop.f32.mrb[0].mxu0
      %v2762 = vadd.f32 %v1096, %v2761
      %v2763 = vpop.f32.mrb[0].mxu0
      %v2764 = vadd.f32 %v1101, %v2763
      %v2765 = vpop.f32.mrb[0].mxu0
      %v2766 = vadd.f32 %v1101, %v2765
      %2767 = vmatprep.mubr.bf16.mxu0 %v1960
      %2768 = vmatmul.mubr.bf16.gmra.mrb[0].mxu0 %v1959
      %v2769 = vpop.f32.mrb[0].mxu0
      %v2770 = vadd.f32 %v1106, %v2769
      %v2771 = vpop.f32.mrb[0].mxu0
      %v2772 = vadd.f32 %v1106, %v2771
      %v2773 = vpop.f32.mrb[0].mxu0
      %v2774 = vadd.f32 %v1111, %v2773
      %v2775 = vpop.f32.mrb[0].mxu0
      %v2776 = vadd.f32 %v1111, %v2775
      %2777 = vmatprep.mubr.bf16.mxu0 %v1962
      %2778 = vmatmul.mubr.bf16.gmra.mrb[0].mxu0 %v1961
      %v2779 = vpop.f32.mrb[0].mxu0
      %v2780 = vadd.f32 %v1116, %v2779
      %v2781 = vpop.f32.mrb[0].mxu0
      %v2782 = vadd.f32 %v1116, %v2781
      %v2783 = vpop.f32.mrb[0].mxu0
      %v2784 = vadd.f32 %v1121, %v2783
      %v2785 = vpop.f32.mrb[0].mxu0
      %v2786 = vadd.f32 %v1121, %v2785
      %2787 = vmatprep.mubr.bf16.mxu0 %v1964
      %2788 = vmatmul.mubr.bf16.gmra.mrb[0].mxu0 %v1963
      %v2789 = vpop.f32.mrb[0].mxu0
      %v2790 = vadd.f32 %v1126, %v2789
      %v2791 = vpop.f32.mrb[0].mxu0
      %v2792 = vadd.f32 %v1126, %v2791
      %v2793 = vpop.f32.mrb[0].mxu0
      %v2794 = vadd.f32 %v1131, %v2793
      %v2795 = vpop.f32.mrb[0].mxu0
      %v2796 = vadd.f32 %v1131, %v2795
      %2797 = vmatprep.mubr.bf16.mxu0 %v1966
      %2798 = vmatmul.mubr.bf16.gmra.mrb[0].mxu0 %v1965
      %v2799 = vpop.f32.mrb[0].mxu0
      %v2800 = vadd.f32 %v1136, %v2799
      %v2801 = vpop.f32.mrb[0].mxu0
      %v2802 = vadd.f32 %v1136, %v2801
      %v2803 = vpop.f32.mrb[0].mxu0
      %v2804 = vadd.f32 %v1141, %v2803
      %v2805 = vpop.f32.mrb[0].mxu0
      %v2806 = vadd.f32 %v1141, %v2805
      %2807 = vmatprep.mubr.bf16.mxu0 %v1968
      %2808 = vmatmul.mubr.bf16.gmra.mrb[0].mxu0 %v1967
      %v2809 = vpop.f32.mrb[0].mxu0
      %v2810 = vadd.f32 %v1146, %v2809
      %v2811 = vpop.f32.mrb[0].mxu0
      %v2812 = vadd.f32 %v1146, %v2811
      %v2813 = vpop.f32.mrb[0].mxu0
      %v2814 = vadd.f32 %v1151, %v2813
      %v2815 = vpop.f32.mrb[0].mxu0
      %v2816 = vadd.f32 %v1151, %v2815
      %2817 = vmatprep.mubr.bf16.mxu0 %v1970
      %2818 = vmatmul.mubr.bf16.gmra.mrb[0].mxu0 %v1969
      %v2819 = vpop.f32.mrb[0].mxu0
      %v2820 = vadd.f32 %v1156, %v2819
      %v2821 = vpop.f32.mrb[0].mxu0
      %v2822 = vadd.f32 %v1156, %v2821
      %v2823 = vpop.f32.mrb[0].mxu0
      %v2824 = vadd.f32 %v1161, %v2823
      %v2825 = vpop.f32.mrb[0].mxu0
      %v2826 = vadd.f32 %v1161, %v2825
      %2827 = vmatprep.mubr.bf16.mxu0 %v1972
      %2828 = vmatmul.mubr.bf16.gmra.mrb[0].mxu0 %v1971
      %v2829 = vpop.f32.mrb[0].mxu0
      %v2830 = vadd.f32 %v1166, %v2829
      %v2831 = vpop.f32.mrb[0].mxu0
      %v2832 = vadd.f32 %v1166, %v2831
      %v2833 = vpop.f32.mrb[0].mxu0
      %v2834 = vadd.f32 %v1171, %v2833
      %v2835 = vpop.f32.mrb[0].mxu0
      %v2836 = vadd.f32 %v1171, %v2835
      %2837 = vmatprep.mubr.bf16.mxu0 %v1974
      %2838 = vmatmul.mubr.bf16.gmra.mrb[0].mxu0 %v1973
      %v2839 = vpop.f32.mrb[0].mxu0
      %v2840 = vadd.f32 %v1176, %v2839
      %v2841 = vpop.f32.mrb[0].mxu0
      %v2842 = vadd.f32 %v1176, %v2841
      %v2843 = vpop.f32.mrb[0].mxu0
      %v2844 = vadd.f32 %v1181, %v2843
      %v2845 = vpop.f32.mrb[0].mxu0
      %v2846 = vadd.f32 %v1181, %v2845
      %2847 = vmatprep.mubr.bf16.mxu0 %v1976
      %2848 = vmatmul.mubr.bf16.gmra.mrb[0].mxu0 %v1975
      %v2849 = vpop.f32.mrb[0].mxu0
      %v2850 = vadd.f32 %v1186, %v2849
      %v2851 = vpop.f32.mrb[0].mxu0
      %v2852 = vadd.f32 %v1186, %v2851
      %v2853 = vpop.f32.mrb[0].mxu0
      %v2854 = vadd.f32 %v1191, %v2853
      %v2855 = vpop.f32.mrb[0].mxu0
      %v2856 = vadd.f32 %v1191, %v2855
      %2857 = vmatprep.mubr.bf16.mxu0 %v1978
      %2858 = vmatmul.mubr.bf16.gmra.mrb[0].mxu0 %v1977
      %v2859 = vpop.f32.mrb[0].mxu0
      %v2860 = vadd.f32 %v1196, %v2859
      %v2861 = vpop.f32.mrb[0].mxu0
      %v2862 = vadd.f32 %v1196, %v2861
      %v2863 = vpop.f32.mrb[0].mxu0
      %v2864 = vadd.f32 %v1201, %v2863
      %v2865 = vpop.f32.mrb[0].mxu0
      %v2866 = vadd.f32 %v1201, %v2865
      %2867 = vmatprep.mubr.bf16.mxu0 %v1980
      %2868 = vmatmul.mubr.bf16.gmra.mrb[0].mxu0 %v1979
      %v2869 = vpop.f32.mrb[0].mxu0
      %v2870 = vadd.f32 %v1206, %v2869
      %v2871 = vpop.f32.mrb[0].mxu0
      %v2872 = vadd.f32 %v1206, %v2871
      %v2873 = vpop.f32.mrb[0].mxu0
      %v2874 = vadd.f32 %v1211, %v2873
      %v2875 = vpop.f32.mrb[0].mxu0
      %v2876 = vadd.f32 %v1211, %v2875
      %2877 = vmatprep.mubr.bf16.mxu0 %v1982
      %2878 = vmatmul.mubr.bf16.gmra.mrb[0].mxu0 %v1981
      %v2879 = vpop.f32.mrb[0].mxu0
      %v2880 = vadd.f32 %v1216, %v2879
      %v2881 = vpop.f32.mrb[0].mxu0
      %v2882 = vadd.f32 %v1216, %v2881
      %v2883 = vpop.f32.mrb[0].mxu0
      %v2884 = vadd.f32 %v1221, %v2883
      %v2885 = vpop.f32.mrb[0].mxu0
      %v2886 = vadd.f32 %v1221, %v2885
      %2887 = vmatprep.mubr.bf16.mxu0 %v1984
      %2888 = vmatmul.mubr.bf16.gmra.mrb[0].mxu0 %v1983
      %v2889 = vpop.f32.mrb[0].mxu0
      %v2890 = vadd.f32 %v1226, %v2889
      %v2891 = vpop.f32.mrb[0].mxu0
      %v2892 = vadd.f32 %v1226, %v2891
      %v2893 = vpop.f32.mrb[0].mxu0
      %v2894 = vadd.f32 %v1231, %v2893
      %v2895 = vpop.f32.mrb[0].mxu0
      %v2896 = vadd.f32 %v1231, %v2895
      %2897 = vmatprep.mubr.bf16.mxu0 %v1986
      %2898 = vmatmul.mubr.bf16.gmra.mrb[0].mxu0 %v1985
      %v2899 = vpop.f32.mrb[0].mxu0
      %v2900 = vadd.f32 %v1236, %v2899
      %v2901 = vpop.f32.mrb[0].mxu0
      %v2902 = vadd.f32 %v1236, %v2901
      %v2903 = vpop.f32.mrb[0].mxu0
      %v2904 = vadd.f32 %v1241, %v2903
      %v2905 = vpop.f32.mrb[0].mxu0
      %v2906 = vadd.f32 %v1241, %v2905
      %2907 = vmatprep.mubr.bf16.mxu0 %v1988
      %2908 = vmatmul.mubr.bf16.gmra.mrb[0].mxu0 %v1987
      %v2909 = vpop.f32.mrb[0].mxu0
      %v2910 = vadd.f32 %v1246, %v2909
      %v2911 = vpop.f32.mrb[0].mxu0
      %v2912 = vadd.f32 %v1246, %v2911
      %v2913 = vpop.f32.mrb[0].mxu0
      %v2914 = vadd.f32 %v1251, %v2913
      %v2915 = vpop.f32.mrb[0].mxu0
      %v2916 = vadd.f32 %v1251, %v2915
      %2917 = vmatprep.mubr.bf16.mxu0 %v1990
      %2918 = vmatmul.mubr.bf16.gmra.mrb[0].mxu0 %v1989
      %v2919 = vpop.f32.mrb[0].mxu0
      %v2920 = vadd.f32 %v1256, %v2919
      %v2921 = vpop.f32.mrb[0].mxu0
      %v2922 = vadd.f32 %v1256, %v2921
      %v2923 = vpop.f32.mrb[0].mxu0
      %v2924 = vadd.f32 %v1261, %v2923
      %v2925 = vpop.f32.mrb[0].mxu0
      %v2926 = vadd.f32 %v1261, %v2925
      %2927 = vmatprep.mubr.bf16.mxu0 %v1992
      %2928 = vmatmul.mubr.bf16.gmra.mrb[0].mxu0 %v1991
      %v2929 = vpop.f32.mrb[0].mxu0
      %v2930 = vadd.f32 %v1266, %v2929
      %v2931 = vpop.f32.mrb[0].mxu0
      %v2932 = vadd.f32 %v1266, %v2931
      %v2933 = vpop.f32.mrb[0].mxu0
      %v2934 = vadd.f32 %v1271, %v2933
      %v2935 = vpop.f32.mrb[0].mxu0
      %v2936 = vadd.f32 %v1271, %v2935
      %2937 = vmatprep.mubr.bf16.mxu0 %v1994
      %2938 = vmatmul.mubr.bf16.gmra.mrb[0].mxu0 %v1993
      %v2939 = vpop.f32.mrb[0].mxu0
      %v2940 = vadd.f32 %v1276, %v2939
      %v2941 = vpop.f32.mrb[0].mxu0
      %v2942 = vadd.f32 %v1276, %v2941
      %v2943 = vpop.f32.mrb[0].mxu0
      %v2944 = vadd.f32 %v1281, %v2943
      %v2945 = vpop.f32.mrb[0].mxu0
      %v2946 = vadd.f32 %v1281, %v2945
      %2947 = vmatprep.mubr.bf16.mxu0 %v1996
      %2948 = vmatmul.mubr.bf16.gmra.mrb[0].mxu0 %v1995
      %v2949 = vpop.f32.mrb[0].mxu0
      %v2950 = vadd.f32 %v1286, %v2949
      %v2951 = vpop.f32.mrb[0].mxu0
      %v2952 = vadd.f32 %v1286, %v2951
      %v2953 = vpop.f32.mrb[0].mxu0
      %v2954 = vadd.f32 %v1291, %v2953
      %v2955 = vpop.f32.mrb[0].mxu0
      %v2956 = vadd.f32 %v1291, %v2955
      %2957 = vmatprep.mubr.bf16.mxu0 %v1998
      %2958 = vmatmul.mubr.bf16.gmra.mrb[0].mxu0 %v1997
      %v2959 = vpop.f32.mrb[0].mxu0
      %v2960 = vadd.f32 %v1296, %v2959
      %v2961 = vpop.f32.mrb[0].mxu0
      %v2962 = vadd.f32 %v1296, %v2961
      %v2963 = vpop.f32.mrb[0].mxu0
      %v2964 = vadd.f32 %v1301, %v2963
      %v2965 = vpop.f32.mrb[0].mxu0
      %v2966 = vadd.f32 %v1301, %v2965
      %2967 = vmatprep.mubr.bf16.mxu0 %v2000
      %2968 = vmatmul.mubr.bf16.gmra.mrb[0].mxu0 %v1999
      %v2969 = vpop.f32.mrb[0].mxu0
      %v2970 = vadd.f32 %v1306, %v2969
      %v2971 = vpop.f32.mrb[0].mxu0
      %v2972 = vadd.f32 %v1306, %v2971
      %v2973 = vpop.f32.mrb[0].mxu0
      %v2974 = vadd.f32 %v1311, %v2973
      %v2975 = vpop.f32.mrb[0].mxu0
      %v2976 = vadd.f32 %v1311, %v2975
      %2977 = vmatprep.mubr.bf16.mxu0 %v2002
      %2978 = vmatmul.mubr.bf16.gmra.mrb[0].mxu0 %v2001
      %v2979 = vpop.f32.mrb[0].mxu0
      %v2980 = vadd.f32 %v1316, %v2979
      %v2981 = vpop.f32.mrb[0].mxu0
      %v2982 = vadd.f32 %v1316, %v2981
      %v2983 = vpop.f32.mrb[0].mxu0
      %v2984 = vadd.f32 %v1321, %v2983
      %v2985 = vpop.f32.mrb[0].mxu0
      %v2986 = vadd.f32 %v1321, %v2985
      %2987 = vmatprep.mubr.bf16.mxu0 %v2004
      %2988 = vmatmul.mubr.bf16.gmra.mrb[0].mxu0 %v2003
      %v2989 = vpop.f32.mrb[0].mxu0
      %v2990 = vadd.f32 %v1326, %v2989
      %v2991 = vpop.f32.mrb[0].mxu0
      %v2992 = vadd.f32 %v1326, %v2991
      %v2993 = vpop.f32.mrb[0].mxu0
      %v2994 = vadd.f32 %v1331, %v2993
      %v2995 = vpop.f32.mrb[0].mxu0
      %v2996 = vadd.f32 %v1331, %v2995
      %2997 = vmatprep.mubr.bf16.mxu0 %v2006
      %2998 = vmatmul.mubr.bf16.gmra.mrb[0].mxu0 %v2005
      %v2999 = vpop.f32.mrb[0].mxu0
      %v3000 = vadd.f32 %v1336, %v2999
      %v3001 = vpop.f32.mrb[0].mxu0
      %v3002 = vadd.f32 %v1336, %v3001
      %v3003 = vpop.f32.mrb[0].mxu0
      %v3004 = vadd.f32 %v1341, %v3003
      %v3005 = vpop.f32.mrb[0].mxu0
      %v3006 = vadd.f32 %v1341, %v3005
      %3007 = vmatprep.mubr.bf16.mxu0 %v2008
      %3008 = vmatmul.mubr.bf16.gmra.mrb[0].mxu0 %v2007
      %v3009 = vpop.f32.mrb[0].mxu0
      %v3010 = vadd.f32 %v1346, %v3009
      %v3011 = vpop.f32.mrb[0].mxu0
      %v3012 = vadd.f32 %v1346, %v3011
      %v3013 = vpop.f32.mrb[0].mxu0
      %v3014 = vadd.f32 %v1351, %v3013
      %v3015 = vpop.f32.mrb[0].mxu0
      %v3016 = vadd.f32 %v1351, %v3015
      %3017 = vmatprep.mubr.bf16.mxu0 %v2010
      %3018 = vmatmul.mubr.bf16.gmra.mrb[0].mxu0 %v2009
      %v3019 = vpop.f32.mrb[0].mxu0
      %v3020 = vadd.f32 %v1356, %v3019
      %v3021 = vpop.f32.mrb[0].mxu0
      %v3022 = vadd.f32 %v1356, %v3021
      %v3023 = vpop.f32.mrb[0].mxu0
      %v3024 = vadd.f32 %v1361, %v3023
      %v3025 = vpop.f32.mrb[0].mxu0
      %v3026 = vadd.f32 %v1361, %v3025
      %3027 = vmatprep.mubr.bf16.mxu0 %v2012
      %3028 = vmatmul.mubr.bf16.gmra.mrb[0].mxu0 %v2011
      %v3029 = vpop.f32.mrb[0].mxu0
      %v3030 = vadd.f32 %v1366, %v3029
      %v3031 = vpop.f32.mrb[0].mxu0
      %v3032 = vadd.f32 %v1366, %v3031
      %v3033 = vpop.f32.mrb[0].mxu0
      %v3034 = vadd.f32 %v1371, %v3033
      %v3035 = vpop.f32.mrb[0].mxu0
      %v3036 = vadd.f32 %v1371, %v3035
      %3037 = vmatprep.mubr.bf16.mxu0 %v2014
      %3038 = vmatmul.mubr.bf16.gmra.mrb[0].mxu0 %v2013
      %v3039 = vpop.f32.mrb[0].mxu0
      %v3040 = vadd.f32 %v1376, %v3039
      %v3041 = vpop.f32.mrb[0].mxu0
      %v3042 = vadd.f32 %v1376, %v3041
      %v3043 = vpop.f32.mrb[0].mxu0
      %v3044 = vadd.f32 %v1381, %v3043
      %v3045 = vpop.f32.mrb[0].mxu0
      %v3046 = vadd.f32 %v1381, %v3045
      %3047 = vmatprep.mubr.bf16.mxu0 %v2016
      %3048 = vmatmul.mubr.bf16.gmra.mrb[0].mxu0 %v2015
      %v3049 = vpop.f32.mrb[0].mxu0
      %v3050 = vadd.f32 %v1386, %v3049
      %v3051 = vpop.f32.mrb[0].mxu0
      %v3052 = vadd.f32 %v1386, %v3051
      %v3053 = vpop.f32.mrb[0].mxu0
      %v3054 = vadd.f32 %v1391, %v3053
      %v3055 = vpop.f32.mrb[0].mxu0
      %v3056 = vadd.f32 %v1391, %v3055
      %3057 = vmatprep.mubr.bf16.mxu0 %v2018
      %3058 = vmatmul.mubr.bf16.gmra.mrb[0].mxu0 %v2017
      %v3059 = vpop.f32.mrb[0].mxu0
      %v3060 = vadd.f32 %v1396, %v3059
      %v3061 = vpop.f32.mrb[0].mxu0
      %v3062 = vadd.f32 %v1396, %v3061
      %v3063 = vpop.f32.mrb[0].mxu0
      %v3064 = vadd.f32 %v1401, %v3063
      %v3065 = vpop.f32.mrb[0].mxu0
      %v3066 = vadd.f32 %v1401, %v3065
      %3067 = vmatprep.mubr.bf16.mxu0 %v2020
      %3068 = vmatmul.mubr.bf16.gmra.mrb[0].mxu0 %v2019
      %v3069 = vpop.f32.mrb[0].mxu0
      %v3070 = vadd.f32 %v1406, %v3069
      %v3071 = vpop.f32.mrb[0].mxu0
      %v3072 = vadd.f32 %v1406, %v3071
      %v3073 = vpop.f32.mrb[0].mxu0
      %v3074 = vadd.f32 %v1411, %v3073
      %v3075 = vpop.f32.mrb[0].mxu0
      %v3076 = vadd.f32 %v1411, %v3075
      %3077 = vmatprep.mubr.bf16.mxu0 %v2022
      %3078 = vmatmul.mubr.bf16.gmra.mrb[0].mxu0 %v2021
      %v3079 = vpop.f32.mrb[0].mxu0
      %v3080 = vadd.f32 %v1416, %v3079
      %v3081 = vpop.f32.mrb[0].mxu0
      %v3082 = vadd.f32 %v1416, %v3081
      %v3083 = vpop.f32.mrb[0].mxu0
      %v3084 = vadd.f32 %v1421, %v3083
      %v3085 = vpop.f32.mrb[0].mxu0
      %v3086 = vadd.f32 %v1421, %v3085
      %3087 = vmatprep.mubr.bf16.mxu0 %v2024
      %3088 = vmatmul.mubr.bf16.gmra.mrb[0].mxu0 %v2023
      %v3089 = vpop.f32.mrb[0].mxu0
      %v3090 = vadd.f32 %v1426, %v3089
      %v3091 = vpop.f32.mrb[0].mxu0
      %v3092 = vadd.f32 %v1426, %v3091
      %v3093 = vpop.f32.mrb[0].mxu0
      %v3094 = vadd.f32 %v1431, %v3093
      %v3095 = vpop.f32.mrb[0].mxu0
      %v3096 = vadd.f32 %v1431, %v3095
      %3097 = vmatprep.mubr.bf16.mxu0 %v2026
      %3098 = vmatmul.mubr.bf16.gmra.mrb[0].mxu0 %v2025
      %v3099 = vpop.f32.mrb[0].mxu0
      %v3100 = vadd.f32 %v1436, %v3099
      %v3101 = vpop.f32.mrb[0].mxu0
      %v3102 = vadd.f32 %v1436, %v3101
      %v3103 = vpop.f32.mrb[0].mxu0
      %v3104 = vpop.f32.mrb[0].mxu0
      %3105 = vdwg.mxu0
      %v3106 = vld [vmem:[%s318] sm:$0xff]
      %v3107 = vld [vmem:[%s318 + $0x8] sm:$0xff]
      %v3108 = vld [vmem:[%s318 + $0x10] sm:$0xff]
      %v3109 = vld [vmem:[%s318 + $0x18] sm:$0xff]
      %v3110 = vld [vmem:[%s318 + $0x20] sm:$0xff]
      %v3111 = vld [vmem:[%s318 + $0x28] sm:$0xff]
      %v3112 = vld [vmem:[%s318 + $0x30] sm:$0xff]
      %v3113 = vld [vmem:[%s318 + $0x38] sm:$0xff]
      %v3114 = vld [vmem:[%s318 + $0x40] sm:$0xff]
      %v3115 = vld [vmem:[%s318 + $0x48] sm:$0xff]
      %v3116 = vld [vmem:[%s318 + $0x50] sm:$0xff]
      %v3117 = vld [vmem:[%s318 + $0x58] sm:$0xff]
      %v3118 = vld [vmem:[%s318 + $0x60] sm:$0xff]
      %v3119 = vld [vmem:[%s318 + $0x68] sm:$0xff]
      %v3120 = vld [vmem:[%s318 + $0x70] sm:$0xff]
      %v3121 = vld [vmem:[%s318 + $0x78] sm:$0xff]
      %v3122 = vld [vmem:[%s318 + $0x80] sm:$0xff]
      %v3123 = vld [vmem:[%s318 + $0x88] sm:$0xff]
      %v3124 = vld [vmem:[%s318 + $0x90] sm:$0xff]
      %v3125 = vld [vmem:[%s318 + $0x98] sm:$0xff]
      %v3126 = vld [vmem:[%s318 + $0xa0] sm:$0xff]
      %v3127 = vld [vmem:[%s318 + $0xa8] sm:$0xff]
      %v3128 = vld [vmem:[%s318 + $0xb0] sm:$0xff]
      %v3129 = vld [vmem:[%s318 + $0xb8] sm:$0xff]
      %v3130 = vld [vmem:[%s318 + $0xc0] sm:$0xff]
      %v3131 = vld [vmem:[%s318 + $0xc8] sm:$0xff]
      %v3132 = vld [vmem:[%s318 + $0xd0] sm:$0xff]
      %v3133 = vld [vmem:[%s318 + $0xd8] sm:$0xff]
      %v3134 = vld [vmem:[%s318 + $0xe0] sm:$0xff]
      %v3135 = vld [vmem:[%s318 + $0xe8] sm:$0xff]
      %v3136 = vld [vmem:[%s318 + $0xf0] sm:$0xff]
      %v3137 = vld [vmem:[%s318 + $0xf8] sm:$0xff]
      %v3138 = vld [vmem:[%s318 + $0x100] sm:$0xff]
      %v3139 = vld [vmem:[%s318 + $0x108] sm:$0xff]
      %v3140 = vld [vmem:[%s318 + $0x110] sm:$0xff]
      %v3141 = vld [vmem:[%s318 + $0x118] sm:$0xff]
      %v3142 = vld [vmem:[%s318 + $0x120] sm:$0xff]
      %v3143 = vld [vmem:[%s318 + $0x128] sm:$0xff]
      %v3144 = vld [vmem:[%s318 + $0x130] sm:$0xff]
      %v3145 = vld [vmem:[%s318 + $0x138] sm:$0xff]
      %v3146 = vld [vmem:[%s318 + $0x140] sm:$0xff]
      %v3147 = vld [vmem:[%s318 + $0x148] sm:$0xff]
      %v3148 = vld [vmem:[%s318 + $0x150] sm:$0xff]
      %v3149 = vld [vmem:[%s318 + $0x158] sm:$0xff]
      %v3150 = vld [vmem:[%s318 + $0x160] sm:$0xff]
      %v3151 = vld [vmem:[%s318 + $0x168] sm:$0xff]
      %v3152 = vld [vmem:[%s318 + $0x170] sm:$0xff]
      %v3153 = vld [vmem:[%s318 + $0x178] sm:$0xff]
      %v3154 = vld [vmem:[%s318 + $0x180] sm:$0xff]
      %vm3155 = vcmask 130048
      %v3157 = vsel %vm3155, %v3106, 0
      %v3160 = vsel %vm3155, %v3107, 0
      %v3163 = vsel %vm3155, %v3108, 0
      %v3166 = vsel %vm3155, %v3109, 0
      %v3169 = vsel %vm3155, %v3110, 0
      %v3172 = vsel %vm3155, %v3111, 0
      %v3175 = vsel %vm3155, %v3112, 0
      %v3178 = vsel %vm3155, %v3113, 0
      %v3181 = vsel %vm3155, %v3114, 0
      %v3184 = vsel %vm3155, %v3115, 0
      %v3187 = vsel %vm3155, %v3116, 0
      %v3190 = vsel %vm3155, %v3117, 0
      %v3193 = vsel %vm3155, %v3118, 0
      %v3196 = vsel %vm3155, %v3119, 0
      %v3199 = vsel %vm3155, %v3120, 0
      %v3202 = vsel %vm3155, %v3121, 0
      %v3205 = vsel %vm3155, %v3122, 0
      %v3208 = vsel %vm3155, %v3123, 0
      %v3211 = vsel %vm3155, %v3124, 0
      %v3214 = vsel %vm3155, %v3125, 0
      %v3217 = vsel %vm3155, %v3126, 0
      %v3220 = vsel %vm3155, %v3127, 0
      %v3223 = vsel %vm3155, %v3128, 0
      %v3226 = vsel %vm3155, %v3129, 0
      %v3229 = vsel %vm3155, %v3130, 0
      %v3232 = vsel %vm3155, %v3131, 0
      %v3235 = vsel %vm3155, %v3132, 0
      %v3238 = vsel %vm3155, %v3133, 0
      %v3241 = vsel %vm3155, %v3134, 0
      %v3244 = vsel %vm3155, %v3135, 0
      %v3247 = vsel %vm3155, %v3136, 0
      %v3250 = vsel %vm3155, %v3137, 0
      %v3253 = vsel %vm3155, %v3138, 0
      %v3256 = vsel %vm3155, %v3139, 0
      %v3259 = vsel %vm3155, %v3140, 0
      %v3262 = vsel %vm3155, %v3141, 0
      %v3265 = vsel %vm3155, %v3142, 0
      %v3268 = vsel %vm3155, %v3143, 0
      %v3271 = vsel %vm3155, %v3144, 0
      %v3274 = vsel %vm3155, %v3145, 0
      %v3277 = vsel %vm3155, %v3146, 0
      %v3280 = vsel %vm3155, %v3147, 0
      %v3283 = vsel %vm3155, %v3148, 0
      %v3286 = vsel %vm3155, %v3149, 0
      %v3289 = vsel %vm3155, %v3150, 0
      %v3292 = vsel %vm3155, %v3151, 0
      %v3295 = vsel %vm3155, %v3152, 0
      %v3298 = vsel %vm3155, %v3153, 0
      %v3301 = vsel %vm3155, %v3154, 0
      %3303 = vmatprep.subr.mxu0 %v362
      %3304 = vmatpush1.msra.mxu0 %v361
      %3305 = vmatprep.subr.mxu0 %v386
      %3306 = vmatpush1.msra.mxu0 %v385
      %3307 = vmatprep.subr.mxu0 0.0
      %3308 = vmatpush1.msra.mxu0 0.0
      %3309 = vmatprep.subr.mxu0 0.0
      %3310 = vmatpush1.msra.mxu0 0.0
      %3311 = vmatprep.subr.mxu0 0.0
      %3312 = vmatpush1.msra.mxu0 0.0
      %3313 = vmatprep.subr.mxu0 0.0
      %3314 = vmatpush1.msra.mxu0 0.0
      %3315 = vmatprep.subr.mxu0 0.0
      %3316 = vmatpush1.msra.mxu0 0.0
      %3317 = vmatprep.subr.mxu0 0.0
      %3318 = vmatpush1.msra.mxu0 0.0
      %3319 = vmatprep.subr.mxu0 0.0
      %3320 = vmatpush1.msra.mxu0 0.0
      %3321 = vmatprep.subr.mxu0 0.0
      %3322 = vmatpush1.msra.mxu0 0.0
      %3323 = vmatprep.subr.mxu0 0.0
      %3324 = vmatpush1.msra.mxu0 0.0
      %3325 = vmatprep.subr.mxu0 0.0
      %3326 = vmatpush1.msra.mxu0 0.0
      %3327 = vmatprep.subr.mxu0 0.0
      %3328 = vmatpush1.msra.mxu0 0.0
      %3329 = vmatprep.subr.mxu0 0.0
      %3330 = vmatpush1.msra.mxu0 0.0
      %3331 = vmatprep.subr.mxu0 0.0
      %3332 = vmatpush1.msra.mxu0 0.0
      %3333 = vmatprep.subr.mxu0 0.0
      %3334 = vmatpush1.msra.mxu0 0.0
      %3335 = vmatprep.subr.mxu0 0.0
      %3336 = vmatpush1.msra.mxu0 0.0
      %3337 = vmatprep.subr.mxu0 0.0
      %3338 = vmatpush1.msra.mxu0 0.0
      %3339 = vmatprep.subr.mxu0 0.0
      %3340 = vmatpush1.msra.mxu0 0.0
      %3341 = vmatprep.subr.mxu0 0.0
      %3342 = vmatpush1.msra.mxu0 0.0
      %3343 = vmatprep.subr.mxu0 0.0
      %3344 = vmatpush1.msra.mxu0 0.0
      %3345 = vmatprep.subr.mxu0 0.0
      %3346 = vmatpush1.msra.mxu0 0.0
      %3347 = vmatprep.subr.mxu0 0.0
      %3348 = vmatpush1.msra.mxu0 0.0
      %3349 = vmatprep.subr.mxu0 0.0
      %3350 = vmatpush1.msra.mxu0 0.0
      %3351 = vmatprep.subr.mxu0 0.0
      %3352 = vmatpush1.msra.mxu0 0.0
      %3353 = vmatprep.subr.mxu0 0.0
      %3354 = vmatpush1.msra.mxu0 0.0
      %3355 = vmatprep.subr.mxu0 0.0
      %3356 = vmatpush1.msra.mxu0 0.0
      %3357 = vmatprep.subr.mxu0 0.0
      %3358 = vmatpush1.msra.mxu0 0.0
      %3359 = vmatprep.subr.mxu0 0.0
      %3360 = vmatpush1.msra.mxu0 0.0
      %3361 = vmatprep.subr.mxu0 0.0
      %3362 = vmatpush1.msra.mxu0 0.0
      %3363 = vmatprep.subr.mxu0 0.0
      %3364 = vmatpush1.msra.mxu0 0.0
      %3365 = vmatprep.subr.mxu0 0.0
      %3366 = vmatpush1.msra.mxu0 0.0
      %3367 = vmatprep.mubr.f32.mxu0 0.0
      %3368 = vmatmul.mubr.f32.gmra.mrb[0].mxu0 %v3157
      %v3369 = vpop.f32.mrb[0].mxu0
      %v3370 = vadd.f32 0.0, %v3369
      %v3371 = vpop.f32.mrb[0].mxu0
      %v3372 = vadd.f32 0.0, %v3371
      %3373 = vmatprep.mubr.f32.mxu0 0.0
      %3374 = vmatmul.mubr.f32.gmra.mrb[0].mxu0 %v3160
      %v3375 = vpop.f32.mrb[0].mxu0
      %v3376 = vadd.f32 0.0, %v3375
      %v3377 = vpop.f32.mrb[0].mxu0
      %v3378 = vadd.f32 0.0, %v3377
      %3379 = vmatprep.mubr.f32.mxu0 0.0
      %3380 = vmatmul.mubr.f32.gmra.mrb[0].mxu0 %v3163
      %v3381 = vpop.f32.mrb[0].mxu0
      %v3382 = vadd.f32 0.0, %v3381
      %v3383 = vpop.f32.mrb[0].mxu0
      %v3384 = vadd.f32 0.0, %v3383
      %3385 = vmatprep.mubr.f32.mxu0 0.0
      %3386 = vmatmul.mubr.f32.gmra.mrb[0].mxu0 %v3166
      %v3387 = vpop.f32.mrb[0].mxu0
      %v3388 = vadd.f32 0.0, %v3387
      %v3389 = vpop.f32.mrb[0].mxu0
      %v3390 = vadd.f32 0.0, %v3389
      %3391 = vmatprep.mubr.f32.mxu0 0.0
      %3392 = vmatmul.mubr.f32.gmra.mrb[0].mxu0 %v3169
      %v3393 = vpop.f32.mrb[0].mxu0
      %v3394 = vadd.f32 0.0, %v3393
      %v3395 = vpop.f32.mrb[0].mxu0
      %v3396 = vadd.f32 0.0, %v3395
      %3397 = vmatprep.mubr.f32.mxu0 0.0
      %3398 = vmatmul.mubr.f32.gmra.mrb[0].mxu0 %v3172
      %v3399 = vpop.f32.mrb[0].mxu0
      %v3400 = vadd.f32 0.0, %v3399
      %v3401 = vpop.f32.mrb[0].mxu0
      %v3402 = vadd.f32 0.0, %v3401
      %3403 = vmatprep.mubr.f32.mxu0 0.0
      %3404 = vmatmul.mubr.f32.gmra.mrb[0].mxu0 %v3175
      %v3405 = vpop.f32.mrb[0].mxu0
      %v3406 = vadd.f32 0.0, %v3405
      %v3407 = vpop.f32.mrb[0].mxu0
      %v3408 = vadd.f32 0.0, %v3407
      %3409 = vmatprep.mubr.f32.mxu0 0.0
      %3410 = vmatmul.mubr.f32.gmra.mrb[0].mxu0 %v3178
      %v3411 = vpop.f32.mrb[0].mxu0
      %v3412 = vadd.f32 0.0, %v3411
      %v3413 = vpop.f32.mrb[0].mxu0
      %v3414 = vadd.f32 0.0, %v3413
      %3415 = vmatprep.mubr.f32.mxu0 0.0
      %3416 = vmatmul.mubr.f32.gmra.mrb[0].mxu0 %v3181
      %v3417 = vpop.f32.mrb[0].mxu0
      %v3418 = vadd.f32 0.0, %v3417
      %v3419 = vpop.f32.mrb[0].mxu0
      %v3420 = vadd.f32 0.0, %v3419
      %3421 = vmatprep.mubr.f32.mxu0 0.0
      %3422 = vmatmul.mubr.f32.gmra.mrb[0].mxu0 %v3184
      %v3423 = vpop.f32.mrb[0].mxu0
      %v3424 = vadd.f32 0.0, %v3423
      %v3425 = vpop.f32.mrb[0].mxu0
      %v3426 = vadd.f32 0.0, %v3425
      %3427 = vmatprep.mubr.f32.mxu0 0.0
      %3428 = vmatmul.mubr.f32.gmra.mrb[0].mxu0 %v3187
      %v3429 = vpop.f32.mrb[0].mxu0
      %v3430 = vadd.f32 0.0, %v3429
      %v3431 = vpop.f32.mrb[0].mxu0
      %v3432 = vadd.f32 0.0, %v3431
      %3433 = vmatprep.mubr.f32.mxu0 0.0
      %3434 = vmatmul.mubr.f32.gmra.mrb[0].mxu0 %v3190
      %v3435 = vpop.f32.mrb[0].mxu0
      %v3436 = vadd.f32 0.0, %v3435
      %v3437 = vpop.f32.mrb[0].mxu0
      %v3438 = vadd.f32 0.0, %v3437
      %3439 = vmatprep.mubr.f32.mxu0 0.0
      %3440 = vmatmul.mubr.f32.gmra.mrb[0].mxu0 %v3193
      %v3441 = vpop.f32.mrb[0].mxu0
      %v3442 = vadd.f32 0.0, %v3441
      %v3443 = vpop.f32.mrb[0].mxu0
      %v3444 = vadd.f32 0.0, %v3443
      %3445 = vmatprep.mubr.f32.mxu0 0.0
      %3446 = vmatmul.mubr.f32.gmra.mrb[0].mxu0 %v3196
      %v3447 = vpop.f32.mrb[0].mxu0
      %v3448 = vadd.f32 0.0, %v3447
      %v3449 = vpop.f32.mrb[0].mxu0
      %v3450 = vadd.f32 0.0, %v3449
      %3451 = vmatprep.mubr.f32.mxu0 0.0
      %3452 = vmatmul.mubr.f32.gmra.mrb[0].mxu0 %v3199
      %v3453 = vpop.f32.mrb[0].mxu0
      %v3454 = vadd.f32 0.0, %v3453
      %v3455 = vpop.f32.mrb[0].mxu0
      %v3456 = vadd.f32 0.0, %v3455
      %3457 = vmatprep.mubr.f32.mxu0 0.0
      %3458 = vmatmul.mubr.f32.gmra.mrb[0].mxu0 %v3202
      %v3459 = vpop.f32.mrb[0].mxu0
      %v3460 = vadd.f32 0.0, %v3459
      %v3461 = vpop.f32.mrb[0].mxu0
      %v3462 = vadd.f32 0.0, %v3461
      %3463 = vmatprep.mubr.f32.mxu0 0.0
      %3464 = vmatmul.mubr.f32.gmra.mrb[0].mxu0 %v3205
      %v3465 = vpop.f32.mrb[0].mxu0
      %v3466 = vadd.f32 0.0, %v3465
      %v3467 = vpop.f32.mrb[0].mxu0
      %v3468 = vadd.f32 0.0, %v3467
      %3469 = vmatprep.mubr.f32.mxu0 0.0
      %3470 = vmatmul.mubr.f32.gmra.mrb[0].mxu0 %v3208
      %v3471 = vpop.f32.mrb[0].mxu0
      %v3472 = vadd.f32 0.0, %v3471
      %v3473 = vpop.f32.mrb[0].mxu0
      %v3474 = vadd.f32 0.0, %v3473
      %3475 = vmatprep.mubr.f32.mxu0 0.0
      %3476 = vmatmul.mubr.f32.gmra.mrb[0].mxu0 %v3211
      %v3477 = vpop.f32.mrb[0].mxu0
      %v3478 = vadd.f32 0.0, %v3477
      %v3479 = vpop.f32.mrb[0].mxu0
      %v3480 = vadd.f32 0.0, %v3479
      %3481 = vmatprep.mubr.f32.mxu0 0.0
      %3482 = vmatmul.mubr.f32.gmra.mrb[0].mxu0 %v3214
      %v3483 = vpop.f32.mrb[0].mxu0
      %v3484 = vadd.f32 0.0, %v3483
      %v3485 = vpop.f32.mrb[0].mxu0
      %v3486 = vadd.f32 0.0, %v3485
      %3487 = vmatprep.mubr.f32.mxu0 0.0
      %3488 = vmatmul.mubr.f32.gmra.mrb[0].mxu0 %v3217
      %v3489 = vpop.f32.mrb[0].mxu0
      %v3490 = vadd.f32 0.0, %v3489
      %v3491 = vpop.f32.mrb[0].mxu0
      %v3492 = vadd.f32 0.0, %v3491
      %3493 = vmatprep.mubr.f32.mxu0 0.0
      %3494 = vmatmul.mubr.f32.gmra.mrb[0].mxu0 %v3220
      %v3495 = vpop.f32.mrb[0].mxu0
      %v3496 = vadd.f32 0.0, %v3495
      %v3497 = vpop.f32.mrb[0].mxu0
      %v3498 = vadd.f32 0.0, %v3497
      %3499 = vmatprep.mubr.f32.mxu0 0.0
      %3500 = vmatmul.mubr.f32.gmra.mrb[0].mxu0 %v3223
      %v3501 = vpop.f32.mrb[0].mxu0
      %v3502 = vadd.f32 0.0, %v3501
      %v3503 = vpop.f32.mrb[0].mxu0
      %v3504 = vadd.f32 0.0, %v3503
      %3505 = vmatprep.mubr.f32.mxu0 0.0
      %3506 = vmatmul.mubr.f32.gmra.mrb[0].mxu0 %v3226
      %v3507 = vpop.f32.mrb[0].mxu0
      %v3508 = vadd.f32 0.0, %v3507
      %v3509 = vpop.f32.mrb[0].mxu0
      %v3510 = vadd.f32 0.0, %v3509
      %3511 = vmatprep.mubr.f32.mxu0 0.0
      %3512 = vmatmul.mubr.f32.gmra.mrb[0].mxu0 %v3229
      %v3513 = vpop.f32.mrb[0].mxu0
      %v3514 = vadd.f32 0.0, %v3513
      %v3515 = vpop.f32.mrb[0].mxu0
      %v3516 = vadd.f32 0.0, %v3515
      %3517 = vmatprep.mubr.f32.mxu0 0.0
      %3518 = vmatmul.mubr.f32.gmra.mrb[0].mxu0 %v3232
      %v3519 = vpop.f32.mrb[0].mxu0
      %v3520 = vadd.f32 0.0, %v3519
      %v3521 = vpop.f32.mrb[0].mxu0
      %v3522 = vadd.f32 0.0, %v3521
      %3523 = vmatprep.mubr.f32.mxu0 0.0
      %3524 = vmatmul.mubr.f32.gmra.mrb[0].mxu0 %v3235
      %v3525 = vpop.f32.mrb[0].mxu0
      %v3526 = vadd.f32 0.0, %v3525
      %v3527 = vpop.f32.mrb[0].mxu0
      %v3528 = vadd.f32 0.0, %v3527
      %3529 = vmatprep.mubr.f32.mxu0 0.0
      %3530 = vmatmul.mubr.f32.gmra.mrb[0].mxu0 %v3238
      %v3531 = vpop.f32.mrb[0].mxu0
      %v3532 = vadd.f32 0.0, %v3531
      %v3533 = vpop.f32.mrb[0].mxu0
      %v3534 = vadd.f32 0.0, %v3533
      %3535 = vmatprep.mubr.f32.mxu0 0.0
      %3536 = vmatmul.mubr.f32.gmra.mrb[0].mxu0 %v3241
      %v3537 = vpop.f32.mrb[0].mxu0
      %v3538 = vadd.f32 0.0, %v3537
      %v3539 = vpop.f32.mrb[0].mxu0
      %v3540 = vadd.f32 0.0, %v3539
      %3541 = vmatprep.mubr.f32.mxu0 0.0
      %3542 = vmatmul.mubr.f32.gmra.mrb[0].mxu0 %v3244
      %v3543 = vpop.f32.mrb[0].mxu0
      %v3544 = vadd.f32 0.0, %v3543
      %v3545 = vpop.f32.mrb[0].mxu0
      %v3546 = vadd.f32 0.0, %v3545
      %3547 = vmatprep.mubr.f32.mxu0 0.0
      %3548 = vmatmul.mubr.f32.gmra.mrb[0].mxu0 %v3247
      %v3549 = vpop.f32.mrb[0].mxu0
      %v3550 = vadd.f32 0.0, %v3549
      %v3551 = vpop.f32.mrb[0].mxu0
      %v3552 = vadd.f32 0.0, %v3551
      %3553 = vmatprep.mubr.f32.mxu0 0.0
      %3554 = vmatmul.mubr.f32.gmra.mrb[0].mxu0 %v3250
      %v3555 = vpop.f32.mrb[0].mxu0
      %v3556 = vadd.f32 0.0, %v3555
      %v3557 = vpop.f32.mrb[0].mxu0
      %v3558 = vadd.f32 0.0, %v3557
      %3559 = vmatprep.mubr.f32.mxu0 0.0
      %3560 = vmatmul.mubr.f32.gmra.mrb[0].mxu0 %v3253
      %v3561 = vpop.f32.mrb[0].mxu0
      %v3562 = vadd.f32 0.0, %v3561
      %v3563 = vpop.f32.mrb[0].mxu0
      %v3564 = vadd.f32 0.0, %v3563
      %3565 = vmatprep.mubr.f32.mxu0 0.0
      %3566 = vmatmul.mubr.f32.gmra.mrb[0].mxu0 %v3256
      %v3567 = vpop.f32.mrb[0].mxu0
      %v3568 = vadd.f32 0.0, %v3567
      %v3569 = vpop.f32.mrb[0].mxu0
      %v3570 = vadd.f32 0.0, %v3569
      %3571 = vmatprep.mubr.f32.mxu0 0.0
      %3572 = vmatmul.mubr.f32.gmra.mrb[0].mxu0 %v3259
      %v3573 = vpop.f32.mrb[0].mxu0
      %v3574 = vadd.f32 0.0, %v3573
      %v3575 = vpop.f32.mrb[0].mxu0
      %v3576 = vadd.f32 0.0, %v3575
      %3577 = vmatprep.mubr.f32.mxu0 0.0
      %3578 = vmatmul.mubr.f32.gmra.mrb[0].mxu0 %v3262
      %v3579 = vpop.f32.mrb[0].mxu0
      %v3580 = vadd.f32 0.0, %v3579
      %v3581 = vpop.f32.mrb[0].mxu0
      %v3582 = vadd.f32 0.0, %v3581
      %3583 = vmatprep.mubr.f32.mxu0 0.0
      %3584 = vmatmul.mubr.f32.gmra.mrb[0].mxu0 %v3265
      %v3585 = vpop.f32.mrb[0].mxu0
      %v3586 = vadd.f32 0.0, %v3585
      %v3587 = vpop.f32.mrb[0].mxu0
      %v3588 = vadd.f32 0.0, %v3587
      %3589 = vmatprep.mubr.f32.mxu0 0.0
      %3590 = vmatmul.mubr.f32.gmra.mrb[0].mxu0 %v3268
      %v3591 = vpop.f32.mrb[0].mxu0
      %v3592 = vadd.f32 0.0, %v3591
      %v3593 = vpop.f32.mrb[0].mxu0
      %v3594 = vadd.f32 0.0, %v3593
      %3595 = vmatprep.mubr.f32.mxu0 0.0
      %3596 = vmatmul.mubr.f32.gmra.mrb[0].mxu0 %v3271
      %v3597 = vpop.f32.mrb[0].mxu0
      %v3598 = vadd.f32 0.0, %v3597
      %v3599 = vpop.f32.mrb[0].mxu0
      %v3600 = vadd.f32 0.0, %v3599
      %3601 = vmatprep.mubr.f32.mxu0 0.0
      %3602 = vmatmul.mubr.f32.gmra.mrb[0].mxu0 %v3274
      %v3603 = vpop.f32.mrb[0].mxu0
      %v3604 = vadd.f32 0.0, %v3603
      %v3605 = vpop.f32.mrb[0].mxu0
      %v3606 = vadd.f32 0.0, %v3605
      %3607 = vmatprep.mubr.f32.mxu0 0.0
      %3608 = vmatmul.mubr.f32.gmra.mrb[0].mxu0 %v3277
      %v3609 = vpop.f32.mrb[0].mxu0
      %v3610 = vadd.f32 0.0, %v3609
      %v3611 = vpop.f32.mrb[0].mxu0
      %v3612 = vadd.f32 0.0, %v3611
      %3613 = vmatprep.mubr.f32.mxu0 0.0
      %3614 = vmatmul.mubr.f32.gmra.mrb[0].mxu0 %v3280
      %v3615 = vpop.f32.mrb[0].mxu0
      %v3616 = vadd.f32 0.0, %v3615
      %v3617 = vpop.f32.mrb[0].mxu0
      %v3618 = vadd.f32 0.0, %v3617
      %3619 = vmatprep.mubr.f32.mxu0 0.0
      %3620 = vmatmul.mubr.f32.gmra.mrb[0].mxu0 %v3283
      %v3621 = vpop.f32.mrb[0].mxu0
      %v3622 = vadd.f32 0.0, %v3621
      %v3623 = vpop.f32.mrb[0].mxu0
      %v3624 = vadd.f32 0.0, %v3623
      %3625 = vmatprep.mubr.f32.mxu0 0.0
      %3626 = vmatmul.mubr.f32.gmra.mrb[0].mxu0 %v3286
      %v3627 = vpop.f32.mrb[0].mxu0
      %v3628 = vadd.f32 0.0, %v3627
      %v3629 = vpop.f32.mrb[0].mxu0
      %v3630 = vadd.f32 0.0, %v3629
      %3631 = vmatprep.mubr.f32.mxu0 0.0
      %3632 = vmatmul.mubr.f32.gmra.mrb[0].mxu0 %v3289
      %v3633 = vpop.f32.mrb[0].mxu0
      %v3634 = vadd.f32 0.0, %v3633
      %v3635 = vpop.f32.mrb[0].mxu0
      %v3636 = vadd.f32 0.0, %v3635
      %3637 = vmatprep.mubr.f32.mxu0 0.0
      %3638 = vmatmul.mubr.f32.gmra.mrb[0].mxu0 %v3292
      %v3639 = vpop.f32.mrb[0].mxu0
      %v3640 = vadd.f32 0.0, %v3639
      %v3641 = vpop.f32.mrb[0].mxu0
      %v3642 = vadd.f32 0.0, %v3641
      %3643 = vmatprep.mubr.f32.mxu0 0.0
      %3644 = vmatmul.mubr.f32.gmra.mrb[0].mxu0 %v3295
      %v3645 = vpop.f32.mrb[0].mxu0
      %v3646 = vadd.f32 0.0, %v3645
      %v3647 = vpop.f32.mrb[0].mxu0
      %v3648 = vadd.f32 0.0, %v3647
      %3649 = vmatprep.mubr.f32.mxu0 0.0
      %3650 = vmatmul.mubr.f32.gmra.mrb[0].mxu0 %v3298
      %v3651 = vpop.f32.mrb[0].mxu0
      %v3652 = vadd.f32 0.0, %v3651
      %v3653 = vpop.f32.mrb[0].mxu0
      %v3654 = vadd.f32 0.0, %v3653
      %3655 = vmatprep.mubr.f32.mxu0 0.0
      %3656 = vmatmul.mubr.f32.gmra.mrb[0].mxu0 %v3301
      %v3657 = vpop.f32.mrb[0].mxu0
      %v3658 = vadd.f32 0.0, %v3657
      %v3659 = vpop.f32.mrb[0].mxu0
      %v3660 = vadd.f32 0.0, %v3659
      %3661 = vdwg.mxu0
      %3662 = vmatprep.subr.mxu0 %v364
      %3663 = vmatpush1.msra.mxu0 %v363
      %3664 = vmatprep.subr.mxu0 %v388
      %3665 = vmatpush1.msra.mxu0 %v387
      %3666 = vmatprep.subr.mxu0 0.0
      %3667 = vmatpush1.msra.mxu0 0.0
      %3668 = vmatprep.subr.mxu0 0.0
      %3669 = vmatpush1.msra.mxu0 0.0
      %3670 = vmatprep.subr.mxu0 0.0
      %3671 = vmatpush1.msra.mxu0 0.0
      %3672 = vmatprep.subr.mxu0 0.0
      %3673 = vmatpush1.msra.mxu0 0.0
      %3674 = vmatprep.subr.mxu0 0.0
      %3675 = vmatpush1.msra.mxu0 0.0
      %3676 = vmatprep.subr.mxu0 0.0
      %3677 = vmatpush1.msra.mxu0 0.0
      %3678 = vmatprep.subr.mxu0 0.0
      %3679 = vmatpush1.msra.mxu0 0.0
      %3680 = vmatprep.subr.mxu0 0.0
      %3681 = vmatpush1.msra.mxu0 0.0
      %3682 = vmatprep.subr.mxu0 0.0
      %3683 = vmatpush1.msra.mxu0 0.0
      %3684 = vmatprep.subr.mxu0 0.0
      %3685 = vmatpush1.msra.mxu0 0.0
      %3686 = vmatprep.subr.mxu0 0.0
      %3687 = vmatpush1.msra.mxu0 0.0
      %3688 = vmatprep.subr.mxu0 0.0
      %3689 = vmatpush1.msra.mxu0 0.0
      %3690 = vmatprep.subr.mxu0 0.0
      %3691 = vmatpush1.msra.mxu0 0.0
      %3692 = vmatprep.subr.mxu0 0.0
      %3693 = vmatpush1.msra.mxu0 0.0
      %3694 = vmatprep.subr.mxu0 0.0
      %3695 = vmatpush1.msra.mxu0 0.0
      %3696 = vmatprep.subr.mxu0 0.0
      %3697 = vmatpush1.msra.mxu0 0.0
      %3698 = vmatprep.subr.mxu0 0.0
      %3699 = vmatpush1.msra.mxu0 0.0
      %3700 = vmatprep.subr.mxu0 0.0
      %3701 = vmatpush1.msra.mxu0 0.0
      %3702 = vmatprep.subr.mxu0 0.0
      %3703 = vmatpush1.msra.mxu0 0.0
      %3704 = vmatprep.subr.mxu0 0.0
      %3705 = vmatpush1.msra.mxu0 0.0
      %3706 = vmatprep.subr.mxu0 0.0
      %3707 = vmatpush1.msra.mxu0 0.0
      %3708 = vmatprep.subr.mxu0 0.0
      %3709 = vmatpush1.msra.mxu0 0.0
      %3710 = vmatprep.subr.mxu0 0.0
      %3711 = vmatpush1.msra.mxu0 0.0
      %3712 = vmatprep.subr.mxu0 0.0
      %3713 = vmatpush1.msra.mxu0 0.0
      %3714 = vmatprep.subr.mxu0 0.0
      %3715 = vmatpush1.msra.mxu0 0.0
      %3716 = vmatprep.subr.mxu0 0.0
      %3717 = vmatpush1.msra.mxu0 0.0
      %3718 = vmatprep.subr.mxu0 0.0
      %3719 = vmatpush1.msra.mxu0 0.0
      %3720 = vmatprep.subr.mxu0 0.0
      %3721 = vmatpush1.msra.mxu0 0.0
      %3722 = vmatprep.subr.mxu0 0.0
      %3723 = vmatpush1.msra.mxu0 0.0
      %3724 = vmatprep.subr.mxu0 0.0
      %3725 = vmatpush1.msra.mxu0 0.0
      %3726 = vmatprep.mubr.f32.mxu0 0.0
      %3727 = vmatmul.mubr.f32.gmra.mrb[0].mxu0 %v3157
      %v3728 = vpop.f32.mrb[0].mxu0
      %v3729 = vadd.f32 0.0, %v3728
      %v3730 = vpop.f32.mrb[0].mxu0
      %v3731 = vadd.f32 0.0, %v3730
      %3732 = vmatprep.mubr.f32.mxu0 0.0
      %3733 = vmatmul.mubr.f32.gmra.mrb[0].mxu0 %v3160
      %v3734 = vpop.f32.mrb[0].mxu0
      %v3735 = vadd.f32 0.0, %v3734
      %v3736 = vpop.f32.mrb[0].mxu0
      %v3737 = vadd.f32 0.0, %v3736
      %3738 = vmatprep.mubr.f32.mxu0 0.0
      %3739 = vmatmul.mubr.f32.gmra.mrb[0].mxu0 %v3163
      %v3740 = vpop.f32.mrb[0].mxu0
      %v3741 = vadd.f32 0.0, %v3740
      %v3742 = vpop.f32.mrb[0].mxu0
      %v3743 = vadd.f32 0.0, %v3742
      %3744 = vmatprep.mubr.f32.mxu0 0.0
      %3745 = vmatmul.mubr.f32.gmra.mrb[0].mxu0 %v3166
      %v3746 = vpop.f32.mrb[0].mxu0
      %v3747 = vadd.f32 0.0, %v3746
      %v3748 = vpop.f32.mrb[0].mxu0
      %v3749 = vadd.f32 0.0, %v3748
      %3750 = vmatprep.mubr.f32.mxu0 0.0
      %3751 = vmatmul.mubr.f32.gmra.mrb[0].mxu0 %v3169
      %v3752 = vpop.f32.mrb[0].mxu0
      %v3753 = vadd.f32 0.0, %v3752
      %v3754 = vpop.f32.mrb[0].mxu0
      %v3755 = vadd.f32 0.0, %v3754
      %3756 = vmatprep.mubr.f32.mxu0 0.0
      %3757 = vmatmul.mubr.f32.gmra.mrb[0].mxu0 %v3172
      %v3758 = vpop.f32.mrb[0].mxu0
      %v3759 = vadd.f32 0.0, %v3758
      %v3760 = vpop.f32.mrb[0].mxu0
      %v3761 = vadd.f32 0.0, %v3760
      %3762 = vmatprep.mubr.f32.mxu0 0.0
      %3763 = vmatmul.mubr.f32.gmra.mrb[0].mxu0 %v3175
      %v3764 = vpop.f32.mrb[0].mxu0
      %v3765 = vadd.f32 0.0, %v3764
      %v3766 = vpop.f32.mrb[0].mxu0
      %v3767 = vadd.f32 0.0, %v3766
      %3768 = vmatprep.mubr.f32.mxu0 0.0
      %3769 = vmatmul.mubr.f32.gmra.mrb[0].mxu0 %v3178
      %v3770 = vpop.f32.mrb[0].mxu0
      %v3771 = vadd.f32 0.0, %v3770
      %v3772 = vpop.f32.mrb[0].mxu0
      %v3773 = vadd.f32 0.0, %v3772
      %3774 = vmatprep.mubr.f32.mxu0 0.0
      %3775 = vmatmul.mubr.f32.gmra.mrb[0].mxu0 %v3181
      %v3776 = vpop.f32.mrb[0].mxu0
      %v3777 = vadd.f32 0.0, %v3776
      %v3778 = vpop.f32.mrb[0].mxu0
      %v3779 = vadd.f32 0.0, %v3778
      %3780 = vmatprep.mubr.f32.mxu0 0.0
      %3781 = vmatmul.mubr.f32.gmra.mrb[0].mxu0 %v3184
      %v3782 = vpop.f32.mrb[0].mxu0
      %v3783 = vadd.f32 0.0, %v3782
      %v3784 = vpop.f32.mrb[0].mxu0
      %v3785 = vadd.f32 0.0, %v3784
      %3786 = vmatprep.mubr.f32.mxu0 0.0
      %3787 = vmatmul.mubr.f32.gmra.mrb[0].mxu0 %v3187
      %v3788 = vpop.f32.mrb[0].mxu0
      %v3789 = vadd.f32 0.0, %v3788
      %v3790 = vpop.f32.mrb[0].mxu0
      %v3791 = vadd.f32 0.0, %v3790
      %3792 = vmatprep.mubr.f32.mxu0 0.0
      %3793 = vmatmul.mubr.f32.gmra.mrb[0].mxu0 %v3190
      %v3794 = vpop.f32.mrb[0].mxu0
      %v3795 = vadd.f32 0.0, %v3794
      %v3796 = vpop.f32.mrb[0].mxu0
      %v3797 = vadd.f32 0.0, %v3796
      %3798 = vmatprep.mubr.f32.mxu0 0.0
      %3799 = vmatmul.mubr.f32.gmra.mrb[0].mxu0 %v3193
      %v3800 = vpop.f32.mrb[0].mxu0
      %v3801 = vadd.f32 0.0, %v3800
      %v3802 = vpop.f32.mrb[0].mxu0
      %v3803 = vadd.f32 0.0, %v3802
      %3804 = vmatprep.mubr.f32.mxu0 0.0
      %3805 = vmatmul.mubr.f32.gmra.mrb[0].mxu0 %v3196
      %v3806 = vpop.f32.mrb[0].mxu0
      %v3807 = vadd.f32 0.0, %v3806
      %v3808 = vpop.f32.mrb[0].mxu0
      %v3809 = vadd.f32 0.0, %v3808
      %3810 = vmatprep.mubr.f32.mxu0 0.0
      %3811 = vmatmul.mubr.f32.gmra.mrb[0].mxu0 %v3199
      %v3812 = vpop.f32.mrb[0].mxu0
      %v3813 = vadd.f32 0.0, %v3812
      %v3814 = vpop.f32.mrb[0].mxu0
      %v3815 = vadd.f32 0.0, %v3814
      %3816 = vmatprep.mubr.f32.mxu0 0.0
      %3817 = vmatmul.mubr.f32.gmra.mrb[0].mxu0 %v3202
      %v3818 = vpop.f32.mrb[0].mxu0
      %v3819 = vadd.f32 0.0, %v3818
      %v3820 = vpop.f32.mrb[0].mxu0
      %v3821 = vadd.f32 0.0, %v3820
      %3822 = vmatprep.mubr.f32.mxu0 0.0
      %3823 = vmatmul.mubr.f32.gmra.mrb[0].mxu0 %v3205
      %v3824 = vpop.f32.mrb[0].mxu0
      %v3825 = vadd.f32 0.0, %v3824
      %v3826 = vpop.f32.mrb[0].mxu0
      %v3827 = vadd.f32 0.0, %v3826
      %3828 = vmatprep.mubr.f32.mxu0 0.0
      %3829 = vmatmul.mubr.f32.gmra.mrb[0].mxu0 %v3208
      %v3830 = vpop.f32.mrb[0].mxu0
      %v3831 = vadd.f32 0.0, %v3830
      %v3832 = vpop.f32.mrb[0].mxu0
      %v3833 = vadd.f32 0.0, %v3832
      %3834 = vmatprep.mubr.f32.mxu0 0.0
      %3835 = vmatmul.mubr.f32.gmra.mrb[0].mxu0 %v3211
      %v3836 = vpop.f32.mrb[0].mxu0
      %v3837 = vadd.f32 0.0, %v3836
      %v3838 = vpop.f32.mrb[0].mxu0
      %v3839 = vadd.f32 0.0, %v3838
      %3840 = vmatprep.mubr.f32.mxu0 0.0
      %3841 = vmatmul.mubr.f32.gmra.mrb[0].mxu0 %v3214
      %v3842 = vpop.f32.mrb[0].mxu0
      %v3843 = vadd.f32 0.0, %v3842
      %v3844 = vpop.f32.mrb[0].mxu0
      %v3845 = vadd.f32 0.0, %v3844
      %3846 = vmatprep.mubr.f32.mxu0 0.0
      %3847 = vmatmul.mubr.f32.gmra.mrb[0].mxu0 %v3217
      %v3848 = vpop.f32.mrb[0].mxu0
      %v3849 = vadd.f32 0.0, %v3848
      %v3850 = vpop.f32.mrb[0].mxu0
      %v3851 = vadd.f32 0.0, %v3850
      %3852 = vmatprep.mubr.f32.mxu0 0.0
      %3853 = vmatmul.mubr.f32.gmra.mrb[0].mxu0 %v3220
      %v3854 = vpop.f32.mrb[0].mxu0
      %v3855 = vadd.f32 0.0, %v3854
      %v3856 = vpop.f32.mrb[0].mxu0
      %v3857 = vadd.f32 0.0, %v3856
      %3858 = vmatprep.mubr.f32.mxu0 0.0
      %3859 = vmatmul.mubr.f32.gmra.mrb[0].mxu0 %v3223
      %v3860 = vpop.f32.mrb[0].mxu0
      %v3861 = vadd.f32 0.0, %v3860
      %v3862 = vpop.f32.mrb[0].mxu0
      %v3863 = vadd.f32 0.0, %v3862
      %3864 = vmatprep.mubr.f32.mxu0 0.0
      %3865 = vmatmul.mubr.f32.gmra.mrb[0].mxu0 %v3226
      %v3866 = vpop.f32.mrb[0].mxu0
      %v3867 = vadd.f32 0.0, %v3866
      %v3868 = vpop.f32.mrb[0].mxu0
      %v3869 = vadd.f32 0.0, %v3868
      %3870 = vmatprep.mubr.f32.mxu0 0.0
      %3871 = vmatmul.mubr.f32.gmra.mrb[0].mxu0 %v3229
      %v3872 = vpop.f32.mrb[0].mxu0
      %v3873 = vadd.f32 0.0, %v3872
      %v3874 = vpop.f32.mrb[0].mxu0
      %v3875 = vadd.f32 0.0, %v3874
      %3876 = vmatprep.mubr.f32.mxu0 0.0
      %3877 = vmatmul.mubr.f32.gmra.mrb[0].mxu0 %v3232
      %v3878 = vpop.f32.mrb[0].mxu0
      %v3879 = vadd.f32 0.0, %v3878
      %v3880 = vpop.f32.mrb[0].mxu0
      %v3881 = vadd.f32 0.0, %v3880
      %3882 = vmatprep.mubr.f32.mxu0 0.0
      %3883 = vmatmul.mubr.f32.gmra.mrb[0].mxu0 %v3235
      %v3884 = vpop.f32.mrb[0].mxu0
      %v3885 = vadd.f32 0.0, %v3884
      %v3886 = vpop.f32.mrb[0].mxu0
      %v3887 = vadd.f32 0.0, %v3886
      %3888 = vmatprep.mubr.f32.mxu0 0.0
      %3889 = vmatmul.mubr.f32.gmra.mrb[0].mxu0 %v3238
      %v3890 = vpop.f32.mrb[0].mxu0
      %v3891 = vadd.f32 0.0, %v3890
      %v3892 = vpop.f32.mrb[0].mxu0
      %v3893 = vadd.f32 0.0, %v3892
      %3894 = vmatprep.mubr.f32.mxu0 0.0
      %3895 = vmatmul.mubr.f32.gmra.mrb[0].mxu0 %v3241
      %v3896 = vpop.f32.mrb[0].mxu0
      %v3897 = vadd.f32 0.0, %v3896
      %v3898 = vpop.f32.mrb[0].mxu0
      %v3899 = vadd.f32 0.0, %v3898
      %3900 = vmatprep.mubr.f32.mxu0 0.0
      %3901 = vmatmul.mubr.f32.gmra.mrb[0].mxu0 %v3244
      %v3902 = vpop.f32.mrb[0].mxu0
      %v3903 = vadd.f32 0.0, %v3902
      %v3904 = vpop.f32.mrb[0].mxu0
      %v3905 = vadd.f32 0.0, %v3904
      %3906 = vmatprep.mubr.f32.mxu0 0.0
      %3907 = vmatmul.mubr.f32.gmra.mrb[0].mxu0 %v3247
      %v3908 = vpop.f32.mrb[0].mxu0
      %v3909 = vadd.f32 0.0, %v3908
      %v3910 = vpop.f32.mrb[0].mxu0
      %v3911 = vadd.f32 0.0, %v3910
      %3912 = vmatprep.mubr.f32.mxu0 0.0
      %3913 = vmatmul.mubr.f32.gmra.mrb[0].mxu0 %v3250
      %v3914 = vpop.f32.mrb[0].mxu0
      %v3915 = vadd.f32 0.0, %v3914
      %v3916 = vpop.f32.mrb[0].mxu0
      %v3917 = vadd.f32 0.0, %v3916
      %3918 = vmatprep.mubr.f32.mxu0 0.0
      %3919 = vmatmul.mubr.f32.gmra.mrb[0].mxu0 %v3253
      %v3920 = vpop.f32.mrb[0].mxu0
      %v3921 = vadd.f32 0.0, %v3920
      %v3922 = vpop.f32.mrb[0].mxu0
      %v3923 = vadd.f32 0.0, %v3922
      %3924 = vmatprep.mubr.f32.mxu0 0.0
      %3925 = vmatmul.mubr.f32.gmra.mrb[0].mxu0 %v3256
      %v3926 = vpop.f32.mrb[0].mxu0
      %v3927 = vadd.f32 0.0, %v3926
      %v3928 = vpop.f32.mrb[0].mxu0
      %v3929 = vadd.f32 0.0, %v3928
      %3930 = vmatprep.mubr.f32.mxu0 0.0
      %3931 = vmatmul.mubr.f32.gmra.mrb[0].mxu0 %v3259
      %v3932 = vpop.f32.mrb[0].mxu0
      %v3933 = vadd.f32 0.0, %v3932
      %v3934 = vpop.f32.mrb[0].mxu0
      %v3935 = vadd.f32 0.0, %v3934
      %3936 = vmatprep.mubr.f32.mxu0 0.0
      %3937 = vmatmul.mubr.f32.gmra.mrb[0].mxu0 %v3262
      %v3938 = vpop.f32.mrb[0].mxu0
      %v3939 = vadd.f32 0.0, %v3938
      %v3940 = vpop.f32.mrb[0].mxu0
      %v3941 = vadd.f32 0.0, %v3940
      %3942 = vmatprep.mubr.f32.mxu0 0.0
      %3943 = vmatmul.mubr.f32.gmra.mrb[0].mxu0 %v3265
      %v3944 = vpop.f32.mrb[0].mxu0
      %v3945 = vadd.f32 0.0, %v3944
      %v3946 = vpop.f32.mrb[0].mxu0
      %v3947 = vadd.f32 0.0, %v3946
      %3948 = vmatprep.mubr.f32.mxu0 0.0
      %3949 = vmatmul.mubr.f32.gmra.mrb[0].mxu0 %v3268
      %v3950 = vpop.f32.mrb[0].mxu0
      %v3951 = vadd.f32 0.0, %v3950
      %v3952 = vpop.f32.mrb[0].mxu0
      %v3953 = vadd.f32 0.0, %v3952
      %3954 = vmatprep.mubr.f32.mxu0 0.0
      %3955 = vmatmul.mubr.f32.gmra.mrb[0].mxu0 %v3271
      %v3956 = vpop.f32.mrb[0].mxu0
      %v3957 = vadd.f32 0.0, %v3956
      %v3958 = vpop.f32.mrb[0].mxu0
      %v3959 = vadd.f32 0.0, %v3958
      %3960 = vmatprep.mubr.f32.mxu0 0.0
      %3961 = vmatmul.mubr.f32.gmra.mrb[0].mxu0 %v3274
      %v3962 = vpop.f32.mrb[0].mxu0
      %v3963 = vadd.f32 0.0, %v3962
      %v3964 = vpop.f32.mrb[0].mxu0
      %v3965 = vadd.f32 0.0, %v3964
      %3966 = vmatprep.mubr.f32.mxu0 0.0
      %3967 = vmatmul.mubr.f32.gmra.mrb[0].mxu0 %v3277
      %v3968 = vpop.f32.mrb[0].mxu0
      %v3969 = vadd.f32 0.0, %v3968
      %v3970 = vpop.f32.mrb[0].mxu0
      %v3971 = vadd.f32 0.0, %v3970
      %3972 = vmatprep.mubr.f32.mxu0 0.0
      %3973 = vmatmul.mubr.f32.gmra.mrb[0].mxu0 %v3280
      %v3974 = vpop.f32.mrb[0].mxu0
      %v3975 = vadd.f32 0.0, %v3974
      %v3976 = vpop.f32.mrb[0].mxu0
      %v3977 = vadd.f32 0.0, %v3976
      %3978 = vmatprep.mubr.f32.mxu0 0.0
      %3979 = vmatmul.mubr.f32.gmra.mrb[0].mxu0 %v3283
      %v3980 = vpop.f32.mrb[0].mxu0
      %v3981 = vadd.f32 0.0, %v3980
      %v3982 = vpop.f32.mrb[0].mxu0
      %v3983 = vadd.f32 0.0, %v3982
      %3984 = vmatprep.mubr.f32.mxu0 0.0
      %3985 = vmatmul.mubr.f32.gmra.mrb[0].mxu0 %v3286
      %v3986 = vpop.f32.mrb[0].mxu0
      %v3987 = vadd.f32 0.0, %v3986
      %v3988 = vpop.f32.mrb[0].mxu0
      %v3989 = vadd.f32 0.0, %v3988
      %3990 = vmatprep.mubr.f32.mxu0 0.0
      %3991 = vmatmul.mubr.f32.gmra.mrb[0].mxu0 %v3289
      %v3992 = vpop.f32.mrb[0].mxu0
      %v3993 = vadd.f32 0.0, %v3992
      %v3994 = vpop.f32.mrb[0].mxu0
      %v3995 = vadd.f32 0.0, %v3994
      %3996 = vmatprep.mubr.f32.mxu0 0.0
      %3997 = vmatmul.mubr.f32.gmra.mrb[0].mxu0 %v3292
      %v3998 = vpop.f32.mrb[0].mxu0
      %v3999 = vadd.f32 0.0, %v3998
      %v4000 = vpop.f32.mrb[0].mxu0
      %v4001 = vadd.f32 0.0, %v4000
      %4002 = vmatprep.mubr.f32.mxu0 0.0
      %4003 = vmatmul.mubr.f32.gmra.mrb[0].mxu0 %v3295
      %v4004 = vpop.f32.mrb[0].mxu0
      %v4005 = vadd.f32 0.0, %v4004
      %v4006 = vpop.f32.mrb[0].mxu0
      %v4007 = vadd.f32 0.0, %v4006
      %4008 = vmatprep.mubr.f32.mxu0 0.0
      %4009 = vmatmul.mubr.f32.gmra.mrb[0].mxu0 %v3298
      %v4010 = vpop.f32.mrb[0].mxu0
      %v4011 = vadd.f32 0.0, %v4010
      %v4012 = vpop.f32.mrb[0].mxu0
      %v4013 = vadd.f32 0.0, %v4012
      %4014 = vmatprep.mubr.f32.mxu0 0.0
      %4015 = vmatmul.mubr.f32.gmra.mrb[0].mxu0 %v3301
      %v4016 = vpop.f32.mrb[0].mxu0
      %v4017 = vadd.f32 0.0, %v4016
      %v4018 = vpop.f32.mrb[0].mxu0
      %v4019 = vadd.f32 0.0, %v4018
      %4020 = vdwg.mxu0
      %4021 = vmatprep.subr.mxu0 %v366
      %4022 = vmatpush1.msra.mxu0 %v365
      %4023 = vmatprep.subr.mxu0 %v390
      %4024 = vmatpush1.msra.mxu0 %v389
      %4025 = vmatprep.subr.mxu0 0.0
      %4026 = vmatpush1.msra.mxu0 0.0
      %4027 = vmatprep.subr.mxu0 0.0
      %4028 = vmatpush1.msra.mxu0 0.0
      %4029 = vmatprep.subr.mxu0 0.0
      %4030 = vmatpush1.msra.mxu0 0.0
      %4031 = vmatprep.subr.mxu0 0.0
      %4032 = vmatpush1.msra.mxu0 0.0
      %4033 = vmatprep.subr.mxu0 0.0
      %4034 = vmatpush1.msra.mxu0 0.0
      %4035 = vmatprep.subr.mxu0 0.0
      %4036 = vmatpush1.msra.mxu0 0.0
      %4037 = vmatprep.subr.mxu0 0.0
      %4038 = vmatpush1.msra.mxu0 0.0
      %4039 = vmatprep.subr.mxu0 0.0
      %4040 = vmatpush1.msra.mxu0 0.0
      %4041 = vmatprep.subr.mxu0 0.0
      %4042 = vmatpush1.msra.mxu0 0.0
      %4043 = vmatprep.subr.mxu0 0.0
      %4044 = vmatpush1.msra.mxu0 0.0
      %4045 = vmatprep.subr.mxu0 0.0
      %4046 = vmatpush1.msra.mxu0 0.0
      %4047 = vmatprep.subr.mxu0 0.0
      %4048 = vmatpush1.msra.mxu0 0.0
      %4049 = vmatprep.subr.mxu0 0.0
      %4050 = vmatpush1.msra.mxu0 0.0
      %4051 = vmatprep.subr.mxu0 0.0
      %4052 = vmatpush1.msra.mxu0 0.0
      %4053 = vmatprep.subr.mxu0 0.0
      %4054 = vmatpush1.msra.mxu0 0.0
      %4055 = vmatprep.subr.mxu0 0.0
      %4056 = vmatpush1.msra.mxu0 0.0
      %4057 = vmatprep.subr.mxu0 0.0
      %4058 = vmatpush1.msra.mxu0 0.0
      %4059 = vmatprep.subr.mxu0 0.0
      %4060 = vmatpush1.msra.mxu0 0.0
      %4061 = vmatprep.subr.mxu0 0.0
      %4062 = vmatpush1.msra.mxu0 0.0
      %4063 = vmatprep.subr.mxu0 0.0
      %4064 = vmatpush1.msra.mxu0 0.0
      %4065 = vmatprep.subr.mxu0 0.0
      %4066 = vmatpush1.msra.mxu0 0.0
      %4067 = vmatprep.subr.mxu0 0.0
      %4068 = vmatpush1.msra.mxu0 0.0
      %4069 = vmatprep.subr.mxu0 0.0
      %4070 = vmatpush1.msra.mxu0 0.0
      %4071 = vmatprep.subr.mxu0 0.0
      %4072 = vmatpush1.msra.mxu0 0.0
      %4073 = vmatprep.subr.mxu0 0.0
      %4074 = vmatpush1.msra.mxu0 0.0
      %4075 = vmatprep.subr.mxu0 0.0
      %4076 = vmatpush1.msra.mxu0 0.0
      %4077 = vmatprep.subr.mxu0 0.0
      %4078 = vmatpush1.msra.mxu0 0.0
      %4079 = vmatprep.subr.mxu0 0.0
      %4080 = vmatpush1.msra.mxu0 0.0
      %4081 = vmatprep.subr.mxu0 0.0
      %4082 = vmatpush1.msra.mxu0 0.0
      %4083 = vmatprep.subr.mxu0 0.0
      %4084 = vmatpush1.msra.mxu0 0.0
      %4085 = vmatprep.mubr.f32.mxu0 0.0
      %4086 = vmatmul.mubr.f32.gmra.mrb[0].mxu0 %v3157
      %v4087 = vpop.f32.mrb[0].mxu0
      %v4088 = vadd.f32 0.0, %v4087
      %v4089 = vpop.f32.mrb[0].mxu0
      %v4090 = vadd.f32 0.0, %v4089
      %4091 = vmatprep.mubr.f32.mxu0 0.0
      %4092 = vmatmul.mubr.f32.gmra.mrb[0].mxu0 %v3160
      %v4093 = vpop.f32.mrb[0].mxu0
      %v4094 = vadd.f32 0.0, %v4093
      %v4095 = vpop.f32.mrb[0].mxu0
      %v4096 = vadd.f32 0.0, %v4095
      %4097 = vmatprep.mubr.f32.mxu0 0.0
      %4098 = vmatmul.mubr.f32.gmra.mrb[0].mxu0 %v3163
      %v4099 = vpop.f32.mrb[0].mxu0
      %v4100 = vadd.f32 0.0, %v4099
      %v4101 = vpop.f32.mrb[0].mxu0
      %v4102 = vadd.f32 0.0, %v4101
      %4103 = vmatprep.mubr.f32.mxu0 0.0
      %4104 = vmatmul.mubr.f32.gmra.mrb[0].mxu0 %v3166
      %v4105 = vpop.f32.mrb[0].mxu0
      %v4106 = vadd.f32 0.0, %v4105
      %v4107 = vpop.f32.mrb[0].mxu0
      %v4108 = vadd.f32 0.0, %v4107
      %4109 = vmatprep.mubr.f32.mxu0 0.0
      %4110 = vmatmul.mubr.f32.gmra.mrb[0].mxu0 %v3169
      %v4111 = vpop.f32.mrb[0].mxu0
      %v4112 = vadd.f32 0.0, %v4111
      %v4113 = vpop.f32.mrb[0].mxu0
      %v4114 = vadd.f32 0.0, %v4113
      %4115 = vmatprep.mubr.f32.mxu0 0.0
      %4116 = vmatmul.mubr.f32.gmra.mrb[0].mxu0 %v3172
      %v4117 = vpop.f32.mrb[0].mxu0
      %v4118 = vadd.f32 0.0, %v4117
      %v4119 = vpop.f32.mrb[0].mxu0
      %v4120 = vadd.f32 0.0, %v4119
      %4121 = vmatprep.mubr.f32.mxu0 0.0
      %4122 = vmatmul.mubr.f32.gmra.mrb[0].mxu0 %v3175
      %v4123 = vpop.f32.mrb[0].mxu0
      %v4124 = vadd.f32 0.0, %v4123
      %v4125 = vpop.f32.mrb[0].mxu0
      %v4126 = vadd.f32 0.0, %v4125
      %4127 = vmatprep.mubr.f32.mxu0 0.0
      %4128 = vmatmul.mubr.f32.gmra.mrb[0].mxu0 %v3178
      %v4129 = vpop.f32.mrb[0].mxu0
      %v4130 = vadd.f32 0.0, %v4129
      %v4131 = vpop.f32.mrb[0].mxu0
      %v4132 = vadd.f32 0.0, %v4131
      %4133 = vmatprep.mubr.f32.mxu0 0.0
      %4134 = vmatmul.mubr.f32.gmra.mrb[0].mxu0 %v3181
      %v4135 = vpop.f32.mrb[0].mxu0
      %v4136 = vadd.f32 0.0, %v4135
      %v4137 = vpop.f32.mrb[0].mxu0
      %v4138 = vadd.f32 0.0, %v4137
      %4139 = vmatprep.mubr.f32.mxu0 0.0
      %4140 = vmatmul.mubr.f32.gmra.mrb[0].mxu0 %v3184
      %v4141 = vpop.f32.mrb[0].mxu0
      %v4142 = vadd.f32 0.0, %v4141
      %v4143 = vpop.f32.mrb[0].mxu0
      %v4144 = vadd.f32 0.0, %v4143
      %4145 = vmatprep.mubr.f32.mxu0 0.0
      %4146 = vmatmul.mubr.f32.gmra.mrb[0].mxu0 %v3187
      %v4147 = vpop.f32.mrb[0].mxu0
      %v4148 = vadd.f32 0.0, %v4147
      %v4149 = vpop.f32.mrb[0].mxu0
      %v4150 = vadd.f32 0.0, %v4149
      %4151 = vmatprep.mubr.f32.mxu0 0.0
      %4152 = vmatmul.mubr.f32.gmra.mrb[0].mxu0 %v3190
      %v4153 = vpop.f32.mrb[0].mxu0
      %v4154 = vadd.f32 0.0, %v4153
      %v4155 = vpop.f32.mrb[0].mxu0
      %v4156 = vadd.f32 0.0, %v4155
      %4157 = vmatprep.mubr.f32.mxu0 0.0
      %4158 = vmatmul.mubr.f32.gmra.mrb[0].mxu0 %v3193
      %v4159 = vpop.f32.mrb[0].mxu0
      %v4160 = vadd.f32 0.0, %v4159
      %v4161 = vpop.f32.mrb[0].mxu0
      %v4162 = vadd.f32 0.0, %v4161
      %4163 = vmatprep.mubr.f32.mxu0 0.0
      %4164 = vmatmul.mubr.f32.gmra.mrb[0].mxu0 %v3196
      %v4165 = vpop.f32.mrb[0].mxu0
      %v4166 = vadd.f32 0.0, %v4165
      %v4167 = vpop.f32.mrb[0].mxu0
      %v4168 = vadd.f32 0.0, %v4167
      %4169 = vmatprep.mubr.f32.mxu0 0.0
      %4170 = vmatmul.mubr.f32.gmra.mrb[0].mxu0 %v3199
      %v4171 = vpop.f32.mrb[0].mxu0
      %v4172 = vadd.f32 0.0, %v4171
      %v4173 = vpop.f32.mrb[0].mxu0
      %v4174 = vadd.f32 0.0, %v4173
      %4175 = vmatprep.mubr.f32.mxu0 0.0
      %4176 = vmatmul.mubr.f32.gmra.mrb[0].mxu0 %v3202
      %v4177 = vpop.f32.mrb[0].mxu0
      %v4178 = vadd.f32 0.0, %v4177
      %v4179 = vpop.f32.mrb[0].mxu0
      %v4180 = vadd.f32 0.0, %v4179
      %4181 = vmatprep.mubr.f32.mxu0 0.0
      %4182 = vmatmul.mubr.f32.gmra.mrb[0].mxu0 %v3205
      %v4183 = vpop.f32.mrb[0].mxu0
      %v4184 = vadd.f32 0.0, %v4183
      %v4185 = vpop.f32.mrb[0].mxu0
      %v4186 = vadd.f32 0.0, %v4185
      %4187 = vmatprep.mubr.f32.mxu0 0.0
      %4188 = vmatmul.mubr.f32.gmra.mrb[0].mxu0 %v3208
      %v4189 = vpop.f32.mrb[0].mxu0
      %v4190 = vadd.f32 0.0, %v4189
      %v4191 = vpop.f32.mrb[0].mxu0
      %v4192 = vadd.f32 0.0, %v4191
      %4193 = vmatprep.mubr.f32.mxu0 0.0
      %4194 = vmatmul.mubr.f32.gmra.mrb[0].mxu0 %v3211
      %v4195 = vpop.f32.mrb[0].mxu0
      %v4196 = vadd.f32 0.0, %v4195
      %v4197 = vpop.f32.mrb[0].mxu0
      %v4198 = vadd.f32 0.0, %v4197
      %4199 = vmatprep.mubr.f32.mxu0 0.0
      %4200 = vmatmul.mubr.f32.gmra.mrb[0].mxu0 %v3214
      %v4201 = vpop.f32.mrb[0].mxu0
      %v4202 = vadd.f32 0.0, %v4201
      %v4203 = vpop.f32.mrb[0].mxu0
      %v4204 = vadd.f32 0.0, %v4203
      %4205 = vmatprep.mubr.f32.mxu0 0.0
      %4206 = vmatmul.mubr.f32.gmra.mrb[0].mxu0 %v3217
      %v4207 = vpop.f32.mrb[0].mxu0
      %v4208 = vadd.f32 0.0, %v4207
      %v4209 = vpop.f32.mrb[0].mxu0
      %v4210 = vadd.f32 0.0, %v4209
      %4211 = vmatprep.mubr.f32.mxu0 0.0
      %4212 = vmatmul.mubr.f32.gmra.mrb[0].mxu0 %v3220
      %v4213 = vpop.f32.mrb[0].mxu0
      %v4214 = vadd.f32 0.0, %v4213
      %v4215 = vpop.f32.mrb[0].mxu0
      %v4216 = vadd.f32 0.0, %v4215
      %4217 = vmatprep.mubr.f32.mxu0 0.0
      %4218 = vmatmul.mubr.f32.gmra.mrb[0].mxu0 %v3223
      %v4219 = vpop.f32.mrb[0].mxu0
      %v4220 = vadd.f32 0.0, %v4219
      %v4221 = vpop.f32.mrb[0].mxu0
      %v4222 = vadd.f32 0.0, %v4221
      %4223 = vmatprep.mubr.f32.mxu0 0.0
      %4224 = vmatmul.mubr.f32.gmra.mrb[0].mxu0 %v3226
      %v4225 = vpop.f32.mrb[0].mxu0
      %v4226 = vadd.f32 0.0, %v4225
      %v4227 = vpop.f32.mrb[0].mxu0
      %v4228 = vadd.f32 0.0, %v4227
      %4229 = vmatprep.mubr.f32.mxu0 0.0
      %4230 = vmatmul.mubr.f32.gmra.mrb[0].mxu0 %v3229
      %v4231 = vpop.f32.mrb[0].mxu0
      %v4232 = vadd.f32 0.0, %v4231
      %v4233 = vpop.f32.mrb[0].mxu0
      %v4234 = vadd.f32 0.0, %v4233
      %4235 = vmatprep.mubr.f32.mxu0 0.0
      %4236 = vmatmul.mubr.f32.gmra.mrb[0].mxu0 %v3232
      %v4237 = vpop.f32.mrb[0].mxu0
      %v4238 = vadd.f32 0.0, %v4237
      %v4239 = vpop.f32.mrb[0].mxu0
      %v4240 = vadd.f32 0.0, %v4239
      %4241 = vmatprep.mubr.f32.mxu0 0.0
      %4242 = vmatmul.mubr.f32.gmra.mrb[0].mxu0 %v3235
      %v4243 = vpop.f32.mrb[0].mxu0
      %v4244 = vadd.f32 0.0, %v4243
      %v4245 = vpop.f32.mrb[0].mxu0
      %v4246 = vadd.f32 0.0, %v4245
      %4247 = vmatprep.mubr.f32.mxu0 0.0
      %4248 = vmatmul.mubr.f32.gmra.mrb[0].mxu0 %v3238
      %v4249 = vpop.f32.mrb[0].mxu0
      %v4250 = vadd.f32 0.0, %v4249
      %v4251 = vpop.f32.mrb[0].mxu0
      %v4252 = vadd.f32 0.0, %v4251
      %4253 = vmatprep.mubr.f32.mxu0 0.0
      %4254 = vmatmul.mubr.f32.gmra.mrb[0].mxu0 %v3241
      %v4255 = vpop.f32.mrb[0].mxu0
      %v4256 = vadd.f32 0.0, %v4255
      %v4257 = vpop.f32.mrb[0].mxu0
      %v4258 = vadd.f32 0.0, %v4257
      %4259 = vmatprep.mubr.f32.mxu0 0.0
      %4260 = vmatmul.mubr.f32.gmra.mrb[0].mxu0 %v3244
      %v4261 = vpop.f32.mrb[0].mxu0
      %v4262 = vadd.f32 0.0, %v4261
      %v4263 = vpop.f32.mrb[0].mxu0
      %v4264 = vadd.f32 0.0, %v4263
      %4265 = vmatprep.mubr.f32.mxu0 0.0
      %4266 = vmatmul.mubr.f32.gmra.mrb[0].mxu0 %v3247
      %v4267 = vpop.f32.mrb[0].mxu0
      %v4268 = vadd.f32 0.0, %v4267
      %v4269 = vpop.f32.mrb[0].mxu0
      %v4270 = vadd.f32 0.0, %v4269
      %4271 = vmatprep.mubr.f32.mxu0 0.0
      %4272 = vmatmul.mubr.f32.gmra.mrb[0].mxu0 %v3250
      %v4273 = vpop.f32.mrb[0].mxu0
      %v4274 = vadd.f32 0.0, %v4273
      %v4275 = vpop.f32.mrb[0].mxu0
      %v4276 = vadd.f32 0.0, %v4275
      %4277 = vmatprep.mubr.f32.mxu0 0.0
      %4278 = vmatmul.mubr.f32.gmra.mrb[0].mxu0 %v3253
      %v4279 = vpop.f32.mrb[0].mxu0
      %v4280 = vadd.f32 0.0, %v4279
      %v4281 = vpop.f32.mrb[0].mxu0
      %v4282 = vadd.f32 0.0, %v4281
      %4283 = vmatprep.mubr.f32.mxu0 0.0
      %4284 = vmatmul.mubr.f32.gmra.mrb[0].mxu0 %v3256
      %v4285 = vpop.f32.mrb[0].mxu0
      %v4286 = vadd.f32 0.0, %v4285
      %v4287 = vpop.f32.mrb[0].mxu0
      %v4288 = vadd.f32 0.0, %v4287
      %4289 = vmatprep.mubr.f32.mxu0 0.0
      %4290 = vmatmul.mubr.f32.gmra.mrb[0].mxu0 %v3259
      %v4291 = vpop.f32.mrb[0].mxu0
      %v4292 = vadd.f32 0.0, %v4291
      %v4293 = vpop.f32.mrb[0].mxu0
      %v4294 = vadd.f32 0.0, %v4293
      %4295 = vmatprep.mubr.f32.mxu0 0.0
      %4296 = vmatmul.mubr.f32.gmra.mrb[0].mxu0 %v3262
      %v4297 = vpop.f32.mrb[0].mxu0
      %v4298 = vadd.f32 0.0, %v4297
      %v4299 = vpop.f32.mrb[0].mxu0
      %v4300 = vadd.f32 0.0, %v4299
      %4301 = vmatprep.mubr.f32.mxu0 0.0
      %4302 = vmatmul.mubr.f32.gmra.mrb[0].mxu0 %v3265
      %v4303 = vpop.f32.mrb[0].mxu0
      %v4304 = vadd.f32 0.0, %v4303
      %v4305 = vpop.f32.mrb[0].mxu0
      %v4306 = vadd.f32 0.0, %v4305
      %4307 = vmatprep.mubr.f32.mxu0 0.0
      %4308 = vmatmul.mubr.f32.gmra.mrb[0].mxu0 %v3268
      %v4309 = vpop.f32.mrb[0].mxu0
      %v4310 = vadd.f32 0.0, %v4309
      %v4311 = vpop.f32.mrb[0].mxu0
      %v4312 = vadd.f32 0.0, %v4311
      %4313 = vmatprep.mubr.f32.mxu0 0.0
      %4314 = vmatmul.mubr.f32.gmra.mrb[0].mxu0 %v3271
      %v4315 = vpop.f32.mrb[0].mxu0
      %v4316 = vadd.f32 0.0, %v4315
      %v4317 = vpop.f32.mrb[0].mxu0
      %v4318 = vadd.f32 0.0, %v4317
      %4319 = vmatprep.mubr.f32.mxu0 0.0
      %4320 = vmatmul.mubr.f32.gmra.mrb[0].mxu0 %v3274
      %v4321 = vpop.f32.mrb[0].mxu0
      %v4322 = vadd.f32 0.0, %v4321
      %v4323 = vpop.f32.mrb[0].mxu0
      %v4324 = vadd.f32 0.0, %v4323
      %4325 = vmatprep.mubr.f32.mxu0 0.0
      %4326 = vmatmul.mubr.f32.gmra.mrb[0].mxu0 %v3277
      %v4327 = vpop.f32.mrb[0].mxu0
      %v4328 = vadd.f32 0.0, %v4327
      %v4329 = vpop.f32.mrb[0].mxu0
      %v4330 = vadd.f32 0.0, %v4329
      %4331 = vmatprep.mubr.f32.mxu0 0.0
      %4332 = vmatmul.mubr.f32.gmra.mrb[0].mxu0 %v3280
      %v4333 = vpop.f32.mrb[0].mxu0
      %v4334 = vadd.f32 0.0, %v4333
      %v4335 = vpop.f32.mrb[0].mxu0
      %v4336 = vadd.f32 0.0, %v4335
      %4337 = vmatprep.mubr.f32.mxu0 0.0
      %4338 = vmatmul.mubr.f32.gmra.mrb[0].mxu0 %v3283
      %v4339 = vpop.f32.mrb[0].mxu0
      %v4340 = vadd.f32 0.0, %v4339
      %v4341 = vpop.f32.mrb[0].mxu0
      %v4342 = vadd.f32 0.0, %v4341
      %4343 = vmatprep.mubr.f32.mxu0 0.0
      %4344 = vmatmul.mubr.f32.gmra.mrb[0].mxu0 %v3286
      %v4345 = vpop.f32.mrb[0].mxu0
      %v4346 = vadd.f32 0.0, %v4345
      %v4347 = vpop.f32.mrb[0].mxu0
      %v4348 = vadd.f32 0.0, %v4347
      %4349 = vmatprep.mubr.f32.mxu0 0.0
      %4350 = vmatmul.mubr.f32.gmra.mrb[0].mxu0 %v3289
      %v4351 = vpop.f32.mrb[0].mxu0
      %v4352 = vadd.f32 0.0, %v4351
      %v4353 = vpop.f32.mrb[0].mxu0
      %v4354 = vadd.f32 0.0, %v4353
      %4355 = vmatprep.mubr.f32.mxu0 0.0
      %4356 = vmatmul.mubr.f32.gmra.mrb[0].mxu0 %v3292
      %v4357 = vpop.f32.mrb[0].mxu0
      %v4358 = vadd.f32 0.0, %v4357
      %v4359 = vpop.f32.mrb[0].mxu0
      %v4360 = vadd.f32 0.0, %v4359
      %4361 = vmatprep.mubr.f32.mxu0 0.0
      %4362 = vmatmul.mubr.f32.gmra.mrb[0].mxu0 %v3295
      %v4363 = vpop.f32.mrb[0].mxu0
      %v4364 = vadd.f32 0.0, %v4363
      %v4365 = vpop.f32.mrb[0].mxu0
      %v4366 = vadd.f32 0.0, %v4365
      %4367 = vmatprep.mubr.f32.mxu0 0.0
      %4368 = vmatmul.mubr.f32.gmra.mrb[0].mxu0 %v3298
      %v4369 = vpop.f32.mrb[0].mxu0
      %v4370 = vadd.f32 0.0, %v4369
      %v4371 = vpop.f32.mrb[0].mxu0
      %v4372 = vadd.f32 0.0, %v4371
      %4373 = vmatprep.mubr.f32.mxu0 0.0
      %4374 = vmatmul.mubr.f32.gmra.mrb[0].mxu0 %v3301
      %v4375 = vpop.f32.mrb[0].mxu0
      %v4376 = vadd.f32 0.0, %v4375
      %v4377 = vpop.f32.mrb[0].mxu0
      %v4378 = vadd.f32 0.0, %v4377
      %4379 = vdwg.mxu0
      %4380 = vmatprep.subr.mxu0 %v368
      %4381 = vmatpush1.msra.mxu0 %v367
      %4382 = vmatprep.subr.mxu0 %v392
      %4383 = vmatpush1.msra.mxu0 %v391
      %4384 = vmatprep.subr.mxu0 0.0
      %4385 = vmatpush1.msra.mxu0 0.0
      %4386 = vmatprep.subr.mxu0 0.0
      %4387 = vmatpush1.msra.mxu0 0.0
      %4388 = vmatprep.subr.mxu0 0.0
      %4389 = vmatpush1.msra.mxu0 0.0
      %4390 = vmatprep.subr.mxu0 0.0
      %4391 = vmatpush1.msra.mxu0 0.0
      %4392 = vmatprep.subr.mxu0 0.0
      %4393 = vmatpush1.msra.mxu0 0.0
      %4394 = vmatprep.subr.mxu0 0.0
      %4395 = vmatpush1.msra.mxu0 0.0
      %4396 = vmatprep.subr.mxu0 0.0
      %4397 = vmatpush1.msra.mxu0 0.0
      %4398 = vmatprep.subr.mxu0 0.0
      %4399 = vmatpush1.msra.mxu0 0.0
      %4400 = vmatprep.subr.mxu0 0.0
      %4401 = vmatpush1.msra.mxu0 0.0
      %4402 = vmatprep.subr.mxu0 0.0
      %4403 = vmatpush1.msra.mxu0 0.0
      %4404 = vmatprep.subr.mxu0 0.0
      %4405 = vmatpush1.msra.mxu0 0.0
      %4406 = vmatprep.subr.mxu0 0.0
      %4407 = vmatpush1.msra.mxu0 0.0
      %4408 = vmatprep.subr.mxu0 0.0
      %4409 = vmatpush1.msra.mxu0 0.0
      %4410 = vmatprep.subr.mxu0 0.0
      %4411 = vmatpush1.msra.mxu0 0.0
      %4412 = vmatprep.subr.mxu0 0.0
      %4413 = vmatpush1.msra.mxu0 0.0
      %4414 = vmatprep.subr.mxu0 0.0
      %4415 = vmatpush1.msra.mxu0 0.0
      %4416 = vmatprep.subr.mxu0 0.0
      %4417 = vmatpush1.msra.mxu0 0.0
      %4418 = vmatprep.subr.mxu0 0.0
      %4419 = vmatpush1.msra.mxu0 0.0
      %4420 = vmatprep.subr.mxu0 0.0
      %4421 = vmatpush1.msra.mxu0 0.0
      %4422 = vmatprep.subr.mxu0 0.0
      %4423 = vmatpush1.msra.mxu0 0.0
      %4424 = vmatprep.subr.mxu0 0.0
      %4425 = vmatpush1.msra.mxu0 0.0
      %4426 = vmatprep.subr.mxu0 0.0
      %4427 = vmatpush1.msra.mxu0 0.0
      %4428 = vmatprep.subr.mxu0 0.0
      %4429 = vmatpush1.msra.mxu0 0.0
      %4430 = vmatprep.subr.mxu0 0.0
      %4431 = vmatpush1.msra.mxu0 0.0
      %4432 = vmatprep.subr.mxu0 0.0
      %4433 = vmatpush1.msra.mxu0 0.0
      %4434 = vmatprep.subr.mxu0 0.0
      %4435 = vmatpush1.msra.mxu0 0.0
      %4436 = vmatprep.subr.mxu0 0.0
      %4437 = vmatpush1.msra.mxu0 0.0
      %4438 = vmatprep.subr.mxu0 0.0
      %4439 = vmatpush1.msra.mxu0 0.0
      %4440 = vmatprep.subr.mxu0 0.0
      %4441 = vmatpush1.msra.mxu0 0.0
      %4442 = vmatprep.subr.mxu0 0.0
      %4443 = vmatpush1.msra.mxu0 0.0
      %4444 = vmatprep.mubr.f32.mxu0 0.0
      %4445 = vmatmul.mubr.f32.gmra.mrb[0].mxu0 %v3157
      %v4446 = vpop.f32.mrb[0].mxu0
      %v4447 = vadd.f32 0.0, %v4446
      %v4448 = vpop.f32.mrb[0].mxu0
      %v4449 = vadd.f32 0.0, %v4448
      %4450 = vmatprep.mubr.f32.mxu0 0.0
      %4451 = vmatmul.mubr.f32.gmra.mrb[0].mxu0 %v3160
      %v4452 = vpop.f32.mrb[0].mxu0
      %v4453 = vadd.f32 0.0, %v4452
      %v4454 = vpop.f32.mrb[0].mxu0
      %v4455 = vadd.f32 0.0, %v4454
      %4456 = vmatprep.mubr.f32.mxu0 0.0
      %4457 = vmatmul.mubr.f32.gmra.mrb[0].mxu0 %v3163
      %v4458 = vpop.f32.mrb[0].mxu0
      %v4459 = vadd.f32 0.0, %v4458
      %v4460 = vpop.f32.mrb[0].mxu0
      %v4461 = vadd.f32 0.0, %v4460
      %4462 = vmatprep.mubr.f32.mxu0 0.0
      %4463 = vmatmul.mubr.f32.gmra.mrb[0].mxu0 %v3166
      %v4464 = vpop.f32.mrb[0].mxu0
      %v4465 = vadd.f32 0.0, %v4464
      %v4466 = vpop.f32.mrb[0].mxu0
      %v4467 = vadd.f32 0.0, %v4466
      %4468 = vmatprep.mubr.f32.mxu0 0.0
      %4469 = vmatmul.mubr.f32.gmra.mrb[0].mxu0 %v3169
      %v4470 = vpop.f32.mrb[0].mxu0
      %v4471 = vadd.f32 0.0, %v4470
      %v4472 = vpop.f32.mrb[0].mxu0
      %v4473 = vadd.f32 0.0, %v4472
      %4474 = vmatprep.mubr.f32.mxu0 0.0
      %4475 = vmatmul.mubr.f32.gmra.mrb[0].mxu0 %v3172
      %v4476 = vpop.f32.mrb[0].mxu0
      %v4477 = vadd.f32 0.0, %v4476
      %v4478 = vpop.f32.mrb[0].mxu0
      %v4479 = vadd.f32 0.0, %v4478
      %4480 = vmatprep.mubr.f32.mxu0 0.0
      %4481 = vmatmul.mubr.f32.gmra.mrb[0].mxu0 %v3175
      %v4482 = vpop.f32.mrb[0].mxu0
      %v4483 = vadd.f32 0.0, %v4482
      %v4484 = vpop.f32.mrb[0].mxu0
      %v4485 = vadd.f32 0.0, %v4484
      %4486 = vmatprep.mubr.f32.mxu0 0.0
      %4487 = vmatmul.mubr.f32.gmra.mrb[0].mxu0 %v3178
      %v4488 = vpop.f32.mrb[0].mxu0
      %v4489 = vadd.f32 0.0, %v4488
      %v4490 = vpop.f32.mrb[0].mxu0
      %v4491 = vadd.f32 0.0, %v4490
      %4492 = vmatprep.mubr.f32.mxu0 0.0
      %4493 = vmatmul.mubr.f32.gmra.mrb[0].mxu0 %v3181
      %v4494 = vpop.f32.mrb[0].mxu0
      %v4495 = vadd.f32 0.0, %v4494
      %v4496 = vpop.f32.mrb[0].mxu0
      %v4497 = vadd.f32 0.0, %v4496
      %4498 = vmatprep.mubr.f32.mxu0 0.0
      %4499 = vmatmul.mubr.f32.gmra.mrb[0].mxu0 %v3184
      %v4500 = vpop.f32.mrb[0].mxu0
      %v4501 = vadd.f32 0.0, %v4500
      %v4502 = vpop.f32.mrb[0].mxu0
      %v4503 = vadd.f32 0.0, %v4502
      %4504 = vmatprep.mubr.f32.mxu0 0.0
      %4505 = vmatmul.mubr.f32.gmra.mrb[0].mxu0 %v3187
      %v4506 = vpop.f32.mrb[0].mxu0
      %v4507 = vadd.f32 0.0, %v4506
      %v4508 = vpop.f32.mrb[0].mxu0
      %v4509 = vadd.f32 0.0, %v4508
      %4510 = vmatprep.mubr.f32.mxu0 0.0
      %4511 = vmatmul.mubr.f32.gmra.mrb[0].mxu0 %v3190
      %v4512 = vpop.f32.mrb[0].mxu0
      %v4513 = vadd.f32 0.0, %v4512
      %v4514 = vpop.f32.mrb[0].mxu0
      %v4515 = vadd.f32 0.0, %v4514
      %4516 = vmatprep.mubr.f32.mxu0 0.0
      %4517 = vmatmul.mubr.f32.gmra.mrb[0].mxu0 %v3193
      %v4518 = vpop.f32.mrb[0].mxu0
      %v4519 = vadd.f32 0.0, %v4518
      %v4520 = vpop.f32.mrb[0].mxu0
      %v4521 = vadd.f32 0.0, %v4520
      %4522 = vmatprep.mubr.f32.mxu0 0.0
      %4523 = vmatmul.mubr.f32.gmra.mrb[0].mxu0 %v3196
      %v4524 = vpop.f32.mrb[0].mxu0
      %v4525 = vadd.f32 0.0, %v4524
      %v4526 = vpop.f32.mrb[0].mxu0
      %v4527 = vadd.f32 0.0, %v4526
      %4528 = vmatprep.mubr.f32.mxu0 0.0
      %4529 = vmatmul.mubr.f32.gmra.mrb[0].mxu0 %v3199
      %v4530 = vpop.f32.mrb[0].mxu0
      %v4531 = vadd.f32 0.0, %v4530
      %v4532 = vpop.f32.mrb[0].mxu0
      %v4533 = vadd.f32 0.0, %v4532
      %4534 = vmatprep.mubr.f32.mxu0 0.0
      %4535 = vmatmul.mubr.f32.gmra.mrb[0].mxu0 %v3202
      %v4536 = vpop.f32.mrb[0].mxu0
      %v4537 = vadd.f32 0.0, %v4536
      %v4538 = vpop.f32.mrb[0].mxu0
      %v4539 = vadd.f32 0.0, %v4538
      %4540 = vmatprep.mubr.f32.mxu0 0.0
      %4541 = vmatmul.mubr.f32.gmra.mrb[0].mxu0 %v3205
      %v4542 = vpop.f32.mrb[0].mxu0
      %v4543 = vadd.f32 0.0, %v4542
      %v4544 = vpop.f32.mrb[0].mxu0
      %v4545 = vadd.f32 0.0, %v4544
      %4546 = vmatprep.mubr.f32.mxu0 0.0
      %4547 = vmatmul.mubr.f32.gmra.mrb[0].mxu0 %v3208
      %v4548 = vpop.f32.mrb[0].mxu0
      %v4549 = vadd.f32 0.0, %v4548
      %v4550 = vpop.f32.mrb[0].mxu0
      %v4551 = vadd.f32 0.0, %v4550
      %4552 = vmatprep.mubr.f32.mxu0 0.0
      %4553 = vmatmul.mubr.f32.gmra.mrb[0].mxu0 %v3211
      %v4554 = vpop.f32.mrb[0].mxu0
      %v4555 = vadd.f32 0.0, %v4554
      %v4556 = vpop.f32.mrb[0].mxu0
      %v4557 = vadd.f32 0.0, %v4556
      %4558 = vmatprep.mubr.f32.mxu0 0.0
      %4559 = vmatmul.mubr.f32.gmra.mrb[0].mxu0 %v3214
      %v4560 = vpop.f32.mrb[0].mxu0
      %v4561 = vadd.f32 0.0, %v4560
      %v4562 = vpop.f32.mrb[0].mxu0
      %v4563 = vadd.f32 0.0, %v4562
      %4564 = vmatprep.mubr.f32.mxu0 0.0
      %4565 = vmatmul.mubr.f32.gmra.mrb[0].mxu0 %v3217
      %v4566 = vpop.f32.mrb[0].mxu0
      %v4567 = vadd.f32 0.0, %v4566
      %v4568 = vpop.f32.mrb[0].mxu0
      %v4569 = vadd.f32 0.0, %v4568
      %4570 = vmatprep.mubr.f32.mxu0 0.0
      %4571 = vmatmul.mubr.f32.gmra.mrb[0].mxu0 %v3220
      %v4572 = vpop.f32.mrb[0].mxu0
      %v4573 = vadd.f32 0.0, %v4572
      %v4574 = vpop.f32.mrb[0].mxu0
      %v4575 = vadd.f32 0.0, %v4574
      %4576 = vmatprep.mubr.f32.mxu0 0.0
      %4577 = vmatmul.mubr.f32.gmra.mrb[0].mxu0 %v3223
      %v4578 = vpop.f32.mrb[0].mxu0
      %v4579 = vadd.f32 0.0, %v4578
      %v4580 = vpop.f32.mrb[0].mxu0
      %v4581 = vadd.f32 0.0, %v4580
      %4582 = vmatprep.mubr.f32.mxu0 0.0
      %4583 = vmatmul.mubr.f32.gmra.mrb[0].mxu0 %v3226
      %v4584 = vpop.f32.mrb[0].mxu0
      %v4585 = vadd.f32 0.0, %v4584
      %v4586 = vpop.f32.mrb[0].mxu0
      %v4587 = vadd.f32 0.0, %v4586
      %4588 = vmatprep.mubr.f32.mxu0 0.0
      %4589 = vmatmul.mubr.f32.gmra.mrb[0].mxu0 %v3229
      %v4590 = vpop.f32.mrb[0].mxu0
      %v4591 = vadd.f32 0.0, %v4590
      %v4592 = vpop.f32.mrb[0].mxu0
      %v4593 = vadd.f32 0.0, %v4592
      %4594 = vmatprep.mubr.f32.mxu0 0.0
      %4595 = vmatmul.mubr.f32.gmra.mrb[0].mxu0 %v3232
      %v4596 = vpop.f32.mrb[0].mxu0
      %v4597 = vadd.f32 0.0, %v4596
      %v4598 = vpop.f32.mrb[0].mxu0
      %v4599 = vadd.f32 0.0, %v4598
      %4600 = vmatprep.mubr.f32.mxu0 0.0
      %4601 = vmatmul.mubr.f32.gmra.mrb[0].mxu0 %v3235
      %v4602 = vpop.f32.mrb[0].mxu0
      %v4603 = vadd.f32 0.0, %v4602
      %v4604 = vpop.f32.mrb[0].mxu0
      %v4605 = vadd.f32 0.0, %v4604
      %4606 = vmatprep.mubr.f32.mxu0 0.0
      %4607 = vmatmul.mubr.f32.gmra.mrb[0].mxu0 %v3238
      %v4608 = vpop.f32.mrb[0].mxu0
      %v4609 = vadd.f32 0.0, %v4608
      %v4610 = vpop.f32.mrb[0].mxu0
      %v4611 = vadd.f32 0.0, %v4610
      %4612 = vmatprep.mubr.f32.mxu0 0.0
      %4613 = vmatmul.mubr.f32.gmra.mrb[0].mxu0 %v3241
      %v4614 = vpop.f32.mrb[0].mxu0
      %v4615 = vadd.f32 0.0, %v4614
      %v4616 = vpop.f32.mrb[0].mxu0
      %v4617 = vadd.f32 0.0, %v4616
      %4618 = vmatprep.mubr.f32.mxu0 0.0
      %4619 = vmatmul.mubr.f32.gmra.mrb[0].mxu0 %v3244
      %v4620 = vpop.f32.mrb[0].mxu0
      %v4621 = vadd.f32 0.0, %v4620
      %v4622 = vpop.f32.mrb[0].mxu0
      %v4623 = vadd.f32 0.0, %v4622
      %4624 = vmatprep.mubr.f32.mxu0 0.0
      %4625 = vmatmul.mubr.f32.gmra.mrb[0].mxu0 %v3247
      %v4626 = vpop.f32.mrb[0].mxu0
      %v4627 = vadd.f32 0.0, %v4626
      %v4628 = vpop.f32.mrb[0].mxu0
      %v4629 = vadd.f32 0.0, %v4628
      %4630 = vmatprep.mubr.f32.mxu0 0.0
      %4631 = vmatmul.mubr.f32.gmra.mrb[0].mxu0 %v3250
      %v4632 = vpop.f32.mrb[0].mxu0
      %v4633 = vadd.f32 0.0, %v4632
      %v4634 = vpop.f32.mrb[0].mxu0
      %v4635 = vadd.f32 0.0, %v4634
      %4636 = vmatprep.mubr.f32.mxu0 0.0
      %4637 = vmatmul.mubr.f32.gmra.mrb[0].mxu0 %v3253
      %v4638 = vpop.f32.mrb[0].mxu0
      %v4639 = vadd.f32 0.0, %v4638
      %v4640 = vpop.f32.mrb[0].mxu0
      %v4641 = vadd.f32 0.0, %v4640
      %4642 = vmatprep.mubr.f32.mxu0 0.0
      %4643 = vmatmul.mubr.f32.gmra.mrb[0].mxu0 %v3256
      %v4644 = vpop.f32.mrb[0].mxu0
      %v4645 = vadd.f32 0.0, %v4644
      %v4646 = vpop.f32.mrb[0].mxu0
      %v4647 = vadd.f32 0.0, %v4646
      %4648 = vmatprep.mubr.f32.mxu0 0.0
      %4649 = vmatmul.mubr.f32.gmra.mrb[0].mxu0 %v3259
      %v4650 = vpop.f32.mrb[0].mxu0
      %v4651 = vadd.f32 0.0, %v4650
      %v4652 = vpop.f32.mrb[0].mxu0
      %v4653 = vadd.f32 0.0, %v4652
      %4654 = vmatprep.mubr.f32.mxu0 0.0
      %4655 = vmatmul.mubr.f32.gmra.mrb[0].mxu0 %v3262
      %v4656 = vpop.f32.mrb[0].mxu0
      %v4657 = vadd.f32 0.0, %v4656
      %v4658 = vpop.f32.mrb[0].mxu0
      %v4659 = vadd.f32 0.0, %v4658
      %4660 = vmatprep.mubr.f32.mxu0 0.0
      %4661 = vmatmul.mubr.f32.gmra.mrb[0].mxu0 %v3265
      %v4662 = vpop.f32.mrb[0].mxu0
      %v4663 = vadd.f32 0.0, %v4662
      %v4664 = vpop.f32.mrb[0].mxu0
      %v4665 = vadd.f32 0.0, %v4664
      %4666 = vmatprep.mubr.f32.mxu0 0.0
      %4667 = vmatmul.mubr.f32.gmra.mrb[0].mxu0 %v3268
      %v4668 = vpop.f32.mrb[0].mxu0
      %v4669 = vadd.f32 0.0, %v4668
      %v4670 = vpop.f32.mrb[0].mxu0
      %v4671 = vadd.f32 0.0, %v4670
      %4672 = vmatprep.mubr.f32.mxu0 0.0
      %4673 = vmatmul.mubr.f32.gmra.mrb[0].mxu0 %v3271
      %v4674 = vpop.f32.mrb[0].mxu0
      %v4675 = vadd.f32 0.0, %v4674
      %v4676 = vpop.f32.mrb[0].mxu0
      %v4677 = vadd.f32 0.0, %v4676
      %4678 = vmatprep.mubr.f32.mxu0 0.0
      %4679 = vmatmul.mubr.f32.gmra.mrb[0].mxu0 %v3274
      %v4680 = vpop.f32.mrb[0].mxu0
      %v4681 = vadd.f32 0.0, %v4680
      %v4682 = vpop.f32.mrb[0].mxu0
      %v4683 = vadd.f32 0.0, %v4682
      %4684 = vmatprep.mubr.f32.mxu0 0.0
      %4685 = vmatmul.mubr.f32.gmra.mrb[0].mxu0 %v3277
      %v4686 = vpop.f32.mrb[0].mxu0
      %v4687 = vadd.f32 0.0, %v4686
      %v4688 = vpop.f32.mrb[0].mxu0
      %v4689 = vadd.f32 0.0, %v4688
      %4690 = vmatprep.mubr.f32.mxu0 0.0
      %4691 = vmatmul.mubr.f32.gmra.mrb[0].mxu0 %v3280
      %v4692 = vpop.f32.mrb[0].mxu0
      %v4693 = vadd.f32 0.0, %v4692
      %v4694 = vpop.f32.mrb[0].mxu0
      %v4695 = vadd.f32 0.0, %v4694
      %4696 = vmatprep.mubr.f32.mxu0 0.0
      %4697 = vmatmul.mubr.f32.gmra.mrb[0].mxu0 %v3283
      %v4698 = vpop.f32.mrb[0].mxu0
      %v4699 = vadd.f32 0.0, %v4698
      %v4700 = vpop.f32.mrb[0].mxu0
      %v4701 = vadd.f32 0.0, %v4700
      %4702 = vmatprep.mubr.f32.mxu0 0.0
      %4703 = vmatmul.mubr.f32.gmra.mrb[0].mxu0 %v3286
      %v4704 = vpop.f32.mrb[0].mxu0
      %v4705 = vadd.f32 0.0, %v4704
      %v4706 = vpop.f32.mrb[0].mxu0
      %v4707 = vadd.f32 0.0, %v4706
      %4708 = vmatprep.mubr.f32.mxu0 0.0
      %4709 = vmatmul.mubr.f32.gmra.mrb[0].mxu0 %v3289
      %v4710 = vpop.f32.mrb[0].mxu0
      %v4711 = vadd.f32 0.0, %v4710
      %v4712 = vpop.f32.mrb[0].mxu0
      %v4713 = vadd.f32 0.0, %v4712
      %4714 = vmatprep.mubr.f32.mxu0 0.0
      %4715 = vmatmul.mubr.f32.gmra.mrb[0].mxu0 %v3292
      %v4716 = vpop.f32.mrb[0].mxu0
      %v4717 = vadd.f32 0.0, %v4716
      %v4718 = vpop.f32.mrb[0].mxu0
      %v4719 = vadd.f32 0.0, %v4718
      %4720 = vmatprep.mubr.f32.mxu0 0.0
      %4721 = vmatmul.mubr.f32.gmra.mrb[0].mxu0 %v3295
      %v4722 = vpop.f32.mrb[0].mxu0
      %v4723 = vadd.f32 0.0, %v4722
      %v4724 = vpop.f32.mrb[0].mxu0
      %v4725 = vadd.f32 0.0, %v4724
      %4726 = vmatprep.mubr.f32.mxu0 0.0
      %4727 = vmatmul.mubr.f32.gmra.mrb[0].mxu0 %v3298
      %v4728 = vpop.f32.mrb[0].mxu0
      %v4729 = vadd.f32 0.0, %v4728
      %v4730 = vpop.f32.mrb[0].mxu0
      %v4731 = vadd.f32 0.0, %v4730
      %4732 = vmatprep.mubr.f32.mxu0 0.0
      %4733 = vmatmul.mubr.f32.gmra.mrb[0].mxu0 %v3301
      %v4734 = vpop.f32.mrb[0].mxu0
      %v4735 = vadd.f32 0.0, %v4734
      %v4736 = vpop.f32.mrb[0].mxu0
      %v4737 = vadd.f32 0.0, %v4736
      %4738 = vdwg.mxu0
      %v4739 = vmul.f32 %v3370, %v2370
      %v4740 = vmul.f32 %v3372, %v2372
      %v4741 = vmul.f32 %v3376, %v2374
      %v4742 = vmul.f32 %v3378, %v2376
      %v4743 = vmul.f32 %v3382, %v2380
      %v4744 = vmul.f32 %v3384, %v2382
      %v4745 = vmul.f32 %v3388, %v2384
      %v4746 = vmul.f32 %v3390, %v2386
      %v4747 = vmul.f32 %v3394, %v2390
      %v4748 = vmul.f32 %v3396, %v2392
      %v4749 = vmul.f32 %v3400, %v2394
      %v4750 = vmul.f32 %v3402, %v2396
      %v4751 = vmul.f32 %v3406, %v2400
      %v4752 = vmul.f32 %v3408, %v2402
      %v4753 = vmul.f32 %v3412, %v2404
      %v4754 = vmul.f32 %v3414, %v2406
      %v4755 = vmul.f32 %v3418, %v2410
      %v4756 = vmul.f32 %v3420, %v2412
      %v4757 = vmul.f32 %v3424, %v2414
      %v4758 = vmul.f32 %v3426, %v2416
      %v4759 = vmul.f32 %v3430, %v2420
      %v4760 = vmul.f32 %v3432, %v2422
      %v4761 = vmul.f32 %v3436, %v2424
      %v4762 = vmul.f32 %v3438, %v2426
      %v4763 = vmul.f32 %v3442, %v2430
      %v4764 = vmul.f32 %v3444, %v2432
      %v4765 = vmul.f32 %v3448, %v2434
      %v4766 = vmul.f32 %v3450, %v2436
      %v4767 = vmul.f32 %v3454, %v2440
      %v4768 = vmul.f32 %v3456, %v2442
      %v4769 = vmul.f32 %v3460, %v2444
      %v4770 = vmul.f32 %v3462, %v2446
      %v4771 = vmul.f32 %v3466, %v2450
      %v4772 = vmul.f32 %v3468, %v2452
      %v4773 = vmul.f32 %v3472, %v2454
      %v4774 = vmul.f32 %v3474, %v2456
      %v4775 = vmul.f32 %v3478, %v2460
      %v4776 = vmul.f32 %v3480, %v2462
      %v4777 = vmul.f32 %v3484, %v2464
      %v4778 = vmul.f32 %v3486, %v2466
      %v4779 = vmul.f32 %v3490, %v2470
      %v4780 = vmul.f32 %v3492, %v2472
      %v4781 = vmul.f32 %v3496, %v2474
      %v4782 = vmul.f32 %v3498, %v2476
      %v4783 = vmul.f32 %v3502, %v2480
      %v4784 = vmul.f32 %v3504, %v2482
      %v4785 = vmul.f32 %v3508, %v2484
      %v4786 = vmul.f32 %v3510, %v2486
      %v4787 = vmul.f32 %v3514, %v2490
      %v4788 = vmul.f32 %v3516, %v2492
      %v4789 = vmul.f32 %v3520, %v2494
      %v4790 = vmul.f32 %v3522, %v2496
      %v4791 = vmul.f32 %v3526, %v2500
      %v4792 = vmul.f32 %v3528, %v2502
      %v4793 = vmul.f32 %v3532, %v2504
      %v4794 = vmul.f32 %v3534, %v2506
      %v4795 = vmul.f32 %v3538, %v2510
      %v4796 = vmul.f32 %v3540, %v2512
      %v4797 = vmul.f32 %v3544, %v2514
      %v4798 = vmul.f32 %v3546, %v2516
      %v4799 = vmul.f32 %v3550, %v2520
      %v4800 = vmul.f32 %v3552, %v2522
      %v4801 = vmul.f32 %v3556, %v2524
      %v4802 = vmul.f32 %v3558, %v2526
      %v4803 = vmul.f32 %v3562, %v2530
      %v4804 = vmul.f32 %v3564, %v2532
      %v4805 = vmul.f32 %v3568, %v2534
      %v4806 = vmul.f32 %v3570, %v2536
      %v4807 = vmul.f32 %v3574, %v2540
      %v4808 = vmul.f32 %v3576, %v2542
      %v4809 = vmul.f32 %v3580, %v2544
      %v4810 = vmul.f32 %v3582, %v2546
      %v4811 = vmul.f32 %v3586, %v2550
      %v4812 = vmul.f32 %v3588, %v2552
      %v4813 = vmul.f32 %v3592, %v2554
      %v4814 = vmul.f32 %v3594, %v2556
      %v4815 = vmul.f32 %v3598, %v2560
      %v4816 = vmul.f32 %v3600, %v2562
      %v4817 = vmul.f32 %v3604, %v2564
      %v4818 = vmul.f32 %v3606, %v2566
      %v4819 = vmul.f32 %v3610, %v2570
      %v4820 = vmul.f32 %v3612, %v2572
      %v4821 = vmul.f32 %v3616, %v2574
      %v4822 = vmul.f32 %v3618, %v2576
      %v4823 = vmul.f32 %v3622, %v2580
      %v4824 = vmul.f32 %v3624, %v2582
      %v4825 = vmul.f32 %v3628, %v2584
      %v4826 = vmul.f32 %v3630, %v2586
      %v4827 = vmul.f32 %v3634, %v2590
      %v4828 = vmul.f32 %v3636, %v2592
      %v4829 = vmul.f32 %v3640, %v2594
      %v4830 = vmul.f32 %v3642, %v2596
      %v4831 = vmul.f32 %v3646, %v2600
      %v4832 = vmul.f32 %v3648, %v2602
      %v4833 = vmul.f32 %v3652, %v2604
      %v4834 = vmul.f32 %v3654, %v2606
      %v4835 = vmul.f32 %v3658, %v2610
      %v4836 = vmul.f32 %v3660, %v2612
      %v4837 = vmul.f32 %v3729, %v2614
      %v4838 = vmul.f32 %v3731, %v2616
      %v4839 = vmul.f32 %v3735, %v2620
      %v4840 = vmul.f32 %v3737, %v2622
      %v4841 = vmul.f32 %v3741, %v2624
      %v4842 = vmul.f32 %v3743, %v2626
      %v4843 = vmul.f32 %v3747, %v2630
      %v4844 = vmul.f32 %v3749, %v2632
      %v4845 = vmul.f32 %v3753, %v2634
      %v4846 = vmul.f32 %v3755, %v2636
      %v4847 = vmul.f32 %v3759, %v2640
      %v4848 = vmul.f32 %v3761, %v2642
      %v4849 = vmul.f32 %v3765, %v2644
      %v4850 = vmul.f32 %v3767, %v2646
      %v4851 = vmul.f32 %v3771, %v2650
      %v4852 = vmul.f32 %v3773, %v2652
      %v4853 = vmul.f32 %v3777, %v2654
      %v4854 = vmul.f32 %v3779, %v2656
      %v4855 = vmul.f32 %v3783, %v2660
      %v4856 = vmul.f32 %v3785, %v2662
      %v4857 = vmul.f32 %v3789, %v2664
      %v4858 = vmul.f32 %v3791, %v2666
      %v4859 = vmul.f32 %v3795, %v2670
      %v4860 = vmul.f32 %v3797, %v2672
      %v4861 = vmul.f32 %v3801, %v2674
      %v4862 = vmul.f32 %v3803, %v2676
      %v4863 = vmul.f32 %v3807, %v2680
      %v4864 = vmul.f32 %v3809, %v2682
      %v4865 = vmul.f32 %v3813, %v2684
      %v4866 = vmul.f32 %v3815, %v2686
      %v4867 = vmul.f32 %v3819, %v2690
      %v4868 = vmul.f32 %v3821, %v2692
      %v4869 = vmul.f32 %v3825, %v2694
      %v4870 = vmul.f32 %v3827, %v2696
      %v4871 = vmul.f32 %v3831, %v2700
      %v4872 = vmul.f32 %v3833, %v2702
      %v4873 = vmul.f32 %v3837, %v2704
      %v4874 = vmul.f32 %v3839, %v2706
      %v4875 = vmul.f32 %v3843, %v2710
      %v4876 = vmul.f32 %v3845, %v2712
      %v4877 = vmul.f32 %v3849, %v2714
      %v4878 = vmul.f32 %v3851, %v2716
      %v4879 = vmul.f32 %v3855, %v2720
      %v4880 = vmul.f32 %v3857, %v2722
      %v4881 = vmul.f32 %v3861, %v2724
      %v4882 = vmul.f32 %v3863, %v2726
      %v4883 = vmul.f32 %v3867, %v2730
      %v4884 = vmul.f32 %v3869, %v2732
      %v4885 = vmul.f32 %v3873, %v2734
      %v4886 = vmul.f32 %v3875, %v2736
      %v4887 = vmul.f32 %v3879, %v2740
      %v4888 = vmul.f32 %v3881, %v2742
      %v4889 = vmul.f32 %v3885, %v2744
      %v4890 = vmul.f32 %v3887, %v2746
      %v4891 = vmul.f32 %v3891, %v2750
      %v4892 = vmul.f32 %v3893, %v2752
      %v4893 = vmul.f32 %v3897, %v2754
      %v4894 = vmul.f32 %v3899, %v2756
      %v4895 = vmul.f32 %v3903, %v2760
      %v4896 = vmul.f32 %v3905, %v2762
      %v4897 = vmul.f32 %v3909, %v2764
      %v4898 = vmul.f32 %v3911, %v2766
      %v4899 = vmul.f32 %v3915, %v2770
      %v4900 = vmul.f32 %v3917, %v2772
      %v4901 = vmul.f32 %v3921, %v2774
      %v4902 = vmul.f32 %v3923, %v2776
      %v4903 = vmul.f32 %v3927, %v2780
      %v4904 = vmul.f32 %v3929, %v2782
      %v4905 = vmul.f32 %v3933, %v2784
      %v4906 = vmul.f32 %v3935, %v2786
      %v4907 = vmul.f32 %v3939, %v2790
      %v4908 = vmul.f32 %v3941, %v2792
      %v4909 = vmul.f32 %v3945, %v2794
      %v4910 = vmul.f32 %v3947, %v2796
      %v4911 = vmul.f32 %v3951, %v2800
      %v4912 = vmul.f32 %v3953, %v2802
      %v4913 = vmul.f32 %v3957, %v2804
      %v4914 = vmul.f32 %v3959, %v2806
      %v4915 = vmul.f32 %v3963, %v2810
      %v4916 = vmul.f32 %v3965, %v2812
      %v4917 = vmul.f32 %v3969, %v2814
      %v4918 = vmul.f32 %v3971, %v2816
      %v4919 = vmul.f32 %v3975, %v2820
      %v4920 = vmul.f32 %v3977, %v2822
      %v4921 = vmul.f32 %v3981, %v2824
      %v4922 = vmul.f32 %v3983, %v2826
      %v4923 = vmul.f32 %v3987, %v2830
      %v4924 = vmul.f32 %v3989, %v2832
      %v4925 = vmul.f32 %v3993, %v2834
      %v4926 = vmul.f32 %v3995, %v2836
      %v4927 = vmul.f32 %v3999, %v2840
      %v4928 = vmul.f32 %v4001, %v2842
      %v4929 = vmul.f32 %v4005, %v2844
      %v4930 = vmul.f32 %v4007, %v2846
      %v4931 = vmul.f32 %v4011, %v2850
      %v4932 = vmul.f32 %v4013, %v2852
      %v4933 = vmul.f32 %v4017, %v2854
      %v4934 = vmul.f32 %v4019, %v2856
      %v4935 = vadd.f32 %v4739, %v4837
      %v4936 = vadd.f32 %v4740, %v4838
      %v4937 = vadd.f32 %v4741, %v4839
      %v4938 = vadd.f32 %v4742, %v4840
      %v4939 = vadd.f32 %v4743, %v4841
      %v4940 = vadd.f32 %v4744, %v4842
      %v4941 = vadd.f32 %v4745, %v4843
      %v4942 = vadd.f32 %v4746, %v4844
      %v4943 = vadd.f32 %v4747, %v4845
      %v4944 = vadd.f32 %v4748, %v4846
      %v4945 = vadd.f32 %v4749, %v4847
      %v4946 = vadd.f32 %v4750, %v4848
      %v4947 = vadd.f32 %v4751, %v4849
      %v4948 = vadd.f32 %v4752, %v4850
      %v4949 = vadd.f32 %v4753, %v4851
      %v4950 = vadd.f32 %v4754, %v4852
      %v4951 = vadd.f32 %v4755, %v4853
      %v4952 = vadd.f32 %v4756, %v4854
      %v4953 = vadd.f32 %v4757, %v4855
      %v4954 = vadd.f32 %v4758, %v4856
      %v4955 = vadd.f32 %v4759, %v4857
      %v4956 = vadd.f32 %v4760, %v4858
      %v4957 = vadd.f32 %v4761, %v4859
      %v4958 = vadd.f32 %v4762, %v4860
      %v4959 = vadd.f32 %v4763, %v4861
      %v4960 = vadd.f32 %v4764, %v4862
      %v4961 = vadd.f32 %v4765, %v4863
      %v4962 = vadd.f32 %v4766, %v4864
      %v4963 = vadd.f32 %v4767, %v4865
      %v4964 = vadd.f32 %v4768, %v4866
      %v4965 = vadd.f32 %v4769, %v4867
      %v4966 = vadd.f32 %v4770, %v4868
      %v4967 = vadd.f32 %v4771, %v4869
      %v4968 = vadd.f32 %v4772, %v4870
      %v4969 = vadd.f32 %v4773, %v4871
      %v4970 = vadd.f32 %v4774, %v4872
      %v4971 = vadd.f32 %v4775, %v4873
      %v4972 = vadd.f32 %v4776, %v4874
      %v4973 = vadd.f32 %v4777, %v4875
      %v4974 = vadd.f32 %v4778, %v4876
      %v4975 = vadd.f32 %v4779, %v4877
      %v4976 = vadd.f32 %v4780, %v4878
      %v4977 = vadd.f32 %v4781, %v4879
      %v4978 = vadd.f32 %v4782, %v4880
      %v4979 = vadd.f32 %v4783, %v4881
      %v4980 = vadd.f32 %v4784, %v4882
      %v4981 = vadd.f32 %v4785, %v4883
      %v4982 = vadd.f32 %v4786, %v4884
      %v4983 = vadd.f32 %v4787, %v4885
      %v4984 = vadd.f32 %v4788, %v4886
      %v4985 = vadd.f32 %v4789, %v4887
      %v4986 = vadd.f32 %v4790, %v4888
      %v4987 = vadd.f32 %v4791, %v4889
      %v4988 = vadd.f32 %v4792, %v4890
      %v4989 = vadd.f32 %v4793, %v4891
      %v4990 = vadd.f32 %v4794, %v4892
      %v4991 = vadd.f32 %v4795, %v4893
      %v4992 = vadd.f32 %v4796, %v4894
      %v4993 = vadd.f32 %v4797, %v4895
      %v4994 = vadd.f32 %v4798, %v4896
      %v4995 = vadd.f32 %v4799, %v4897
      %v4996 = vadd.f32 %v4800, %v4898
      %v4997 = vadd.f32 %v4801, %v4899
      %v4998 = vadd.f32 %v4802, %v4900
      %v4999 = vadd.f32 %v4803, %v4901
      %v5000 = vadd.f32 %v4804, %v4902
      %v5001 = vadd.f32 %v4805, %v4903
      %v5002 = vadd.f32 %v4806, %v4904
      %v5003 = vadd.f32 %v4807, %v4905
      %v5004 = vadd.f32 %v4808, %v4906
      %v5005 = vadd.f32 %v4809, %v4907
      %v5006 = vadd.f32 %v4810, %v4908
      %v5007 = vadd.f32 %v4811, %v4909
      %v5008 = vadd.f32 %v4812, %v4910
      %v5009 = vadd.f32 %v4813, %v4911
      %v5010 = vadd.f32 %v4814, %v4912
      %v5011 = vadd.f32 %v4815, %v4913
      %v5012 = vadd.f32 %v4816, %v4914
      %v5013 = vadd.f32 %v4817, %v4915
      %v5014 = vadd.f32 %v4818, %v4916
      %v5015 = vadd.f32 %v4819, %v4917
      %v5016 = vadd.f32 %v4820, %v4918
      %v5017 = vadd.f32 %v4821, %v4919
      %v5018 = vadd.f32 %v4822, %v4920
      %v5019 = vadd.f32 %v4823, %v4921
      %v5020 = vadd.f32 %v4824, %v4922
      %v5021 = vadd.f32 %v4825, %v4923
      %v5022 = vadd.f32 %v4826, %v4924
      %v5023 = vadd.f32 %v4827, %v4925
      %v5024 = vadd.f32 %v4828, %v4926
      %v5025 = vadd.f32 %v4829, %v4927
      %v5026 = vadd.f32 %v4830, %v4928
      %v5027 = vadd.f32 %v4831, %v4929
      %v5028 = vadd.f32 %v4832, %v4930
      %v5029 = vadd.f32 %v4833, %v4931
      %v5030 = vadd.f32 %v4834, %v4932
      %v5031 = vadd.f32 %v4835, %v4933
      %v5032 = vadd.f32 %v4836, %v4934
      %v5033 = vmul.f32 %v4088, %v2860
      %v5034 = vmul.f32 %v4090, %v2862
      %v5035 = vmul.f32 %v4094, %v2864
      %v5036 = vmul.f32 %v4096, %v2866
      %v5037 = vmul.f32 %v4100, %v2870
      %v5038 = vmul.f32 %v4102, %v2872
      %v5039 = vmul.f32 %v4106, %v2874
      %v5040 = vmul.f32 %v4108, %v2876
      %v5041 = vmul.f32 %v4112, %v2880
      %v5042 = vmul.f32 %v4114, %v2882
      %v5043 = vmul.f32 %v4118, %v2884
      %v5044 = vmul.f32 %v4120, %v2886
      %v5045 = vmul.f32 %v4124, %v2890
      %v5046 = vmul.f32 %v4126, %v2892
      %v5047 = vmul.f32 %v4130, %v2894
      %v5048 = vmul.f32 %v4132, %v2896
      %v5049 = vmul.f32 %v4136, %v2900
      %v5050 = vmul.f32 %v4138, %v2902
      %v5051 = vmul.f32 %v4142, %v2904
      %v5052 = vmul.f32 %v4144, %v2906
      %v5053 = vmul.f32 %v4148, %v2910
      %v5054 = vmul.f32 %v4150, %v2912
      %v5055 = vmul.f32 %v4154, %v2914
      %v5056 = vmul.f32 %v4156, %v2916
      %v5057 = vmul.f32 %v4160, %v2920
      %v5058 = vmul.f32 %v4162, %v2922
      %v5059 = vmul.f32 %v4166, %v2924
      %v5060 = vmul.f32 %v4168, %v2926
      %v5061 = vmul.f32 %v4172, %v2930
      %v5062 = vmul.f32 %v4174, %v2932
      %v5063 = vmul.f32 %v4178, %v2934
      %v5064 = vmul.f32 %v4180, %v2936
      %v5065 = vmul.f32 %v4184, %v2940
      %v5066 = vmul.f32 %v4186, %v2942
      %v5067 = vmul.f32 %v4190, %v2944
      %v5068 = vmul.f32 %v4192, %v2946
      %v5069 = vmul.f32 %v4196, %v2950
      %v5070 = vmul.f32 %v4198, %v2952
      %v5071 = vmul.f32 %v4202, %v2954
      %v5072 = vmul.f32 %v4204, %v2956
      %v5073 = vmul.f32 %v4208, %v2960
      %v5074 = vmul.f32 %v4210, %v2962
      %v5075 = vmul.f32 %v4214, %v2964
      %v5076 = vmul.f32 %v4216, %v2966
      %v5077 = vmul.f32 %v4220, %v2970
      %v5078 = vmul.f32 %v4222, %v2972
      %v5079 = vmul.f32 %v4226, %v2974
      %v5080 = vmul.f32 %v4228, %v2976
      %v5081 = vmul.f32 %v4232, %v2980
      %v5082 = vmul.f32 %v4234, %v2982
      %v5083 = vmul.f32 %v4238, %v2984
      %v5084 = vmul.f32 %v4240, %v2986
      %v5085 = vmul.f32 %v4244, %v2990
      %v5086 = vmul.f32 %v4246, %v2992
      %v5087 = vmul.f32 %v4250, %v2994
      %v5088 = vmul.f32 %v4252, %v2996
      %v5089 = vmul.f32 %v4256, %v3000
      %v5090 = vmul.f32 %v4258, %v3002
      %v5091 = vmul.f32 %v4262, %v3004
      %v5092 = vmul.f32 %v4264, %v3006
      %v5093 = vmul.f32 %v4268, %v3010
      %v5094 = vmul.f32 %v4270, %v3012
      %v5095 = vmul.f32 %v4274, %v3014
      %v5096 = vmul.f32 %v4276, %v3016
      %v5097 = vmul.f32 %v4280, %v3020
      %v5098 = vmul.f32 %v4282, %v3022
      %v5099 = vmul.f32 %v4286, %v3024
      %v5100 = vmul.f32 %v4288, %v3026
      %v5101 = vmul.f32 %v4292, %v3030
      %v5102 = vmul.f32 %v4294, %v3032
      %v5103 = vmul.f32 %v4298, %v3034
      %v5104 = vmul.f32 %v4300, %v3036
      %v5105 = vmul.f32 %v4304, %v3040
      %v5106 = vmul.f32 %v4306, %v3042
      %v5107 = vmul.f32 %v4310, %v3044
      %v5108 = vmul.f32 %v4312, %v3046
      %v5109 = vmul.f32 %v4316, %v3050
      %v5110 = vmul.f32 %v4318, %v3052
      %v5111 = vmul.f32 %v4322, %v3054
      %v5112 = vmul.f32 %v4324, %v3056
      %v5113 = vmul.f32 %v4328, %v3060
      %v5114 = vmul.f32 %v4330, %v3062
      %v5115 = vmul.f32 %v4334, %v3064
      %v5116 = vmul.f32 %v4336, %v3066
      %v5117 = vmul.f32 %v4340, %v3070
      %v5118 = vmul.f32 %v4342, %v3072
      %v5119 = vmul.f32 %v4346, %v3074
      %v5120 = vmul.f32 %v4348, %v3076
      %v5121 = vmul.f32 %v4352, %v3080
      %v5122 = vmul.f32 %v4354, %v3082
      %v5123 = vmul.f32 %v4358, %v3084
      %v5124 = vmul.f32 %v4360, %v3086
      %v5125 = vmul.f32 %v4364, %v3090
      %v5126 = vmul.f32 %v4366, %v3092
      %v5127 = vmul.f32 %v4370, %v3094
      %v5128 = vmul.f32 %v4372, %v3096
      %v5129 = vmul.f32 %v4376, %v3100
      %v5130 = vmul.f32 %v4378, %v3102
      %v5131 = vadd.f32 %v4935, %v5033
      %v5132 = vadd.f32 %v4936, %v5034
      %v5133 = vadd.f32 %v4937, %v5035
      %v5134 = vadd.f32 %v4938, %v5036
      %v5135 = vadd.f32 %v4939, %v5037
      %v5136 = vadd.f32 %v4940, %v5038
      %v5137 = vadd.f32 %v4941, %v5039
      %v5138 = vadd.f32 %v4942, %v5040
      %v5139 = vadd.f32 %v4943, %v5041
      %v5140 = vadd.f32 %v4944, %v5042
      %v5141 = vadd.f32 %v4945, %v5043
      %v5142 = vadd.f32 %v4946, %v5044
      %v5143 = vadd.f32 %v4947, %v5045
      %v5144 = vadd.f32 %v4948, %v5046
      %v5145 = vadd.f32 %v4949, %v5047
      %v5146 = vadd.f32 %v4950, %v5048
      %v5147 = vadd.f32 %v4951, %v5049
      %v5148 = vadd.f32 %v4952, %v5050
      %v5149 = vadd.f32 %v4953, %v5051
      %v5150 = vadd.f32 %v4954, %v5052
      %v5151 = vadd.f32 %v4955, %v5053
      %v5152 = vadd.f32 %v4956, %v5054
      %v5153 = vadd.f32 %v4957, %v5055
      %v5154 = vadd.f32 %v4958, %v5056
      %v5155 = vadd.f32 %v4959, %v5057
      %v5156 = vadd.f32 %v4960, %v5058
      %v5157 = vadd.f32 %v4961, %v5059
      %v5158 = vadd.f32 %v4962, %v5060
      %v5159 = vadd.f32 %v4963, %v5061
      %v5160 = vadd.f32 %v4964, %v5062
      %v5161 = vadd.f32 %v4965, %v5063
      %v5162 = vadd.f32 %v4966, %v5064
      %v5163 = vadd.f32 %v4967, %v5065
      %v5164 = vadd.f32 %v4968, %v5066
      %v5165 = vadd.f32 %v4969, %v5067
      %v5166 = vadd.f32 %v4970, %v5068
      %v5167 = vadd.f32 %v4971, %v5069
      %v5168 = vadd.f32 %v4972, %v5070
      %v5169 = vadd.f32 %v4973, %v5071
      %v5170 = vadd.f32 %v4974, %v5072
      %v5171 = vadd.f32 %v4975, %v5073
      %v5172 = vadd.f32 %v4976, %v5074
      %v5173 = vadd.f32 %v4977, %v5075
      %v5174 = vadd.f32 %v4978, %v5076
      %v5175 = vadd.f32 %v4979, %v5077
      %v5176 = vadd.f32 %v4980, %v5078
      %v5177 = vadd.f32 %v4981, %v5079
      %v5178 = vadd.f32 %v4982, %v5080
      %v5179 = vadd.f32 %v4983, %v5081
      %v5180 = vadd.f32 %v4984, %v5082
      %v5181 = vadd.f32 %v4985, %v5083
      %v5182 = vadd.f32 %v4986, %v5084
      %v5183 = vadd.f32 %v4987, %v5085
      %v5184 = vadd.f32 %v4988, %v5086
      %v5185 = vadd.f32 %v4989, %v5087
      %v5186 = vadd.f32 %v4990, %v5088
      %v5187 = vadd.f32 %v4991, %v5089
      %v5188 = vadd.f32 %v4992, %v5090
      %v5189 = vadd.f32 %v4993, %v5091
      %v5190 = vadd.f32 %v4994, %v5092
      %v5191 = vadd.f32 %v4995, %v5093
      %v5192 = vadd.f32 %v4996, %v5094
      %v5193 = vadd.f32 %v4997, %v5095
      %v5194 = vadd.f32 %v4998, %v5096
      %v5195 = vadd.f32 %v4999, %v5097
      %v5196 = vadd.f32 %v5000, %v5098
      %v5197 = vadd.f32 %v5001, %v5099
      %v5198 = vadd.f32 %v5002, %v5100
      %v5199 = vadd.f32 %v5003, %v5101
      %v5200 = vadd.f32 %v5004, %v5102
      %v5201 = vadd.f32 %v5005, %v5103
      %v5202 = vadd.f32 %v5006, %v5104
      %v5203 = vadd.f32 %v5007, %v5105
      %v5204 = vadd.f32 %v5008, %v5106
      %v5205 = vadd.f32 %v5009, %v5107
      %v5206 = vadd.f32 %v5010, %v5108
      %v5207 = vadd.f32 %v5011, %v5109
      %v5208 = vadd.f32 %v5012, %v5110
      %v5209 = vadd.f32 %v5013, %v5111
      %v5210 = vadd.f32 %v5014, %v5112
      %v5211 = vadd.f32 %v5015, %v5113
      %v5212 = vadd.f32 %v5016, %v5114
      %v5213 = vadd.f32 %v5017, %v5115
      %v5214 = vadd.f32 %v5018, %v5116
      %v5215 = vadd.f32 %v5019, %v5117
      %v5216 = vadd.f32 %v5020, %v5118
      %v5217 = vadd.f32 %v5021, %v5119
      %v5218 = vadd.f32 %v5022, %v5120
      %v5219 = vadd.f32 %v5023, %v5121
      %v5220 = vadd.f32 %v5024, %v5122
      %v5221 = vadd.f32 %v5025, %v5123
      %v5222 = vadd.f32 %v5026, %v5124
      %v5223 = vadd.f32 %v5027, %v5125
      %v5224 = vadd.f32 %v5028, %v5126
      %v5225 = vadd.f32 %v5029, %v5127
      %v5226 = vadd.f32 %v5030, %v5128
      %v5227 = vadd.f32 %v5031, %v5129
      %v5228 = vadd.f32 %v5032, %v5130
      %v5229 = vadd.f32 %v5131, %v4447
      %v5230 = vadd.f32 %v5132, %v4449
      %v5231 = vadd.f32 %v5133, %v4453
      %v5232 = vadd.f32 %v5134, %v4455
      %v5233 = vadd.f32 %v5135, %v4459
      %v5234 = vadd.f32 %v5136, %v4461
      %v5235 = vadd.f32 %v5137, %v4465
      %v5236 = vadd.f32 %v5138, %v4467
      %v5237 = vadd.f32 %v5139, %v4471
      %v5238 = vadd.f32 %v5140, %v4473
      %v5239 = vadd.f32 %v5141, %v4477
      %v5240 = vadd.f32 %v5142, %v4479
      %v5241 = vadd.f32 %v5143, %v4483
      %v5242 = vadd.f32 %v5144, %v4485
      %v5243 = vadd.f32 %v5145, %v4489
      %v5244 = vadd.f32 %v5146, %v4491
      %v5245 = vadd.f32 %v5147, %v4495
      %v5246 = vadd.f32 %v5148, %v4497
      %v5247 = vadd.f32 %v5149, %v4501
      %v5248 = vadd.f32 %v5150, %v4503
      %v5249 = vadd.f32 %v5151, %v4507
      %v5250 = vadd.f32 %v5152, %v4509
      %v5251 = vadd.f32 %v5153, %v4513
      %v5252 = vadd.f32 %v5154, %v4515
      %v5253 = vadd.f32 %v5155, %v4519
      %v5254 = vadd.f32 %v5156, %v4521
      %v5255 = vadd.f32 %v5157, %v4525
      %v5256 = vadd.f32 %v5158, %v4527
      %v5257 = vadd.f32 %v5159, %v4531
      %v5258 = vadd.f32 %v5160, %v4533
      %v5259 = vadd.f32 %v5161, %v4537
      %v5260 = vadd.f32 %v5162, %v4539
      %v5261 = vadd.f32 %v5163, %v4543
      %v5262 = vadd.f32 %v5164, %v4545
      %v5263 = vadd.f32 %v5165, %v4549
      %v5264 = vadd.f32 %v5166, %v4551
      %v5265 = vadd.f32 %v5167, %v4555
      %v5266 = vadd.f32 %v5168, %v4557
      %v5267 = vadd.f32 %v5169, %v4561
      %v5268 = vadd.f32 %v5170, %v4563
      %v5269 = vadd.f32 %v5171, %v4567
      %v5270 = vadd.f32 %v5172, %v4569
      %v5271 = vadd.f32 %v5173, %v4573
      %v5272 = vadd.f32 %v5174, %v4575
      %v5273 = vadd.f32 %v5175, %v4579
      %v5274 = vadd.f32 %v5176, %v4581
      %v5275 = vadd.f32 %v5177, %v4585
      %v5276 = vadd.f32 %v5178, %v4587
      %v5277 = vadd.f32 %v5179, %v4591
      %v5278 = vadd.f32 %v5180, %v4593
      %v5279 = vadd.f32 %v5181, %v4597
      %v5280 = vadd.f32 %v5182, %v4599
      %v5281 = vadd.f32 %v5183, %v4603
      %v5282 = vadd.f32 %v5184, %v4605
      %v5283 = vadd.f32 %v5185, %v4609
      %v5284 = vadd.f32 %v5186, %v4611
      %v5285 = vadd.f32 %v5187, %v4615
      %v5286 = vadd.f32 %v5188, %v4617
      %v5287 = vadd.f32 %v5189, %v4621
      %v5288 = vadd.f32 %v5190, %v4623
      %v5289 = vadd.f32 %v5191, %v4627
      %v5290 = vadd.f32 %v5192, %v4629
      %v5291 = vadd.f32 %v5193, %v4633
      %v5292 = vadd.f32 %v5194, %v4635
      %v5293 = vadd.f32 %v5195, %v4639
      %v5294 = vadd.f32 %v5196, %v4641
      %v5295 = vadd.f32 %v5197, %v4645
      %v5296 = vadd.f32 %v5198, %v4647
      %v5297 = vadd.f32 %v5199, %v4651
      %v5298 = vadd.f32 %v5200, %v4653
      %v5299 = vadd.f32 %v5201, %v4657
      %v5300 = vadd.f32 %v5202, %v4659
      %v5301 = vadd.f32 %v5203, %v4663
      %v5302 = vadd.f32 %v5204, %v4665
      %v5303 = vadd.f32 %v5205, %v4669
      %v5304 = vadd.f32 %v5206, %v4671
      %v5305 = vadd.f32 %v5207, %v4675
      %v5306 = vadd.f32 %v5208, %v4677
      %v5307 = vadd.f32 %v5209, %v4681
      %v5308 = vadd.f32 %v5210, %v4683
      %v5309 = vadd.f32 %v5211, %v4687
      %v5310 = vadd.f32 %v5212, %v4689
      %v5311 = vadd.f32 %v5213, %v4693
      %v5312 = vadd.f32 %v5214, %v4695
      %v5313 = vadd.f32 %v5215, %v4699
      %v5314 = vadd.f32 %v5216, %v4701
      %v5315 = vadd.f32 %v5217, %v4705
      %v5316 = vadd.f32 %v5218, %v4707
      %v5317 = vadd.f32 %v5219, %v4711
      %v5318 = vadd.f32 %v5220, %v4713
      %v5319 = vadd.f32 %v5221, %v4717
      %v5320 = vadd.f32 %v5222, %v4719
      %v5321 = vadd.f32 %v5223, %v4723
      %v5322 = vadd.f32 %v5224, %v4725
      %v5323 = vadd.f32 %v5225, %v4729
      %v5324 = vadd.f32 %v5226, %v4731
      %v5325 = vadd.f32 %v5227, %v4735
      %v5326 = vadd.f32 %v5228, %v4737
      %5327 = vst [vmem:[%s328] sm:$0xff] %v5229
      %5328 = vst [vmem:[%s328 + $0x8] sm:$0xff] %v5230
      %5329 = vst [vmem:[%s328 + $0x10] sm:$0xff] %v5231
      %5330 = vst [vmem:[%s328 + $0x18] sm:$0xff] %v5232
      %5331 = vst [vmem:[%s328 + $0x20] sm:$0xff] %v5233
      %5332 = vst [vmem:[%s328 + $0x28] sm:$0xff] %v5234
      %5333 = vst [vmem:[%s328 + $0x30] sm:$0xff] %v5235
      %5334 = vst [vmem:[%s328 + $0x38] sm:$0xff] %v5236
      %5335 = vst [vmem:[%s328 + $0x40] sm:$0xff] %v5237
      %5336 = vst [vmem:[%s328 + $0x48] sm:$0xff] %v5238
      %5337 = vst [vmem:[%s328 + $0x50] sm:$0xff] %v5239
      %5338 = vst [vmem:[%s328 + $0x58] sm:$0xff] %v5240
      %5339 = vst [vmem:[%s328 + $0x60] sm:$0xff] %v5241
      %5340 = vst [vmem:[%s328 + $0x68] sm:$0xff] %v5242
      %5341 = vst [vmem:[%s328 + $0x70] sm:$0xff] %v5243
      %5342 = vst [vmem:[%s328 + $0x78] sm:$0xff] %v5244
      %5343 = vst [vmem:[%s328 + $0x80] sm:$0xff] %v5245
      %5344 = vst [vmem:[%s328 + $0x88] sm:$0xff] %v5246
      %5345 = vst [vmem:[%s328 + $0x90] sm:$0xff] %v5247
      %5346 = vst [vmem:[%s328 + $0x98] sm:$0xff] %v5248
      %5347 = vst [vmem:[%s328 + $0xa0] sm:$0xff] %v5249
      %5348 = vst [vmem:[%s328 + $0xa8] sm:$0xff] %v5250
      %5349 = vst [vmem:[%s328 + $0xb0] sm:$0xff] %v5251
      %5350 = vst [vmem:[%s328 + $0xb8] sm:$0xff] %v5252
      %5351 = vst [vmem:[%s328 + $0xc0] sm:$0xff] %v5253
      %5352 = vst [vmem:[%s328 + $0xc8] sm:$0xff] %v5254
      %5353 = vst [vmem:[%s328 + $0xd0] sm:$0xff] %v5255
      %5354 = vst [vmem:[%s328 + $0xd8] sm:$0xff] %v5256
      %5355 = vst [vmem:[%s328 + $0xe0] sm:$0xff] %v5257
      %5356 = vst [vmem:[%s328 + $0xe8] sm:$0xff] %v5258
      %5357 = vst [vmem:[%s328 + $0xf0] sm:$0xff] %v5259
      %5358 = vst [vmem:[%s328 + $0xf8] sm:$0xff] %v5260
      %5359 = vst [vmem:[%s328 + $0x100] sm:$0xff] %v5261
      %5360 = vst [vmem:[%s328 + $0x108] sm:$0xff] %v5262
      %5361 = vst [vmem:[%s328 + $0x110] sm:$0xff] %v5263
      %5362 = vst [vmem:[%s328 + $0x118] sm:$0xff] %v5264
      %5363 = vst [vmem:[%s328 + $0x120] sm:$0xff] %v5265
      %5364 = vst [vmem:[%s328 + $0x128] sm:$0xff] %v5266
      %5365 = vst [vmem:[%s328 + $0x130] sm:$0xff] %v5267
      %5366 = vst [vmem:[%s328 + $0x138] sm:$0xff] %v5268
      %5367 = vst [vmem:[%s328 + $0x140] sm:$0xff] %v5269
      %5368 = vst [vmem:[%s328 + $0x148] sm:$0xff] %v5270
      %5369 = vst [vmem:[%s328 + $0x150] sm:$0xff] %v5271
      %5370 = vst [vmem:[%s328 + $0x158] sm:$0xff] %v5272
      %5371 = vst [vmem:[%s328 + $0x160] sm:$0xff] %v5273
      %5372 = vst [vmem:[%s328 + $0x168] sm:$0xff] %v5274
      %5373 = vst [vmem:[%s328 + $0x170] sm:$0xff] %v5275
      %5374 = vst [vmem:[%s328 + $0x178] sm:$0xff] %v5276
      %5375 = vst [vmem:[%s328 + $0x180] sm:$0xff] %v5277
      %5376 = vst [vmem:[%s328 + $0x188] sm:$0xff] %v5278
      %5377 = vst [vmem:[%s328 + $0x190] sm:$0xff] %v5279
      %5378 = vst [vmem:[%s328 + $0x198] sm:$0xff] %v5280
      %5379 = vst [vmem:[%s328 + $0x1a0] sm:$0xff] %v5281
      %5380 = vst [vmem:[%s328 + $0x1a8] sm:$0xff] %v5282
      %5381 = vst [vmem:[%s328 + $0x1b0] sm:$0xff] %v5283
      %5382 = vst [vmem:[%s328 + $0x1b8] sm:$0xff] %v5284
      %5383 = vst [vmem:[%s328 + $0x1c0] sm:$0xff] %v5285
      %5384 = vst [vmem:[%s328 + $0x1c8] sm:$0xff] %v5286
      %5385 = vst [vmem:[%s328 + $0x1d0] sm:$0xff] %v5287
      %5386 = vst [vmem:[%s328 + $0x1d8] sm:$0xff] %v5288
      %5387 = vst [vmem:[%s328 + $0x1e0] sm:$0xff] %v5289
      %5388 = vst [vmem:[%s328 + $0x1e8] sm:$0xff] %v5290
      %5389 = vst [vmem:[%s328 + $0x1f0] sm:$0xff] %v5291
      %5390 = vst [vmem:[%s328 + $0x1f8] sm:$0xff] %v5292
      %5391 = vst [vmem:[%s328 + $0x200] sm:$0xff] %v5293
      %5392 = vst [vmem:[%s328 + $0x208] sm:$0xff] %v5294
      %5393 = vst [vmem:[%s328 + $0x210] sm:$0xff] %v5295
      %5394 = vst [vmem:[%s328 + $0x218] sm:$0xff] %v5296
      %5395 = vst [vmem:[%s328 + $0x220] sm:$0xff] %v5297
      %5396 = vst [vmem:[%s328 + $0x228] sm:$0xff] %v5298
      %5397 = vst [vmem:[%s328 + $0x230] sm:$0xff] %v5299
      %5398 = vst [vmem:[%s328 + $0x238] sm:$0xff] %v5300
      %5399 = vst [vmem:[%s328 + $0x240] sm:$0xff] %v5301
      %5400 = vst [vmem:[%s328 + $0x248] sm:$0xff] %v5302
      %5401 = vst [vmem:[%s328 + $0x250] sm:$0xff] %v5303
      %5402 = vst [vmem:[%s328 + $0x258] sm:$0xff] %v5304
      %5403 = vst [vmem:[%s328 + $0x260] sm:$0xff] %v5305
      %5404 = vst [vmem:[%s328 + $0x268] sm:$0xff] %v5306
      %5405 = vst [vmem:[%s328 + $0x270] sm:$0xff] %v5307
      %5406 = vst [vmem:[%s328 + $0x278] sm:$0xff] %v5308
      %5407 = vst [vmem:[%s328 + $0x280] sm:$0xff] %v5309
      %5408 = vst [vmem:[%s328 + $0x288] sm:$0xff] %v5310
      %5409 = vst [vmem:[%s328 + $0x290] sm:$0xff] %v5311
      %5410 = vst [vmem:[%s328 + $0x298] sm:$0xff] %v5312
      %5411 = vst [vmem:[%s328 + $0x2a0] sm:$0xff] %v5313
      %5412 = vst [vmem:[%s328 + $0x2a8] sm:$0xff] %v5314
      %5413 = vst [vmem:[%s328 + $0x2b0] sm:$0xff] %v5315
      %5414 = vst [vmem:[%s328 + $0x2b8] sm:$0xff] %v5316
      %5415 = vst [vmem:[%s328 + $0x2c0] sm:$0xff] %v5317
      %5416 = vst [vmem:[%s328 + $0x2c8] sm:$0xff] %v5318
      %5417 = vst [vmem:[%s328 + $0x2d0] sm:$0xff] %v5319
      %5418 = vst [vmem:[%s328 + $0x2d8] sm:$0xff] %v5320
      %5419 = vst [vmem:[%s328 + $0x2e0] sm:$0xff] %v5321
      %5420 = vst [vmem:[%s328 + $0x2e8] sm:$0xff] %v5322
      %5421 = vst [vmem:[%s328 + $0x2f0] sm:$0xff] %v5323
      %5422 = vst [vmem:[%s328 + $0x2f8] sm:$0xff] %v5324
      %5423 = vst [vmem:[%s328 + $0x300] sm:$0xff] %v5325
      %5424 = vst [vmem:[%s328 + $0x308] sm:$0xff] %v5326
      %5425 = vmatprep.subr.mxu0 %v370
      %5426 = vmatpush1.msra.mxu0 %v369
      %5427 = vmatprep.subr.mxu0 %v394
      %5428 = vmatpush1.msra.mxu0 %v393
      %5429 = vmatprep.subr.mxu0 0.0
      %5430 = vmatpush1.msra.mxu0 0.0
      %5431 = vmatprep.subr.mxu0 0.0
      %5432 = vmatpush1.msra.mxu0 0.0
      %5433 = vmatprep.subr.mxu0 0.0
      %5434 = vmatpush1.msra.mxu0 0.0
      %5435 = vmatprep.subr.mxu0 0.0
      %5436 = vmatpush1.msra.mxu0 0.0
      %5437 = vmatprep.subr.mxu0 0.0
      %5438 = vmatpush1.msra.mxu0 0.0
      %5439 = vmatprep.subr.mxu0 0.0
      %5440 = vmatpush1.msra.mxu0 0.0
      %5441 = vmatprep.subr.mxu0 0.0
      %5442 = vmatpush1.msra.mxu0 0.0
      %5443 = vmatprep.subr.mxu0 0.0
      %5444 = vmatpush1.msra.mxu0 0.0
      %5445 = vmatprep.subr.mxu0 0.0
      %5446 = vmatpush1.msra.mxu0 0.0
      %5447 = vmatprep.subr.mxu0 0.0
      %5448 = vmatpush1.msra.mxu0 0.0
      %5449 = vmatprep.subr.mxu0 0.0
      %5450 = vmatpush1.msra.mxu0 0.0
      %5451 = vmatprep.subr.mxu0 0.0
      %5452 = vmatpush1.msra.mxu0 0.0
      %5453 = vmatprep.subr.mxu0 0.0
      %5454 = vmatpush1.msra.mxu0 0.0
      %5455 = vmatprep.subr.mxu0 0.0
      %5456 = vmatpush1.msra.mxu0 0.0
      %5457 = vmatprep.subr.mxu0 0.0
      %5458 = vmatpush1.msra.mxu0 0.0
      %5459 = vmatprep.subr.mxu0 0.0
      %5460 = vmatpush1.msra.mxu0 0.0
      %5461 = vmatprep.subr.mxu0 0.0
      %5462 = vmatpush1.msra.mxu0 0.0
      %5463 = vmatprep.subr.mxu0 0.0
      %5464 = vmatpush1.msra.mxu0 0.0
      %5465 = vmatprep.subr.mxu0 0.0
      %5466 = vmatpush1.msra.mxu0 0.0
      %5467 = vmatprep.subr.mxu0 0.0
      %5468 = vmatpush1.msra.mxu0 0.0
      %5469 = vmatprep.subr.mxu0 0.0
      %5470 = vmatpush1.msra.mxu0 0.0
      %5471 = vmatprep.subr.mxu0 0.0
      %5472 = vmatpush1.msra.mxu0 0.0
      %5473 = vmatprep.subr.mxu0 0.0
      %5474 = vmatpush1.msra.mxu0 0.0
      %5475 = vmatprep.subr.mxu0 0.0
      %5476 = vmatpush1.msra.mxu0 0.0
      %5477 = vmatprep.subr.mxu0 0.0
      %5478 = vmatpush1.msra.mxu0 0.0
      %5479 = vmatprep.subr.mxu0 0.0
      %5480 = vmatpush1.msra.mxu0 0.0
      %5481 = vmatprep.subr.mxu0 0.0
      %5482 = vmatpush1.msra.mxu0 0.0
      %5483 = vmatprep.subr.mxu0 0.0
      %5484 = vmatpush1.msra.mxu0 0.0
      %5485 = vmatprep.subr.mxu0 0.0
      %5486 = vmatpush1.msra.mxu0 0.0
      %5487 = vmatprep.subr.mxu0 0.0
      %5488 = vmatpush1.msra.mxu0 0.0
      %5489 = vmatprep.mubr.f32.mxu0 0.0
      %5490 = vmatmul.mubr.f32.gmra.mrb[0].mxu0 %v3157
      %v5491 = vpop.f32.mrb[0].mxu0
      %v5492 = vadd.f32 0.0, %v5491
      %v5493 = vpop.f32.mrb[0].mxu0
      %v5494 = vadd.f32 0.0, %v5493
      %5495 = vmatprep.mubr.f32.mxu0 0.0
      %5496 = vmatmul.mubr.f32.gmra.mrb[0].mxu0 %v3160
      %v5497 = vpop.f32.mrb[0].mxu0
      %v5498 = vadd.f32 0.0, %v5497
      %v5499 = vpop.f32.mrb[0].mxu0
      %v5500 = vadd.f32 0.0, %v5499
      %5501 = vmatprep.mubr.f32.mxu0 0.0
      %5502 = vmatmul.mubr.f32.gmra.mrb[0].mxu0 %v3163
      %v5503 = vpop.f32.mrb[0].mxu0
      %v5504 = vadd.f32 0.0, %v5503
      %v5505 = vpop.f32.mrb[0].mxu0
      %v5506 = vadd.f32 0.0, %v5505
      %5507 = vmatprep.mubr.f32.mxu0 0.0
      %5508 = vmatmul.mubr.f32.gmra.mrb[0].mxu0 %v3166
      %v5509 = vpop.f32.mrb[0].mxu0
      %v5510 = vadd.f32 0.0, %v5509
      %v5511 = vpop.f32.mrb[0].mxu0
      %v5512 = vadd.f32 0.0, %v5511
      %5513 = vmatprep.mubr.f32.mxu0 0.0
      %5514 = vmatmul.mubr.f32.gmra.mrb[0].mxu0 %v3169
      %v5515 = vpop.f32.mrb[0].mxu0
      %v5516 = vadd.f32 0.0, %v5515
      %v5517 = vpop.f32.mrb[0].mxu0
      %v5518 = vadd.f32 0.0, %v5517
      %5519 = vmatprep.mubr.f32.mxu0 0.0
      %5520 = vmatmul.mubr.f32.gmra.mrb[0].mxu0 %v3172
      %v5521 = vpop.f32.mrb[0].mxu0
      %v5522 = vadd.f32 0.0, %v5521
      %v5523 = vpop.f32.mrb[0].mxu0
      %v5524 = vadd.f32 0.0, %v5523
      %5525 = vmatprep.mubr.f32.mxu0 0.0
      %5526 = vmatmul.mubr.f32.gmra.mrb[0].mxu0 %v3175
      %v5527 = vpop.f32.mrb[0].mxu0
      %v5528 = vadd.f32 0.0, %v5527
      %v5529 = vpop.f32.mrb[0].mxu0
      %v5530 = vadd.f32 0.0, %v5529
      %5531 = vmatprep.mubr.f32.mxu0 0.0
      %5532 = vmatmul.mubr.f32.gmra.mrb[0].mxu0 %v3178
      %v5533 = vpop.f32.mrb[0].mxu0
      %v5534 = vadd.f32 0.0, %v5533
      %v5535 = vpop.f32.mrb[0].mxu0
      %v5536 = vadd.f32 0.0, %v5535
      %5537 = vmatprep.mubr.f32.mxu0 0.0
      %5538 = vmatmul.mubr.f32.gmra.mrb[0].mxu0 %v3181
      %v5539 = vpop.f32.mrb[0].mxu0
      %v5540 = vadd.f32 0.0, %v5539
      %v5541 = vpop.f32.mrb[0].mxu0
      %v5542 = vadd.f32 0.0, %v5541
      %5543 = vmatprep.mubr.f32.mxu0 0.0
      %5544 = vmatmul.mubr.f32.gmra.mrb[0].mxu0 %v3184
      %v5545 = vpop.f32.mrb[0].mxu0
      %v5546 = vadd.f32 0.0, %v5545
      %v5547 = vpop.f32.mrb[0].mxu0
      %v5548 = vadd.f32 0.0, %v5547
      %5549 = vmatprep.mubr.f32.mxu0 0.0
      %5550 = vmatmul.mubr.f32.gmra.mrb[0].mxu0 %v3187
      %v5551 = vpop.f32.mrb[0].mxu0
      %v5552 = vadd.f32 0.0, %v5551
      %v5553 = vpop.f32.mrb[0].mxu0
      %v5554 = vadd.f32 0.0, %v5553
      %5555 = vmatprep.mubr.f32.mxu0 0.0
      %5556 = vmatmul.mubr.f32.gmra.mrb[0].mxu0 %v3190
      %v5557 = vpop.f32.mrb[0].mxu0
      %v5558 = vadd.f32 0.0, %v5557
      %v5559 = vpop.f32.mrb[0].mxu0
      %v5560 = vadd.f32 0.0, %v5559
      %5561 = vmatprep.mubr.f32.mxu0 0.0
      %5562 = vmatmul.mubr.f32.gmra.mrb[0].mxu0 %v3193
      %v5563 = vpop.f32.mrb[0].mxu0
      %v5564 = vadd.f32 0.0, %v5563
      %v5565 = vpop.f32.mrb[0].mxu0
      %v5566 = vadd.f32 0.0, %v5565
      %5567 = vmatprep.mubr.f32.mxu0 0.0
      %5568 = vmatmul.mubr.f32.gmra.mrb[0].mxu0 %v3196
      %v5569 = vpop.f32.mrb[0].mxu0
      %v5570 = vadd.f32 0.0, %v5569
      %v5571 = vpop.f32.mrb[0].mxu0
      %v5572 = vadd.f32 0.0, %v5571
      %5573 = vmatprep.mubr.f32.mxu0 0.0
      %5574 = vmatmul.mubr.f32.gmra.mrb[0].mxu0 %v3199
      %v5575 = vpop.f32.mrb[0].mxu0
      %v5576 = vadd.f32 0.0, %v5575
      %v5577 = vpop.f32.mrb[0].mxu0
      %v5578 = vadd.f32 0.0, %v5577
      %5579 = vmatprep.mubr.f32.mxu0 0.0
      %5580 = vmatmul.mubr.f32.gmra.mrb[0].mxu0 %v3202
      %v5581 = vpop.f32.mrb[0].mxu0
      %v5582 = vadd.f32 0.0, %v5581
      %v5583 = vpop.f32.mrb[0].mxu0
      %v5584 = vadd.f32 0.0, %v5583
      %5585 = vmatprep.mubr.f32.mxu0 0.0
      %5586 = vmatmul.mubr.f32.gmra.mrb[0].mxu0 %v3205
      %v5587 = vpop.f32.mrb[0].mxu0
      %v5588 = vadd.f32 0.0, %v5587
      %v5589 = vpop.f32.mrb[0].mxu0
      %v5590 = vadd.f32 0.0, %v5589
      %5591 = vmatprep.mubr.f32.mxu0 0.0
      %5592 = vmatmul.mubr.f32.gmra.mrb[0].mxu0 %v3208
      %v5593 = vpop.f32.mrb[0].mxu0
      %v5594 = vadd.f32 0.0, %v5593
      %v5595 = vpop.f32.mrb[0].mxu0
      %v5596 = vadd.f32 0.0, %v5595
      %5597 = vmatprep.mubr.f32.mxu0 0.0
      %5598 = vmatmul.mubr.f32.gmra.mrb[0].mxu0 %v3211
      %v5599 = vpop.f32.mrb[0].mxu0
      %v5600 = vadd.f32 0.0, %v5599
      %v5601 = vpop.f32.mrb[0].mxu0
      %v5602 = vadd.f32 0.0, %v5601
      %5603 = vmatprep.mubr.f32.mxu0 0.0
      %5604 = vmatmul.mubr.f32.gmra.mrb[0].mxu0 %v3214
      %v5605 = vpop.f32.mrb[0].mxu0
      %v5606 = vadd.f32 0.0, %v5605
      %v5607 = vpop.f32.mrb[0].mxu0
      %v5608 = vadd.f32 0.0, %v5607
      %5609 = vmatprep.mubr.f32.mxu0 0.0
      %5610 = vmatmul.mubr.f32.gmra.mrb[0].mxu0 %v3217
      %v5611 = vpop.f32.mrb[0].mxu0
      %v5612 = vadd.f32 0.0, %v5611
      %v5613 = vpop.f32.mrb[0].mxu0
      %v5614 = vadd.f32 0.0, %v5613
      %5615 = vmatprep.mubr.f32.mxu0 0.0
      %5616 = vmatmul.mubr.f32.gmra.mrb[0].mxu0 %v3220
      %v5617 = vpop.f32.mrb[0].mxu0
      %v5618 = vadd.f32 0.0, %v5617
      %v5619 = vpop.f32.mrb[0].mxu0
      %v5620 = vadd.f32 0.0, %v5619
      %5621 = vmatprep.mubr.f32.mxu0 0.0
      %5622 = vmatmul.mubr.f32.gmra.mrb[0].mxu0 %v3223
      %v5623 = vpop.f32.mrb[0].mxu0
      %v5624 = vadd.f32 0.0, %v5623
      %v5625 = vpop.f32.mrb[0].mxu0
      %v5626 = vadd.f32 0.0, %v5625
      %5627 = vmatprep.mubr.f32.mxu0 0.0
      %5628 = vmatmul.mubr.f32.gmra.mrb[0].mxu0 %v3226
      %v5629 = vpop.f32.mrb[0].mxu0
      %v5630 = vadd.f32 0.0, %v5629
      %v5631 = vpop.f32.mrb[0].mxu0
      %v5632 = vadd.f32 0.0, %v5631
      %5633 = vmatprep.mubr.f32.mxu0 0.0
      %5634 = vmatmul.mubr.f32.gmra.mrb[0].mxu0 %v3229
      %v5635 = vpop.f32.mrb[0].mxu0
      %v5636 = vadd.f32 0.0, %v5635
      %v5637 = vpop.f32.mrb[0].mxu0
      %v5638 = vadd.f32 0.0, %v5637
      %5639 = vmatprep.mubr.f32.mxu0 0.0
      %5640 = vmatmul.mubr.f32.gmra.mrb[0].mxu0 %v3232
      %v5641 = vpop.f32.mrb[0].mxu0
      %v5642 = vadd.f32 0.0, %v5641
      %v5643 = vpop.f32.mrb[0].mxu0
      %v5644 = vadd.f32 0.0, %v5643
      %5645 = vmatprep.mubr.f32.mxu0 0.0
      %5646 = vmatmul.mubr.f32.gmra.mrb[0].mxu0 %v3235
      %v5647 = vpop.f32.mrb[0].mxu0
      %v5648 = vadd.f32 0.0, %v5647
      %v5649 = vpop.f32.mrb[0].mxu0
      %v5650 = vadd.f32 0.0, %v5649
      %5651 = vmatprep.mubr.f32.mxu0 0.0
      %5652 = vmatmul.mubr.f32.gmra.mrb[0].mxu0 %v3238
      %v5653 = vpop.f32.mrb[0].mxu0
      %v5654 = vadd.f32 0.0, %v5653
      %v5655 = vpop.f32.mrb[0].mxu0
      %v5656 = vadd.f32 0.0, %v5655
      %5657 = vmatprep.mubr.f32.mxu0 0.0
      %5658 = vmatmul.mubr.f32.gmra.mrb[0].mxu0 %v3241
      %v5659 = vpop.f32.mrb[0].mxu0
      %v5660 = vadd.f32 0.0, %v5659
      %v5661 = vpop.f32.mrb[0].mxu0
      %v5662 = vadd.f32 0.0, %v5661
      %5663 = vmatprep.mubr.f32.mxu0 0.0
      %5664 = vmatmul.mubr.f32.gmra.mrb[0].mxu0 %v3244
      %v5665 = vpop.f32.mrb[0].mxu0
      %v5666 = vadd.f32 0.0, %v5665
      %v5667 = vpop.f32.mrb[0].mxu0
      %v5668 = vadd.f32 0.0, %v5667
      %5669 = vmatprep.mubr.f32.mxu0 0.0
      %5670 = vmatmul.mubr.f32.gmra.mrb[0].mxu0 %v3247
      %v5671 = vpop.f32.mrb[0].mxu0
      %v5672 = vadd.f32 0.0, %v5671
      %v5673 = vpop.f32.mrb[0].mxu0
      %v5674 = vadd.f32 0.0, %v5673
      %5675 = vmatprep.mubr.f32.mxu0 0.0
      %5676 = vmatmul.mubr.f32.gmra.mrb[0].mxu0 %v3250
      %v5677 = vpop.f32.mrb[0].mxu0
      %v5678 = vadd.f32 0.0, %v5677
      %v5679 = vpop.f32.mrb[0].mxu0
      %v5680 = vadd.f32 0.0, %v5679
      %5681 = vmatprep.mubr.f32.mxu0 0.0
      %5682 = vmatmul.mubr.f32.gmra.mrb[0].mxu0 %v3253
      %v5683 = vpop.f32.mrb[0].mxu0
      %v5684 = vadd.f32 0.0, %v5683
      %v5685 = vpop.f32.mrb[0].mxu0
      %v5686 = vadd.f32 0.0, %v5685
      %5687 = vmatprep.mubr.f32.mxu0 0.0
      %5688 = vmatmul.mubr.f32.gmra.mrb[0].mxu0 %v3256
      %v5689 = vpop.f32.mrb[0].mxu0
      %v5690 = vadd.f32 0.0, %v5689
      %v5691 = vpop.f32.mrb[0].mxu0
      %v5692 = vadd.f32 0.0, %v5691
      %5693 = vmatprep.mubr.f32.mxu0 0.0
      %5694 = vmatmul.mubr.f32.gmra.mrb[0].mxu0 %v3259
      %v5695 = vpop.f32.mrb[0].mxu0
      %v5696 = vadd.f32 0.0, %v5695
      %v5697 = vpop.f32.mrb[0].mxu0
      %v5698 = vadd.f32 0.0, %v5697
      %5699 = vmatprep.mubr.f32.mxu0 0.0
      %5700 = vmatmul.mubr.f32.gmra.mrb[0].mxu0 %v3262
      %v5701 = vpop.f32.mrb[0].mxu0
      %v5702 = vadd.f32 0.0, %v5701
      %v5703 = vpop.f32.mrb[0].mxu0
      %v5704 = vadd.f32 0.0, %v5703
      %5705 = vmatprep.mubr.f32.mxu0 0.0
      %5706 = vmatmul.mubr.f32.gmra.mrb[0].mxu0 %v3265
      %v5707 = vpop.f32.mrb[0].mxu0
      %v5708 = vadd.f32 0.0, %v5707
      %v5709 = vpop.f32.mrb[0].mxu0
      %v5710 = vadd.f32 0.0, %v5709
      %5711 = vmatprep.mubr.f32.mxu0 0.0
      %5712 = vmatmul.mubr.f32.gmra.mrb[0].mxu0 %v3268
      %v5713 = vpop.f32.mrb[0].mxu0
      %v5714 = vadd.f32 0.0, %v5713
      %v5715 = vpop.f32.mrb[0].mxu0
      %v5716 = vadd.f32 0.0, %v5715
      %5717 = vmatprep.mubr.f32.mxu0 0.0
      %5718 = vmatmul.mubr.f32.gmra.mrb[0].mxu0 %v3271
      %v5719 = vpop.f32.mrb[0].mxu0
      %v5720 = vadd.f32 0.0, %v5719
      %v5721 = vpop.f32.mrb[0].mxu0
      %v5722 = vadd.f32 0.0, %v5721
      %5723 = vmatprep.mubr.f32.mxu0 0.0
      %5724 = vmatmul.mubr.f32.gmra.mrb[0].mxu0 %v3274
      %v5725 = vpop.f32.mrb[0].mxu0
      %v5726 = vadd.f32 0.0, %v5725
      %v5727 = vpop.f32.mrb[0].mxu0
      %v5728 = vadd.f32 0.0, %v5727
      %5729 = vmatprep.mubr.f32.mxu0 0.0
      %5730 = vmatmul.mubr.f32.gmra.mrb[0].mxu0 %v3277
      %v5731 = vpop.f32.mrb[0].mxu0
      %v5732 = vadd.f32 0.0, %v5731
      %v5733 = vpop.f32.mrb[0].mxu0
      %v5734 = vadd.f32 0.0, %v5733
      %5735 = vmatprep.mubr.f32.mxu0 0.0
      %5736 = vmatmul.mubr.f32.gmra.mrb[0].mxu0 %v3280
      %v5737 = vpop.f32.mrb[0].mxu0
      %v5738 = vadd.f32 0.0, %v5737
      %v5739 = vpop.f32.mrb[0].mxu0
      %v5740 = vadd.f32 0.0, %v5739
      %5741 = vmatprep.mubr.f32.mxu0 0.0
      %5742 = vmatmul.mubr.f32.gmra.mrb[0].mxu0 %v3283
      %v5743 = vpop.f32.mrb[0].mxu0
      %v5744 = vadd.f32 0.0, %v5743
      %v5745 = vpop.f32.mrb[0].mxu0
      %v5746 = vadd.f32 0.0, %v5745
      %5747 = vmatprep.mubr.f32.mxu0 0.0
      %5748 = vmatmul.mubr.f32.gmra.mrb[0].mxu0 %v3286
      %v5749 = vpop.f32.mrb[0].mxu0
      %v5750 = vadd.f32 0.0, %v5749
      %v5751 = vpop.f32.mrb[0].mxu0
      %v5752 = vadd.f32 0.0, %v5751
      %5753 = vmatprep.mubr.f32.mxu0 0.0
      %5754 = vmatmul.mubr.f32.gmra.mrb[0].mxu0 %v3289
      %v5755 = vpop.f32.mrb[0].mxu0
      %v5756 = vadd.f32 0.0, %v5755
      %v5757 = vpop.f32.mrb[0].mxu0
      %v5758 = vadd.f32 0.0, %v5757
      %5759 = vmatprep.mubr.f32.mxu0 0.0
      %5760 = vmatmul.mubr.f32.gmra.mrb[0].mxu0 %v3292
      %v5761 = vpop.f32.mrb[0].mxu0
      %v5762 = vadd.f32 0.0, %v5761
      %v5763 = vpop.f32.mrb[0].mxu0
      %v5764 = vadd.f32 0.0, %v5763
      %5765 = vmatprep.mubr.f32.mxu0 0.0
      %5766 = vmatmul.mubr.f32.gmra.mrb[0].mxu0 %v3295
      %v5767 = vpop.f32.mrb[0].mxu0
      %v5768 = vadd.f32 0.0, %v5767
      %v5769 = vpop.f32.mrb[0].mxu0
      %v5770 = vadd.f32 0.0, %v5769
      %5771 = vmatprep.mubr.f32.mxu0 0.0
      %5772 = vmatmul.mubr.f32.gmra.mrb[0].mxu0 %v3298
      %v5773 = vpop.f32.mrb[0].mxu0
      %v5774 = vadd.f32 0.0, %v5773
      %v5775 = vpop.f32.mrb[0].mxu0
      %v5776 = vadd.f32 0.0, %v5775
      %5777 = vmatprep.mubr.f32.mxu0 0.0
      %5778 = vmatmul.mubr.f32.gmra.mrb[0].mxu0 %v3301
      %v5779 = vpop.f32.mrb[0].mxu0
      %v5780 = vadd.f32 0.0, %v5779
      %v5781 = vpop.f32.mrb[0].mxu0
      %v5782 = vadd.f32 0.0, %v5781
      %5783 = vdwg.mxu0
      %5784 = vmatprep.subr.mxu0 %v372
      %5785 = vmatpush1.msra.mxu0 %v371
      %5786 = vmatprep.subr.mxu0 %v396
      %5787 = vmatpush1.msra.mxu0 %v395
      %5788 = vmatprep.subr.mxu0 0.0
      %5789 = vmatpush1.msra.mxu0 0.0
      %5790 = vmatprep.subr.mxu0 0.0
      %5791 = vmatpush1.msra.mxu0 0.0
      %5792 = vmatprep.subr.mxu0 0.0
      %5793 = vmatpush1.msra.mxu0 0.0
      %5794 = vmatprep.subr.mxu0 0.0
      %5795 = vmatpush1.msra.mxu0 0.0
      %5796 = vmatprep.subr.mxu0 0.0
      %5797 = vmatpush1.msra.mxu0 0.0
      %5798 = vmatprep.subr.mxu0 0.0
      %5799 = vmatpush1.msra.mxu0 0.0
      %5800 = vmatprep.subr.mxu0 0.0
      %5801 = vmatpush1.msra.mxu0 0.0
      %5802 = vmatprep.subr.mxu0 0.0
      %5803 = vmatpush1.msra.mxu0 0.0
      %5804 = vmatprep.subr.mxu0 0.0
      %5805 = vmatpush1.msra.mxu0 0.0
      %5806 = vmatprep.subr.mxu0 0.0
      %5807 = vmatpush1.msra.mxu0 0.0
      %5808 = vmatprep.subr.mxu0 0.0
      %5809 = vmatpush1.msra.mxu0 0.0
      %5810 = vmatprep.subr.mxu0 0.0
      %5811 = vmatpush1.msra.mxu0 0.0
      %5812 = vmatprep.subr.mxu0 0.0
      %5813 = vmatpush1.msra.mxu0 0.0
      %5814 = vmatprep.subr.mxu0 0.0
      %5815 = vmatpush1.msra.mxu0 0.0
      %5816 = vmatprep.subr.mxu0 0.0
      %5817 = vmatpush1.msra.mxu0 0.0
      %5818 = vmatprep.subr.mxu0 0.0
      %5819 = vmatpush1.msra.mxu0 0.0
      %5820 = vmatprep.subr.mxu0 0.0
      %5821 = vmatpush1.msra.mxu0 0.0
      %5822 = vmatprep.subr.mxu0 0.0
      %5823 = vmatpush1.msra.mxu0 0.0
      %5824 = vmatprep.subr.mxu0 0.0
      %5825 = vmatpush1.msra.mxu0 0.0
      %5826 = vmatprep.subr.mxu0 0.0
      %5827 = vmatpush1.msra.mxu0 0.0
      %5828 = vmatprep.subr.mxu0 0.0
      %5829 = vmatpush1.msra.mxu0 0.0
      %5830 = vmatprep.subr.mxu0 0.0
      %5831 = vmatpush1.msra.mxu0 0.0
      %5832 = vmatprep.subr.mxu0 0.0
      %5833 = vmatpush1.msra.mxu0 0.0
      %5834 = vmatprep.subr.mxu0 0.0
      %5835 = vmatpush1.msra.mxu0 0.0
      %5836 = vmatprep.subr.mxu0 0.0
      %5837 = vmatpush1.msra.mxu0 0.0
      %5838 = vmatprep.subr.mxu0 0.0
      %5839 = vmatpush1.msra.mxu0 0.0
      %5840 = vmatprep.subr.mxu0 0.0
      %5841 = vmatpush1.msra.mxu0 0.0
      %5842 = vmatprep.subr.mxu0 0.0
      %5843 = vmatpush1.msra.mxu0 0.0
      %5844 = vmatprep.subr.mxu0 0.0
      %5845 = vmatpush1.msra.mxu0 0.0
      %5846 = vmatprep.subr.mxu0 0.0
      %5847 = vmatpush1.msra.mxu0 0.0
      %5848 = vmatprep.mubr.f32.mxu0 0.0
      %5849 = vmatmul.mubr.f32.gmra.mrb[0].mxu0 %v3157
      %v5850 = vpop.f32.mrb[0].mxu0
      %v5851 = vadd.f32 0.0, %v5850
      %v5852 = vpop.f32.mrb[0].mxu0
      %v5853 = vadd.f32 0.0, %v5852
      %5854 = vmatprep.mubr.f32.mxu0 0.0
      %5855 = vmatmul.mubr.f32.gmra.mrb[0].mxu0 %v3160
      %v5856 = vpop.f32.mrb[0].mxu0
      %v5857 = vadd.f32 0.0, %v5856
      %v5858 = vpop.f32.mrb[0].mxu0
      %v5859 = vadd.f32 0.0, %v5858
      %5860 = vmatprep.mubr.f32.mxu0 0.0
      %5861 = vmatmul.mubr.f32.gmra.mrb[0].mxu0 %v3163
      %v5862 = vpop.f32.mrb[0].mxu0
      %v5863 = vadd.f32 0.0, %v5862
      %v5864 = vpop.f32.mrb[0].mxu0
      %v5865 = vadd.f32 0.0, %v5864
      %5866 = vmatprep.mubr.f32.mxu0 0.0
      %5867 = vmatmul.mubr.f32.gmra.mrb[0].mxu0 %v3166
      %v5868 = vpop.f32.mrb[0].mxu0
      %v5869 = vadd.f32 0.0, %v5868
      %v5870 = vpop.f32.mrb[0].mxu0
      %v5871 = vadd.f32 0.0, %v5870
      %5872 = vmatprep.mubr.f32.mxu0 0.0
      %5873 = vmatmul.mubr.f32.gmra.mrb[0].mxu0 %v3169
      %v5874 = vpop.f32.mrb[0].mxu0
      %v5875 = vadd.f32 0.0, %v5874
      %v5876 = vpop.f32.mrb[0].mxu0
      %v5877 = vadd.f32 0.0, %v5876
      %5878 = vmatprep.mubr.f32.mxu0 0.0
      %5879 = vmatmul.mubr.f32.gmra.mrb[0].mxu0 %v3172
      %v5880 = vpop.f32.mrb[0].mxu0
      %v5881 = vadd.f32 0.0, %v5880
      %v5882 = vpop.f32.mrb[0].mxu0
      %v5883 = vadd.f32 0.0, %v5882
      %5884 = vmatprep.mubr.f32.mxu0 0.0
      %5885 = vmatmul.mubr.f32.gmra.mrb[0].mxu0 %v3175
      %v5886 = vpop.f32.mrb[0].mxu0
      %v5887 = vadd.f32 0.0, %v5886
      %v5888 = vpop.f32.mrb[0].mxu0
      %v5889 = vadd.f32 0.0, %v5888
      %5890 = vmatprep.mubr.f32.mxu0 0.0
      %5891 = vmatmul.mubr.f32.gmra.mrb[0].mxu0 %v3178
      %v5892 = vpop.f32.mrb[0].mxu0
      %v5893 = vadd.f32 0.0, %v5892
      %v5894 = vpop.f32.mrb[0].mxu0
      %v5895 = vadd.f32 0.0, %v5894
      %5896 = vmatprep.mubr.f32.mxu0 0.0
      %5897 = vmatmul.mubr.f32.gmra.mrb[0].mxu0 %v3181
      %v5898 = vpop.f32.mrb[0].mxu0
      %v5899 = vadd.f32 0.0, %v5898
      %v5900 = vpop.f32.mrb[0].mxu0
      %v5901 = vadd.f32 0.0, %v5900
      %5902 = vmatprep.mubr.f32.mxu0 0.0
      %5903 = vmatmul.mubr.f32.gmra.mrb[0].mxu0 %v3184
      %v5904 = vpop.f32.mrb[0].mxu0
      %v5905 = vadd.f32 0.0, %v5904
      %v5906 = vpop.f32.mrb[0].mxu0
      %v5907 = vadd.f32 0.0, %v5906
      %5908 = vmatprep.mubr.f32.mxu0 0.0
      %5909 = vmatmul.mubr.f32.gmra.mrb[0].mxu0 %v3187
      %v5910 = vpop.f32.mrb[0].mxu0
      %v5911 = vadd.f32 0.0, %v5910
      %v5912 = vpop.f32.mrb[0].mxu0
      %v5913 = vadd.f32 0.0, %v5912
      %5914 = vmatprep.mubr.f32.mxu0 0.0
      %5915 = vmatmul.mubr.f32.gmra.mrb[0].mxu0 %v3190
      %v5916 = vpop.f32.mrb[0].mxu0
      %v5917 = vadd.f32 0.0, %v5916
      %v5918 = vpop.f32.mrb[0].mxu0
      %v5919 = vadd.f32 0.0, %v5918
      %5920 = vmatprep.mubr.f32.mxu0 0.0
      %5921 = vmatmul.mubr.f32.gmra.mrb[0].mxu0 %v3193
      %v5922 = vpop.f32.mrb[0].mxu0
      %v5923 = vadd.f32 0.0, %v5922
      %v5924 = vpop.f32.mrb[0].mxu0
      %v5925 = vadd.f32 0.0, %v5924
      %5926 = vmatprep.mubr.f32.mxu0 0.0
      %5927 = vmatmul.mubr.f32.gmra.mrb[0].mxu0 %v3196
      %v5928 = vpop.f32.mrb[0].mxu0
      %v5929 = vadd.f32 0.0, %v5928
      %v5930 = vpop.f32.mrb[0].mxu0
      %v5931 = vadd.f32 0.0, %v5930
      %5932 = vmatprep.mubr.f32.mxu0 0.0
      %5933 = vmatmul.mubr.f32.gmra.mrb[0].mxu0 %v3199
      %v5934 = vpop.f32.mrb[0].mxu0
      %v5935 = vadd.f32 0.0, %v5934
      %v5936 = vpop.f32.mrb[0].mxu0
      %v5937 = vadd.f32 0.0, %v5936
      %5938 = vmatprep.mubr.f32.mxu0 0.0
      %5939 = vmatmul.mubr.f32.gmra.mrb[0].mxu0 %v3202
      %v5940 = vpop.f32.mrb[0].mxu0
      %v5941 = vadd.f32 0.0, %v5940
      %v5942 = vpop.f32.mrb[0].mxu0
      %v5943 = vadd.f32 0.0, %v5942
      %5944 = vmatprep.mubr.f32.mxu0 0.0
      %5945 = vmatmul.mubr.f32.gmra.mrb[0].mxu0 %v3205
      %v5946 = vpop.f32.mrb[0].mxu0
      %v5947 = vadd.f32 0.0, %v5946
      %v5948 = vpop.f32.mrb[0].mxu0
      %v5949 = vadd.f32 0.0, %v5948
      %5950 = vmatprep.mubr.f32.mxu0 0.0
      %5951 = vmatmul.mubr.f32.gmra.mrb[0].mxu0 %v3208
      %v5952 = vpop.f32.mrb[0].mxu0
      %v5953 = vadd.f32 0.0, %v5952
      %v5954 = vpop.f32.mrb[0].mxu0
      %v5955 = vadd.f32 0.0, %v5954
      %5956 = vmatprep.mubr.f32.mxu0 0.0
      %5957 = vmatmul.mubr.f32.gmra.mrb[0].mxu0 %v3211
      %v5958 = vpop.f32.mrb[0].mxu0
      %v5959 = vadd.f32 0.0, %v5958
      %v5960 = vpop.f32.mrb[0].mxu0
      %v5961 = vadd.f32 0.0, %v5960
      %5962 = vmatprep.mubr.f32.mxu0 0.0
      %5963 = vmatmul.mubr.f32.gmra.mrb[0].mxu0 %v3214
      %v5964 = vpop.f32.mrb[0].mxu0
      %v5965 = vadd.f32 0.0, %v5964
      %v5966 = vpop.f32.mrb[0].mxu0
      %v5967 = vadd.f32 0.0, %v5966
      %5968 = vmatprep.mubr.f32.mxu0 0.0
      %5969 = vmatmul.mubr.f32.gmra.mrb[0].mxu0 %v3217
      %v5970 = vpop.f32.mrb[0].mxu0
      %v5971 = vadd.f32 0.0, %v5970
      %v5972 = vpop.f32.mrb[0].mxu0
      %v5973 = vadd.f32 0.0, %v5972
      %5974 = vmatprep.mubr.f32.mxu0 0.0
      %5975 = vmatmul.mubr.f32.gmra.mrb[0].mxu0 %v3220
      %v5976 = vpop.f32.mrb[0].mxu0
      %v5977 = vadd.f32 0.0, %v5976
      %v5978 = vpop.f32.mrb[0].mxu0
      %v5979 = vadd.f32 0.0, %v5978
      %5980 = vmatprep.mubr.f32.mxu0 0.0
      %5981 = vmatmul.mubr.f32.gmra.mrb[0].mxu0 %v3223
      %v5982 = vpop.f32.mrb[0].mxu0
      %v5983 = vadd.f32 0.0, %v5982
      %v5984 = vpop.f32.mrb[0].mxu0
      %v5985 = vadd.f32 0.0, %v5984
      %5986 = vmatprep.mubr.f32.mxu0 0.0
      %5987 = vmatmul.mubr.f32.gmra.mrb[0].mxu0 %v3226
      %v5988 = vpop.f32.mrb[0].mxu0
      %v5989 = vadd.f32 0.0, %v5988
      %v5990 = vpop.f32.mrb[0].mxu0
      %v5991 = vadd.f32 0.0, %v5990
      %5992 = vmatprep.mubr.f32.mxu0 0.0
      %5993 = vmatmul.mubr.f32.gmra.mrb[0].mxu0 %v3229
      %v5994 = vpop.f32.mrb[0].mxu0
      %v5995 = vadd.f32 0.0, %v5994
      %v5996 = vpop.f32.mrb[0].mxu0
      %v5997 = vadd.f32 0.0, %v5996
      %5998 = vmatprep.mubr.f32.mxu0 0.0
      %5999 = vmatmul.mubr.f32.gmra.mrb[0].mxu0 %v3232
      %v6000 = vpop.f32.mrb[0].mxu0
      %v6001 = vadd.f32 0.0, %v6000
      %v6002 = vpop.f32.mrb[0].mxu0
      %v6003 = vadd.f32 0.0, %v6002
      %6004 = vmatprep.mubr.f32.mxu0 0.0
      %6005 = vmatmul.mubr.f32.gmra.mrb[0].mxu0 %v3235
      %v6006 = vpop.f32.mrb[0].mxu0
      %v6007 = vadd.f32 0.0, %v6006
      %v6008 = vpop.f32.mrb[0].mxu0
      %v6009 = vadd.f32 0.0, %v6008
      %6010 = vmatprep.mubr.f32.mxu0 0.0
      %6011 = vmatmul.mubr.f32.gmra.mrb[0].mxu0 %v3238
      %v6012 = vpop.f32.mrb[0].mxu0
      %v6013 = vadd.f32 0.0, %v6012
      %v6014 = vpop.f32.mrb[0].mxu0
      %v6015 = vadd.f32 0.0, %v6014
      %6016 = vmatprep.mubr.f32.mxu0 0.0
      %6017 = vmatmul.mubr.f32.gmra.mrb[0].mxu0 %v3241
      %v6018 = vpop.f32.mrb[0].mxu0
      %v6019 = vadd.f32 0.0, %v6018
      %v6020 = vpop.f32.mrb[0].mxu0
      %v6021 = vadd.f32 0.0, %v6020
      %6022 = vmatprep.mubr.f32.mxu0 0.0
      %6023 = vmatmul.mubr.f32.gmra.mrb[0].mxu0 %v3244
      %v6024 = vpop.f32.mrb[0].mxu0
      %v6025 = vadd.f32 0.0, %v6024
      %v6026 = vpop.f32.mrb[0].mxu0
      %v6027 = vadd.f32 0.0, %v6026
      %6028 = vmatprep.mubr.f32.mxu0 0.0
      %6029 = vmatmul.mubr.f32.gmra.mrb[0].mxu0 %v3247
      %v6030 = vpop.f32.mrb[0].mxu0
      %v6031 = vadd.f32 0.0, %v6030
      %v6032 = vpop.f32.mrb[0].mxu0
      %v6033 = vadd.f32 0.0, %v6032
      %6034 = vmatprep.mubr.f32.mxu0 0.0
      %6035 = vmatmul.mubr.f32.gmra.mrb[0].mxu0 %v3250
      %v6036 = vpop.f32.mrb[0].mxu0
      %v6037 = vadd.f32 0.0, %v6036
      %v6038 = vpop.f32.mrb[0].mxu0
      %v6039 = vadd.f32 0.0, %v6038
      %6040 = vmatprep.mubr.f32.mxu0 0.0
      %6041 = vmatmul.mubr.f32.gmra.mrb[0].mxu0 %v3253
      %v6042 = vpop.f32.mrb[0].mxu0
      %v6043 = vadd.f32 0.0, %v6042
      %v6044 = vpop.f32.mrb[0].mxu0
      %v6045 = vadd.f32 0.0, %v6044
      %6046 = vmatprep.mubr.f32.mxu0 0.0
      %6047 = vmatmul.mubr.f32.gmra.mrb[0].mxu0 %v3256
      %v6048 = vpop.f32.mrb[0].mxu0
      %v6049 = vadd.f32 0.0, %v6048
      %v6050 = vpop.f32.mrb[0].mxu0
      %v6051 = vadd.f32 0.0, %v6050
      %6052 = vmatprep.mubr.f32.mxu0 0.0
      %6053 = vmatmul.mubr.f32.gmra.mrb[0].mxu0 %v3259
      %v6054 = vpop.f32.mrb[0].mxu0
      %v6055 = vadd.f32 0.0, %v6054
      %v6056 = vpop.f32.mrb[0].mxu0
      %v6057 = vadd.f32 0.0, %v6056
      %6058 = vmatprep.mubr.f32.mxu0 0.0
      %6059 = vmatmul.mubr.f32.gmra.mrb[0].mxu0 %v3262
      %v6060 = vpop.f32.mrb[0].mxu0
      %v6061 = vadd.f32 0.0, %v6060
      %v6062 = vpop.f32.mrb[0].mxu0
      %v6063 = vadd.f32 0.0, %v6062
      %6064 = vmatprep.mubr.f32.mxu0 0.0
      %6065 = vmatmul.mubr.f32.gmra.mrb[0].mxu0 %v3265
      %v6066 = vpop.f32.mrb[0].mxu0
      %v6067 = vadd.f32 0.0, %v6066
      %v6068 = vpop.f32.mrb[0].mxu0
      %v6069 = vadd.f32 0.0, %v6068
      %6070 = vmatprep.mubr.f32.mxu0 0.0
      %6071 = vmatmul.mubr.f32.gmra.mrb[0].mxu0 %v3268
      %v6072 = vpop.f32.mrb[0].mxu0
      %v6073 = vadd.f32 0.0, %v6072
      %v6074 = vpop.f32.mrb[0].mxu0
      %v6075 = vadd.f32 0.0, %v6074
      %6076 = vmatprep.mubr.f32.mxu0 0.0
      %6077 = vmatmul.mubr.f32.gmra.mrb[0].mxu0 %v3271
      %v6078 = vpop.f32.mrb[0].mxu0
      %v6079 = vadd.f32 0.0, %v6078
      %v6080 = vpop.f32.mrb[0].mxu0
      %v6081 = vadd.f32 0.0, %v6080
      %6082 = vmatprep.mubr.f32.mxu0 0.0
      %6083 = vmatmul.mubr.f32.gmra.mrb[0].mxu0 %v3274
      %v6084 = vpop.f32.mrb[0].mxu0
      %v6085 = vadd.f32 0.0, %v6084
      %v6086 = vpop.f32.mrb[0].mxu0
      %v6087 = vadd.f32 0.0, %v6086
      %6088 = vmatprep.mubr.f32.mxu0 0.0
      %6089 = vmatmul.mubr.f32.gmra.mrb[0].mxu0 %v3277
      %v6090 = vpop.f32.mrb[0].mxu0
      %v6091 = vadd.f32 0.0, %v6090
      %v6092 = vpop.f32.mrb[0].mxu0
      %v6093 = vadd.f32 0.0, %v6092
      %6094 = vmatprep.mubr.f32.mxu0 0.0
      %6095 = vmatmul.mubr.f32.gmra.mrb[0].mxu0 %v3280
      %v6096 = vpop.f32.mrb[0].mxu0
      %v6097 = vadd.f32 0.0, %v6096
      %v6098 = vpop.f32.mrb[0].mxu0
      %v6099 = vadd.f32 0.0, %v6098
      %6100 = vmatprep.mubr.f32.mxu0 0.0
      %6101 = vmatmul.mubr.f32.gmra.mrb[0].mxu0 %v3283
      %v6102 = vpop.f32.mrb[0].mxu0
      %v6103 = vadd.f32 0.0, %v6102
      %v6104 = vpop.f32.mrb[0].mxu0
      %v6105 = vadd.f32 0.0, %v6104
      %6106 = vmatprep.mubr.f32.mxu0 0.0
      %6107 = vmatmul.mubr.f32.gmra.mrb[0].mxu0 %v3286
      %v6108 = vpop.f32.mrb[0].mxu0
      %v6109 = vadd.f32 0.0, %v6108
      %v6110 = vpop.f32.mrb[0].mxu0
      %v6111 = vadd.f32 0.0, %v6110
      %6112 = vmatprep.mubr.f32.mxu0 0.0
      %6113 = vmatmul.mubr.f32.gmra.mrb[0].mxu0 %v3289
      %v6114 = vpop.f32.mrb[0].mxu0
      %v6115 = vadd.f32 0.0, %v6114
      %v6116 = vpop.f32.mrb[0].mxu0
      %v6117 = vadd.f32 0.0, %v6116
      %6118 = vmatprep.mubr.f32.mxu0 0.0
      %6119 = vmatmul.mubr.f32.gmra.mrb[0].mxu0 %v3292
      %v6120 = vpop.f32.mrb[0].mxu0
      %v6121 = vadd.f32 0.0, %v6120
      %v6122 = vpop.f32.mrb[0].mxu0
      %v6123 = vadd.f32 0.0, %v6122
      %6124 = vmatprep.mubr.f32.mxu0 0.0
      %6125 = vmatmul.mubr.f32.gmra.mrb[0].mxu0 %v3295
      %v6126 = vpop.f32.mrb[0].mxu0
      %v6127 = vadd.f32 0.0, %v6126
      %v6128 = vpop.f32.mrb[0].mxu0
      %v6129 = vadd.f32 0.0, %v6128
      %6130 = vmatprep.mubr.f32.mxu0 0.0
      %6131 = vmatmul.mubr.f32.gmra.mrb[0].mxu0 %v3298
      %v6132 = vpop.f32.mrb[0].mxu0
      %v6133 = vadd.f32 0.0, %v6132
      %v6134 = vpop.f32.mrb[0].mxu0
      %v6135 = vadd.f32 0.0, %v6134
      %6136 = vmatprep.mubr.f32.mxu0 0.0
      %6137 = vmatmul.mubr.f32.gmra.mrb[0].mxu0 %v3301
      %v6138 = vpop.f32.mrb[0].mxu0
      %v6139 = vadd.f32 0.0, %v6138
      %v6140 = vpop.f32.mrb[0].mxu0
      %v6141 = vadd.f32 0.0, %v6140
      %6142 = vdwg.mxu0
      %6143 = vmatprep.subr.mxu0 %v374
      %6144 = vmatpush1.msra.mxu0 %v373
      %6145 = vmatprep.subr.mxu0 %v398
      %6146 = vmatpush1.msra.mxu0 %v397
      %6147 = vmatprep.subr.mxu0 0.0
      %6148 = vmatpush1.msra.mxu0 0.0
      %6149 = vmatprep.subr.mxu0 0.0
      %6150 = vmatpush1.msra.mxu0 0.0
      %6151 = vmatprep.subr.mxu0 0.0
      %6152 = vmatpush1.msra.mxu0 0.0
      %6153 = vmatprep.subr.mxu0 0.0
      %6154 = vmatpush1.msra.mxu0 0.0
      %6155 = vmatprep.subr.mxu0 0.0
      %6156 = vmatpush1.msra.mxu0 0.0
      %6157 = vmatprep.subr.mxu0 0.0
      %6158 = vmatpush1.msra.mxu0 0.0
      %6159 = vmatprep.subr.mxu0 0.0
      %6160 = vmatpush1.msra.mxu0 0.0
      %6161 = vmatprep.subr.mxu0 0.0
      %6162 = vmatpush1.msra.mxu0 0.0
      %6163 = vmatprep.subr.mxu0 0.0
      %6164 = vmatpush1.msra.mxu0 0.0
      %6165 = vmatprep.subr.mxu0 0.0
      %6166 = vmatpush1.msra.mxu0 0.0
      %6167 = vmatprep.subr.mxu0 0.0
      %6168 = vmatpush1.msra.mxu0 0.0
      %6169 = vmatprep.subr.mxu0 0.0
      %6170 = vmatpush1.msra.mxu0 0.0
      %6171 = vmatprep.subr.mxu0 0.0
      %6172 = vmatpush1.msra.mxu0 0.0
      %6173 = vmatprep.subr.mxu0 0.0
      %6174 = vmatpush1.msra.mxu0 0.0
      %6175 = vmatprep.subr.mxu0 0.0
      %6176 = vmatpush1.msra.mxu0 0.0
      %6177 = vmatprep.subr.mxu0 0.0
      %6178 = vmatpush1.msra.mxu0 0.0
      %6179 = vmatprep.subr.mxu0 0.0
      %6180 = vmatpush1.msra.mxu0 0.0
      %6181 = vmatprep.subr.mxu0 0.0
      %6182 = vmatpush1.msra.mxu0 0.0
      %6183 = vmatprep.subr.mxu0 0.0
      %6184 = vmatpush1.msra.mxu0 0.0
      %6185 = vmatprep.subr.mxu0 0.0
      %6186 = vmatpush1.msra.mxu0 0.0
      %6187 = vmatprep.subr.mxu0 0.0
      %6188 = vmatpush1.msra.mxu0 0.0
      %6189 = vmatprep.subr.mxu0 0.0
      %6190 = vmatpush1.msra.mxu0 0.0
      %6191 = vmatprep.subr.mxu0 0.0
      %6192 = vmatpush1.msra.mxu0 0.0
      %6193 = vmatprep.subr.mxu0 0.0
      %6194 = vmatpush1.msra.mxu0 0.0
      %6195 = vmatprep.subr.mxu0 0.0
      %6196 = vmatpush1.msra.mxu0 0.0
      %6197 = vmatprep.subr.mxu0 0.0
      %6198 = vmatpush1.msra.mxu0 0.0
      %6199 = vmatprep.subr.mxu0 0.0
      %6200 = vmatpush1.msra.mxu0 0.0
      %6201 = vmatprep.subr.mxu0 0.0
      %6202 = vmatpush1.msra.mxu0 0.0
      %6203 = vmatprep.subr.mxu0 0.0
      %6204 = vmatpush1.msra.mxu0 0.0
      %6205 = vmatprep.subr.mxu0 0.0
      %6206 = vmatpush1.msra.mxu0 0.0
      %6207 = vmatprep.mubr.f32.mxu0 0.0
      %6208 = vmatmul.mubr.f32.gmra.mrb[0].mxu0 %v3157
      %v6209 = vpop.f32.mrb[0].mxu0
      %v6210 = vadd.f32 0.0, %v6209
      %v6211 = vpop.f32.mrb[0].mxu0
      %v6212 = vadd.f32 0.0, %v6211
      %6213 = vmatprep.mubr.f32.mxu0 0.0
      %6214 = vmatmul.mubr.f32.gmra.mrb[0].mxu0 %v3160
      %v6215 = vpop.f32.mrb[0].mxu0
      %v6216 = vadd.f32 0.0, %v6215
      %v6217 = vpop.f32.mrb[0].mxu0
      %v6218 = vadd.f32 0.0, %v6217
      %6219 = vmatprep.mubr.f32.mxu0 0.0
      %6220 = vmatmul.mubr.f32.gmra.mrb[0].mxu0 %v3163
      %v6221 = vpop.f32.mrb[0].mxu0
      %v6222 = vadd.f32 0.0, %v6221
      %v6223 = vpop.f32.mrb[0].mxu0
      %v6224 = vadd.f32 0.0, %v6223
      %6225 = vmatprep.mubr.f32.mxu0 0.0
      %6226 = vmatmul.mubr.f32.gmra.mrb[0].mxu0 %v3166
      %v6227 = vpop.f32.mrb[0].mxu0
      %v6228 = vadd.f32 0.0, %v6227
      %v6229 = vpop.f32.mrb[0].mxu0
      %v6230 = vadd.f32 0.0, %v6229
      %6231 = vmatprep.mubr.f32.mxu0 0.0
      %6232 = vmatmul.mubr.f32.gmra.mrb[0].mxu0 %v3169
      %v6233 = vpop.f32.mrb[0].mxu0
      %v6234 = vadd.f32 0.0, %v6233
      %v6235 = vpop.f32.mrb[0].mxu0
      %v6236 = vadd.f32 0.0, %v6235
      %6237 = vmatprep.mubr.f32.mxu0 0.0
      %6238 = vmatmul.mubr.f32.gmra.mrb[0].mxu0 %v3172
      %v6239 = vpop.f32.mrb[0].mxu0
      %v6240 = vadd.f32 0.0, %v6239
      %v6241 = vpop.f32.mrb[0].mxu0
      %v6242 = vadd.f32 0.0, %v6241
      %6243 = vmatprep.mubr.f32.mxu0 0.0
      %6244 = vmatmul.mubr.f32.gmra.mrb[0].mxu0 %v3175
      %v6245 = vpop.f32.mrb[0].mxu0
      %v6246 = vadd.f32 0.0, %v6245
      %v6247 = vpop.f32.mrb[0].mxu0
      %v6248 = vadd.f32 0.0, %v6247
      %6249 = vmatprep.mubr.f32.mxu0 0.0
      %6250 = vmatmul.mubr.f32.gmra.mrb[0].mxu0 %v3178
      %v6251 = vpop.f32.mrb[0].mxu0
      %v6252 = vadd.f32 0.0, %v6251
      %v6253 = vpop.f32.mrb[0].mxu0
      %v6254 = vadd.f32 0.0, %v6253
      %6255 = vmatprep.mubr.f32.mxu0 0.0
      %6256 = vmatmul.mubr.f32.gmra.mrb[0].mxu0 %v3181
      %v6257 = vpop.f32.mrb[0].mxu0
      %v6258 = vadd.f32 0.0, %v6257
      %v6259 = vpop.f32.mrb[0].mxu0
      %v6260 = vadd.f32 0.0, %v6259
      %6261 = vmatprep.mubr.f32.mxu0 0.0
      %6262 = vmatmul.mubr.f32.gmra.mrb[0].mxu0 %v3184
      %v6263 = vpop.f32.mrb[0].mxu0
      %v6264 = vadd.f32 0.0, %v6263
      %v6265 = vpop.f32.mrb[0].mxu0
      %v6266 = vadd.f32 0.0, %v6265
      %6267 = vmatprep.mubr.f32.mxu0 0.0
      %6268 = vmatmul.mubr.f32.gmra.mrb[0].mxu0 %v3187
      %v6269 = vpop.f32.mrb[0].mxu0
      %v6270 = vadd.f32 0.0, %v6269
      %v6271 = vpop.f32.mrb[0].mxu0
      %v6272 = vadd.f32 0.0, %v6271
      %6273 = vmatprep.mubr.f32.mxu0 0.0
      %6274 = vmatmul.mubr.f32.gmra.mrb[0].mxu0 %v3190
      %v6275 = vpop.f32.mrb[0].mxu0
      %v6276 = vadd.f32 0.0, %v6275
      %v6277 = vpop.f32.mrb[0].mxu0
      %v6278 = vadd.f32 0.0, %v6277
      %6279 = vmatprep.mubr.f32.mxu0 0.0
      %6280 = vmatmul.mubr.f32.gmra.mrb[0].mxu0 %v3193
      %v6281 = vpop.f32.mrb[0].mxu0
      %v6282 = vadd.f32 0.0, %v6281
      %v6283 = vpop.f32.mrb[0].mxu0
      %v6284 = vadd.f32 0.0, %v6283
      %6285 = vmatprep.mubr.f32.mxu0 0.0
      %6286 = vmatmul.mubr.f32.gmra.mrb[0].mxu0 %v3196
      %v6287 = vpop.f32.mrb[0].mxu0
      %v6288 = vadd.f32 0.0, %v6287
      %v6289 = vpop.f32.mrb[0].mxu0
      %v6290 = vadd.f32 0.0, %v6289
      %6291 = vmatprep.mubr.f32.mxu0 0.0
      %6292 = vmatmul.mubr.f32.gmra.mrb[0].mxu0 %v3199
      %v6293 = vpop.f32.mrb[0].mxu0
      %v6294 = vadd.f32 0.0, %v6293
      %v6295 = vpop.f32.mrb[0].mxu0
      %v6296 = vadd.f32 0.0, %v6295
      %6297 = vmatprep.mubr.f32.mxu0 0.0
      %6298 = vmatmul.mubr.f32.gmra.mrb[0].mxu0 %v3202
      %v6299 = vpop.f32.mrb[0].mxu0
      %v6300 = vadd.f32 0.0, %v6299
      %v6301 = vpop.f32.mrb[0].mxu0
      %v6302 = vadd.f32 0.0, %v6301
      %6303 = vmatprep.mubr.f32.mxu0 0.0
      %6304 = vmatmul.mubr.f32.gmra.mrb[0].mxu0 %v3205
      %v6305 = vpop.f32.mrb[0].mxu0
      %v6306 = vadd.f32 0.0, %v6305
      %v6307 = vpop.f32.mrb[0].mxu0
      %v6308 = vadd.f32 0.0, %v6307
      %6309 = vmatprep.mubr.f32.mxu0 0.0
      %6310 = vmatmul.mubr.f32.gmra.mrb[0].mxu0 %v3208
      %v6311 = vpop.f32.mrb[0].mxu0
      %v6312 = vadd.f32 0.0, %v6311
      %v6313 = vpop.f32.mrb[0].mxu0
      %v6314 = vadd.f32 0.0, %v6313
      %6315 = vmatprep.mubr.f32.mxu0 0.0
      %6316 = vmatmul.mubr.f32.gmra.mrb[0].mxu0 %v3211
      %v6317 = vpop.f32.mrb[0].mxu0
      %v6318 = vadd.f32 0.0, %v6317
      %v6319 = vpop.f32.mrb[0].mxu0
      %v6320 = vadd.f32 0.0, %v6319
      %6321 = vmatprep.mubr.f32.mxu0 0.0
      %6322 = vmatmul.mubr.f32.gmra.mrb[0].mxu0 %v3214
      %v6323 = vpop.f32.mrb[0].mxu0
      %v6324 = vadd.f32 0.0, %v6323
      %v6325 = vpop.f32.mrb[0].mxu0
      %v6326 = vadd.f32 0.0, %v6325
      %6327 = vmatprep.mubr.f32.mxu0 0.0
      %6328 = vmatmul.mubr.f32.gmra.mrb[0].mxu0 %v3217
      %v6329 = vpop.f32.mrb[0].mxu0
      %v6330 = vadd.f32 0.0, %v6329
      %v6331 = vpop.f32.mrb[0].mxu0
      %v6332 = vadd.f32 0.0, %v6331
      %6333 = vmatprep.mubr.f32.mxu0 0.0
      %6334 = vmatmul.mubr.f32.gmra.mrb[0].mxu0 %v3220
      %v6335 = vpop.f32.mrb[0].mxu0
      %v6336 = vadd.f32 0.0, %v6335
      %v6337 = vpop.f32.mrb[0].mxu0
      %v6338 = vadd.f32 0.0, %v6337
      %6339 = vmatprep.mubr.f32.mxu0 0.0
      %6340 = vmatmul.mubr.f32.gmra.mrb[0].mxu0 %v3223
      %v6341 = vpop.f32.mrb[0].mxu0
      %v6342 = vadd.f32 0.0, %v6341
      %v6343 = vpop.f32.mrb[0].mxu0
      %v6344 = vadd.f32 0.0, %v6343
      %6345 = vmatprep.mubr.f32.mxu0 0.0
      %6346 = vmatmul.mubr.f32.gmra.mrb[0].mxu0 %v3226
      %v6347 = vpop.f32.mrb[0].mxu0
      %v6348 = vadd.f32 0.0, %v6347
      %v6349 = vpop.f32.mrb[0].mxu0
      %v6350 = vadd.f32 0.0, %v6349
      %6351 = vmatprep.mubr.f32.mxu0 0.0
      %6352 = vmatmul.mubr.f32.gmra.mrb[0].mxu0 %v3229
      %v6353 = vpop.f32.mrb[0].mxu0
      %v6354 = vadd.f32 0.0, %v6353
      %v6355 = vpop.f32.mrb[0].mxu0
      %v6356 = vadd.f32 0.0, %v6355
      %6357 = vmatprep.mubr.f32.mxu0 0.0
      %6358 = vmatmul.mubr.f32.gmra.mrb[0].mxu0 %v3232
      %v6359 = vpop.f32.mrb[0].mxu0
      %v6360 = vadd.f32 0.0, %v6359
      %v6361 = vpop.f32.mrb[0].mxu0
      %v6362 = vadd.f32 0.0, %v6361
      %6363 = vmatprep.mubr.f32.mxu0 0.0
      %6364 = vmatmul.mubr.f32.gmra.mrb[0].mxu0 %v3235
      %v6365 = vpop.f32.mrb[0].mxu0
      %v6366 = vadd.f32 0.0, %v6365
      %v6367 = vpop.f32.mrb[0].mxu0
      %v6368 = vadd.f32 0.0, %v6367
      %6369 = vmatprep.mubr.f32.mxu0 0.0
      %6370 = vmatmul.mubr.f32.gmra.mrb[0].mxu0 %v3238
      %v6371 = vpop.f32.mrb[0].mxu0
      %v6372 = vadd.f32 0.0, %v6371
      %v6373 = vpop.f32.mrb[0].mxu0
      %v6374 = vadd.f32 0.0, %v6373
      %6375 = vmatprep.mubr.f32.mxu0 0.0
      %6376 = vmatmul.mubr.f32.gmra.mrb[0].mxu0 %v3241
      %v6377 = vpop.f32.mrb[0].mxu0
      %v6378 = vadd.f32 0.0, %v6377
      %v6379 = vpop.f32.mrb[0].mxu0
      %v6380 = vadd.f32 0.0, %v6379
      %6381 = vmatprep.mubr.f32.mxu0 0.0
      %6382 = vmatmul.mubr.f32.gmra.mrb[0].mxu0 %v3244
      %v6383 = vpop.f32.mrb[0].mxu0
      %v6384 = vadd.f32 0.0, %v6383
      %v6385 = vpop.f32.mrb[0].mxu0
      %v6386 = vadd.f32 0.0, %v6385
      %6387 = vmatprep.mubr.f32.mxu0 0.0
      %6388 = vmatmul.mubr.f32.gmra.mrb[0].mxu0 %v3247
      %v6389 = vpop.f32.mrb[0].mxu0
      %v6390 = vadd.f32 0.0, %v6389
      %v6391 = vpop.f32.mrb[0].mxu0
      %v6392 = vadd.f32 0.0, %v6391
      %6393 = vmatprep.mubr.f32.mxu0 0.0
      %6394 = vmatmul.mubr.f32.gmra.mrb[0].mxu0 %v3250
      %v6395 = vpop.f32.mrb[0].mxu0
      %v6396 = vadd.f32 0.0, %v6395
      %v6397 = vpop.f32.mrb[0].mxu0
      %v6398 = vadd.f32 0.0, %v6397
      %6399 = vmatprep.mubr.f32.mxu0 0.0
      %6400 = vmatmul.mubr.f32.gmra.mrb[0].mxu0 %v3253
      %v6401 = vpop.f32.mrb[0].mxu0
      %v6402 = vadd.f32 0.0, %v6401
      %v6403 = vpop.f32.mrb[0].mxu0
      %v6404 = vadd.f32 0.0, %v6403
      %6405 = vmatprep.mubr.f32.mxu0 0.0
      %6406 = vmatmul.mubr.f32.gmra.mrb[0].mxu0 %v3256
      %v6407 = vpop.f32.mrb[0].mxu0
      %v6408 = vadd.f32 0.0, %v6407
      %v6409 = vpop.f32.mrb[0].mxu0
      %v6410 = vadd.f32 0.0, %v6409
      %6411 = vmatprep.mubr.f32.mxu0 0.0
      %6412 = vmatmul.mubr.f32.gmra.mrb[0].mxu0 %v3259
      %v6413 = vpop.f32.mrb[0].mxu0
      %v6414 = vadd.f32 0.0, %v6413
      %v6415 = vpop.f32.mrb[0].mxu0
      %v6416 = vadd.f32 0.0, %v6415
      %6417 = vmatprep.mubr.f32.mxu0 0.0
      %6418 = vmatmul.mubr.f32.gmra.mrb[0].mxu0 %v3262
      %v6419 = vpop.f32.mrb[0].mxu0
      %v6420 = vadd.f32 0.0, %v6419
      %v6421 = vpop.f32.mrb[0].mxu0
      %v6422 = vadd.f32 0.0, %v6421
      %6423 = vmatprep.mubr.f32.mxu0 0.0
      %6424 = vmatmul.mubr.f32.gmra.mrb[0].mxu0 %v3265
      %v6425 = vpop.f32.mrb[0].mxu0
      %v6426 = vadd.f32 0.0, %v6425
      %v6427 = vpop.f32.mrb[0].mxu0
      %v6428 = vadd.f32 0.0, %v6427
      %6429 = vmatprep.mubr.f32.mxu0 0.0
      %6430 = vmatmul.mubr.f32.gmra.mrb[0].mxu0 %v3268
      %v6431 = vpop.f32.mrb[0].mxu0
      %v6432 = vadd.f32 0.0, %v6431
      %v6433 = vpop.f32.mrb[0].mxu0
      %v6434 = vadd.f32 0.0, %v6433
      %6435 = vmatprep.mubr.f32.mxu0 0.0
      %6436 = vmatmul.mubr.f32.gmra.mrb[0].mxu0 %v3271
      %v6437 = vpop.f32.mrb[0].mxu0
      %v6438 = vadd.f32 0.0, %v6437
      %v6439 = vpop.f32.mrb[0].mxu0
      %v6440 = vadd.f32 0.0, %v6439
      %6441 = vmatprep.mubr.f32.mxu0 0.0
      %6442 = vmatmul.mubr.f32.gmra.mrb[0].mxu0 %v3274
      %v6443 = vpop.f32.mrb[0].mxu0
      %v6444 = vadd.f32 0.0, %v6443
      %v6445 = vpop.f32.mrb[0].mxu0
      %v6446 = vadd.f32 0.0, %v6445
      %6447 = vmatprep.mubr.f32.mxu0 0.0
      %6448 = vmatmul.mubr.f32.gmra.mrb[0].mxu0 %v3277
      %v6449 = vpop.f32.mrb[0].mxu0
      %v6450 = vadd.f32 0.0, %v6449
      %v6451 = vpop.f32.mrb[0].mxu0
      %v6452 = vadd.f32 0.0, %v6451
      %6453 = vmatprep.mubr.f32.mxu0 0.0
      %6454 = vmatmul.mubr.f32.gmra.mrb[0].mxu0 %v3280
      %v6455 = vpop.f32.mrb[0].mxu0
      %v6456 = vadd.f32 0.0, %v6455
      %v6457 = vpop.f32.mrb[0].mxu0
      %v6458 = vadd.f32 0.0, %v6457
      %6459 = vmatprep.mubr.f32.mxu0 0.0
      %6460 = vmatmul.mubr.f32.gmra.mrb[0].mxu0 %v3283
      %v6461 = vpop.f32.mrb[0].mxu0
      %v6462 = vadd.f32 0.0, %v6461
      %v6463 = vpop.f32.mrb[0].mxu0
      %v6464 = vadd.f32 0.0, %v6463
      %6465 = vmatprep.mubr.f32.mxu0 0.0
      %6466 = vmatmul.mubr.f32.gmra.mrb[0].mxu0 %v3286
      %v6467 = vpop.f32.mrb[0].mxu0
      %v6468 = vadd.f32 0.0, %v6467
      %v6469 = vpop.f32.mrb[0].mxu0
      %v6470 = vadd.f32 0.0, %v6469
      %6471 = vmatprep.mubr.f32.mxu0 0.0
      %6472 = vmatmul.mubr.f32.gmra.mrb[0].mxu0 %v3289
      %v6473 = vpop.f32.mrb[0].mxu0
      %v6474 = vadd.f32 0.0, %v6473
      %v6475 = vpop.f32.mrb[0].mxu0
      %v6476 = vadd.f32 0.0, %v6475
      %6477 = vmatprep.mubr.f32.mxu0 0.0
      %6478 = vmatmul.mubr.f32.gmra.mrb[0].mxu0 %v3292
      %v6479 = vpop.f32.mrb[0].mxu0
      %v6480 = vadd.f32 0.0, %v6479
      %v6481 = vpop.f32.mrb[0].mxu0
      %v6482 = vadd.f32 0.0, %v6481
      %6483 = vmatprep.mubr.f32.mxu0 0.0
      %6484 = vmatmul.mubr.f32.gmra.mrb[0].mxu0 %v3295
      %v6485 = vpop.f32.mrb[0].mxu0
      %v6486 = vadd.f32 0.0, %v6485
      %v6487 = vpop.f32.mrb[0].mxu0
      %v6488 = vadd.f32 0.0, %v6487
      %6489 = vmatprep.mubr.f32.mxu0 0.0
      %6490 = vmatmul.mubr.f32.gmra.mrb[0].mxu0 %v3298
      %v6491 = vpop.f32.mrb[0].mxu0
      %v6492 = vadd.f32 0.0, %v6491
      %v6493 = vpop.f32.mrb[0].mxu0
      %v6494 = vadd.f32 0.0, %v6493
      %6495 = vmatprep.mubr.f32.mxu0 0.0
      %6496 = vmatmul.mubr.f32.gmra.mrb[0].mxu0 %v3301
      %v6497 = vpop.f32.mrb[0].mxu0
      %v6498 = vadd.f32 0.0, %v6497
      %v6499 = vpop.f32.mrb[0].mxu0
      %v6500 = vadd.f32 0.0, %v6499
      %6501 = vdwg.mxu0
      %6502 = vmatprep.subr.mxu0 %v376
      %6503 = vmatpush1.msra.mxu0 %v375
      %6504 = vmatprep.subr.mxu0 %v400
      %6505 = vmatpush1.msra.mxu0 %v399
      %6506 = vmatprep.subr.mxu0 0.0
      %6507 = vmatpush1.msra.mxu0 0.0
      %6508 = vmatprep.subr.mxu0 0.0
      %6509 = vmatpush1.msra.mxu0 0.0
      %6510 = vmatprep.subr.mxu0 0.0
      %6511 = vmatpush1.msra.mxu0 0.0
      %6512 = vmatprep.subr.mxu0 0.0
      %6513 = vmatpush1.msra.mxu0 0.0
      %6514 = vmatprep.subr.mxu0 0.0
      %6515 = vmatpush1.msra.mxu0 0.0
      %6516 = vmatprep.subr.mxu0 0.0
      %6517 = vmatpush1.msra.mxu0 0.0
      %6518 = vmatprep.subr.mxu0 0.0
      %6519 = vmatpush1.msra.mxu0 0.0
      %6520 = vmatprep.subr.mxu0 0.0
      %6521 = vmatpush1.msra.mxu0 0.0
      %6522 = vmatprep.subr.mxu0 0.0
      %6523 = vmatpush1.msra.mxu0 0.0
      %6524 = vmatprep.subr.mxu0 0.0
      %6525 = vmatpush1.msra.mxu0 0.0
      %6526 = vmatprep.subr.mxu0 0.0
      %6527 = vmatpush1.msra.mxu0 0.0
      %6528 = vmatprep.subr.mxu0 0.0
      %6529 = vmatpush1.msra.mxu0 0.0
      %6530 = vmatprep.subr.mxu0 0.0
      %6531 = vmatpush1.msra.mxu0 0.0
      %6532 = vmatprep.subr.mxu0 0.0
      %6533 = vmatpush1.msra.mxu0 0.0
      %6534 = vmatprep.subr.mxu0 0.0
      %6535 = vmatpush1.msra.mxu0 0.0
      %6536 = vmatprep.subr.mxu0 0.0
      %6537 = vmatpush1.msra.mxu0 0.0
      %6538 = vmatprep.subr.mxu0 0.0
      %6539 = vmatpush1.msra.mxu0 0.0
      %6540 = vmatprep.subr.mxu0 0.0
      %6541 = vmatpush1.msra.mxu0 0.0
      %6542 = vmatprep.subr.mxu0 0.0
      %6543 = vmatpush1.msra.mxu0 0.0
      %6544 = vmatprep.subr.mxu0 0.0
      %6545 = vmatpush1.msra.mxu0 0.0
      %6546 = vmatprep.subr.mxu0 0.0
      %6547 = vmatpush1.msra.mxu0 0.0
      %6548 = vmatprep.subr.mxu0 0.0
      %6549 = vmatpush1.msra.mxu0 0.0
      %6550 = vmatprep.subr.mxu0 0.0
      %6551 = vmatpush1.msra.mxu0 0.0
      %6552 = vmatprep.subr.mxu0 0.0
      %6553 = vmatpush1.msra.mxu0 0.0
      %6554 = vmatprep.subr.mxu0 0.0
      %6555 = vmatpush1.msra.mxu0 0.0
      %6556 = vmatprep.subr.mxu0 0.0
      %6557 = vmatpush1.msra.mxu0 0.0
      %6558 = vmatprep.subr.mxu0 0.0
      %6559 = vmatpush1.msra.mxu0 0.0
      %6560 = vmatprep.subr.mxu0 0.0
      %6561 = vmatpush1.msra.mxu0 0.0
      %6562 = vmatprep.subr.mxu0 0.0
      %6563 = vmatpush1.msra.mxu0 0.0
      %6564 = vmatprep.subr.mxu0 0.0
      %6565 = vmatpush1.msra.mxu0 0.0
      %6566 = vmatprep.mubr.f32.mxu0 0.0
      %6567 = vmatmul.mubr.f32.gmra.mrb[0].mxu0 %v3157
      %v6568 = vpop.f32.mrb[0].mxu0
      %v6569 = vadd.f32 0.0, %v6568
      %v6570 = vpop.f32.mrb[0].mxu0
      %v6571 = vadd.f32 0.0, %v6570
      %6572 = vmatprep.mubr.f32.mxu0 0.0
      %6573 = vmatmul.mubr.f32.gmra.mrb[0].mxu0 %v3160
      %v6574 = vpop.f32.mrb[0].mxu0
      %v6575 = vadd.f32 0.0, %v6574
      %v6576 = vpop.f32.mrb[0].mxu0
      %v6577 = vadd.f32 0.0, %v6576
      %6578 = vmatprep.mubr.f32.mxu0 0.0
      %6579 = vmatmul.mubr.f32.gmra.mrb[0].mxu0 %v3163
      %v6580 = vpop.f32.mrb[0].mxu0
      %v6581 = vadd.f32 0.0, %v6580
      %v6582 = vpop.f32.mrb[0].mxu0
      %v6583 = vadd.f32 0.0, %v6582
      %6584 = vmatprep.mubr.f32.mxu0 0.0
      %6585 = vmatmul.mubr.f32.gmra.mrb[0].mxu0 %v3166
      %v6586 = vpop.f32.mrb[0].mxu0
      %v6587 = vadd.f32 0.0, %v6586
      %v6588 = vpop.f32.mrb[0].mxu0
      %v6589 = vadd.f32 0.0, %v6588
      %6590 = vmatprep.mubr.f32.mxu0 0.0
      %6591 = vmatmul.mubr.f32.gmra.mrb[0].mxu0 %v3169
      %v6592 = vpop.f32.mrb[0].mxu0
      %v6593 = vadd.f32 0.0, %v6592
      %v6594 = vpop.f32.mrb[0].mxu0
      %v6595 = vadd.f32 0.0, %v6594
      %6596 = vmatprep.mubr.f32.mxu0 0.0
      %6597 = vmatmul.mubr.f32.gmra.mrb[0].mxu0 %v3172
      %v6598 = vpop.f32.mrb[0].mxu0
      %v6599 = vadd.f32 0.0, %v6598
      %v6600 = vpop.f32.mrb[0].mxu0
      %v6601 = vadd.f32 0.0, %v6600
      %6602 = vmatprep.mubr.f32.mxu0 0.0
      %6603 = vmatmul.mubr.f32.gmra.mrb[0].mxu0 %v3175
      %v6604 = vpop.f32.mrb[0].mxu0
      %v6605 = vadd.f32 0.0, %v6604
      %v6606 = vpop.f32.mrb[0].mxu0
      %v6607 = vadd.f32 0.0, %v6606
      %6608 = vmatprep.mubr.f32.mxu0 0.0
      %6609 = vmatmul.mubr.f32.gmra.mrb[0].mxu0 %v3178
      %v6610 = vpop.f32.mrb[0].mxu0
      %v6611 = vadd.f32 0.0, %v6610
      %v6612 = vpop.f32.mrb[0].mxu0
      %v6613 = vadd.f32 0.0, %v6612
      %6614 = vmatprep.mubr.f32.mxu0 0.0
      %6615 = vmatmul.mubr.f32.gmra.mrb[0].mxu0 %v3181
      %v6616 = vpop.f32.mrb[0].mxu0
      %v6617 = vadd.f32 0.0, %v6616
      %v6618 = vpop.f32.mrb[0].mxu0
      %v6619 = vadd.f32 0.0, %v6618
      %6620 = vmatprep.mubr.f32.mxu0 0.0
      %6621 = vmatmul.mubr.f32.gmra.mrb[0].mxu0 %v3184
      %v6622 = vpop.f32.mrb[0].mxu0
      %v6623 = vadd.f32 0.0, %v6622
      %v6624 = vpop.f32.mrb[0].mxu0
      %v6625 = vadd.f32 0.0, %v6624
      %6626 = vmatprep.mubr.f32.mxu0 0.0
      %6627 = vmatmul.mubr.f32.gmra.mrb[0].mxu0 %v3187
      %v6628 = vpop.f32.mrb[0].mxu0
      %v6629 = vadd.f32 0.0, %v6628
      %v6630 = vpop.f32.mrb[0].mxu0
      %v6631 = vadd.f32 0.0, %v6630
      %6632 = vmatprep.mubr.f32.mxu0 0.0
      %6633 = vmatmul.mubr.f32.gmra.mrb[0].mxu0 %v3190
      %v6634 = vpop.f32.mrb[0].mxu0
      %v6635 = vadd.f32 0.0, %v6634
      %v6636 = vpop.f32.mrb[0].mxu0
      %v6637 = vadd.f32 0.0, %v6636
      %6638 = vmatprep.mubr.f32.mxu0 0.0
      %6639 = vmatmul.mubr.f32.gmra.mrb[0].mxu0 %v3193
      %v6640 = vpop.f32.mrb[0].mxu0
      %v6641 = vadd.f32 0.0, %v6640
      %v6642 = vpop.f32.mrb[0].mxu0
      %v6643 = vadd.f32 0.0, %v6642
      %6644 = vmatprep.mubr.f32.mxu0 0.0
      %6645 = vmatmul.mubr.f32.gmra.mrb[0].mxu0 %v3196
      %v6646 = vpop.f32.mrb[0].mxu0
      %v6647 = vadd.f32 0.0, %v6646
      %v6648 = vpop.f32.mrb[0].mxu0
      %v6649 = vadd.f32 0.0, %v6648
      %6650 = vmatprep.mubr.f32.mxu0 0.0
      %6651 = vmatmul.mubr.f32.gmra.mrb[0].mxu0 %v3199
      %v6652 = vpop.f32.mrb[0].mxu0
      %v6653 = vadd.f32 0.0, %v6652
      %v6654 = vpop.f32.mrb[0].mxu0
      %v6655 = vadd.f32 0.0, %v6654
      %6656 = vmatprep.mubr.f32.mxu0 0.0
      %6657 = vmatmul.mubr.f32.gmra.mrb[0].mxu0 %v3202
      %v6658 = vpop.f32.mrb[0].mxu0
      %v6659 = vadd.f32 0.0, %v6658
      %v6660 = vpop.f32.mrb[0].mxu0
      %v6661 = vadd.f32 0.0, %v6660
      %6662 = vmatprep.mubr.f32.mxu0 0.0
      %6663 = vmatmul.mubr.f32.gmra.mrb[0].mxu0 %v3205
      %v6664 = vpop.f32.mrb[0].mxu0
      %v6665 = vadd.f32 0.0, %v6664
      %v6666 = vpop.f32.mrb[0].mxu0
      %v6667 = vadd.f32 0.0, %v6666
      %6668 = vmatprep.mubr.f32.mxu0 0.0
      %6669 = vmatmul.mubr.f32.gmra.mrb[0].mxu0 %v3208
      %v6670 = vpop.f32.mrb[0].mxu0
      %v6671 = vadd.f32 0.0, %v6670
      %v6672 = vpop.f32.mrb[0].mxu0
      %v6673 = vadd.f32 0.0, %v6672
      %6674 = vmatprep.mubr.f32.mxu0 0.0
      %6675 = vmatmul.mubr.f32.gmra.mrb[0].mxu0 %v3211
      %v6676 = vpop.f32.mrb[0].mxu0
      %v6677 = vadd.f32 0.0, %v6676
      %v6678 = vpop.f32.mrb[0].mxu0
      %v6679 = vadd.f32 0.0, %v6678
      %6680 = vmatprep.mubr.f32.mxu0 0.0
      %6681 = vmatmul.mubr.f32.gmra.mrb[0].mxu0 %v3214
      %v6682 = vpop.f32.mrb[0].mxu0
      %v6683 = vadd.f32 0.0, %v6682
      %v6684 = vpop.f32.mrb[0].mxu0
      %v6685 = vadd.f32 0.0, %v6684
      %6686 = vmatprep.mubr.f32.mxu0 0.0
      %6687 = vmatmul.mubr.f32.gmra.mrb[0].mxu0 %v3217
      %v6688 = vpop.f32.mrb[0].mxu0
      %v6689 = vadd.f32 0.0, %v6688
      %v6690 = vpop.f32.mrb[0].mxu0
      %v6691 = vadd.f32 0.0, %v6690
      %6692 = vmatprep.mubr.f32.mxu0 0.0
      %6693 = vmatmul.mubr.f32.gmra.mrb[0].mxu0 %v3220
      %v6694 = vpop.f32.mrb[0].mxu0
      %v6695 = vadd.f32 0.0, %v6694
      %v6696 = vpop.f32.mrb[0].mxu0
      %v6697 = vadd.f32 0.0, %v6696
      %6698 = vmatprep.mubr.f32.mxu0 0.0
      %6699 = vmatmul.mubr.f32.gmra.mrb[0].mxu0 %v3223
      %v6700 = vpop.f32.mrb[0].mxu0
      %v6701 = vadd.f32 0.0, %v6700
      %v6702 = vpop.f32.mrb[0].mxu0
      %v6703 = vadd.f32 0.0, %v6702
      %6704 = vmatprep.mubr.f32.mxu0 0.0
      %6705 = vmatmul.mubr.f32.gmra.mrb[0].mxu0 %v3226
      %v6706 = vpop.f32.mrb[0].mxu0
      %v6707 = vadd.f32 0.0, %v6706
      %v6708 = vpop.f32.mrb[0].mxu0
      %v6709 = vadd.f32 0.0, %v6708
      %6710 = vmatprep.mubr.f32.mxu0 0.0
      %6711 = vmatmul.mubr.f32.gmra.mrb[0].mxu0 %v3229
      %v6712 = vpop.f32.mrb[0].mxu0
      %v6713 = vadd.f32 0.0, %v6712
      %v6714 = vpop.f32.mrb[0].mxu0
      %v6715 = vadd.f32 0.0, %v6714
      %6716 = vmatprep.mubr.f32.mxu0 0.0
      %6717 = vmatmul.mubr.f32.gmra.mrb[0].mxu0 %v3232
      %v6718 = vpop.f32.mrb[0].mxu0
      %v6719 = vadd.f32 0.0, %v6718
      %v6720 = vpop.f32.mrb[0].mxu0
      %v6721 = vadd.f32 0.0, %v6720
      %6722 = vmatprep.mubr.f32.mxu0 0.0
      %6723 = vmatmul.mubr.f32.gmra.mrb[0].mxu0 %v3235
      %v6724 = vpop.f32.mrb[0].mxu0
      %v6725 = vadd.f32 0.0, %v6724
      %v6726 = vpop.f32.mrb[0].mxu0
      %v6727 = vadd.f32 0.0, %v6726
      %6728 = vmatprep.mubr.f32.mxu0 0.0
      %6729 = vmatmul.mubr.f32.gmra.mrb[0].mxu0 %v3238
      %v6730 = vpop.f32.mrb[0].mxu0
      %v6731 = vadd.f32 0.0, %v6730
      %v6732 = vpop.f32.mrb[0].mxu0
      %v6733 = vadd.f32 0.0, %v6732
      %6734 = vmatprep.mubr.f32.mxu0 0.0
      %6735 = vmatmul.mubr.f32.gmra.mrb[0].mxu0 %v3241
      %v6736 = vpop.f32.mrb[0].mxu0
      %v6737 = vadd.f32 0.0, %v6736
      %v6738 = vpop.f32.mrb[0].mxu0
      %v6739 = vadd.f32 0.0, %v6738
      %6740 = vmatprep.mubr.f32.mxu0 0.0
      %6741 = vmatmul.mubr.f32.gmra.mrb[0].mxu0 %v3244
      %v6742 = vpop.f32.mrb[0].mxu0
      %v6743 = vadd.f32 0.0, %v6742
      %v6744 = vpop.f32.mrb[0].mxu0
      %v6745 = vadd.f32 0.0, %v6744
      %6746 = vmatprep.mubr.f32.mxu0 0.0
      %6747 = vmatmul.mubr.f32.gmra.mrb[0].mxu0 %v3247
      %v6748 = vpop.f32.mrb[0].mxu0
      %v6749 = vadd.f32 0.0, %v6748
      %v6750 = vpop.f32.mrb[0].mxu0
      %v6751 = vadd.f32 0.0, %v6750
      %6752 = vmatprep.mubr.f32.mxu0 0.0
      %6753 = vmatmul.mubr.f32.gmra.mrb[0].mxu0 %v3250
      %v6754 = vpop.f32.mrb[0].mxu0
      %v6755 = vadd.f32 0.0, %v6754
      %v6756 = vpop.f32.mrb[0].mxu0
      %v6757 = vadd.f32 0.0, %v6756
      %6758 = vmatprep.mubr.f32.mxu0 0.0
      %6759 = vmatmul.mubr.f32.gmra.mrb[0].mxu0 %v3253
      %v6760 = vpop.f32.mrb[0].mxu0
      %v6761 = vadd.f32 0.0, %v6760
      %v6762 = vpop.f32.mrb[0].mxu0
      %v6763 = vadd.f32 0.0, %v6762
      %6764 = vmatprep.mubr.f32.mxu0 0.0
      %6765 = vmatmul.mubr.f32.gmra.mrb[0].mxu0 %v3256
      %v6766 = vpop.f32.mrb[0].mxu0
      %v6767 = vadd.f32 0.0, %v6766
      %v6768 = vpop.f32.mrb[0].mxu0
      %v6769 = vadd.f32 0.0, %v6768
      %6770 = vmatprep.mubr.f32.mxu0 0.0
      %6771 = vmatmul.mubr.f32.gmra.mrb[0].mxu0 %v3259
      %v6772 = vpop.f32.mrb[0].mxu0
      %v6773 = vadd.f32 0.0, %v6772
      %v6774 = vpop.f32.mrb[0].mxu0
      %v6775 = vadd.f32 0.0, %v6774
      %6776 = vmatprep.mubr.f32.mxu0 0.0
      %6777 = vmatmul.mubr.f32.gmra.mrb[0].mxu0 %v3262
      %v6778 = vpop.f32.mrb[0].mxu0
      %v6779 = vadd.f32 0.0, %v6778
      %v6780 = vpop.f32.mrb[0].mxu0
      %v6781 = vadd.f32 0.0, %v6780
      %6782 = vmatprep.mubr.f32.mxu0 0.0
      %6783 = vmatmul.mubr.f32.gmra.mrb[0].mxu0 %v3265
      %v6784 = vpop.f32.mrb[0].mxu0
      %v6785 = vadd.f32 0.0, %v6784
      %v6786 = vpop.f32.mrb[0].mxu0
      %v6787 = vadd.f32 0.0, %v6786
      %6788 = vmatprep.mubr.f32.mxu0 0.0
      %6789 = vmatmul.mubr.f32.gmra.mrb[0].mxu0 %v3268
      %v6790 = vpop.f32.mrb[0].mxu0
      %v6791 = vadd.f32 0.0, %v6790
      %v6792 = vpop.f32.mrb[0].mxu0
      %v6793 = vadd.f32 0.0, %v6792
      %6794 = vmatprep.mubr.f32.mxu0 0.0
      %6795 = vmatmul.mubr.f32.gmra.mrb[0].mxu0 %v3271
      %v6796 = vpop.f32.mrb[0].mxu0
      %v6797 = vadd.f32 0.0, %v6796
      %v6798 = vpop.f32.mrb[0].mxu0
      %v6799 = vadd.f32 0.0, %v6798
      %6800 = vmatprep.mubr.f32.mxu0 0.0
      %6801 = vmatmul.mubr.f32.gmra.mrb[0].mxu0 %v3274
      %v6802 = vpop.f32.mrb[0].mxu0
      %v6803 = vadd.f32 0.0, %v6802
      %v6804 = vpop.f32.mrb[0].mxu0
      %v6805 = vadd.f32 0.0, %v6804
      %6806 = vmatprep.mubr.f32.mxu0 0.0
      %6807 = vmatmul.mubr.f32.gmra.mrb[0].mxu0 %v3277
      %v6808 = vpop.f32.mrb[0].mxu0
      %v6809 = vadd.f32 0.0, %v6808
      %v6810 = vpop.f32.mrb[0].mxu0
      %v6811 = vadd.f32 0.0, %v6810
      %6812 = vmatprep.mubr.f32.mxu0 0.0
      %6813 = vmatmul.mubr.f32.gmra.mrb[0].mxu0 %v3280
      %v6814 = vpop.f32.mrb[0].mxu0
      %v6815 = vadd.f32 0.0, %v6814
      %v6816 = vpop.f32.mrb[0].mxu0
      %v6817 = vadd.f32 0.0, %v6816
      %6818 = vmatprep.mubr.f32.mxu0 0.0
      %6819 = vmatmul.mubr.f32.gmra.mrb[0].mxu0 %v3283
      %v6820 = vpop.f32.mrb[0].mxu0
      %v6821 = vadd.f32 0.0, %v6820
      %v6822 = vpop.f32.mrb[0].mxu0
      %v6823 = vadd.f32 0.0, %v6822
      %6824 = vmatprep.mubr.f32.mxu0 0.0
      %6825 = vmatmul.mubr.f32.gmra.mrb[0].mxu0 %v3286
      %v6826 = vpop.f32.mrb[0].mxu0
      %v6827 = vadd.f32 0.0, %v6826
      %v6828 = vpop.f32.mrb[0].mxu0
      %v6829 = vadd.f32 0.0, %v6828
      %6830 = vmatprep.mubr.f32.mxu0 0.0
      %6831 = vmatmul.mubr.f32.gmra.mrb[0].mxu0 %v3289
      %v6832 = vpop.f32.mrb[0].mxu0
      %v6833 = vadd.f32 0.0, %v6832
      %v6834 = vpop.f32.mrb[0].mxu0
      %v6835 = vadd.f32 0.0, %v6834
      %6836 = vmatprep.mubr.f32.mxu0 0.0
      %6837 = vmatmul.mubr.f32.gmra.mrb[0].mxu0 %v3292
      %v6838 = vpop.f32.mrb[0].mxu0
      %v6839 = vadd.f32 0.0, %v6838
      %v6840 = vpop.f32.mrb[0].mxu0
      %v6841 = vadd.f32 0.0, %v6840
      %6842 = vmatprep.mubr.f32.mxu0 0.0
      %6843 = vmatmul.mubr.f32.gmra.mrb[0].mxu0 %v3295
      %v6844 = vpop.f32.mrb[0].mxu0
      %v6845 = vadd.f32 0.0, %v6844
      %v6846 = vpop.f32.mrb[0].mxu0
      %v6847 = vadd.f32 0.0, %v6846
      %6848 = vmatprep.mubr.f32.mxu0 0.0
      %6849 = vmatmul.mubr.f32.gmra.mrb[0].mxu0 %v3298
      %v6850 = vpop.f32.mrb[0].mxu0
      %v6851 = vadd.f32 0.0, %v6850
      %v6852 = vpop.f32.mrb[0].mxu0
      %v6853 = vadd.f32 0.0, %v6852
      %6854 = vmatprep.mubr.f32.mxu0 0.0
      %6855 = vmatmul.mubr.f32.gmra.mrb[0].mxu0 %v3301
      %v6856 = vpop.f32.mrb[0].mxu0
      %v6857 = vadd.f32 0.0, %v6856
      %v6858 = vpop.f32.mrb[0].mxu0
      %v6859 = vadd.f32 0.0, %v6858
      %6860 = vdwg.mxu0
      %v6861 = vmul.f32 %v5492, %v2370
      %v6862 = vmul.f32 %v5494, %v2372
      %v6863 = vmul.f32 %v5498, %v2374
      %v6864 = vmul.f32 %v5500, %v2376
      %v6865 = vmul.f32 %v5504, %v2380
      %v6866 = vmul.f32 %v5506, %v2382
      %v6867 = vmul.f32 %v5510, %v2384
      %v6868 = vmul.f32 %v5512, %v2386
      %v6869 = vmul.f32 %v5516, %v2390
      %v6870 = vmul.f32 %v5518, %v2392
      %v6871 = vmul.f32 %v5522, %v2394
      %v6872 = vmul.f32 %v5524, %v2396
      %v6873 = vmul.f32 %v5528, %v2400
      %v6874 = vmul.f32 %v5530, %v2402
      %v6875 = vmul.f32 %v5534, %v2404
      %v6876 = vmul.f32 %v5536, %v2406
      %v6877 = vmul.f32 %v5540, %v2410
      %v6878 = vmul.f32 %v5542, %v2412
      %v6879 = vmul.f32 %v5546, %v2414
      %v6880 = vmul.f32 %v5548, %v2416
      %v6881 = vmul.f32 %v5552, %v2420
      %v6882 = vmul.f32 %v5554, %v2422
      %v6883 = vmul.f32 %v5558, %v2424
      %v6884 = vmul.f32 %v5560, %v2426
      %v6885 = vmul.f32 %v5564, %v2430
      %v6886 = vmul.f32 %v5566, %v2432
      %v6887 = vmul.f32 %v5570, %v2434
      %v6888 = vmul.f32 %v5572, %v2436
      %v6889 = vmul.f32 %v5576, %v2440
      %v6890 = vmul.f32 %v5578, %v2442
      %v6891 = vmul.f32 %v5582, %v2444
      %v6892 = vmul.f32 %v5584, %v2446
      %v6893 = vmul.f32 %v5588, %v2450
      %v6894 = vmul.f32 %v5590, %v2452
      %v6895 = vmul.f32 %v5594, %v2454
      %v6896 = vmul.f32 %v5596, %v2456
      %v6897 = vmul.f32 %v5600, %v2460
      %v6898 = vmul.f32 %v5602, %v2462
      %v6899 = vmul.f32 %v5606, %v2464
      %v6900 = vmul.f32 %v5608, %v2466
      %v6901 = vmul.f32 %v5612, %v2470
      %v6902 = vmul.f32 %v5614, %v2472
      %v6903 = vmul.f32 %v5618, %v2474
      %v6904 = vmul.f32 %v5620, %v2476
      %v6905 = vmul.f32 %v5624, %v2480
      %v6906 = vmul.f32 %v5626, %v2482
      %v6907 = vmul.f32 %v5630, %v2484
      %v6908 = vmul.f32 %v5632, %v2486
      %v6909 = vmul.f32 %v5636, %v2490
      %v6910 = vmul.f32 %v5638, %v2492
      %v6911 = vmul.f32 %v5642, %v2494
      %v6912 = vmul.f32 %v5644, %v2496
      %v6913 = vmul.f32 %v5648, %v2500
      %v6914 = vmul.f32 %v5650, %v2502
      %v6915 = vmul.f32 %v5654, %v2504
      %v6916 = vmul.f32 %v5656, %v2506
      %v6917 = vmul.f32 %v5660, %v2510
      %v6918 = vmul.f32 %v5662, %v2512
      %v6919 = vmul.f32 %v5666, %v2514
      %v6920 = vmul.f32 %v5668, %v2516
      %v6921 = vmul.f32 %v5672, %v2520
      %v6922 = vmul.f32 %v5674, %v2522
      %v6923 = vmul.f32 %v5678, %v2524
      %v6924 = vmul.f32 %v5680, %v2526
      %v6925 = vmul.f32 %v5684, %v2530
      %v6926 = vmul.f32 %v5686, %v2532
      %v6927 = vmul.f32 %v5690, %v2534
      %v6928 = vmul.f32 %v5692, %v2536
      %v6929 = vmul.f32 %v5696, %v2540
      %v6930 = vmul.f32 %v5698, %v2542
      %v6931 = vmul.f32 %v5702, %v2544
      %v6932 = vmul.f32 %v5704, %v2546
      %v6933 = vmul.f32 %v5708, %v2550
      %v6934 = vmul.f32 %v5710, %v2552
      %v6935 = vmul.f32 %v5714, %v2554
      %v6936 = vmul.f32 %v5716, %v2556
      %v6937 = vmul.f32 %v5720, %v2560
      %v6938 = vmul.f32 %v5722, %v2562
      %v6939 = vmul.f32 %v5726, %v2564
      %v6940 = vmul.f32 %v5728, %v2566
      %v6941 = vmul.f32 %v5732, %v2570
      %v6942 = vmul.f32 %v5734, %v2572
      %v6943 = vmul.f32 %v5738, %v2574
      %v6944 = vmul.f32 %v5740, %v2576
      %v6945 = vmul.f32 %v5744, %v2580
      %v6946 = vmul.f32 %v5746, %v2582
      %v6947 = vmul.f32 %v5750, %v2584
      %v6948 = vmul.f32 %v5752, %v2586
      %v6949 = vmul.f32 %v5756, %v2590
      %v6950 = vmul.f32 %v5758, %v2592
      %v6951 = vmul.f32 %v5762, %v2594
      %v6952 = vmul.f32 %v5764, %v2596
      %v6953 = vmul.f32 %v5768, %v2600
      %v6954 = vmul.f32 %v5770, %v2602
      %v6955 = vmul.f32 %v5774, %v2604
      %v6956 = vmul.f32 %v5776, %v2606
      %v6957 = vmul.f32 %v5780, %v2610
      %v6958 = vmul.f32 %v5782, %v2612
      %v6959 = vmul.f32 %v5851, %v2614
      %v6960 = vmul.f32 %v5853, %v2616
      %v6961 = vmul.f32 %v5857, %v2620
      %v6962 = vmul.f32 %v5859, %v2622
      %v6963 = vmul.f32 %v5863, %v2624
      %v6964 = vmul.f32 %v5865, %v2626
      %v6965 = vmul.f32 %v5869, %v2630
      %v6966 = vmul.f32 %v5871, %v2632
      %v6967 = vmul.f32 %v5875, %v2634
      %v6968 = vmul.f32 %v5877, %v2636
      %v6969 = vmul.f32 %v5881, %v2640
      %v6970 = vmul.f32 %v5883, %v2642
      %v6971 = vmul.f32 %v5887, %v2644
      %v6972 = vmul.f32 %v5889, %v2646
      %v6973 = vmul.f32 %v5893, %v2650
      %v6974 = vmul.f32 %v5895, %v2652
      %v6975 = vmul.f32 %v5899, %v2654
      %v6976 = vmul.f32 %v5901, %v2656
      %v6977 = vmul.f32 %v5905, %v2660
      %v6978 = vmul.f32 %v5907, %v2662
      %v6979 = vmul.f32 %v5911, %v2664
      %v6980 = vmul.f32 %v5913, %v2666
      %v6981 = vmul.f32 %v5917, %v2670
      %v6982 = vmul.f32 %v5919, %v2672
      %v6983 = vmul.f32 %v5923, %v2674
      %v6984 = vmul.f32 %v5925, %v2676
      %v6985 = vmul.f32 %v5929, %v2680
      %v6986 = vmul.f32 %v5931, %v2682
      %v6987 = vmul.f32 %v5935, %v2684
      %v6988 = vmul.f32 %v5937, %v2686
      %v6989 = vmul.f32 %v5941, %v2690
      %v6990 = vmul.f32 %v5943, %v2692
      %v6991 = vmul.f32 %v5947, %v2694
      %v6992 = vmul.f32 %v5949, %v2696
      %v6993 = vmul.f32 %v5953, %v2700
      %v6994 = vmul.f32 %v5955, %v2702
      %v6995 = vmul.f32 %v5959, %v2704
      %v6996 = vmul.f32 %v5961, %v2706
      %v6997 = vmul.f32 %v5965, %v2710
      %v6998 = vmul.f32 %v5967, %v2712
      %v6999 = vmul.f32 %v5971, %v2714
      %v7000 = vmul.f32 %v5973, %v2716
      %v7001 = vmul.f32 %v5977, %v2720
      %v7002 = vmul.f32 %v5979, %v2722
      %v7003 = vmul.f32 %v5983, %v2724
      %v7004 = vmul.f32 %v5985, %v2726
      %v7005 = vmul.f32 %v5989, %v2730
      %v7006 = vmul.f32 %v5991, %v2732
      %v7007 = vmul.f32 %v5995, %v2734
      %v7008 = vmul.f32 %v5997, %v2736
      %v7009 = vmul.f32 %v6001, %v2740
      %v7010 = vmul.f32 %v6003, %v2742
      %v7011 = vmul.f32 %v6007, %v2744
      %v7012 = vmul.f32 %v6009, %v2746
      %v7013 = vmul.f32 %v6013, %v2750
      %v7014 = vmul.f32 %v6015, %v2752
      %v7015 = vmul.f32 %v6019, %v2754
      %v7016 = vmul.f32 %v6021, %v2756
      %v7017 = vmul.f32 %v6025, %v2760
      %v7018 = vmul.f32 %v6027, %v2762
      %v7019 = vmul.f32 %v6031, %v2764
      %v7020 = vmul.f32 %v6033, %v2766
      %v7021 = vmul.f32 %v6037, %v2770
      %v7022 = vmul.f32 %v6039, %v2772
      %v7023 = vmul.f32 %v6043, %v2774
      %v7024 = vmul.f32 %v6045, %v2776
      %v7025 = vmul.f32 %v6049, %v2780
      %v7026 = vmul.f32 %v6051, %v2782
      %v7027 = vmul.f32 %v6055, %v2784
      %v7028 = vmul.f32 %v6057, %v2786
      %v7029 = vmul.f32 %v6061, %v2790
      %v7030 = vmul.f32 %v6063, %v2792
      %v7031 = vmul.f32 %v6067, %v2794
      %v7032 = vmul.f32 %v6069, %v2796
      %v7033 = vmul.f32 %v6073, %v2800
      %v7034 = vmul.f32 %v6075, %v2802
      %v7035 = vmul.f32 %v6079, %v2804
      %v7036 = vmul.f32 %v6081, %v2806
      %v7037 = vmul.f32 %v6085, %v2810
      %v7038 = vmul.f32 %v6087, %v2812
      %v7039 = vmul.f32 %v6091, %v2814
      %v7040 = vmul.f32 %v6093, %v2816
      %v7041 = vmul.f32 %v6097, %v2820
      %v7042 = vmul.f32 %v6099, %v2822
      %v7043 = vmul.f32 %v6103, %v2824
      %v7044 = vmul.f32 %v6105, %v2826
      %v7045 = vmul.f32 %v6109, %v2830
      %v7046 = vmul.f32 %v6111, %v2832
      %v7047 = vmul.f32 %v6115, %v2834
      %v7048 = vmul.f32 %v6117, %v2836
      %v7049 = vmul.f32 %v6121, %v2840
      %v7050 = vmul.f32 %v6123, %v2842
      %v7051 = vmul.f32 %v6127, %v2844
      %v7052 = vmul.f32 %v6129, %v2846
      %v7053 = vmul.f32 %v6133, %v2850
      %v7054 = vmul.f32 %v6135, %v2852
      %v7055 = vmul.f32 %v6139, %v2854
      %v7056 = vmul.f32 %v6141, %v2856
      %v7057 = vadd.f32 %v6861, %v6959
      %v7058 = vadd.f32 %v6862, %v6960
      %v7059 = vadd.f32 %v6863, %v6961
      %v7060 = vadd.f32 %v6864, %v6962
      %v7061 = vadd.f32 %v6865, %v6963
      %v7062 = vadd.f32 %v6866, %v6964
      %v7063 = vadd.f32 %v6867, %v6965
      %v7064 = vadd.f32 %v6868, %v6966
      %v7065 = vadd.f32 %v6869, %v6967
      %v7066 = vadd.f32 %v6870, %v6968
      %v7067 = vadd.f32 %v6871, %v6969
      %v7068 = vadd.f32 %v6872, %v6970
      %v7069 = vadd.f32 %v6873, %v6971
      %v7070 = vadd.f32 %v6874, %v6972
      %v7071 = vadd.f32 %v6875, %v6973
      %v7072 = vadd.f32 %v6876, %v6974
      %v7073 = vadd.f32 %v6877, %v6975
      %v7074 = vadd.f32 %v6878, %v6976
      %v7075 = vadd.f32 %v6879, %v6977
      %v7076 = vadd.f32 %v6880, %v6978
      %v7077 = vadd.f32 %v6881, %v6979
      %v7078 = vadd.f32 %v6882, %v6980
      %v7079 = vadd.f32 %v6883, %v6981
      %v7080 = vadd.f32 %v6884, %v6982
      %v7081 = vadd.f32 %v6885, %v6983
      %v7082 = vadd.f32 %v6886, %v6984
      %v7083 = vadd.f32 %v6887, %v6985
      %v7084 = vadd.f32 %v6888, %v6986
      %v7085 = vadd.f32 %v6889, %v6987
      %v7086 = vadd.f32 %v6890, %v6988
      %v7087 = vadd.f32 %v6891, %v6989
      %v7088 = vadd.f32 %v6892, %v6990
      %v7089 = vadd.f32 %v6893, %v6991
      %v7090 = vadd.f32 %v6894, %v6992
      %v7091 = vadd.f32 %v6895, %v6993
      %v7092 = vadd.f32 %v6896, %v6994
      %v7093 = vadd.f32 %v6897, %v6995
      %v7094 = vadd.f32 %v6898, %v6996
      %v7095 = vadd.f32 %v6899, %v6997
      %v7096 = vadd.f32 %v6900, %v6998
      %v7097 = vadd.f32 %v6901, %v6999
      %v7098 = vadd.f32 %v6902, %v7000
      %v7099 = vadd.f32 %v6903, %v7001
      %v7100 = vadd.f32 %v6904, %v7002
      %v7101 = vadd.f32 %v6905, %v7003
      %v7102 = vadd.f32 %v6906, %v7004
      %v7103 = vadd.f32 %v6907, %v7005
      %v7104 = vadd.f32 %v6908, %v7006
      %v7105 = vadd.f32 %v6909, %v7007
      %v7106 = vadd.f32 %v6910, %v7008
      %v7107 = vadd.f32 %v6911, %v7009
      %v7108 = vadd.f32 %v6912, %v7010
      %v7109 = vadd.f32 %v6913, %v7011
      %v7110 = vadd.f32 %v6914, %v7012
      %v7111 = vadd.f32 %v6915, %v7013
      %v7112 = vadd.f32 %v6916, %v7014
      %v7113 = vadd.f32 %v6917, %v7015
      %v7114 = vadd.f32 %v6918, %v7016
      %v7115 = vadd.f32 %v6919, %v7017
      %v7116 = vadd.f32 %v6920, %v7018
      %v7117 = vadd.f32 %v6921, %v7019
      %v7118 = vadd.f32 %v6922, %v7020
      %v7119 = vadd.f32 %v6923, %v7021
      %v7120 = vadd.f32 %v6924, %v7022
      %v7121 = vadd.f32 %v6925, %v7023
      %v7122 = vadd.f32 %v6926, %v7024
      %v7123 = vadd.f32 %v6927, %v7025
      %v7124 = vadd.f32 %v6928, %v7026
      %v7125 = vadd.f32 %v6929, %v7027
      %v7126 = vadd.f32 %v6930, %v7028
      %v7127 = vadd.f32 %v6931, %v7029
      %v7128 = vadd.f32 %v6932, %v7030
      %v7129 = vadd.f32 %v6933, %v7031
      %v7130 = vadd.f32 %v6934, %v7032
      %v7131 = vadd.f32 %v6935, %v7033
      %v7132 = vadd.f32 %v6936, %v7034
      %v7133 = vadd.f32 %v6937, %v7035
      %v7134 = vadd.f32 %v6938, %v7036
      %v7135 = vadd.f32 %v6939, %v7037
      %v7136 = vadd.f32 %v6940, %v7038
      %v7137 = vadd.f32 %v6941, %v7039
      %v7138 = vadd.f32 %v6942, %v7040
      %v7139 = vadd.f32 %v6943, %v7041
      %v7140 = vadd.f32 %v6944, %v7042
      %v7141 = vadd.f32 %v6945, %v7043
      %v7142 = vadd.f32 %v6946, %v7044
      %v7143 = vadd.f32 %v6947, %v7045
      %v7144 = vadd.f32 %v6948, %v7046
      %v7145 = vadd.f32 %v6949, %v7047
      %v7146 = vadd.f32 %v6950, %v7048
      %v7147 = vadd.f32 %v6951, %v7049
      %v7148 = vadd.f32 %v6952, %v7050
      %v7149 = vadd.f32 %v6953, %v7051
      %v7150 = vadd.f32 %v6954, %v7052
      %v7151 = vadd.f32 %v6955, %v7053
      %v7152 = vadd.f32 %v6956, %v7054
      %v7153 = vadd.f32 %v6957, %v7055
      %v7154 = vadd.f32 %v6958, %v7056
      %v7155 = vmul.f32 %v6210, %v2860
      %v7156 = vmul.f32 %v6212, %v2862
      %v7157 = vmul.f32 %v6216, %v2864
      %v7158 = vmul.f32 %v6218, %v2866
      %v7159 = vmul.f32 %v6222, %v2870
      %v7160 = vmul.f32 %v6224, %v2872
      %v7161 = vmul.f32 %v6228, %v2874
      %v7162 = vmul.f32 %v6230, %v2876
      %v7163 = vmul.f32 %v6234, %v2880
      %v7164 = vmul.f32 %v6236, %v2882
      %v7165 = vmul.f32 %v6240, %v2884
      %v7166 = vmul.f32 %v6242, %v2886
      %v7167 = vmul.f32 %v6246, %v2890
      %v7168 = vmul.f32 %v6248, %v2892
      %v7169 = vmul.f32 %v6252, %v2894
      %v7170 = vmul.f32 %v6254, %v2896
      %v7171 = vmul.f32 %v6258, %v2900
      %v7172 = vmul.f32 %v6260, %v2902
      %v7173 = vmul.f32 %v6264, %v2904
      %v7174 = vmul.f32 %v6266, %v2906
      %v7175 = vmul.f32 %v6270, %v2910
      %v7176 = vmul.f32 %v6272, %v2912
      %v7177 = vmul.f32 %v6276, %v2914
      %v7178 = vmul.f32 %v6278, %v2916
      %v7179 = vmul.f32 %v6282, %v2920
      %v7180 = vmul.f32 %v6284, %v2922
      %v7181 = vmul.f32 %v6288, %v2924
      %v7182 = vmul.f32 %v6290, %v2926
      %v7183 = vmul.f32 %v6294, %v2930
      %v7184 = vmul.f32 %v6296, %v2932
      %v7185 = vmul.f32 %v6300, %v2934
      %v7186 = vmul.f32 %v6302, %v2936
      %v7187 = vmul.f32 %v6306, %v2940
      %v7188 = vmul.f32 %v6308, %v2942
      %v7189 = vmul.f32 %v6312, %v2944
      %v7190 = vmul.f32 %v6314, %v2946
      %v7191 = vmul.f32 %v6318, %v2950
      %v7192 = vmul.f32 %v6320, %v2952
      %v7193 = vmul.f32 %v6324, %v2954
      %v7194 = vmul.f32 %v6326, %v2956
      %v7195 = vmul.f32 %v6330, %v2960
      %v7196 = vmul.f32 %v6332, %v2962
      %v7197 = vmul.f32 %v6336, %v2964
      %v7198 = vmul.f32 %v6338, %v2966
      %v7199 = vmul.f32 %v6342, %v2970
      %v7200 = vmul.f32 %v6344, %v2972
      %v7201 = vmul.f32 %v6348, %v2974
      %v7202 = vmul.f32 %v6350, %v2976
      %v7203 = vmul.f32 %v6354, %v2980
      %v7204 = vmul.f32 %v6356, %v2982
      %v7205 = vmul.f32 %v6360, %v2984
      %v7206 = vmul.f32 %v6362, %v2986
      %v7207 = vmul.f32 %v6366, %v2990
      %v7208 = vmul.f32 %v6368, %v2992
      %v7209 = vmul.f32 %v6372, %v2994
      %v7210 = vmul.f32 %v6374, %v2996
      %v7211 = vmul.f32 %v6378, %v3000
      %v7212 = vmul.f32 %v6380, %v3002
      %v7213 = vmul.f32 %v6384, %v3004
      %v7214 = vmul.f32 %v6386, %v3006
      %v7215 = vmul.f32 %v6390, %v3010
      %v7216 = vmul.f32 %v6392, %v3012
      %v7217 = vmul.f32 %v6396, %v3014
      %v7218 = vmul.f32 %v6398, %v3016
      %v7219 = vmul.f32 %v6402, %v3020
      %v7220 = vmul.f32 %v6404, %v3022
      %v7221 = vmul.f32 %v6408, %v3024
      %v7222 = vmul.f32 %v6410, %v3026
      %v7223 = vmul.f32 %v6414, %v3030
      %v7224 = vmul.f32 %v6416, %v3032
      %v7225 = vmul.f32 %v6420, %v3034
      %v7226 = vmul.f32 %v6422, %v3036
      %v7227 = vmul.f32 %v6426, %v3040
      %v7228 = vmul.f32 %v6428, %v3042
      %v7229 = vmul.f32 %v6432, %v3044
      %v7230 = vmul.f32 %v6434, %v3046
      %v7231 = vmul.f32 %v6438, %v3050
      %v7232 = vmul.f32 %v6440, %v3052
      %v7233 = vmul.f32 %v6444, %v3054
      %v7234 = vmul.f32 %v6446, %v3056
      %v7235 = vmul.f32 %v6450, %v3060
      %v7236 = vmul.f32 %v6452, %v3062
      %v7237 = vmul.f32 %v6456, %v3064
      %v7238 = vmul.f32 %v6458, %v3066
      %v7239 = vmul.f32 %v6462, %v3070
      %v7240 = vmul.f32 %v6464, %v3072
      %v7241 = vmul.f32 %v6468, %v3074
      %v7242 = vmul.f32 %v6470, %v3076
      %v7243 = vmul.f32 %v6474, %v3080
      %v7244 = vmul.f32 %v6476, %v3082
      %v7245 = vmul.f32 %v6480, %v3084
      %v7246 = vmul.f32 %v6482, %v3086
      %v7247 = vmul.f32 %v6486, %v3090
      %v7248 = vmul.f32 %v6488, %v3092
      %v7249 = vmul.f32 %v6492, %v3094
      %v7250 = vmul.f32 %v6494, %v3096
      %v7251 = vmul.f32 %v6498, %v3100
      %v7252 = vmul.f32 %v6500, %v3102
      %v7253 = vadd.f32 %v7057, %v7155
      %v7254 = vadd.f32 %v7058, %v7156
      %v7255 = vadd.f32 %v7059, %v7157
      %v7256 = vadd.f32 %v7060, %v7158
      %v7257 = vadd.f32 %v7061, %v7159
      %v7258 = vadd.f32 %v7062, %v7160
      %v7259 = vadd.f32 %v7063, %v7161
      %v7260 = vadd.f32 %v7064, %v7162
      %v7261 = vadd.f32 %v7065, %v7163
      %v7262 = vadd.f32 %v7066, %v7164
      %v7263 = vadd.f32 %v7067, %v7165
      %v7264 = vadd.f32 %v7068, %v7166
      %v7265 = vadd.f32 %v7069, %v7167
      %v7266 = vadd.f32 %v7070, %v7168
      %v7267 = vadd.f32 %v7071, %v7169
      %v7268 = vadd.f32 %v7072, %v7170
      %v7269 = vadd.f32 %v7073, %v7171
      %v7270 = vadd.f32 %v7074, %v7172
      %v7271 = vadd.f32 %v7075, %v7173
      %v7272 = vadd.f32 %v7076, %v7174
      %v7273 = vadd.f32 %v7077, %v7175
      %v7274 = vadd.f32 %v7078, %v7176
      %v7275 = vadd.f32 %v7079, %v7177
      %v7276 = vadd.f32 %v7080, %v7178
      %v7277 = vadd.f32 %v7081, %v7179
      %v7278 = vadd.f32 %v7082, %v7180
      %v7279 = vadd.f32 %v7083, %v7181
      %v7280 = vadd.f32 %v7084, %v7182
      %v7281 = vadd.f32 %v7085, %v7183
      %v7282 = vadd.f32 %v7086, %v7184
      %v7283 = vadd.f32 %v7087, %v7185
      %v7284 = vadd.f32 %v7088, %v7186
      %v7285 = vadd.f32 %v7089, %v7187
      %v7286 = vadd.f32 %v7090, %v7188
      %v7287 = vadd.f32 %v7091, %v7189
      %v7288 = vadd.f32 %v7092, %v7190
      %v7289 = vadd.f32 %v7093, %v7191
      %v7290 = vadd.f32 %v7094, %v7192
      %v7291 = vadd.f32 %v7095, %v7193
      %v7292 = vadd.f32 %v7096, %v7194
      %v7293 = vadd.f32 %v7097, %v7195
      %v7294 = vadd.f32 %v7098, %v7196
      %v7295 = vadd.f32 %v7099, %v7197
      %v7296 = vadd.f32 %v7100, %v7198
      %v7297 = vadd.f32 %v7101, %v7199
      %v7298 = vadd.f32 %v7102, %v7200
      %v7299 = vadd.f32 %v7103, %v7201
      %v7300 = vadd.f32 %v7104, %v7202
      %v7301 = vadd.f32 %v7105, %v7203
      %v7302 = vadd.f32 %v7106, %v7204
      %v7303 = vadd.f32 %v7107, %v7205
      %v7304 = vadd.f32 %v7108, %v7206
      %v7305 = vadd.f32 %v7109, %v7207
      %v7306 = vadd.f32 %v7110, %v7208
      %v7307 = vadd.f32 %v7111, %v7209
      %v7308 = vadd.f32 %v7112, %v7210
      %v7309 = vadd.f32 %v7113, %v7211
      %v7310 = vadd.f32 %v7114, %v7212
      %v7311 = vadd.f32 %v7115, %v7213
      %v7312 = vadd.f32 %v7116, %v7214
      %v7313 = vadd.f32 %v7117, %v7215
      %v7314 = vadd.f32 %v7118, %v7216
      %v7315 = vadd.f32 %v7119, %v7217
      %v7316 = vadd.f32 %v7120, %v7218
      %v7317 = vadd.f32 %v7121, %v7219
      %v7318 = vadd.f32 %v7122, %v7220
      %v7319 = vadd.f32 %v7123, %v7221
      %v7320 = vadd.f32 %v7124, %v7222
      %v7321 = vadd.f32 %v7125, %v7223
      %v7322 = vadd.f32 %v7126, %v7224
      %v7323 = vadd.f32 %v7127, %v7225
      %v7324 = vadd.f32 %v7128, %v7226
      %v7325 = vadd.f32 %v7129, %v7227
      %v7326 = vadd.f32 %v7130, %v7228
      %v7327 = vadd.f32 %v7131, %v7229
      %v7328 = vadd.f32 %v7132, %v7230
      %v7329 = vadd.f32 %v7133, %v7231
      %v7330 = vadd.f32 %v7134, %v7232
      %v7331 = vadd.f32 %v7135, %v7233
      %v7332 = vadd.f32 %v7136, %v7234
      %v7333 = vadd.f32 %v7137, %v7235
      %v7334 = vadd.f32 %v7138, %v7236
      %v7335 = vadd.f32 %v7139, %v7237
      %v7336 = vadd.f32 %v7140, %v7238
      %v7337 = vadd.f32 %v7141, %v7239
      %v7338 = vadd.f32 %v7142, %v7240
      %v7339 = vadd.f32 %v7143, %v7241
      %v7340 = vadd.f32 %v7144, %v7242
      %v7341 = vadd.f32 %v7145, %v7243
      %v7342 = vadd.f32 %v7146, %v7244
      %v7343 = vadd.f32 %v7147, %v7245
      %v7344 = vadd.f32 %v7148, %v7246
      %v7345 = vadd.f32 %v7149, %v7247
      %v7346 = vadd.f32 %v7150, %v7248
      %v7347 = vadd.f32 %v7151, %v7249
      %v7348 = vadd.f32 %v7152, %v7250
      %v7349 = vadd.f32 %v7153, %v7251
      %v7350 = vadd.f32 %v7154, %v7252
      %v7351 = vadd.f32 %v7253, %v6569
      %v7352 = vadd.f32 %v7254, %v6571
      %v7353 = vadd.f32 %v7255, %v6575
      %v7354 = vadd.f32 %v7256, %v6577
      %v7355 = vadd.f32 %v7257, %v6581
      %v7356 = vadd.f32 %v7258, %v6583
      %v7357 = vadd.f32 %v7259, %v6587
      %v7358 = vadd.f32 %v7260, %v6589
      %v7359 = vadd.f32 %v7261, %v6593
      %v7360 = vadd.f32 %v7262, %v6595
      %v7361 = vadd.f32 %v7263, %v6599
      %v7362 = vadd.f32 %v7264, %v6601
      %v7363 = vadd.f32 %v7265, %v6605
      %v7364 = vadd.f32 %v7266, %v6607
      %v7365 = vadd.f32 %v7267, %v6611
      %v7366 = vadd.f32 %v7268, %v6613
      %v7367 = vadd.f32 %v7269, %v6617
      %v7368 = vadd.f32 %v7270, %v6619
      %v7369 = vadd.f32 %v7271, %v6623
      %v7370 = vadd.f32 %v7272, %v6625
      %v7371 = vadd.f32 %v7273, %v6629
      %v7372 = vadd.f32 %v7274, %v6631
      %v7373 = vadd.f32 %v7275, %v6635
      %v7374 = vadd.f32 %v7276, %v6637
      %v7375 = vadd.f32 %v7277, %v6641
      %v7376 = vadd.f32 %v7278, %v6643
      %v7377 = vadd.f32 %v7279, %v6647
      %v7378 = vadd.f32 %v7280, %v6649
      %v7379 = vadd.f32 %v7281, %v6653
      %v7380 = vadd.f32 %v7282, %v6655
      %v7381 = vadd.f32 %v7283, %v6659
      %v7382 = vadd.f32 %v7284, %v6661
      %v7383 = vadd.f32 %v7285, %v6665
      %v7384 = vadd.f32 %v7286, %v6667
      %v7385 = vadd.f32 %v7287, %v6671
      %v7386 = vadd.f32 %v7288, %v6673
      %v7387 = vadd.f32 %v7289, %v6677
      %v7388 = vadd.f32 %v7290, %v6679
      %v7389 = vadd.f32 %v7291, %v6683
      %v7390 = vadd.f32 %v7292, %v6685
      %v7391 = vadd.f32 %v7293, %v6689
      %v7392 = vadd.f32 %v7294, %v6691
      %v7393 = vadd.f32 %v7295, %v6695
      %v7394 = vadd.f32 %v7296, %v6697
      %v7395 = vadd.f32 %v7297, %v6701
      %v7396 = vadd.f32 %v7298, %v6703
      %v7397 = vadd.f32 %v7299, %v6707
      %v7398 = vadd.f32 %v7300, %v6709
      %v7399 = vadd.f32 %v7301, %v6713
      %v7400 = vadd.f32 %v7302, %v6715
      %v7401 = vadd.f32 %v7303, %v6719
      %v7402 = vadd.f32 %v7304, %v6721
      %v7403 = vadd.f32 %v7305, %v6725
      %v7404 = vadd.f32 %v7306, %v6727
      %v7405 = vadd.f32 %v7307, %v6731
      %v7406 = vadd.f32 %v7308, %v6733
      %v7407 = vadd.f32 %v7309, %v6737
      %v7408 = vadd.f32 %v7310, %v6739
      %v7409 = vadd.f32 %v7311, %v6743
      %v7410 = vadd.f32 %v7312, %v6745
      %v7411 = vadd.f32 %v7313, %v6749
      %v7412 = vadd.f32 %v7314, %v6751
      %v7413 = vadd.f32 %v7315, %v6755
      %v7414 = vadd.f32 %v7316, %v6757
      %v7415 = vadd.f32 %v7317, %v6761
      %v7416 = vadd.f32 %v7318, %v6763
      %v7417 = vadd.f32 %v7319, %v6767
      %v7418 = vadd.f32 %v7320, %v6769
      %v7419 = vadd.f32 %v7321, %v6773
      %v7420 = vadd.f32 %v7322, %v6775
      %v7421 = vadd.f32 %v7323, %v6779
      %v7422 = vadd.f32 %v7324, %v6781
      %v7423 = vadd.f32 %v7325, %v6785
      %v7424 = vadd.f32 %v7326, %v6787
      %v7425 = vadd.f32 %v7327, %v6791
      %v7426 = vadd.f32 %v7328, %v6793
      %v7427 = vadd.f32 %v7329, %v6797
      %v7428 = vadd.f32 %v7330, %v6799
      %v7429 = vadd.f32 %v7331, %v6803
      %v7430 = vadd.f32 %v7332, %v6805
      %v7431 = vadd.f32 %v7333, %v6809
      %v7432 = vadd.f32 %v7334, %v6811
      %v7433 = vadd.f32 %v7335, %v6815
      %v7434 = vadd.f32 %v7336, %v6817
      %v7435 = vadd.f32 %v7337, %v6821
      %v7436 = vadd.f32 %v7338, %v6823
      %v7437 = vadd.f32 %v7339, %v6827
      %v7438 = vadd.f32 %v7340, %v6829
      %v7439 = vadd.f32 %v7341, %v6833
      %v7440 = vadd.f32 %v7342, %v6835
      %v7441 = vadd.f32 %v7343, %v6839
      %v7442 = vadd.f32 %v7344, %v6841
      %v7443 = vadd.f32 %v7345, %v6845
      %v7444 = vadd.f32 %v7346, %v6847
      %v7445 = vadd.f32 %v7347, %v6851
      %v7446 = vadd.f32 %v7348, %v6853
      %v7447 = vadd.f32 %v7349, %v6857
      %v7448 = vadd.f32 %v7350, %v6859
      %7449 = vst [vmem:[%s328 + $0x310] sm:$0xff] %v7351
      %7450 = vst [vmem:[%s328 + $0x318] sm:$0xff] %v7352
      %7451 = vst [vmem:[%s328 + $0x320] sm:$0xff] %v7353
      %7452 = vst [vmem:[%s328 + $0x328] sm:$0xff] %v7354
      %7453 = vst [vmem:[%s328 + $0x330] sm:$0xff] %v7355
      %7454 = vst [vmem:[%s328 + $0x338] sm:$0xff] %v7356
      %7455 = vst [vmem:[%s328 + $0x340] sm:$0xff] %v7357
      %7456 = vst [vmem:[%s328 + $0x348] sm:$0xff] %v7358
      %7457 = vst [vmem:[%s328 + $0x350] sm:$0xff] %v7359
      %7458 = vst [vmem:[%s328 + $0x358] sm:$0xff] %v7360
      %7459 = vst [vmem:[%s328 + $0x360] sm:$0xff] %v7361
      %7460 = vst [vmem:[%s328 + $0x368] sm:$0xff] %v7362
      %7461 = vst [vmem:[%s328 + $0x370] sm:$0xff] %v7363
      %7462 = vst [vmem:[%s328 + $0x378] sm:$0xff] %v7364
      %7463 = vst [vmem:[%s328 + $0x380] sm:$0xff] %v7365
      %7464 = vst [vmem:[%s328 + $0x388] sm:$0xff] %v7366
      %7465 = vst [vmem:[%s328 + $0x390] sm:$0xff] %v7367
      %7466 = vst [vmem:[%s328 + $0x398] sm:$0xff] %v7368
      %7467 = vst [vmem:[%s328 + $0x3a0] sm:$0xff] %v7369
      %7468 = vst [vmem:[%s328 + $0x3a8] sm:$0xff] %v7370
      %7469 = vst [vmem:[%s328 + $0x3b0] sm:$0xff] %v7371
      %7470 = vst [vmem:[%s328 + $0x3b8] sm:$0xff] %v7372
      %7471 = vst [vmem:[%s328 + $0x3c0] sm:$0xff] %v7373
      %7472 = vst [vmem:[%s328 + $0x3c8] sm:$0xff] %v7374
      %7473 = vst [vmem:[%s328 + $0x3d0] sm:$0xff] %v7375
      %7474 = vst [vmem:[%s328 + $0x3d8] sm:$0xff] %v7376
      %7475 = vst [vmem:[%s328 + $0x3e0] sm:$0xff] %v7377
      %7476 = vst [vmem:[%s328 + $0x3e8] sm:$0xff] %v7378
      %7477 = vst [vmem:[%s328 + $0x3f0] sm:$0xff] %v7379
      %7478 = vst [vmem:[%s328 + $0x3f8] sm:$0xff] %v7380
      %7479 = vst [vmem:[%s328 + $0x400] sm:$0xff] %v7381
      %7480 = vst [vmem:[%s328 + $0x408] sm:$0xff] %v7382
      %7481 = vst [vmem:[%s328 + $0x410] sm:$0xff] %v7383
      %7482 = vst [vmem:[%s328 + $0x418] sm:$0xff] %v7384
      %7483 = vst [vmem:[%s328 + $0x420] sm:$0xff] %v7385
      %7484 = vst [vmem:[%s328 + $0x428] sm:$0xff] %v7386
      %7485 = vst [vmem:[%s328 + $0x430] sm:$0xff] %v7387
      %7486 = vst [vmem:[%s328 + $0x438] sm:$0xff] %v7388
      %7487 = vst [vmem:[%s328 + $0x440] sm:$0xff] %v7389
      %7488 = vst [vmem:[%s328 + $0x448] sm:$0xff] %v7390
      %7489 = vst [vmem:[%s328 + $0x450] sm:$0xff] %v7391
      %7490 = vst [vmem:[%s328 + $0x458] sm:$0xff] %v7392
      %7491 = vst [vmem:[%s328 + $0x460] sm:$0xff] %v7393
      %7492 = vst [vmem:[%s328 + $0x468] sm:$0xff] %v7394
      %7493 = vst [vmem:[%s328 + $0x470] sm:$0xff] %v7395
      %7494 = vst [vmem:[%s328 + $0x478] sm:$0xff] %v7396
      %7495 = vst [vmem:[%s328 + $0x480] sm:$0xff] %v7397
      %7496 = vst [vmem:[%s328 + $0x488] sm:$0xff] %v7398
      %7497 = vst [vmem:[%s328 + $0x490] sm:$0xff] %v7399
      %7498 = vst [vmem:[%s328 + $0x498] sm:$0xff] %v7400
      %7499 = vst [vmem:[%s328 + $0x4a0] sm:$0xff] %v7401
      %7500 = vst [vmem:[%s328 + $0x4a8] sm:$0xff] %v7402
      %7501 = vst [vmem:[%s328 + $0x4b0] sm:$0xff] %v7403
      %7502 = vst [vmem:[%s328 + $0x4b8] sm:$0xff] %v7404
      %7503 = vst [vmem:[%s328 + $0x4c0] sm:$0xff] %v7405
      %7504 = vst [vmem:[%s328 + $0x4c8] sm:$0xff] %v7406
      %7505 = vst [vmem:[%s328 + $0x4d0] sm:$0xff] %v7407
      %7506 = vst [vmem:[%s328 + $0x4d8] sm:$0xff] %v7408
      %7507 = vst [vmem:[%s328 + $0x4e0] sm:$0xff] %v7409
      %7508 = vst [vmem:[%s328 + $0x4e8] sm:$0xff] %v7410
      %7509 = vst [vmem:[%s328 + $0x4f0] sm:$0xff] %v7411
      %7510 = vst [vmem:[%s328 + $0x4f8] sm:$0xff] %v7412
      %7511 = vst [vmem:[%s328 + $0x500] sm:$0xff] %v7413
      %7512 = vst [vmem:[%s328 + $0x508] sm:$0xff] %v7414
      %7513 = vst [vmem:[%s328 + $0x510] sm:$0xff] %v7415
      %7514 = vst [vmem:[%s328 + $0x518] sm:$0xff] %v7416
      %7515 = vst [vmem:[%s328 + $0x520] sm:$0xff] %v7417
      %7516 = vst [vmem:[%s328 + $0x528] sm:$0xff] %v7418
      %7517 = vst [vmem:[%s328 + $0x530] sm:$0xff] %v7419
      %7518 = vst [vmem:[%s328 + $0x538] sm:$0xff] %v7420
      %7519 = vst [vmem:[%s328 + $0x540] sm:$0xff] %v7421
      %7520 = vst [vmem:[%s328 + $0x548] sm:$0xff] %v7422
      %7521 = vst [vmem:[%s328 + $0x550] sm:$0xff] %v7423
      %7522 = vst [vmem:[%s328 + $0x558] sm:$0xff] %v7424
      %7523 = vst [vmem:[%s328 + $0x560] sm:$0xff] %v7425
      %7524 = vst [vmem:[%s328 + $0x568] sm:$0xff] %v7426
      %7525 = vst [vmem:[%s328 + $0x570] sm:$0xff] %v7427
      %7526 = vst [vmem:[%s328 + $0x578] sm:$0xff] %v7428
      %7527 = vst [vmem:[%s328 + $0x580] sm:$0xff] %v7429
      %7528 = vst [vmem:[%s328 + $0x588] sm:$0xff] %v7430
      %7529 = vst [vmem:[%s328 + $0x590] sm:$0xff] %v7431
      %7530 = vst [vmem:[%s328 + $0x598] sm:$0xff] %v7432
      %7531 = vst [vmem:[%s328 + $0x5a0] sm:$0xff] %v7433
      %7532 = vst [vmem:[%s328 + $0x5a8] sm:$0xff] %v7434
      %7533 = vst [vmem:[%s328 + $0x5b0] sm:$0xff] %v7435
      %7534 = vst [vmem:[%s328 + $0x5b8] sm:$0xff] %v7436
      %7535 = vst [vmem:[%s328 + $0x5c0] sm:$0xff] %v7437
      %7536 = vst [vmem:[%s328 + $0x5c8] sm:$0xff] %v7438
      %7537 = vst [vmem:[%s328 + $0x5d0] sm:$0xff] %v7439
      %7538 = vst [vmem:[%s328 + $0x5d8] sm:$0xff] %v7440
      %7539 = vst [vmem:[%s328 + $0x5e0] sm:$0xff] %v7441
      %7540 = vst [vmem:[%s328 + $0x5e8] sm:$0xff] %v7442
      %7541 = vst [vmem:[%s328 + $0x5f0] sm:$0xff] %v7443
      %7542 = vst [vmem:[%s328 + $0x5f8] sm:$0xff] %v7444
      %7543 = vst [vmem:[%s328 + $0x600] sm:$0xff] %v7445
      %7544 = vst [vmem:[%s328 + $0x608] sm:$0xff] %v7446
      %7545 = vst [vmem:[%s328 + $0x610] sm:$0xff] %v7447
      %7546 = vst [vmem:[%s328 + $0x618] sm:$0xff] %v7448
      %7547 = vmatprep.subr.mxu0 %v378
      %7548 = vmatpush1.msra.mxu0 %v377
      %7549 = vmatprep.subr.mxu0 %v402
      %7550 = vmatpush1.msra.mxu0 %v401
      %7551 = vmatprep.subr.mxu0 0.0
      %7552 = vmatpush1.msra.mxu0 0.0
      %7553 = vmatprep.subr.mxu0 0.0
      %7554 = vmatpush1.msra.mxu0 0.0
      %7555 = vmatprep.subr.mxu0 0.0
      %7556 = vmatpush1.msra.mxu0 0.0
      %7557 = vmatprep.subr.mxu0 0.0
      %7558 = vmatpush1.msra.mxu0 0.0
      %7559 = vmatprep.subr.mxu0 0.0
      %7560 = vmatpush1.msra.mxu0 0.0
      %7561 = vmatprep.subr.mxu0 0.0
      %7562 = vmatpush1.msra.mxu0 0.0
      %7563 = vmatprep.subr.mxu0 0.0
      %7564 = vmatpush1.msra.mxu0 0.0
      %7565 = vmatprep.subr.mxu0 0.0
      %7566 = vmatpush1.msra.mxu0 0.0
      %7567 = vmatprep.subr.mxu0 0.0
      %7568 = vmatpush1.msra.mxu0 0.0
      %7569 = vmatprep.subr.mxu0 0.0
      %7570 = vmatpush1.msra.mxu0 0.0
      %7571 = vmatprep.subr.mxu0 0.0
      %7572 = vmatpush1.msra.mxu0 0.0
      %7573 = vmatprep.subr.mxu0 0.0
      %7574 = vmatpush1.msra.mxu0 0.0
      %7575 = vmatprep.subr.mxu0 0.0
      %7576 = vmatpush1.msra.mxu0 0.0
      %7577 = vmatprep.subr.mxu0 0.0
      %7578 = vmatpush1.msra.mxu0 0.0
      %7579 = vmatprep.subr.mxu0 0.0
      %7580 = vmatpush1.msra.mxu0 0.0
      %7581 = vmatprep.subr.mxu0 0.0
      %7582 = vmatpush1.msra.mxu0 0.0
      %7583 = vmatprep.subr.mxu0 0.0
      %7584 = vmatpush1.msra.mxu0 0.0
      %7585 = vmatprep.subr.mxu0 0.0
      %7586 = vmatpush1.msra.mxu0 0.0
      %7587 = vmatprep.subr.mxu0 0.0
      %7588 = vmatpush1.msra.mxu0 0.0
      %7589 = vmatprep.subr.mxu0 0.0
      %7590 = vmatpush1.msra.mxu0 0.0
      %7591 = vmatprep.subr.mxu0 0.0
      %7592 = vmatpush1.msra.mxu0 0.0
      %7593 = vmatprep.subr.mxu0 0.0
      %7594 = vmatpush1.msra.mxu0 0.0
      %7595 = vmatprep.subr.mxu0 0.0
      %7596 = vmatpush1.msra.mxu0 0.0
      %7597 = vmatprep.subr.mxu0 0.0
      %7598 = vmatpush1.msra.mxu0 0.0
      %7599 = vmatprep.subr.mxu0 0.0
      %7600 = vmatpush1.msra.mxu0 0.0
      %7601 = vmatprep.subr.mxu0 0.0
      %7602 = vmatpush1.msra.mxu0 0.0
      %7603 = vmatprep.subr.mxu0 0.0
      %7604 = vmatpush1.msra.mxu0 0.0
      %7605 = vmatprep.subr.mxu0 0.0
      %7606 = vmatpush1.msra.mxu0 0.0
      %7607 = vmatprep.subr.mxu0 0.0
      %7608 = vmatpush1.msra.mxu0 0.0
      %7609 = vmatprep.subr.mxu0 0.0
      %7610 = vmatpush1.msra.mxu0 0.0
      %7611 = vmatprep.mubr.f32.mxu0 0.0
      %7612 = vmatmul.mubr.f32.gmra.mrb[0].mxu0 %v3157
      %v7613 = vpop.f32.mrb[0].mxu0
      %v7614 = vadd.f32 0.0, %v7613
      %v7615 = vpop.f32.mrb[0].mxu0
      %v7616 = vadd.f32 0.0, %v7615
      %7617 = vmatprep.mubr.f32.mxu0 0.0
      %7618 = vmatmul.mubr.f32.gmra.mrb[0].mxu0 %v3160
      %v7619 = vpop.f32.mrb[0].mxu0
      %v7620 = vadd.f32 0.0, %v7619
      %v7621 = vpop.f32.mrb[0].mxu0
      %v7622 = vadd.f32 0.0, %v7621
      %7623 = vmatprep.mubr.f32.mxu0 0.0
      %7624 = vmatmul.mubr.f32.gmra.mrb[0].mxu0 %v3163
      %v7625 = vpop.f32.mrb[0].mxu0
      %v7626 = vadd.f32 0.0, %v7625
      %v7627 = vpop.f32.mrb[0].mxu0
      %v7628 = vadd.f32 0.0, %v7627
      %7629 = vmatprep.mubr.f32.mxu0 0.0
      %7630 = vmatmul.mubr.f32.gmra.mrb[0].mxu0 %v3166
      %v7631 = vpop.f32.mrb[0].mxu0
      %v7632 = vadd.f32 0.0, %v7631
      %v7633 = vpop.f32.mrb[0].mxu0
      %v7634 = vadd.f32 0.0, %v7633
      %7635 = vmatprep.mubr.f32.mxu0 0.0
      %7636 = vmatmul.mubr.f32.gmra.mrb[0].mxu0 %v3169
      %v7637 = vpop.f32.mrb[0].mxu0
      %v7638 = vadd.f32 0.0, %v7637
      %v7639 = vpop.f32.mrb[0].mxu0
      %v7640 = vadd.f32 0.0, %v7639
      %7641 = vmatprep.mubr.f32.mxu0 0.0
      %7642 = vmatmul.mubr.f32.gmra.mrb[0].mxu0 %v3172
      %v7643 = vpop.f32.mrb[0].mxu0
      %v7644 = vadd.f32 0.0, %v7643
      %v7645 = vpop.f32.mrb[0].mxu0
      %v7646 = vadd.f32 0.0, %v7645
      %7647 = vmatprep.mubr.f32.mxu0 0.0
      %7648 = vmatmul.mubr.f32.gmra.mrb[0].mxu0 %v3175
      %v7649 = vpop.f32.mrb[0].mxu0
      %v7650 = vadd.f32 0.0, %v7649
      %v7651 = vpop.f32.mrb[0].mxu0
      %v7652 = vadd.f32 0.0, %v7651
      %7653 = vmatprep.mubr.f32.mxu0 0.0
      %7654 = vmatmul.mubr.f32.gmra.mrb[0].mxu0 %v3178
      %v7655 = vpop.f32.mrb[0].mxu0
      %v7656 = vadd.f32 0.0, %v7655
      %v7657 = vpop.f32.mrb[0].mxu0
      %v7658 = vadd.f32 0.0, %v7657
      %7659 = vmatprep.mubr.f32.mxu0 0.0
      %7660 = vmatmul.mubr.f32.gmra.mrb[0].mxu0 %v3181
      %v7661 = vpop.f32.mrb[0].mxu0
      %v7662 = vadd.f32 0.0, %v7661
      %v7663 = vpop.f32.mrb[0].mxu0
      %v7664 = vadd.f32 0.0, %v7663
      %7665 = vmatprep.mubr.f32.mxu0 0.0
      %7666 = vmatmul.mubr.f32.gmra.mrb[0].mxu0 %v3184
      %v7667 = vpop.f32.mrb[0].mxu0
      %v7668 = vadd.f32 0.0, %v7667
      %v7669 = vpop.f32.mrb[0].mxu0
      %v7670 = vadd.f32 0.0, %v7669
      %7671 = vmatprep.mubr.f32.mxu0 0.0
      %7672 = vmatmul.mubr.f32.gmra.mrb[0].mxu0 %v3187
      %v7673 = vpop.f32.mrb[0].mxu0
      %v7674 = vadd.f32 0.0, %v7673
      %v7675 = vpop.f32.mrb[0].mxu0
      %v7676 = vadd.f32 0.0, %v7675
      %7677 = vmatprep.mubr.f32.mxu0 0.0
      %7678 = vmatmul.mubr.f32.gmra.mrb[0].mxu0 %v3190
      %v7679 = vpop.f32.mrb[0].mxu0
      %v7680 = vadd.f32 0.0, %v7679
      %v7681 = vpop.f32.mrb[0].mxu0
      %v7682 = vadd.f32 0.0, %v7681
      %7683 = vmatprep.mubr.f32.mxu0 0.0
      %7684 = vmatmul.mubr.f32.gmra.mrb[0].mxu0 %v3193
      %v7685 = vpop.f32.mrb[0].mxu0
      %v7686 = vadd.f32 0.0, %v7685
      %v7687 = vpop.f32.mrb[0].mxu0
      %v7688 = vadd.f32 0.0, %v7687
      %7689 = vmatprep.mubr.f32.mxu0 0.0
      %7690 = vmatmul.mubr.f32.gmra.mrb[0].mxu0 %v3196
      %v7691 = vpop.f32.mrb[0].mxu0
      %v7692 = vadd.f32 0.0, %v7691
      %v7693 = vpop.f32.mrb[0].mxu0
      %v7694 = vadd.f32 0.0, %v7693
      %7695 = vmatprep.mubr.f32.mxu0 0.0
      %7696 = vmatmul.mubr.f32.gmra.mrb[0].mxu0 %v3199
      %v7697 = vpop.f32.mrb[0].mxu0
      %v7698 = vadd.f32 0.0, %v7697
      %v7699 = vpop.f32.mrb[0].mxu0
      %v7700 = vadd.f32 0.0, %v7699
      %7701 = vmatprep.mubr.f32.mxu0 0.0
      %7702 = vmatmul.mubr.f32.gmra.mrb[0].mxu0 %v3202
      %v7703 = vpop.f32.mrb[0].mxu0
      %v7704 = vadd.f32 0.0, %v7703
      %v7705 = vpop.f32.mrb[0].mxu0
      %v7706 = vadd.f32 0.0, %v7705
      %7707 = vmatprep.mubr.f32.mxu0 0.0
      %7708 = vmatmul.mubr.f32.gmra.mrb[0].mxu0 %v3205
      %v7709 = vpop.f32.mrb[0].mxu0
      %v7710 = vadd.f32 0.0, %v7709
      %v7711 = vpop.f32.mrb[0].mxu0
      %v7712 = vadd.f32 0.0, %v7711
      %7713 = vmatprep.mubr.f32.mxu0 0.0
      %7714 = vmatmul.mubr.f32.gmra.mrb[0].mxu0 %v3208
      %v7715 = vpop.f32.mrb[0].mxu0
      %v7716 = vadd.f32 0.0, %v7715
      %v7717 = vpop.f32.mrb[0].mxu0
      %v7718 = vadd.f32 0.0, %v7717
      %7719 = vmatprep.mubr.f32.mxu0 0.0
      %7720 = vmatmul.mubr.f32.gmra.mrb[0].mxu0 %v3211
      %v7721 = vpop.f32.mrb[0].mxu0
      %v7722 = vadd.f32 0.0, %v7721
      %v7723 = vpop.f32.mrb[0].mxu0
      %v7724 = vadd.f32 0.0, %v7723
      %7725 = vmatprep.mubr.f32.mxu0 0.0
      %7726 = vmatmul.mubr.f32.gmra.mrb[0].mxu0 %v3214
      %v7727 = vpop.f32.mrb[0].mxu0
      %v7728 = vadd.f32 0.0, %v7727
      %v7729 = vpop.f32.mrb[0].mxu0
      %v7730 = vadd.f32 0.0, %v7729
      %7731 = vmatprep.mubr.f32.mxu0 0.0
      %7732 = vmatmul.mubr.f32.gmra.mrb[0].mxu0 %v3217
      %v7733 = vpop.f32.mrb[0].mxu0
      %v7734 = vadd.f32 0.0, %v7733
      %v7735 = vpop.f32.mrb[0].mxu0
      %v7736 = vadd.f32 0.0, %v7735
      %7737 = vmatprep.mubr.f32.mxu0 0.0
      %7738 = vmatmul.mubr.f32.gmra.mrb[0].mxu0 %v3220
      %v7739 = vpop.f32.mrb[0].mxu0
      %v7740 = vadd.f32 0.0, %v7739
      %v7741 = vpop.f32.mrb[0].mxu0
      %v7742 = vadd.f32 0.0, %v7741
      %7743 = vmatprep.mubr.f32.mxu0 0.0
      %7744 = vmatmul.mubr.f32.gmra.mrb[0].mxu0 %v3223
      %v7745 = vpop.f32.mrb[0].mxu0
      %v7746 = vadd.f32 0.0, %v7745
      %v7747 = vpop.f32.mrb[0].mxu0
      %v7748 = vadd.f32 0.0, %v7747
      %7749 = vmatprep.mubr.f32.mxu0 0.0
      %7750 = vmatmul.mubr.f32.gmra.mrb[0].mxu0 %v3226
      %v7751 = vpop.f32.mrb[0].mxu0
      %v7752 = vadd.f32 0.0, %v7751
      %v7753 = vpop.f32.mrb[0].mxu0
      %v7754 = vadd.f32 0.0, %v7753
      %7755 = vmatprep.mubr.f32.mxu0 0.0
      %7756 = vmatmul.mubr.f32.gmra.mrb[0].mxu0 %v3229
      %v7757 = vpop.f32.mrb[0].mxu0
      %v7758 = vadd.f32 0.0, %v7757
      %v7759 = vpop.f32.mrb[0].mxu0
      %v7760 = vadd.f32 0.0, %v7759
      %7761 = vmatprep.mubr.f32.mxu0 0.0
      %7762 = vmatmul.mubr.f32.gmra.mrb[0].mxu0 %v3232
      %v7763 = vpop.f32.mrb[0].mxu0
      %v7764 = vadd.f32 0.0, %v7763
      %v7765 = vpop.f32.mrb[0].mxu0
      %v7766 = vadd.f32 0.0, %v7765
      %7767 = vmatprep.mubr.f32.mxu0 0.0
      %7768 = vmatmul.mubr.f32.gmra.mrb[0].mxu0 %v3235
      %v7769 = vpop.f32.mrb[0].mxu0
      %v7770 = vadd.f32 0.0, %v7769
      %v7771 = vpop.f32.mrb[0].mxu0
      %v7772 = vadd.f32 0.0, %v7771
      %7773 = vmatprep.mubr.f32.mxu0 0.0
      %7774 = vmatmul.mubr.f32.gmra.mrb[0].mxu0 %v3238
      %v7775 = vpop.f32.mrb[0].mxu0
      %v7776 = vadd.f32 0.0, %v7775
      %v7777 = vpop.f32.mrb[0].mxu0
      %v7778 = vadd.f32 0.0, %v7777
      %7779 = vmatprep.mubr.f32.mxu0 0.0
      %7780 = vmatmul.mubr.f32.gmra.mrb[0].mxu0 %v3241
      %v7781 = vpop.f32.mrb[0].mxu0
      %v7782 = vadd.f32 0.0, %v7781
      %v7783 = vpop.f32.mrb[0].mxu0
      %v7784 = vadd.f32 0.0, %v7783
      %7785 = vmatprep.mubr.f32.mxu0 0.0
      %7786 = vmatmul.mubr.f32.gmra.mrb[0].mxu0 %v3244
      %v7787 = vpop.f32.mrb[0].mxu0
      %v7788 = vadd.f32 0.0, %v7787
      %v7789 = vpop.f32.mrb[0].mxu0
      %v7790 = vadd.f32 0.0, %v7789
      %7791 = vmatprep.mubr.f32.mxu0 0.0
      %7792 = vmatmul.mubr.f32.gmra.mrb[0].mxu0 %v3247
      %v7793 = vpop.f32.mrb[0].mxu0
      %v7794 = vadd.f32 0.0, %v7793
      %v7795 = vpop.f32.mrb[0].mxu0
      %v7796 = vadd.f32 0.0, %v7795
      %7797 = vmatprep.mubr.f32.mxu0 0.0
      %7798 = vmatmul.mubr.f32.gmra.mrb[0].mxu0 %v3250
      %v7799 = vpop.f32.mrb[0].mxu0
      %v7800 = vadd.f32 0.0, %v7799
      %v7801 = vpop.f32.mrb[0].mxu0
      %v7802 = vadd.f32 0.0, %v7801
      %7803 = vmatprep.mubr.f32.mxu0 0.0
      %7804 = vmatmul.mubr.f32.gmra.mrb[0].mxu0 %v3253
      %v7805 = vpop.f32.mrb[0].mxu0
      %v7806 = vadd.f32 0.0, %v7805
      %v7807 = vpop.f32.mrb[0].mxu0
      %v7808 = vadd.f32 0.0, %v7807
      %7809 = vmatprep.mubr.f32.mxu0 0.0
      %7810 = vmatmul.mubr.f32.gmra.mrb[0].mxu0 %v3256
      %v7811 = vpop.f32.mrb[0].mxu0
      %v7812 = vadd.f32 0.0, %v7811
      %v7813 = vpop.f32.mrb[0].mxu0
      %v7814 = vadd.f32 0.0, %v7813
      %7815 = vmatprep.mubr.f32.mxu0 0.0
      %7816 = vmatmul.mubr.f32.gmra.mrb[0].mxu0 %v3259
      %v7817 = vpop.f32.mrb[0].mxu0
      %v7818 = vadd.f32 0.0, %v7817
      %v7819 = vpop.f32.mrb[0].mxu0
      %v7820 = vadd.f32 0.0, %v7819
      %7821 = vmatprep.mubr.f32.mxu0 0.0
      %7822 = vmatmul.mubr.f32.gmra.mrb[0].mxu0 %v3262
      %v7823 = vpop.f32.mrb[0].mxu0
      %v7824 = vadd.f32 0.0, %v7823
      %v7825 = vpop.f32.mrb[0].mxu0
      %v7826 = vadd.f32 0.0, %v7825
      %7827 = vmatprep.mubr.f32.mxu0 0.0
      %7828 = vmatmul.mubr.f32.gmra.mrb[0].mxu0 %v3265
      %v7829 = vpop.f32.mrb[0].mxu0
      %v7830 = vadd.f32 0.0, %v7829
      %v7831 = vpop.f32.mrb[0].mxu0
      %v7832 = vadd.f32 0.0, %v7831
      %7833 = vmatprep.mubr.f32.mxu0 0.0
      %7834 = vmatmul.mubr.f32.gmra.mrb[0].mxu0 %v3268
      %v7835 = vpop.f32.mrb[0].mxu0
      %v7836 = vadd.f32 0.0, %v7835
      %v7837 = vpop.f32.mrb[0].mxu0
      %v7838 = vadd.f32 0.0, %v7837
      %7839 = vmatprep.mubr.f32.mxu0 0.0
      %7840 = vmatmul.mubr.f32.gmra.mrb[0].mxu0 %v3271
      %v7841 = vpop.f32.mrb[0].mxu0
      %v7842 = vadd.f32 0.0, %v7841
      %v7843 = vpop.f32.mrb[0].mxu0
      %v7844 = vadd.f32 0.0, %v7843
      %7845 = vmatprep.mubr.f32.mxu0 0.0
      %7846 = vmatmul.mubr.f32.gmra.mrb[0].mxu0 %v3274
      %v7847 = vpop.f32.mrb[0].mxu0
      %v7848 = vadd.f32 0.0, %v7847
      %v7849 = vpop.f32.mrb[0].mxu0
      %v7850 = vadd.f32 0.0, %v7849
      %7851 = vmatprep.mubr.f32.mxu0 0.0
      %7852 = vmatmul.mubr.f32.gmra.mrb[0].mxu0 %v3277
      %v7853 = vpop.f32.mrb[0].mxu0
      %v7854 = vadd.f32 0.0, %v7853
      %v7855 = vpop.f32.mrb[0].mxu0
      %v7856 = vadd.f32 0.0, %v7855
      %7857 = vmatprep.mubr.f32.mxu0 0.0
      %7858 = vmatmul.mubr.f32.gmra.mrb[0].mxu0 %v3280
      %v7859 = vpop.f32.mrb[0].mxu0
      %v7860 = vadd.f32 0.0, %v7859
      %v7861 = vpop.f32.mrb[0].mxu0
      %v7862 = vadd.f32 0.0, %v7861
      %7863 = vmatprep.mubr.f32.mxu0 0.0
      %7864 = vmatmul.mubr.f32.gmra.mrb[0].mxu0 %v3283
      %v7865 = vpop.f32.mrb[0].mxu0
      %v7866 = vadd.f32 0.0, %v7865
      %v7867 = vpop.f32.mrb[0].mxu0
      %v7868 = vadd.f32 0.0, %v7867
      %7869 = vmatprep.mubr.f32.mxu0 0.0
      %7870 = vmatmul.mubr.f32.gmra.mrb[0].mxu0 %v3286
      %v7871 = vpop.f32.mrb[0].mxu0
      %v7872 = vadd.f32 0.0, %v7871
      %v7873 = vpop.f32.mrb[0].mxu0
      %v7874 = vadd.f32 0.0, %v7873
      %7875 = vmatprep.mubr.f32.mxu0 0.0
      %7876 = vmatmul.mubr.f32.gmra.mrb[0].mxu0 %v3289
      %v7877 = vpop.f32.mrb[0].mxu0
      %v7878 = vadd.f32 0.0, %v7877
      %v7879 = vpop.f32.mrb[0].mxu0
      %v7880 = vadd.f32 0.0, %v7879
      %7881 = vmatprep.mubr.f32.mxu0 0.0
      %7882 = vmatmul.mubr.f32.gmra.mrb[0].mxu0 %v3292
      %v7883 = vpop.f32.mrb[0].mxu0
      %v7884 = vadd.f32 0.0, %v7883
      %v7885 = vpop.f32.mrb[0].mxu0
      %v7886 = vadd.f32 0.0, %v7885
      %7887 = vmatprep.mubr.f32.mxu0 0.0
      %7888 = vmatmul.mubr.f32.gmra.mrb[0].mxu0 %v3295
      %v7889 = vpop.f32.mrb[0].mxu0
      %v7890 = vadd.f32 0.0, %v7889
      %v7891 = vpop.f32.mrb[0].mxu0
      %v7892 = vadd.f32 0.0, %v7891
      %7893 = vmatprep.mubr.f32.mxu0 0.0
      %7894 = vmatmul.mubr.f32.gmra.mrb[0].mxu0 %v3298
      %v7895 = vpop.f32.mrb[0].mxu0
      %v7896 = vadd.f32 0.0, %v7895
      %v7897 = vpop.f32.mrb[0].mxu0
      %v7898 = vadd.f32 0.0, %v7897
      %7899 = vmatprep.mubr.f32.mxu0 0.0
      %7900 = vmatmul.mubr.f32.gmra.mrb[0].mxu0 %v3301
      %v7901 = vpop.f32.mrb[0].mxu0
      %v7902 = vadd.f32 0.0, %v7901
      %v7903 = vpop.f32.mrb[0].mxu0
      %v7904 = vadd.f32 0.0, %v7903
      %7905 = vdwg.mxu0
      %7906 = vmatprep.subr.mxu0 %v380
      %7907 = vmatpush1.msra.mxu0 %v379
      %7908 = vmatprep.subr.mxu0 %v404
      %7909 = vmatpush1.msra.mxu0 %v403
      %7910 = vmatprep.subr.mxu0 0.0
      %7911 = vmatpush1.msra.mxu0 0.0
      %7912 = vmatprep.subr.mxu0 0.0
      %7913 = vmatpush1.msra.mxu0 0.0
      %7914 = vmatprep.subr.mxu0 0.0
      %7915 = vmatpush1.msra.mxu0 0.0
      %7916 = vmatprep.subr.mxu0 0.0
      %7917 = vmatpush1.msra.mxu0 0.0
      %7918 = vmatprep.subr.mxu0 0.0
      %7919 = vmatpush1.msra.mxu0 0.0
      %7920 = vmatprep.subr.mxu0 0.0
      %7921 = vmatpush1.msra.mxu0 0.0
      %7922 = vmatprep.subr.mxu0 0.0
      %7923 = vmatpush1.msra.mxu0 0.0
      %7924 = vmatprep.subr.mxu0 0.0
      %7925 = vmatpush1.msra.mxu0 0.0
      %7926 = vmatprep.subr.mxu0 0.0
      %7927 = vmatpush1.msra.mxu0 0.0
      %7928 = vmatprep.subr.mxu0 0.0
      %7929 = vmatpush1.msra.mxu0 0.0
      %7930 = vmatprep.subr.mxu0 0.0
      %7931 = vmatpush1.msra.mxu0 0.0
      %7932 = vmatprep.subr.mxu0 0.0
      %7933 = vmatpush1.msra.mxu0 0.0
      %7934 = vmatprep.subr.mxu0 0.0
      %7935 = vmatpush1.msra.mxu0 0.0
      %7936 = vmatprep.subr.mxu0 0.0
      %7937 = vmatpush1.msra.mxu0 0.0
      %7938 = vmatprep.subr.mxu0 0.0
      %7939 = vmatpush1.msra.mxu0 0.0
      %7940 = vmatprep.subr.mxu0 0.0
      %7941 = vmatpush1.msra.mxu0 0.0
      %7942 = vmatprep.subr.mxu0 0.0
      %7943 = vmatpush1.msra.mxu0 0.0
      %7944 = vmatprep.subr.mxu0 0.0
      %7945 = vmatpush1.msra.mxu0 0.0
      %7946 = vmatprep.subr.mxu0 0.0
      %7947 = vmatpush1.msra.mxu0 0.0
      %7948 = vmatprep.subr.mxu0 0.0
      %7949 = vmatpush1.msra.mxu0 0.0
      %7950 = vmatprep.subr.mxu0 0.0
      %7951 = vmatpush1.msra.mxu0 0.0
      %7952 = vmatprep.subr.mxu0 0.0
      %7953 = vmatpush1.msra.mxu0 0.0
      %7954 = vmatprep.subr.mxu0 0.0
      %7955 = vmatpush1.msra.mxu0 0.0
      %7956 = vmatprep.subr.mxu0 0.0
      %7957 = vmatpush1.msra.mxu0 0.0
      %7958 = vmatprep.subr.mxu0 0.0
      %7959 = vmatpush1.msra.mxu0 0.0
      %7960 = vmatprep.subr.mxu0 0.0
      %7961 = vmatpush1.msra.mxu0 0.0
      %7962 = vmatprep.subr.mxu0 0.0
      %7963 = vmatpush1.msra.mxu0 0.0
      %7964 = vmatprep.subr.mxu0 0.0
      %7965 = vmatpush1.msra.mxu0 0.0
      %7966 = vmatprep.subr.mxu0 0.0
      %7967 = vmatpush1.msra.mxu0 0.0
      %7968 = vmatprep.subr.mxu0 0.0
      %7969 = vmatpush1.msra.mxu0 0.0
      %7970 = vmatprep.mubr.f32.mxu0 0.0
      %7971 = vmatmul.mubr.f32.gmra.mrb[0].mxu0 %v3157
      %v7972 = vpop.f32.mrb[0].mxu0
      %v7973 = vadd.f32 0.0, %v7972
      %v7974 = vpop.f32.mrb[0].mxu0
      %v7975 = vadd.f32 0.0, %v7974
      %7976 = vmatprep.mubr.f32.mxu0 0.0
      %7977 = vmatmul.mubr.f32.gmra.mrb[0].mxu0 %v3160
      %v7978 = vpop.f32.mrb[0].mxu0
      %v7979 = vadd.f32 0.0, %v7978
      %v7980 = vpop.f32.mrb[0].mxu0
      %v7981 = vadd.f32 0.0, %v7980
      %7982 = vmatprep.mubr.f32.mxu0 0.0
      %7983 = vmatmul.mubr.f32.gmra.mrb[0].mxu0 %v3163
      %v7984 = vpop.f32.mrb[0].mxu0
      %v7985 = vadd.f32 0.0, %v7984
      %v7986 = vpop.f32.mrb[0].mxu0
      %v7987 = vadd.f32 0.0, %v7986
      %7988 = vmatprep.mubr.f32.mxu0 0.0
      %7989 = vmatmul.mubr.f32.gmra.mrb[0].mxu0 %v3166
      %v7990 = vpop.f32.mrb[0].mxu0
      %v7991 = vadd.f32 0.0, %v7990
      %v7992 = vpop.f32.mrb[0].mxu0
      %v7993 = vadd.f32 0.0, %v7992
      %7994 = vmatprep.mubr.f32.mxu0 0.0
      %7995 = vmatmul.mubr.f32.gmra.mrb[0].mxu0 %v3169
      %v7996 = vpop.f32.mrb[0].mxu0
      %v7997 = vadd.f32 0.0, %v7996
      %v7998 = vpop.f32.mrb[0].mxu0
      %v7999 = vadd.f32 0.0, %v7998
      %8000 = vmatprep.mubr.f32.mxu0 0.0
      %8001 = vmatmul.mubr.f32.gmra.mrb[0].mxu0 %v3172
      %v8002 = vpop.f32.mrb[0].mxu0
      %v8003 = vadd.f32 0.0, %v8002
      %v8004 = vpop.f32.mrb[0].mxu0
      %v8005 = vadd.f32 0.0, %v8004
      %8006 = vmatprep.mubr.f32.mxu0 0.0
      %8007 = vmatmul.mubr.f32.gmra.mrb[0].mxu0 %v3175
      %v8008 = vpop.f32.mrb[0].mxu0
      %v8009 = vadd.f32 0.0, %v8008
      %v8010 = vpop.f32.mrb[0].mxu0
      %v8011 = vadd.f32 0.0, %v8010
      %8012 = vmatprep.mubr.f32.mxu0 0.0
      %8013 = vmatmul.mubr.f32.gmra.mrb[0].mxu0 %v3178
      %v8014 = vpop.f32.mrb[0].mxu0
      %v8015 = vadd.f32 0.0, %v8014
      %v8016 = vpop.f32.mrb[0].mxu0
      %v8017 = vadd.f32 0.0, %v8016
      %8018 = vmatprep.mubr.f32.mxu0 0.0
      %8019 = vmatmul.mubr.f32.gmra.mrb[0].mxu0 %v3181
      %v8020 = vpop.f32.mrb[0].mxu0
      %v8021 = vadd.f32 0.0, %v8020
      %v8022 = vpop.f32.mrb[0].mxu0
      %v8023 = vadd.f32 0.0, %v8022
      %8024 = vmatprep.mubr.f32.mxu0 0.0
      %8025 = vmatmul.mubr.f32.gmra.mrb[0].mxu0 %v3184
      %v8026 = vpop.f32.mrb[0].mxu0
      %v8027 = vadd.f32 0.0, %v8026
      %v8028 = vpop.f32.mrb[0].mxu0
      %v8029 = vadd.f32 0.0, %v8028
      %8030 = vmatprep.mubr.f32.mxu0 0.0
      %8031 = vmatmul.mubr.f32.gmra.mrb[0].mxu0 %v3187
      %v8032 = vpop.f32.mrb[0].mxu0
      %v8033 = vadd.f32 0.0, %v8032
      %v8034 = vpop.f32.mrb[0].mxu0
      %v8035 = vadd.f32 0.0, %v8034
      %8036 = vmatprep.mubr.f32.mxu0 0.0
      %8037 = vmatmul.mubr.f32.gmra.mrb[0].mxu0 %v3190
      %v8038 = vpop.f32.mrb[0].mxu0
      %v8039 = vadd.f32 0.0, %v8038
      %v8040 = vpop.f32.mrb[0].mxu0
      %v8041 = vadd.f32 0.0, %v8040
      %8042 = vmatprep.mubr.f32.mxu0 0.0
      %8043 = vmatmul.mubr.f32.gmra.mrb[0].mxu0 %v3193
      %v8044 = vpop.f32.mrb[0].mxu0
      %v8045 = vadd.f32 0.0, %v8044
      %v8046 = vpop.f32.mrb[0].mxu0
      %v8047 = vadd.f32 0.0, %v8046
      %8048 = vmatprep.mubr.f32.mxu0 0.0
      %8049 = vmatmul.mubr.f32.gmra.mrb[0].mxu0 %v3196
      %v8050 = vpop.f32.mrb[0].mxu0
      %v8051 = vadd.f32 0.0, %v8050
      %v8052 = vpop.f32.mrb[0].mxu0
      %v8053 = vadd.f32 0.0, %v8052
      %8054 = vmatprep.mubr.f32.mxu0 0.0
      %8055 = vmatmul.mubr.f32.gmra.mrb[0].mxu0 %v3199
      %v8056 = vpop.f32.mrb[0].mxu0
      %v8057 = vadd.f32 0.0, %v8056
      %v8058 = vpop.f32.mrb[0].mxu0
      %v8059 = vadd.f32 0.0, %v8058
      %8060 = vmatprep.mubr.f32.mxu0 0.0
      %8061 = vmatmul.mubr.f32.gmra.mrb[0].mxu0 %v3202
      %v8062 = vpop.f32.mrb[0].mxu0
      %v8063 = vadd.f32 0.0, %v8062
      %v8064 = vpop.f32.mrb[0].mxu0
      %v8065 = vadd.f32 0.0, %v8064
      %8066 = vmatprep.mubr.f32.mxu0 0.0
      %8067 = vmatmul.mubr.f32.gmra.mrb[0].mxu0 %v3205
      %v8068 = vpop.f32.mrb[0].mxu0
      %v8069 = vadd.f32 0.0, %v8068
      %v8070 = vpop.f32.mrb[0].mxu0
      %v8071 = vadd.f32 0.0, %v8070
      %8072 = vmatprep.mubr.f32.mxu0 0.0
      %8073 = vmatmul.mubr.f32.gmra.mrb[0].mxu0 %v3208
      %v8074 = vpop.f32.mrb[0].mxu0
      %v8075 = vadd.f32 0.0, %v8074
      %v8076 = vpop.f32.mrb[0].mxu0
      %v8077 = vadd.f32 0.0, %v8076
      %8078 = vmatprep.mubr.f32.mxu0 0.0
      %8079 = vmatmul.mubr.f32.gmra.mrb[0].mxu0 %v3211
      %v8080 = vpop.f32.mrb[0].mxu0
      %v8081 = vadd.f32 0.0, %v8080
      %v8082 = vpop.f32.mrb[0].mxu0
      %v8083 = vadd.f32 0.0, %v8082
      %8084 = vmatprep.mubr.f32.mxu0 0.0
      %8085 = vmatmul.mubr.f32.gmra.mrb[0].mxu0 %v3214
      %v8086 = vpop.f32.mrb[0].mxu0
      %v8087 = vadd.f32 0.0, %v8086
      %v8088 = vpop.f32.mrb[0].mxu0
      %v8089 = vadd.f32 0.0, %v8088
      %8090 = vmatprep.mubr.f32.mxu0 0.0
      %8091 = vmatmul.mubr.f32.gmra.mrb[0].mxu0 %v3217
      %v8092 = vpop.f32.mrb[0].mxu0
      %v8093 = vadd.f32 0.0, %v8092
      %v8094 = vpop.f32.mrb[0].mxu0
      %v8095 = vadd.f32 0.0, %v8094
      %8096 = vmatprep.mubr.f32.mxu0 0.0
      %8097 = vmatmul.mubr.f32.gmra.mrb[0].mxu0 %v3220
      %v8098 = vpop.f32.mrb[0].mxu0
      %v8099 = vadd.f32 0.0, %v8098
      %v8100 = vpop.f32.mrb[0].mxu0
      %v8101 = vadd.f32 0.0, %v8100
      %8102 = vmatprep.mubr.f32.mxu0 0.0
      %8103 = vmatmul.mubr.f32.gmra.mrb[0].mxu0 %v3223
      %v8104 = vpop.f32.mrb[0].mxu0
      %v8105 = vadd.f32 0.0, %v8104
      %v8106 = vpop.f32.mrb[0].mxu0
      %v8107 = vadd.f32 0.0, %v8106
      %8108 = vmatprep.mubr.f32.mxu0 0.0
      %8109 = vmatmul.mubr.f32.gmra.mrb[0].mxu0 %v3226
      %v8110 = vpop.f32.mrb[0].mxu0
      %v8111 = vadd.f32 0.0, %v8110
      %v8112 = vpop.f32.mrb[0].mxu0
      %v8113 = vadd.f32 0.0, %v8112
      %8114 = vmatprep.mubr.f32.mxu0 0.0
      %8115 = vmatmul.mubr.f32.gmra.mrb[0].mxu0 %v3229
      %v8116 = vpop.f32.mrb[0].mxu0
      %v8117 = vadd.f32 0.0, %v8116
      %v8118 = vpop.f32.mrb[0].mxu0
      %v8119 = vadd.f32 0.0, %v8118
      %8120 = vmatprep.mubr.f32.mxu0 0.0
      %8121 = vmatmul.mubr.f32.gmra.mrb[0].mxu0 %v3232
      %v8122 = vpop.f32.mrb[0].mxu0
      %v8123 = vadd.f32 0.0, %v8122
      %v8124 = vpop.f32.mrb[0].mxu0
      %v8125 = vadd.f32 0.0, %v8124
      %8126 = vmatprep.mubr.f32.mxu0 0.0
      %8127 = vmatmul.mubr.f32.gmra.mrb[0].mxu0 %v3235
      %v8128 = vpop.f32.mrb[0].mxu0
      %v8129 = vadd.f32 0.0, %v8128
      %v8130 = vpop.f32.mrb[0].mxu0
      %v8131 = vadd.f32 0.0, %v8130
      %8132 = vmatprep.mubr.f32.mxu0 0.0
      %8133 = vmatmul.mubr.f32.gmra.mrb[0].mxu0 %v3238
      %v8134 = vpop.f32.mrb[0].mxu0
      %v8135 = vadd.f32 0.0, %v8134
      %v8136 = vpop.f32.mrb[0].mxu0
      %v8137 = vadd.f32 0.0, %v8136
      %8138 = vmatprep.mubr.f32.mxu0 0.0
      %8139 = vmatmul.mubr.f32.gmra.mrb[0].mxu0 %v3241
      %v8140 = vpop.f32.mrb[0].mxu0
      %v8141 = vadd.f32 0.0, %v8140
      %v8142 = vpop.f32.mrb[0].mxu0
      %v8143 = vadd.f32 0.0, %v8142
      %8144 = vmatprep.mubr.f32.mxu0 0.0
      %8145 = vmatmul.mubr.f32.gmra.mrb[0].mxu0 %v3244
      %v8146 = vpop.f32.mrb[0].mxu0
      %v8147 = vadd.f32 0.0, %v8146
      %v8148 = vpop.f32.mrb[0].mxu0
      %v8149 = vadd.f32 0.0, %v8148
      %8150 = vmatprep.mubr.f32.mxu0 0.0
      %8151 = vmatmul.mubr.f32.gmra.mrb[0].mxu0 %v3247
      %v8152 = vpop.f32.mrb[0].mxu0
      %v8153 = vadd.f32 0.0, %v8152
      %v8154 = vpop.f32.mrb[0].mxu0
      %v8155 = vadd.f32 0.0, %v8154
      %8156 = vmatprep.mubr.f32.mxu0 0.0
      %8157 = vmatmul.mubr.f32.gmra.mrb[0].mxu0 %v3250
      %v8158 = vpop.f32.mrb[0].mxu0
      %v8159 = vadd.f32 0.0, %v8158
      %v8160 = vpop.f32.mrb[0].mxu0
      %v8161 = vadd.f32 0.0, %v8160
      %8162 = vmatprep.mubr.f32.mxu0 0.0
      %8163 = vmatmul.mubr.f32.gmra.mrb[0].mxu0 %v3253
      %v8164 = vpop.f32.mrb[0].mxu0
      %v8165 = vadd.f32 0.0, %v8164
      %v8166 = vpop.f32.mrb[0].mxu0
      %v8167 = vadd.f32 0.0, %v8166
      %8168 = vmatprep.mubr.f32.mxu0 0.0
      %8169 = vmatmul.mubr.f32.gmra.mrb[0].mxu0 %v3256
      %v8170 = vpop.f32.mrb[0].mxu0
      %v8171 = vadd.f32 0.0, %v8170
      %v8172 = vpop.f32.mrb[0].mxu0
      %v8173 = vadd.f32 0.0, %v8172
      %8174 = vmatprep.mubr.f32.mxu0 0.0
      %8175 = vmatmul.mubr.f32.gmra.mrb[0].mxu0 %v3259
      %v8176 = vpop.f32.mrb[0].mxu0
      %v8177 = vadd.f32 0.0, %v8176
      %v8178 = vpop.f32.mrb[0].mxu0
      %v8179 = vadd.f32 0.0, %v8178
      %8180 = vmatprep.mubr.f32.mxu0 0.0
      %8181 = vmatmul.mubr.f32.gmra.mrb[0].mxu0 %v3262
      %v8182 = vpop.f32.mrb[0].mxu0
      %v8183 = vadd.f32 0.0, %v8182
      %v8184 = vpop.f32.mrb[0].mxu0
      %v8185 = vadd.f32 0.0, %v8184
      %8186 = vmatprep.mubr.f32.mxu0 0.0
      %8187 = vmatmul.mubr.f32.gmra.mrb[0].mxu0 %v3265
      %v8188 = vpop.f32.mrb[0].mxu0
      %v8189 = vadd.f32 0.0, %v8188
      %v8190 = vpop.f32.mrb[0].mxu0
      %v8191 = vadd.f32 0.0, %v8190
      %8192 = vmatprep.mubr.f32.mxu0 0.0
      %8193 = vmatmul.mubr.f32.gmra.mrb[0].mxu0 %v3268
      %v8194 = vpop.f32.mrb[0].mxu0
      %v8195 = vadd.f32 0.0, %v8194
      %v8196 = vpop.f32.mrb[0].mxu0
      %v8197 = vadd.f32 0.0, %v8196
      %8198 = vmatprep.mubr.f32.mxu0 0.0
      %8199 = vmatmul.mubr.f32.gmra.mrb[0].mxu0 %v3271
      %v8200 = vpop.f32.mrb[0].mxu0
      %v8201 = vadd.f32 0.0, %v8200
      %v8202 = vpop.f32.mrb[0].mxu0
      %v8203 = vadd.f32 0.0, %v8202
      %8204 = vmatprep.mubr.f32.mxu0 0.0
      %8205 = vmatmul.mubr.f32.gmra.mrb[0].mxu0 %v3274
      %v8206 = vpop.f32.mrb[0].mxu0
      %v8207 = vadd.f32 0.0, %v8206
      %v8208 = vpop.f32.mrb[0].mxu0
      %v8209 = vadd.f32 0.0, %v8208
      %8210 = vmatprep.mubr.f32.mxu0 0.0
      %8211 = vmatmul.mubr.f32.gmra.mrb[0].mxu0 %v3277
      %v8212 = vpop.f32.mrb[0].mxu0
      %v8213 = vadd.f32 0.0, %v8212
      %v8214 = vpop.f32.mrb[0].mxu0
      %v8215 = vadd.f32 0.0, %v8214
      %8216 = vmatprep.mubr.f32.mxu0 0.0
      %8217 = vmatmul.mubr.f32.gmra.mrb[0].mxu0 %v3280
      %v8218 = vpop.f32.mrb[0].mxu0
      %v8219 = vadd.f32 0.0, %v8218
      %v8220 = vpop.f32.mrb[0].mxu0
      %v8221 = vadd.f32 0.0, %v8220
      %8222 = vmatprep.mubr.f32.mxu0 0.0
      %8223 = vmatmul.mubr.f32.gmra.mrb[0].mxu0 %v3283
      %v8224 = vpop.f32.mrb[0].mxu0
      %v8225 = vadd.f32 0.0, %v8224
      %v8226 = vpop.f32.mrb[0].mxu0
      %v8227 = vadd.f32 0.0, %v8226
      %8228 = vmatprep.mubr.f32.mxu0 0.0
      %8229 = vmatmul.mubr.f32.gmra.mrb[0].mxu0 %v3286
      %v8230 = vpop.f32.mrb[0].mxu0
      %v8231 = vadd.f32 0.0, %v8230
      %v8232 = vpop.f32.mrb[0].mxu0
      %v8233 = vadd.f32 0.0, %v8232
      %8234 = vmatprep.mubr.f32.mxu0 0.0
      %8235 = vmatmul.mubr.f32.gmra.mrb[0].mxu0 %v3289
      %v8236 = vpop.f32.mrb[0].mxu0
      %v8237 = vadd.f32 0.0, %v8236
      %v8238 = vpop.f32.mrb[0].mxu0
      %v8239 = vadd.f32 0.0, %v8238
      %8240 = vmatprep.mubr.f32.mxu0 0.0
      %8241 = vmatmul.mubr.f32.gmra.mrb[0].mxu0 %v3292
      %v8242 = vpop.f32.mrb[0].mxu0
      %v8243 = vadd.f32 0.0, %v8242
      %v8244 = vpop.f32.mrb[0].mxu0
      %v8245 = vadd.f32 0.0, %v8244
      %8246 = vmatprep.mubr.f32.mxu0 0.0
      %8247 = vmatmul.mubr.f32.gmra.mrb[0].mxu0 %v3295
      %v8248 = vpop.f32.mrb[0].mxu0
      %v8249 = vadd.f32 0.0, %v8248
      %v8250 = vpop.f32.mrb[0].mxu0
      %v8251 = vadd.f32 0.0, %v8250
      %8252 = vmatprep.mubr.f32.mxu0 0.0
      %8253 = vmatmul.mubr.f32.gmra.mrb[0].mxu0 %v3298
      %v8254 = vpop.f32.mrb[0].mxu0
      %v8255 = vadd.f32 0.0, %v8254
      %v8256 = vpop.f32.mrb[0].mxu0
      %v8257 = vadd.f32 0.0, %v8256
      %8258 = vmatprep.mubr.f32.mxu0 0.0
      %8259 = vmatmul.mubr.f32.gmra.mrb[0].mxu0 %v3301
      %v8260 = vpop.f32.mrb[0].mxu0
      %v8261 = vadd.f32 0.0, %v8260
      %v8262 = vpop.f32.mrb[0].mxu0
      %v8263 = vadd.f32 0.0, %v8262
      %8264 = vdwg.mxu0
      %8265 = vmatprep.subr.mxu0 %v382
      %8266 = vmatpush1.msra.mxu0 %v381
      %8267 = vmatprep.subr.mxu0 %v406
      %8268 = vmatpush1.msra.mxu0 %v405
      %8269 = vmatprep.subr.mxu0 0.0
      %8270 = vmatpush1.msra.mxu0 0.0
      %8271 = vmatprep.subr.mxu0 0.0
      %8272 = vmatpush1.msra.mxu0 0.0
      %8273 = vmatprep.subr.mxu0 0.0
      %8274 = vmatpush1.msra.mxu0 0.0
      %8275 = vmatprep.subr.mxu0 0.0
      %8276 = vmatpush1.msra.mxu0 0.0
      %8277 = vmatprep.subr.mxu0 0.0
      %8278 = vmatpush1.msra.mxu0 0.0
      %8279 = vmatprep.subr.mxu0 0.0
      %8280 = vmatpush1.msra.mxu0 0.0
      %8281 = vmatprep.subr.mxu0 0.0
      %8282 = vmatpush1.msra.mxu0 0.0
      %8283 = vmatprep.subr.mxu0 0.0
      %8284 = vmatpush1.msra.mxu0 0.0
      %8285 = vmatprep.subr.mxu0 0.0
      %8286 = vmatpush1.msra.mxu0 0.0
      %8287 = vmatprep.subr.mxu0 0.0
      %8288 = vmatpush1.msra.mxu0 0.0
      %8289 = vmatprep.subr.mxu0 0.0
      %8290 = vmatpush1.msra.mxu0 0.0
      %8291 = vmatprep.subr.mxu0 0.0
      %8292 = vmatpush1.msra.mxu0 0.0
      %8293 = vmatprep.subr.mxu0 0.0
      %8294 = vmatpush1.msra.mxu0 0.0
      %8295 = vmatprep.subr.mxu0 0.0
      %8296 = vmatpush1.msra.mxu0 0.0
      %8297 = vmatprep.subr.mxu0 0.0
      %8298 = vmatpush1.msra.mxu0 0.0
      %8299 = vmatprep.subr.mxu0 0.0
      %8300 = vmatpush1.msra.mxu0 0.0
      %8301 = vmatprep.subr.mxu0 0.0
      %8302 = vmatpush1.msra.mxu0 0.0
      %8303 = vmatprep.subr.mxu0 0.0
      %8304 = vmatpush1.msra.mxu0 0.0
      %8305 = vmatprep.subr.mxu0 0.0
      %8306 = vmatpush1.msra.mxu0 0.0
      %8307 = vmatprep.subr.mxu0 0.0
      %8308 = vmatpush1.msra.mxu0 0.0
      %8309 = vmatprep.subr.mxu0 0.0
      %8310 = vmatpush1.msra.mxu0 0.0
      %8311 = vmatprep.subr.mxu0 0.0
      %8312 = vmatpush1.msra.mxu0 0.0
      %8313 = vmatprep.subr.mxu0 0.0
      %8314 = vmatpush1.msra.mxu0 0.0
      %8315 = vmatprep.subr.mxu0 0.0
      %8316 = vmatpush1.msra.mxu0 0.0
      %8317 = vmatprep.subr.mxu0 0.0
      %8318 = vmatpush1.msra.mxu0 0.0
      %8319 = vmatprep.subr.mxu0 0.0
      %8320 = vmatpush1.msra.mxu0 0.0
      %8321 = vmatprep.subr.mxu0 0.0
      %8322 = vmatpush1.msra.mxu0 0.0
      %8323 = vmatprep.subr.mxu0 0.0
      %8324 = vmatpush1.msra.mxu0 0.0
      %8325 = vmatprep.subr.mxu0 0.0
      %8326 = vmatpush1.msra.mxu0 0.0
      %8327 = vmatprep.subr.mxu0 0.0
      %8328 = vmatpush1.msra.mxu0 0.0
      %8329 = vmatprep.mubr.f32.mxu0 0.0
      %8330 = vmatmul.mubr.f32.gmra.mrb[0].mxu0 %v3157
      %v8331 = vpop.f32.mrb[0].mxu0
      %v8332 = vadd.f32 0.0, %v8331
      %v8333 = vpop.f32.mrb[0].mxu0
      %v8334 = vadd.f32 0.0, %v8333
      %8335 = vmatprep.mubr.f32.mxu0 0.0
      %8336 = vmatmul.mubr.f32.gmra.mrb[0].mxu0 %v3160
      %v8337 = vpop.f32.mrb[0].mxu0
      %v8338 = vadd.f32 0.0, %v8337
      %v8339 = vpop.f32.mrb[0].mxu0
      %v8340 = vadd.f32 0.0, %v8339
      %8341 = vmatprep.mubr.f32.mxu0 0.0
      %8342 = vmatmul.mubr.f32.gmra.mrb[0].mxu0 %v3163
      %v8343 = vpop.f32.mrb[0].mxu0
      %v8344 = vadd.f32 0.0, %v8343
      %v8345 = vpop.f32.mrb[0].mxu0
      %v8346 = vadd.f32 0.0, %v8345
      %8347 = vmatprep.mubr.f32.mxu0 0.0
      %8348 = vmatmul.mubr.f32.gmra.mrb[0].mxu0 %v3166
      %v8349 = vpop.f32.mrb[0].mxu0
      %v8350 = vadd.f32 0.0, %v8349
      %v8351 = vpop.f32.mrb[0].mxu0
      %v8352 = vadd.f32 0.0, %v8351
      %8353 = vmatprep.mubr.f32.mxu0 0.0
      %8354 = vmatmul.mubr.f32.gmra.mrb[0].mxu0 %v3169
      %v8355 = vpop.f32.mrb[0].mxu0
      %v8356 = vadd.f32 0.0, %v8355
      %v8357 = vpop.f32.mrb[0].mxu0
      %v8358 = vadd.f32 0.0, %v8357
      %8359 = vmatprep.mubr.f32.mxu0 0.0
      %8360 = vmatmul.mubr.f32.gmra.mrb[0].mxu0 %v3172
      %v8361 = vpop.f32.mrb[0].mxu0
      %v8362 = vadd.f32 0.0, %v8361
      %v8363 = vpop.f32.mrb[0].mxu0
      %v8364 = vadd.f32 0.0, %v8363
      %8365 = vmatprep.mubr.f32.mxu0 0.0
      %8366 = vmatmul.mubr.f32.gmra.mrb[0].mxu0 %v3175
      %v8367 = vpop.f32.mrb[0].mxu0
      %v8368 = vadd.f32 0.0, %v8367
      %v8369 = vpop.f32.mrb[0].mxu0
      %v8370 = vadd.f32 0.0, %v8369
      %8371 = vmatprep.mubr.f32.mxu0 0.0
      %8372 = vmatmul.mubr.f32.gmra.mrb[0].mxu0 %v3178
      %v8373 = vpop.f32.mrb[0].mxu0
      %v8374 = vadd.f32 0.0, %v8373
      %v8375 = vpop.f32.mrb[0].mxu0
      %v8376 = vadd.f32 0.0, %v8375
      %8377 = vmatprep.mubr.f32.mxu0 0.0
      %8378 = vmatmul.mubr.f32.gmra.mrb[0].mxu0 %v3181
      %v8379 = vpop.f32.mrb[0].mxu0
      %v8380 = vadd.f32 0.0, %v8379
      %v8381 = vpop.f32.mrb[0].mxu0
      %v8382 = vadd.f32 0.0, %v8381
      %8383 = vmatprep.mubr.f32.mxu0 0.0
      %8384 = vmatmul.mubr.f32.gmra.mrb[0].mxu0 %v3184
      %v8385 = vpop.f32.mrb[0].mxu0
      %v8386 = vadd.f32 0.0, %v8385
      %v8387 = vpop.f32.mrb[0].mxu0
      %v8388 = vadd.f32 0.0, %v8387
      %8389 = vmatprep.mubr.f32.mxu0 0.0
      %8390 = vmatmul.mubr.f32.gmra.mrb[0].mxu0 %v3187
      %v8391 = vpop.f32.mrb[0].mxu0
      %v8392 = vadd.f32 0.0, %v8391
      %v8393 = vpop.f32.mrb[0].mxu0
      %v8394 = vadd.f32 0.0, %v8393
      %8395 = vmatprep.mubr.f32.mxu0 0.0
      %8396 = vmatmul.mubr.f32.gmra.mrb[0].mxu0 %v3190
      %v8397 = vpop.f32.mrb[0].mxu0
      %v8398 = vadd.f32 0.0, %v8397
      %v8399 = vpop.f32.mrb[0].mxu0
      %v8400 = vadd.f32 0.0, %v8399
      %8401 = vmatprep.mubr.f32.mxu0 0.0
      %8402 = vmatmul.mubr.f32.gmra.mrb[0].mxu0 %v3193
      %v8403 = vpop.f32.mrb[0].mxu0
      %v8404 = vadd.f32 0.0, %v8403
      %v8405 = vpop.f32.mrb[0].mxu0
      %v8406 = vadd.f32 0.0, %v8405
      %8407 = vmatprep.mubr.f32.mxu0 0.0
      %8408 = vmatmul.mubr.f32.gmra.mrb[0].mxu0 %v3196
      %v8409 = vpop.f32.mrb[0].mxu0
      %v8410 = vadd.f32 0.0, %v8409
      %v8411 = vpop.f32.mrb[0].mxu0
      %v8412 = vadd.f32 0.0, %v8411
      %8413 = vmatprep.mubr.f32.mxu0 0.0
      %8414 = vmatmul.mubr.f32.gmra.mrb[0].mxu0 %v3199
      %v8415 = vpop.f32.mrb[0].mxu0
      %v8416 = vadd.f32 0.0, %v8415
      %v8417 = vpop.f32.mrb[0].mxu0
      %v8418 = vadd.f32 0.0, %v8417
      %8419 = vmatprep.mubr.f32.mxu0 0.0
      %8420 = vmatmul.mubr.f32.gmra.mrb[0].mxu0 %v3202
      %v8421 = vpop.f32.mrb[0].mxu0
      %v8422 = vadd.f32 0.0, %v8421
      %v8423 = vpop.f32.mrb[0].mxu0
      %v8424 = vadd.f32 0.0, %v8423
      %8425 = vmatprep.mubr.f32.mxu0 0.0
      %8426 = vmatmul.mubr.f32.gmra.mrb[0].mxu0 %v3205
      %v8427 = vpop.f32.mrb[0].mxu0
      %v8428 = vadd.f32 0.0, %v8427
      %v8429 = vpop.f32.mrb[0].mxu0
      %v8430 = vadd.f32 0.0, %v8429
      %8431 = vmatprep.mubr.f32.mxu0 0.0
      %8432 = vmatmul.mubr.f32.gmra.mrb[0].mxu0 %v3208
      %v8433 = vpop.f32.mrb[0].mxu0
      %v8434 = vadd.f32 0.0, %v8433
      %v8435 = vpop.f32.mrb[0].mxu0
      %v8436 = vadd.f32 0.0, %v8435
      %8437 = vmatprep.mubr.f32.mxu0 0.0
      %8438 = vmatmul.mubr.f32.gmra.mrb[0].mxu0 %v3211
      %v8439 = vpop.f32.mrb[0].mxu0
      %v8440 = vadd.f32 0.0, %v8439
      %v8441 = vpop.f32.mrb[0].mxu0
      %v8442 = vadd.f32 0.0, %v8441
      %8443 = vmatprep.mubr.f32.mxu0 0.0
      %8444 = vmatmul.mubr.f32.gmra.mrb[0].mxu0 %v3214
      %v8445 = vpop.f32.mrb[0].mxu0
      %v8446 = vadd.f32 0.0, %v8445
      %v8447 = vpop.f32.mrb[0].mxu0
      %v8448 = vadd.f32 0.0, %v8447
      %8449 = vmatprep.mubr.f32.mxu0 0.0
      %8450 = vmatmul.mubr.f32.gmra.mrb[0].mxu0 %v3217
      %v8451 = vpop.f32.mrb[0].mxu0
      %v8452 = vadd.f32 0.0, %v8451
      %v8453 = vpop.f32.mrb[0].mxu0
      %v8454 = vadd.f32 0.0, %v8453
      %8455 = vmatprep.mubr.f32.mxu0 0.0
      %8456 = vmatmul.mubr.f32.gmra.mrb[0].mxu0 %v3220
      %v8457 = vpop.f32.mrb[0].mxu0
      %v8458 = vadd.f32 0.0, %v8457
      %v8459 = vpop.f32.mrb[0].mxu0
      %v8460 = vadd.f32 0.0, %v8459
      %8461 = vmatprep.mubr.f32.mxu0 0.0
      %8462 = vmatmul.mubr.f32.gmra.mrb[0].mxu0 %v3223
      %v8463 = vpop.f32.mrb[0].mxu0
      %v8464 = vadd.f32 0.0, %v8463
      %v8465 = vpop.f32.mrb[0].mxu0
      %v8466 = vadd.f32 0.0, %v8465
      %8467 = vmatprep.mubr.f32.mxu0 0.0
      %8468 = vmatmul.mubr.f32.gmra.mrb[0].mxu0 %v3226
      %v8469 = vpop.f32.mrb[0].mxu0
      %v8470 = vadd.f32 0.0, %v8469
      %v8471 = vpop.f32.mrb[0].mxu0
      %v8472 = vadd.f32 0.0, %v8471
      %8473 = vmatprep.mubr.f32.mxu0 0.0
      %8474 = vmatmul.mubr.f32.gmra.mrb[0].mxu0 %v3229
      %v8475 = vpop.f32.mrb[0].mxu0
      %v8476 = vadd.f32 0.0, %v8475
      %v8477 = vpop.f32.mrb[0].mxu0
      %v8478 = vadd.f32 0.0, %v8477
      %8479 = vmatprep.mubr.f32.mxu0 0.0
      %8480 = vmatmul.mubr.f32.gmra.mrb[0].mxu0 %v3232
      %v8481 = vpop.f32.mrb[0].mxu0
      %v8482 = vadd.f32 0.0, %v8481
      %v8483 = vpop.f32.mrb[0].mxu0
      %v8484 = vadd.f32 0.0, %v8483
      %8485 = vmatprep.mubr.f32.mxu0 0.0
      %8486 = vmatmul.mubr.f32.gmra.mrb[0].mxu0 %v3235
      %v8487 = vpop.f32.mrb[0].mxu0
      %v8488 = vadd.f32 0.0, %v8487
      %v8489 = vpop.f32.mrb[0].mxu0
      %v8490 = vadd.f32 0.0, %v8489
      %8491 = vmatprep.mubr.f32.mxu0 0.0
      %8492 = vmatmul.mubr.f32.gmra.mrb[0].mxu0 %v3238
      %v8493 = vpop.f32.mrb[0].mxu0
      %v8494 = vadd.f32 0.0, %v8493
      %v8495 = vpop.f32.mrb[0].mxu0
      %v8496 = vadd.f32 0.0, %v8495
      %8497 = vmatprep.mubr.f32.mxu0 0.0
      %8498 = vmatmul.mubr.f32.gmra.mrb[0].mxu0 %v3241
      %v8499 = vpop.f32.mrb[0].mxu0
      %v8500 = vadd.f32 0.0, %v8499
      %v8501 = vpop.f32.mrb[0].mxu0
      %v8502 = vadd.f32 0.0, %v8501
      %8503 = vmatprep.mubr.f32.mxu0 0.0
      %8504 = vmatmul.mubr.f32.gmra.mrb[0].mxu0 %v3244
      %v8505 = vpop.f32.mrb[0].mxu0
      %v8506 = vadd.f32 0.0, %v8505
      %v8507 = vpop.f32.mrb[0].mxu0
      %v8508 = vadd.f32 0.0, %v8507
      %8509 = vmatprep.mubr.f32.mxu0 0.0
      %8510 = vmatmul.mubr.f32.gmra.mrb[0].mxu0 %v3247
      %v8511 = vpop.f32.mrb[0].mxu0
      %v8512 = vadd.f32 0.0, %v8511
      %v8513 = vpop.f32.mrb[0].mxu0
      %v8514 = vadd.f32 0.0, %v8513
      %8515 = vmatprep.mubr.f32.mxu0 0.0
      %8516 = vmatmul.mubr.f32.gmra.mrb[0].mxu0 %v3250
      %v8517 = vpop.f32.mrb[0].mxu0
      %v8518 = vadd.f32 0.0, %v8517
      %v8519 = vpop.f32.mrb[0].mxu0
      %v8520 = vadd.f32 0.0, %v8519
      %8521 = vmatprep.mubr.f32.mxu0 0.0
      %8522 = vmatmul.mubr.f32.gmra.mrb[0].mxu0 %v3253
      %v8523 = vpop.f32.mrb[0].mxu0
      %v8524 = vadd.f32 0.0, %v8523
      %v8525 = vpop.f32.mrb[0].mxu0
      %v8526 = vadd.f32 0.0, %v8525
      %8527 = vmatprep.mubr.f32.mxu0 0.0
      %8528 = vmatmul.mubr.f32.gmra.mrb[0].mxu0 %v3256
      %v8529 = vpop.f32.mrb[0].mxu0
      %v8530 = vadd.f32 0.0, %v8529
      %v8531 = vpop.f32.mrb[0].mxu0
      %v8532 = vadd.f32 0.0, %v8531
      %8533 = vmatprep.mubr.f32.mxu0 0.0
      %8534 = vmatmul.mubr.f32.gmra.mrb[0].mxu0 %v3259
      %v8535 = vpop.f32.mrb[0].mxu0
      %v8536 = vadd.f32 0.0, %v8535
      %v8537 = vpop.f32.mrb[0].mxu0
      %v8538 = vadd.f32 0.0, %v8537
      %8539 = vmatprep.mubr.f32.mxu0 0.0
      %8540 = vmatmul.mubr.f32.gmra.mrb[0].mxu0 %v3262
      %v8541 = vpop.f32.mrb[0].mxu0
      %v8542 = vadd.f32 0.0, %v8541
      %v8543 = vpop.f32.mrb[0].mxu0
      %v8544 = vadd.f32 0.0, %v8543
      %8545 = vmatprep.mubr.f32.mxu0 0.0
      %8546 = vmatmul.mubr.f32.gmra.mrb[0].mxu0 %v3265
      %v8547 = vpop.f32.mrb[0].mxu0
      %v8548 = vadd.f32 0.0, %v8547
      %v8549 = vpop.f32.mrb[0].mxu0
      %v8550 = vadd.f32 0.0, %v8549
      %8551 = vmatprep.mubr.f32.mxu0 0.0
      %8552 = vmatmul.mubr.f32.gmra.mrb[0].mxu0 %v3268
      %v8553 = vpop.f32.mrb[0].mxu0
      %v8554 = vadd.f32 0.0, %v8553
      %v8555 = vpop.f32.mrb[0].mxu0
      %v8556 = vadd.f32 0.0, %v8555
      %8557 = vmatprep.mubr.f32.mxu0 0.0
      %8558 = vmatmul.mubr.f32.gmra.mrb[0].mxu0 %v3271
      %v8559 = vpop.f32.mrb[0].mxu0
      %v8560 = vadd.f32 0.0, %v8559
      %v8561 = vpop.f32.mrb[0].mxu0
      %v8562 = vadd.f32 0.0, %v8561
      %8563 = vmatprep.mubr.f32.mxu0 0.0
      %8564 = vmatmul.mubr.f32.gmra.mrb[0].mxu0 %v3274
      %v8565 = vpop.f32.mrb[0].mxu0
      %v8566 = vadd.f32 0.0, %v8565
      %v8567 = vpop.f32.mrb[0].mxu0
      %v8568 = vadd.f32 0.0, %v8567
      %8569 = vmatprep.mubr.f32.mxu0 0.0
      %8570 = vmatmul.mubr.f32.gmra.mrb[0].mxu0 %v3277
      %v8571 = vpop.f32.mrb[0].mxu0
      %v8572 = vadd.f32 0.0, %v8571
      %v8573 = vpop.f32.mrb[0].mxu0
      %v8574 = vadd.f32 0.0, %v8573
      %8575 = vmatprep.mubr.f32.mxu0 0.0
      %8576 = vmatmul.mubr.f32.gmra.mrb[0].mxu0 %v3280
      %v8577 = vpop.f32.mrb[0].mxu0
      %v8578 = vadd.f32 0.0, %v8577
      %v8579 = vpop.f32.mrb[0].mxu0
      %v8580 = vadd.f32 0.0, %v8579
      %8581 = vmatprep.mubr.f32.mxu0 0.0
      %8582 = vmatmul.mubr.f32.gmra.mrb[0].mxu0 %v3283
      %v8583 = vpop.f32.mrb[0].mxu0
      %v8584 = vadd.f32 0.0, %v8583
      %v8585 = vpop.f32.mrb[0].mxu0
      %v8586 = vadd.f32 0.0, %v8585
      %8587 = vmatprep.mubr.f32.mxu0 0.0
      %8588 = vmatmul.mubr.f32.gmra.mrb[0].mxu0 %v3286
      %v8589 = vpop.f32.mrb[0].mxu0
      %v8590 = vadd.f32 0.0, %v8589
      %v8591 = vpop.f32.mrb[0].mxu0
      %v8592 = vadd.f32 0.0, %v8591
      %8593 = vmatprep.mubr.f32.mxu0 0.0
      %8594 = vmatmul.mubr.f32.gmra.mrb[0].mxu0 %v3289
      %v8595 = vpop.f32.mrb[0].mxu0
      %v8596 = vadd.f32 0.0, %v8595
      %v8597 = vpop.f32.mrb[0].mxu0
      %v8598 = vadd.f32 0.0, %v8597
      %8599 = vmatprep.mubr.f32.mxu0 0.0
      %8600 = vmatmul.mubr.f32.gmra.mrb[0].mxu0 %v3292
      %v8601 = vpop.f32.mrb[0].mxu0
      %v8602 = vadd.f32 0.0, %v8601
      %v8603 = vpop.f32.mrb[0].mxu0
      %v8604 = vadd.f32 0.0, %v8603
      %8605 = vmatprep.mubr.f32.mxu0 0.0
      %8606 = vmatmul.mubr.f32.gmra.mrb[0].mxu0 %v3295
      %v8607 = vpop.f32.mrb[0].mxu0
      %v8608 = vadd.f32 0.0, %v8607
      %v8609 = vpop.f32.mrb[0].mxu0
      %v8610 = vadd.f32 0.0, %v8609
      %8611 = vmatprep.mubr.f32.mxu0 0.0
      %8612 = vmatmul.mubr.f32.gmra.mrb[0].mxu0 %v3298
      %v8613 = vpop.f32.mrb[0].mxu0
      %v8614 = vadd.f32 0.0, %v8613
      %v8615 = vpop.f32.mrb[0].mxu0
      %v8616 = vadd.f32 0.0, %v8615
      %8617 = vmatprep.mubr.f32.mxu0 0.0
      %8618 = vmatmul.mubr.f32.gmra.mrb[0].mxu0 %v3301
      %v8619 = vpop.f32.mrb[0].mxu0
      %v8620 = vadd.f32 0.0, %v8619
      %v8621 = vpop.f32.mrb[0].mxu0
      %v8622 = vadd.f32 0.0, %v8621
      %8623 = vdwg.mxu0
      %8624 = vmatprep.subr.mxu0 %v384
      %8625 = vmatpush1.msra.mxu0 %v383
      %8626 = vmatprep.subr.mxu0 %v408
      %8627 = vmatpush1.msra.mxu0 %v407
      %8628 = vmatprep.subr.mxu0 0.0
      %8629 = vmatpush1.msra.mxu0 0.0
      %8630 = vmatprep.subr.mxu0 0.0
      %8631 = vmatpush1.msra.mxu0 0.0
      %8632 = vmatprep.subr.mxu0 0.0
      %8633 = vmatpush1.msra.mxu0 0.0
      %8634 = vmatprep.subr.mxu0 0.0
      %8635 = vmatpush1.msra.mxu0 0.0
      %8636 = vmatprep.subr.mxu0 0.0
      %8637 = vmatpush1.msra.mxu0 0.0
      %8638 = vmatprep.subr.mxu0 0.0
      %8639 = vmatpush1.msra.mxu0 0.0
      %8640 = vmatprep.subr.mxu0 0.0
      %8641 = vmatpush1.msra.mxu0 0.0
      %8642 = vmatprep.subr.mxu0 0.0
      %8643 = vmatpush1.msra.mxu0 0.0
      %8644 = vmatprep.subr.mxu0 0.0
      %8645 = vmatpush1.msra.mxu0 0.0
      %8646 = vmatprep.subr.mxu0 0.0
      %8647 = vmatpush1.msra.mxu0 0.0
      %8648 = vmatprep.subr.mxu0 0.0
      %8649 = vmatpush1.msra.mxu0 0.0
      %8650 = vmatprep.subr.mxu0 0.0
      %8651 = vmatpush1.msra.mxu0 0.0
      %8652 = vmatprep.subr.mxu0 0.0
      %8653 = vmatpush1.msra.mxu0 0.0
      %8654 = vmatprep.subr.mxu0 0.0
      %8655 = vmatpush1.msra.mxu0 0.0
      %8656 = vmatprep.subr.mxu0 0.0
      %8657 = vmatpush1.msra.mxu0 0.0
      %8658 = vmatprep.subr.mxu0 0.0
      %8659 = vmatpush1.msra.mxu0 0.0
      %8660 = vmatprep.subr.mxu0 0.0
      %8661 = vmatpush1.msra.mxu0 0.0
      %8662 = vmatprep.subr.mxu0 0.0
      %8663 = vmatpush1.msra.mxu0 0.0
      %8664 = vmatprep.subr.mxu0 0.0
      %8665 = vmatpush1.msra.mxu0 0.0
      %8666 = vmatprep.subr.mxu0 0.0
      %8667 = vmatpush1.msra.mxu0 0.0
      %8668 = vmatprep.subr.mxu0 0.0
      %8669 = vmatpush1.msra.mxu0 0.0
      %8670 = vmatprep.subr.mxu0 0.0
      %8671 = vmatpush1.msra.mxu0 0.0
      %8672 = vmatprep.subr.mxu0 0.0
      %8673 = vmatpush1.msra.mxu0 0.0
      %8674 = vmatprep.subr.mxu0 0.0
      %8675 = vmatpush1.msra.mxu0 0.0
      %8676 = vmatprep.subr.mxu0 0.0
      %8677 = vmatpush1.msra.mxu0 0.0
      %8678 = vmatprep.subr.mxu0 0.0
      %8679 = vmatpush1.msra.mxu0 0.0
      %8680 = vmatprep.subr.mxu0 0.0
      %8681 = vmatpush1.msra.mxu0 0.0
      %8682 = vmatprep.subr.mxu0 0.0
      %8683 = vmatpush1.msra.mxu0 0.0
      %8684 = vmatprep.subr.mxu0 0.0
      %8685 = vmatpush1.msra.mxu0 0.0
      %8686 = vmatprep.subr.mxu0 0.0
      %8687 = vmatpush1.msra.mxu0 0.0
      %8688 = vmatprep.mubr.f32.mxu0 0.0
      %8689 = vmatmul.mubr.f32.gmra.mrb[0].mxu0 %v3157
      %v8690 = vpop.f32.mrb[0].mxu0
      %v8691 = vadd.f32 0.0, %v8690
      %v8692 = vpop.f32.mrb[0].mxu0
      %v8693 = vadd.f32 0.0, %v8692
      %8694 = vmatprep.mubr.f32.mxu0 0.0
      %8695 = vmatmul.mubr.f32.gmra.mrb[0].mxu0 %v3160
      %v8696 = vpop.f32.mrb[0].mxu0
      %v8697 = vadd.f32 0.0, %v8696
      %v8698 = vpop.f32.mrb[0].mxu0
      %v8699 = vadd.f32 0.0, %v8698
      %8700 = vmatprep.mubr.f32.mxu0 0.0
      %8701 = vmatmul.mubr.f32.gmra.mrb[0].mxu0 %v3163
      %v8702 = vpop.f32.mrb[0].mxu0
      %v8703 = vadd.f32 0.0, %v8702
      %v8704 = vpop.f32.mrb[0].mxu0
      %v8705 = vadd.f32 0.0, %v8704
      %8706 = vmatprep.mubr.f32.mxu0 0.0
      %8707 = vmatmul.mubr.f32.gmra.mrb[0].mxu0 %v3166
      %v8708 = vpop.f32.mrb[0].mxu0
      %v8709 = vadd.f32 0.0, %v8708
      %v8710 = vpop.f32.mrb[0].mxu0
      %v8711 = vadd.f32 0.0, %v8710
      %8712 = vmatprep.mubr.f32.mxu0 0.0
      %8713 = vmatmul.mubr.f32.gmra.mrb[0].mxu0 %v3169
      %v8714 = vpop.f32.mrb[0].mxu0
      %v8715 = vadd.f32 0.0, %v8714
      %v8716 = vpop.f32.mrb[0].mxu0
      %v8717 = vadd.f32 0.0, %v8716
      %8718 = vmatprep.mubr.f32.mxu0 0.0
      %8719 = vmatmul.mubr.f32.gmra.mrb[0].mxu0 %v3172
      %v8720 = vpop.f32.mrb[0].mxu0
      %v8721 = vadd.f32 0.0, %v8720
      %v8722 = vpop.f32.mrb[0].mxu0
      %v8723 = vadd.f32 0.0, %v8722
      %8724 = vmatprep.mubr.f32.mxu0 0.0
      %8725 = vmatmul.mubr.f32.gmra.mrb[0].mxu0 %v3175
      %v8726 = vpop.f32.mrb[0].mxu0
      %v8727 = vadd.f32 0.0, %v8726
      %v8728 = vpop.f32.mrb[0].mxu0
      %v8729 = vadd.f32 0.0, %v8728
      %8730 = vmatprep.mubr.f32.mxu0 0.0
      %8731 = vmatmul.mubr.f32.gmra.mrb[0].mxu0 %v3178
      %v8732 = vpop.f32.mrb[0].mxu0
      %v8733 = vadd.f32 0.0, %v8732
      %v8734 = vpop.f32.mrb[0].mxu0
      %v8735 = vadd.f32 0.0, %v8734
      %8736 = vmatprep.mubr.f32.mxu0 0.0
      %8737 = vmatmul.mubr.f32.gmra.mrb[0].mxu0 %v3181
      %v8738 = vpop.f32.mrb[0].mxu0
      %v8739 = vadd.f32 0.0, %v8738
      %v8740 = vpop.f32.mrb[0].mxu0
      %v8741 = vadd.f32 0.0, %v8740
      %8742 = vmatprep.mubr.f32.mxu0 0.0
      %8743 = vmatmul.mubr.f32.gmra.mrb[0].mxu0 %v3184
      %v8744 = vpop.f32.mrb[0].mxu0
      %v8745 = vadd.f32 0.0, %v8744
      %v8746 = vpop.f32.mrb[0].mxu0
      %v8747 = vadd.f32 0.0, %v8746
      %8748 = vmatprep.mubr.f32.mxu0 0.0
      %8749 = vmatmul.mubr.f32.gmra.mrb[0].mxu0 %v3187
      %v8750 = vpop.f32.mrb[0].mxu0
      %v8751 = vadd.f32 0.0, %v8750
      %v8752 = vpop.f32.mrb[0].mxu0
      %v8753 = vadd.f32 0.0, %v8752
      %8754 = vmatprep.mubr.f32.mxu0 0.0
      %8755 = vmatmul.mubr.f32.gmra.mrb[0].mxu0 %v3190
      %v8756 = vpop.f32.mrb[0].mxu0
      %v8757 = vadd.f32 0.0, %v8756
      %v8758 = vpop.f32.mrb[0].mxu0
      %v8759 = vadd.f32 0.0, %v8758
      %8760 = vmatprep.mubr.f32.mxu0 0.0
      %8761 = vmatmul.mubr.f32.gmra.mrb[0].mxu0 %v3193
      %v8762 = vpop.f32.mrb[0].mxu0
      %v8763 = vadd.f32 0.0, %v8762
      %v8764 = vpop.f32.mrb[0].mxu0
      %v8765 = vadd.f32 0.0, %v8764
      %8766 = vmatprep.mubr.f32.mxu0 0.0
      %8767 = vmatmul.mubr.f32.gmra.mrb[0].mxu0 %v3196
      %v8768 = vpop.f32.mrb[0].mxu0
      %v8769 = vadd.f32 0.0, %v8768
      %v8770 = vpop.f32.mrb[0].mxu0
      %v8771 = vadd.f32 0.0, %v8770
      %8772 = vmatprep.mubr.f32.mxu0 0.0
      %8773 = vmatmul.mubr.f32.gmra.mrb[0].mxu0 %v3199
      %v8774 = vpop.f32.mrb[0].mxu0
      %v8775 = vadd.f32 0.0, %v8774
      %v8776 = vpop.f32.mrb[0].mxu0
      %v8777 = vadd.f32 0.0, %v8776
      %8778 = vmatprep.mubr.f32.mxu0 0.0
      %8779 = vmatmul.mubr.f32.gmra.mrb[0].mxu0 %v3202
      %v8780 = vpop.f32.mrb[0].mxu0
      %v8781 = vadd.f32 0.0, %v8780
      %v8782 = vpop.f32.mrb[0].mxu0
      %v8783 = vadd.f32 0.0, %v8782
      %8784 = vmatprep.mubr.f32.mxu0 0.0
      %8785 = vmatmul.mubr.f32.gmra.mrb[0].mxu0 %v3205
      %v8786 = vpop.f32.mrb[0].mxu0
      %v8787 = vadd.f32 0.0, %v8786
      %v8788 = vpop.f32.mrb[0].mxu0
      %v8789 = vadd.f32 0.0, %v8788
      %8790 = vmatprep.mubr.f32.mxu0 0.0
      %8791 = vmatmul.mubr.f32.gmra.mrb[0].mxu0 %v3208
      %v8792 = vpop.f32.mrb[0].mxu0
      %v8793 = vadd.f32 0.0, %v8792
      %v8794 = vpop.f32.mrb[0].mxu0
      %v8795 = vadd.f32 0.0, %v8794
      %8796 = vmatprep.mubr.f32.mxu0 0.0
      %8797 = vmatmul.mubr.f32.gmra.mrb[0].mxu0 %v3211
      %v8798 = vpop.f32.mrb[0].mxu0
      %v8799 = vadd.f32 0.0, %v8798
      %v8800 = vpop.f32.mrb[0].mxu0
      %v8801 = vadd.f32 0.0, %v8800
      %8802 = vmatprep.mubr.f32.mxu0 0.0
      %8803 = vmatmul.mubr.f32.gmra.mrb[0].mxu0 %v3214
      %v8804 = vpop.f32.mrb[0].mxu0
      %v8805 = vadd.f32 0.0, %v8804
      %v8806 = vpop.f32.mrb[0].mxu0
      %v8807 = vadd.f32 0.0, %v8806
      %8808 = vmatprep.mubr.f32.mxu0 0.0
      %8809 = vmatmul.mubr.f32.gmra.mrb[0].mxu0 %v3217
      %v8810 = vpop.f32.mrb[0].mxu0
      %v8811 = vadd.f32 0.0, %v8810
      %v8812 = vpop.f32.mrb[0].mxu0
      %v8813 = vadd.f32 0.0, %v8812
      %8814 = vmatprep.mubr.f32.mxu0 0.0
      %8815 = vmatmul.mubr.f32.gmra.mrb[0].mxu0 %v3220
      %v8816 = vpop.f32.mrb[0].mxu0
      %v8817 = vadd.f32 0.0, %v8816
      %v8818 = vpop.f32.mrb[0].mxu0
      %v8819 = vadd.f32 0.0, %v8818
      %8820 = vmatprep.mubr.f32.mxu0 0.0
      %8821 = vmatmul.mubr.f32.gmra.mrb[0].mxu0 %v3223
      %v8822 = vpop.f32.mrb[0].mxu0
      %v8823 = vadd.f32 0.0, %v8822
      %v8824 = vpop.f32.mrb[0].mxu0
      %v8825 = vadd.f32 0.0, %v8824
      %8826 = vmatprep.mubr.f32.mxu0 0.0
      %8827 = vmatmul.mubr.f32.gmra.mrb[0].mxu0 %v3226
      %v8828 = vpop.f32.mrb[0].mxu0
      %v8829 = vadd.f32 0.0, %v8828
      %v8830 = vpop.f32.mrb[0].mxu0
      %v8831 = vadd.f32 0.0, %v8830
      %8832 = vmatprep.mubr.f32.mxu0 0.0
      %8833 = vmatmul.mubr.f32.gmra.mrb[0].mxu0 %v3229
      %v8834 = vpop.f32.mrb[0].mxu0
      %v8835 = vadd.f32 0.0, %v8834
      %v8836 = vpop.f32.mrb[0].mxu0
      %v8837 = vadd.f32 0.0, %v8836
      %8838 = vmatprep.mubr.f32.mxu0 0.0
      %8839 = vmatmul.mubr.f32.gmra.mrb[0].mxu0 %v3232
      %v8840 = vpop.f32.mrb[0].mxu0
      %v8841 = vadd.f32 0.0, %v8840
      %v8842 = vpop.f32.mrb[0].mxu0
      %v8843 = vadd.f32 0.0, %v8842
      %8844 = vmatprep.mubr.f32.mxu0 0.0
      %8845 = vmatmul.mubr.f32.gmra.mrb[0].mxu0 %v3235
      %v8846 = vpop.f32.mrb[0].mxu0
      %v8847 = vadd.f32 0.0, %v8846
      %v8848 = vpop.f32.mrb[0].mxu0
      %v8849 = vadd.f32 0.0, %v8848
      %8850 = vmatprep.mubr.f32.mxu0 0.0
      %8851 = vmatmul.mubr.f32.gmra.mrb[0].mxu0 %v3238
      %v8852 = vpop.f32.mrb[0].mxu0
      %v8853 = vadd.f32 0.0, %v8852
      %v8854 = vpop.f32.mrb[0].mxu0
      %v8855 = vadd.f32 0.0, %v8854
      %8856 = vmatprep.mubr.f32.mxu0 0.0
      %8857 = vmatmul.mubr.f32.gmra.mrb[0].mxu0 %v3241
      %v8858 = vpop.f32.mrb[0].mxu0
      %v8859 = vadd.f32 0.0, %v8858
      %v8860 = vpop.f32.mrb[0].mxu0
      %v8861 = vadd.f32 0.0, %v8860
      %8862 = vmatprep.mubr.f32.mxu0 0.0
      %8863 = vmatmul.mubr.f32.gmra.mrb[0].mxu0 %v3244
      %v8864 = vpop.f32.mrb[0].mxu0
      %v8865 = vadd.f32 0.0, %v8864
      %v8866 = vpop.f32.mrb[0].mxu0
      %v8867 = vadd.f32 0.0, %v8866
      %8868 = vmatprep.mubr.f32.mxu0 0.0
      %8869 = vmatmul.mubr.f32.gmra.mrb[0].mxu0 %v3247
      %v8870 = vpop.f32.mrb[0].mxu0
      %v8871 = vadd.f32 0.0, %v8870
      %v8872 = vpop.f32.mrb[0].mxu0
      %v8873 = vadd.f32 0.0, %v8872
      %8874 = vmatprep.mubr.f32.mxu0 0.0
      %8875 = vmatmul.mubr.f32.gmra.mrb[0].mxu0 %v3250
      %v8876 = vpop.f32.mrb[0].mxu0
      %v8877 = vadd.f32 0.0, %v8876
      %v8878 = vpop.f32.mrb[0].mxu0
      %v8879 = vadd.f32 0.0, %v8878
      %8880 = vmatprep.mubr.f32.mxu0 0.0
      %8881 = vmatmul.mubr.f32.gmra.mrb[0].mxu0 %v3253
      %v8882 = vpop.f32.mrb[0].mxu0
      %v8883 = vadd.f32 0.0, %v8882
      %v8884 = vpop.f32.mrb[0].mxu0
      %v8885 = vadd.f32 0.0, %v8884
      %8886 = vmatprep.mubr.f32.mxu0 0.0
      %8887 = vmatmul.mubr.f32.gmra.mrb[0].mxu0 %v3256
      %v8888 = vpop.f32.mrb[0].mxu0
      %v8889 = vadd.f32 0.0, %v8888
      %v8890 = vpop.f32.mrb[0].mxu0
      %v8891 = vadd.f32 0.0, %v8890
      %8892 = vmatprep.mubr.f32.mxu0 0.0
      %8893 = vmatmul.mubr.f32.gmra.mrb[0].mxu0 %v3259
      %v8894 = vpop.f32.mrb[0].mxu0
      %v8895 = vadd.f32 0.0, %v8894
      %v8896 = vpop.f32.mrb[0].mxu0
      %v8897 = vadd.f32 0.0, %v8896
      %8898 = vmatprep.mubr.f32.mxu0 0.0
      %8899 = vmatmul.mubr.f32.gmra.mrb[0].mxu0 %v3262
      %v8900 = vpop.f32.mrb[0].mxu0
      %v8901 = vadd.f32 0.0, %v8900
      %v8902 = vpop.f32.mrb[0].mxu0
      %v8903 = vadd.f32 0.0, %v8902
      %8904 = vmatprep.mubr.f32.mxu0 0.0
      %8905 = vmatmul.mubr.f32.gmra.mrb[0].mxu0 %v3265
      %v8906 = vpop.f32.mrb[0].mxu0
      %v8907 = vadd.f32 0.0, %v8906
      %v8908 = vpop.f32.mrb[0].mxu0
      %v8909 = vadd.f32 0.0, %v8908
      %8910 = vmatprep.mubr.f32.mxu0 0.0
      %8911 = vmatmul.mubr.f32.gmra.mrb[0].mxu0 %v3268
      %v8912 = vpop.f32.mrb[0].mxu0
      %v8913 = vadd.f32 0.0, %v8912
      %v8914 = vpop.f32.mrb[0].mxu0
      %v8915 = vadd.f32 0.0, %v8914
      %8916 = vmatprep.mubr.f32.mxu0 0.0
      %8917 = vmatmul.mubr.f32.gmra.mrb[0].mxu0 %v3271
      %v8918 = vpop.f32.mrb[0].mxu0
      %v8919 = vadd.f32 0.0, %v8918
      %v8920 = vpop.f32.mrb[0].mxu0
      %v8921 = vadd.f32 0.0, %v8920
      %8922 = vmatprep.mubr.f32.mxu0 0.0
      %8923 = vmatmul.mubr.f32.gmra.mrb[0].mxu0 %v3274
      %v8924 = vpop.f32.mrb[0].mxu0
      %v8925 = vadd.f32 0.0, %v8924
      %v8926 = vpop.f32.mrb[0].mxu0
      %v8927 = vadd.f32 0.0, %v8926
      %8928 = vmatprep.mubr.f32.mxu0 0.0
      %8929 = vmatmul.mubr.f32.gmra.mrb[0].mxu0 %v3277
      %v8930 = vpop.f32.mrb[0].mxu0
      %v8931 = vadd.f32 0.0, %v8930
      %v8932 = vpop.f32.mrb[0].mxu0
      %v8933 = vadd.f32 0.0, %v8932
      %8934 = vmatprep.mubr.f32.mxu0 0.0
      %8935 = vmatmul.mubr.f32.gmra.mrb[0].mxu0 %v3280
      %v8936 = vpop.f32.mrb[0].mxu0
      %v8937 = vadd.f32 0.0, %v8936
      %v8938 = vpop.f32.mrb[0].mxu0
      %v8939 = vadd.f32 0.0, %v8938
      %8940 = vmatprep.mubr.f32.mxu0 0.0
      %8941 = vmatmul.mubr.f32.gmra.mrb[0].mxu0 %v3283
      %v8942 = vpop.f32.mrb[0].mxu0
      %v8943 = vadd.f32 0.0, %v8942
      %v8944 = vpop.f32.mrb[0].mxu0
      %v8945 = vadd.f32 0.0, %v8944
      %8946 = vmatprep.mubr.f32.mxu0 0.0
      %8947 = vmatmul.mubr.f32.gmra.mrb[0].mxu0 %v3286
      %v8948 = vpop.f32.mrb[0].mxu0
      %v8949 = vadd.f32 0.0, %v8948
      %v8950 = vpop.f32.mrb[0].mxu0
      %v8951 = vadd.f32 0.0, %v8950
      %8952 = vmatprep.mubr.f32.mxu0 0.0
      %8953 = vmatmul.mubr.f32.gmra.mrb[0].mxu0 %v3289
      %v8954 = vpop.f32.mrb[0].mxu0
      %v8955 = vadd.f32 0.0, %v8954
      %v8956 = vpop.f32.mrb[0].mxu0
      %v8957 = vadd.f32 0.0, %v8956
      %8958 = vmatprep.mubr.f32.mxu0 0.0
      %8959 = vmatmul.mubr.f32.gmra.mrb[0].mxu0 %v3292
      %v8960 = vpop.f32.mrb[0].mxu0
      %v8961 = vadd.f32 0.0, %v8960
      %v8962 = vpop.f32.mrb[0].mxu0
      %v8963 = vadd.f32 0.0, %v8962
      %8964 = vmatprep.mubr.f32.mxu0 0.0
      %8965 = vmatmul.mubr.f32.gmra.mrb[0].mxu0 %v3295
      %v8966 = vpop.f32.mrb[0].mxu0
      %v8967 = vadd.f32 0.0, %v8966
      %v8968 = vpop.f32.mrb[0].mxu0
      %v8969 = vadd.f32 0.0, %v8968
      %8970 = vmatprep.mubr.f32.mxu0 0.0
      %8971 = vmatmul.mubr.f32.gmra.mrb[0].mxu0 %v3298
      %v8972 = vpop.f32.mrb[0].mxu0
      %v8973 = vadd.f32 0.0, %v8972
      %v8974 = vpop.f32.mrb[0].mxu0
      %v8975 = vadd.f32 0.0, %v8974
      %8976 = vmatprep.mubr.f32.mxu0 0.0
      %8977 = vmatmul.mubr.f32.gmra.mrb[0].mxu0 %v3301
      %v8978 = vpop.f32.mrb[0].mxu0
      %v8979 = vadd.f32 0.0, %v8978
      %v8980 = vpop.f32.mrb[0].mxu0
      %v8981 = vadd.f32 0.0, %v8980
      %8982 = vdwg.mxu0
      %v8983 = vmul.f32 %v7614, %v2370
      %v8984 = vmul.f32 %v7616, %v2372
      %v8985 = vmul.f32 %v7620, %v2374
      %v8986 = vmul.f32 %v7622, %v2376
      %v8987 = vmul.f32 %v7626, %v2380
      %v8988 = vmul.f32 %v7628, %v2382
      %v8989 = vmul.f32 %v7632, %v2384
      %v8990 = vmul.f32 %v7634, %v2386
      %v8991 = vmul.f32 %v7638, %v2390
      %v8992 = vmul.f32 %v7640, %v2392
      %v8993 = vmul.f32 %v7644, %v2394
      %v8994 = vmul.f32 %v7646, %v2396
      %v8995 = vmul.f32 %v7650, %v2400
      %v8996 = vmul.f32 %v7652, %v2402
      %v8997 = vmul.f32 %v7656, %v2404
      %v8998 = vmul.f32 %v7658, %v2406
      %v8999 = vmul.f32 %v7662, %v2410
      %v9000 = vmul.f32 %v7664, %v2412
      %v9001 = vmul.f32 %v7668, %v2414
      %v9002 = vmul.f32 %v7670, %v2416
      %v9003 = vmul.f32 %v7674, %v2420
      %v9004 = vmul.f32 %v7676, %v2422
      %v9005 = vmul.f32 %v7680, %v2424
      %v9006 = vmul.f32 %v7682, %v2426
      %v9007 = vmul.f32 %v7686, %v2430
      %v9008 = vmul.f32 %v7688, %v2432
      %v9009 = vmul.f32 %v7692, %v2434
      %v9010 = vmul.f32 %v7694, %v2436
      %v9011 = vmul.f32 %v7698, %v2440
      %v9012 = vmul.f32 %v7700, %v2442
      %v9013 = vmul.f32 %v7704, %v2444
      %v9014 = vmul.f32 %v7706, %v2446
      %v9015 = vmul.f32 %v7710, %v2450
      %v9016 = vmul.f32 %v7712, %v2452
      %v9017 = vmul.f32 %v7716, %v2454
      %v9018 = vmul.f32 %v7718, %v2456
      %v9019 = vmul.f32 %v7722, %v2460
      %v9020 = vmul.f32 %v7724, %v2462
      %v9021 = vmul.f32 %v7728, %v2464
      %v9022 = vmul.f32 %v7730, %v2466
      %v9023 = vmul.f32 %v7734, %v2470
      %v9024 = vmul.f32 %v7736, %v2472
      %v9025 = vmul.f32 %v7740, %v2474
      %v9026 = vmul.f32 %v7742, %v2476
      %v9027 = vmul.f32 %v7746, %v2480
      %v9028 = vmul.f32 %v7748, %v2482
      %v9029 = vmul.f32 %v7752, %v2484
      %v9030 = vmul.f32 %v7754, %v2486
      %v9031 = vmul.f32 %v7758, %v2490
      %v9032 = vmul.f32 %v7760, %v2492
      %v9033 = vmul.f32 %v7764, %v2494
      %v9034 = vmul.f32 %v7766, %v2496
      %v9035 = vmul.f32 %v7770, %v2500
      %v9036 = vmul.f32 %v7772, %v2502
      %v9037 = vmul.f32 %v7776, %v2504
      %v9038 = vmul.f32 %v7778, %v2506
      %v9039 = vmul.f32 %v7782, %v2510
      %v9040 = vmul.f32 %v7784, %v2512
      %v9041 = vmul.f32 %v7788, %v2514
      %v9042 = vmul.f32 %v7790, %v2516
      %v9043 = vmul.f32 %v7794, %v2520
      %v9044 = vmul.f32 %v7796, %v2522
      %v9045 = vmul.f32 %v7800, %v2524
      %v9046 = vmul.f32 %v7802, %v2526
      %v9047 = vmul.f32 %v7806, %v2530
      %v9048 = vmul.f32 %v7808, %v2532
      %v9049 = vmul.f32 %v7812, %v2534
      %v9050 = vmul.f32 %v7814, %v2536
      %v9051 = vmul.f32 %v7818, %v2540
      %v9052 = vmul.f32 %v7820, %v2542
      %v9053 = vmul.f32 %v7824, %v2544
      %v9054 = vmul.f32 %v7826, %v2546
      %v9055 = vmul.f32 %v7830, %v2550
      %v9056 = vmul.f32 %v7832, %v2552
      %v9057 = vmul.f32 %v7836, %v2554
      %v9058 = vmul.f32 %v7838, %v2556
      %v9059 = vmul.f32 %v7842, %v2560
      %v9060 = vmul.f32 %v7844, %v2562
      %v9061 = vmul.f32 %v7848, %v2564
      %v9062 = vmul.f32 %v7850, %v2566
      %v9063 = vmul.f32 %v7854, %v2570
      %v9064 = vmul.f32 %v7856, %v2572
      %v9065 = vmul.f32 %v7860, %v2574
      %v9066 = vmul.f32 %v7862, %v2576
      %v9067 = vmul.f32 %v7866, %v2580
      %v9068 = vmul.f32 %v7868, %v2582
      %v9069 = vmul.f32 %v7872, %v2584
      %v9070 = vmul.f32 %v7874, %v2586
      %v9071 = vmul.f32 %v7878, %v2590
      %v9072 = vmul.f32 %v7880, %v2592
      %v9073 = vmul.f32 %v7884, %v2594
      %v9074 = vmul.f32 %v7886, %v2596
      %v9075 = vmul.f32 %v7890, %v2600
      %v9076 = vmul.f32 %v7892, %v2602
      %v9077 = vmul.f32 %v7896, %v2604
      %v9078 = vmul.f32 %v7898, %v2606
      %v9079 = vmul.f32 %v7902, %v2610
      %v9080 = vmul.f32 %v7904, %v2612
      %v9081 = vmul.f32 %v7973, %v2614
      %v9082 = vmul.f32 %v7975, %v2616
      %v9083 = vmul.f32 %v7979, %v2620
      %v9084 = vmul.f32 %v7981, %v2622
      %v9085 = vmul.f32 %v7985, %v2624
      %v9086 = vmul.f32 %v7987, %v2626
      %v9087 = vmul.f32 %v7991, %v2630
      %v9088 = vmul.f32 %v7993, %v2632
      %v9089 = vmul.f32 %v7997, %v2634
      %v9090 = vmul.f32 %v7999, %v2636
      %v9091 = vmul.f32 %v8003, %v2640
      %v9092 = vmul.f32 %v8005, %v2642
      %v9093 = vmul.f32 %v8009, %v2644
      %v9094 = vmul.f32 %v8011, %v2646
      %v9095 = vmul.f32 %v8015, %v2650
      %v9096 = vmul.f32 %v8017, %v2652
      %v9097 = vmul.f32 %v8021, %v2654
      %v9098 = vmul.f32 %v8023, %v2656
      %v9099 = vmul.f32 %v8027, %v2660
      %v9100 = vmul.f32 %v8029, %v2662
      %v9101 = vmul.f32 %v8033, %v2664
      %v9102 = vmul.f32 %v8035, %v2666
      %v9103 = vmul.f32 %v8039, %v2670
      %v9104 = vmul.f32 %v8041, %v2672
      %v9105 = vmul.f32 %v8045, %v2674
      %v9106 = vmul.f32 %v8047, %v2676
      %v9107 = vmul.f32 %v8051, %v2680
      %v9108 = vmul.f32 %v8053, %v2682
      %v9109 = vmul.f32 %v8057, %v2684
      %v9110 = vmul.f32 %v8059, %v2686
      %v9111 = vmul.f32 %v8063, %v2690
      %v9112 = vmul.f32 %v8065, %v2692
      %v9113 = vmul.f32 %v8069, %v2694
      %v9114 = vmul.f32 %v8071, %v2696
      %v9115 = vmul.f32 %v8075, %v2700
      %v9116 = vmul.f32 %v8077, %v2702
      %v9117 = vmul.f32 %v8081, %v2704
      %v9118 = vmul.f32 %v8083, %v2706
      %v9119 = vmul.f32 %v8087, %v2710
      %v9120 = vmul.f32 %v8089, %v2712
      %v9121 = vmul.f32 %v8093, %v2714
      %v9122 = vmul.f32 %v8095, %v2716
      %v9123 = vmul.f32 %v8099, %v2720
      %v9124 = vmul.f32 %v8101, %v2722
      %v9125 = vmul.f32 %v8105, %v2724
      %v9126 = vmul.f32 %v8107, %v2726
      %v9127 = vmul.f32 %v8111, %v2730
      %v9128 = vmul.f32 %v8113, %v2732
      %v9129 = vmul.f32 %v8117, %v2734
      %v9130 = vmul.f32 %v8119, %v2736
      %v9131 = vmul.f32 %v8123, %v2740
      %v9132 = vmul.f32 %v8125, %v2742
      %v9133 = vmul.f32 %v8129, %v2744
      %v9134 = vmul.f32 %v8131, %v2746
      %v9135 = vmul.f32 %v8135, %v2750
      %v9136 = vmul.f32 %v8137, %v2752
      %v9137 = vmul.f32 %v8141, %v2754
      %v9138 = vmul.f32 %v8143, %v2756
      %v9139 = vmul.f32 %v8147, %v2760
      %v9140 = vmul.f32 %v8149, %v2762
      %v9141 = vmul.f32 %v8153, %v2764
      %v9142 = vmul.f32 %v8155, %v2766
      %v9143 = vmul.f32 %v8159, %v2770
      %v9144 = vmul.f32 %v8161, %v2772
      %v9145 = vmul.f32 %v8165, %v2774
      %v9146 = vmul.f32 %v8167, %v2776
      %v9147 = vmul.f32 %v8171, %v2780
      %v9148 = vmul.f32 %v8173, %v2782
      %v9149 = vmul.f32 %v8177, %v2784
      %v9150 = vmul.f32 %v8179, %v2786
      %v9151 = vmul.f32 %v8183, %v2790
      %v9152 = vmul.f32 %v8185, %v2792
      %v9153 = vmul.f32 %v8189, %v2794
      %v9154 = vmul.f32 %v8191, %v2796
      %v9155 = vmul.f32 %v8195, %v2800
      %v9156 = vmul.f32 %v8197, %v2802
      %v9157 = vmul.f32 %v8201, %v2804
      %v9158 = vmul.f32 %v8203, %v2806
      %v9159 = vmul.f32 %v8207, %v2810
      %v9160 = vmul.f32 %v8209, %v2812
      %v9161 = vmul.f32 %v8213, %v2814
      %v9162 = vmul.f32 %v8215, %v2816
      %v9163 = vmul.f32 %v8219, %v2820
      %v9164 = vmul.f32 %v8221, %v2822
      %v9165 = vmul.f32 %v8225, %v2824
      %v9166 = vmul.f32 %v8227, %v2826
      %v9167 = vmul.f32 %v8231, %v2830
      %v9168 = vmul.f32 %v8233, %v2832
      %v9169 = vmul.f32 %v8237, %v2834
      %v9170 = vmul.f32 %v8239, %v2836
      %v9171 = vmul.f32 %v8243, %v2840
      %v9172 = vmul.f32 %v8245, %v2842
      %v9173 = vmul.f32 %v8249, %v2844
      %v9174 = vmul.f32 %v8251, %v2846
      %v9175 = vmul.f32 %v8255, %v2850
      %v9176 = vmul.f32 %v8257, %v2852
      %v9177 = vmul.f32 %v8261, %v2854
      %v9178 = vmul.f32 %v8263, %v2856
      %v9179 = vadd.f32 %v8983, %v9081
      %v9180 = vadd.f32 %v8984, %v9082
      %v9181 = vadd.f32 %v8985, %v9083
      %v9182 = vadd.f32 %v8986, %v9084
      %v9183 = vadd.f32 %v8987, %v9085
      %v9184 = vadd.f32 %v8988, %v9086
      %v9185 = vadd.f32 %v8989, %v9087
      %v9186 = vadd.f32 %v8990, %v9088
      %v9187 = vadd.f32 %v8991, %v9089
      %v9188 = vadd.f32 %v8992, %v9090
      %v9189 = vadd.f32 %v8993, %v9091
      %v9190 = vadd.f32 %v8994, %v9092
      %v9191 = vadd.f32 %v8995, %v9093
      %v9192 = vadd.f32 %v8996, %v9094
      %v9193 = vadd.f32 %v8997, %v9095
      %v9194 = vadd.f32 %v8998, %v9096
      %v9195 = vadd.f32 %v8999, %v9097
      %v9196 = vadd.f32 %v9000, %v9098
      %v9197 = vadd.f32 %v9001, %v9099
      %v9198 = vadd.f32 %v9002, %v9100
      %v9199 = vadd.f32 %v9003, %v9101
      %v9200 = vadd.f32 %v9004, %v9102
      %v9201 = vadd.f32 %v9005, %v9103
      %v9202 = vadd.f32 %v9006, %v9104
      %v9203 = vadd.f32 %v9007, %v9105
      %v9204 = vadd.f32 %v9008, %v9106
      %v9205 = vadd.f32 %v9009, %v9107
      %v9206 = vadd.f32 %v9010, %v9108
      %v9207 = vadd.f32 %v9011, %v9109
      %v9208 = vadd.f32 %v9012, %v9110
      %v9209 = vadd.f32 %v9013, %v9111
      %v9210 = vadd.f32 %v9014, %v9112
      %v9211 = vadd.f32 %v9015, %v9113
      %v9212 = vadd.f32 %v9016, %v9114
      %v9213 = vadd.f32 %v9017, %v9115
      %v9214 = vadd.f32 %v9018, %v9116
      %v9215 = vadd.f32 %v9019, %v9117
      %v9216 = vadd.f32 %v9020, %v9118
      %v9217 = vadd.f32 %v9021, %v9119
      %v9218 = vadd.f32 %v9022, %v9120
      %v9219 = vadd.f32 %v9023, %v9121
      %v9220 = vadd.f32 %v9024, %v9122
      %v9221 = vadd.f32 %v9025, %v9123
      %v9222 = vadd.f32 %v9026, %v9124
      %v9223 = vadd.f32 %v9027, %v9125
      %v9224 = vadd.f32 %v9028, %v9126
      %v9225 = vadd.f32 %v9029, %v9127
      %v9226 = vadd.f32 %v9030, %v9128
      %v9227 = vadd.f32 %v9031, %v9129
      %v9228 = vadd.f32 %v9032, %v9130
      %v9229 = vadd.f32 %v9033, %v9131
      %v9230 = vadd.f32 %v9034, %v9132
      %v9231 = vadd.f32 %v9035, %v9133
      %v9232 = vadd.f32 %v9036, %v9134
      %v9233 = vadd.f32 %v9037, %v9135
      %v9234 = vadd.f32 %v9038, %v9136
      %v9235 = vadd.f32 %v9039, %v9137
      %v9236 = vadd.f32 %v9040, %v9138
      %v9237 = vadd.f32 %v9041, %v9139
      %v9238 = vadd.f32 %v9042, %v9140
      %v9239 = vadd.f32 %v9043, %v9141
      %v9240 = vadd.f32 %v9044, %v9142
      %v9241 = vadd.f32 %v9045, %v9143
      %v9242 = vadd.f32 %v9046, %v9144
      %v9243 = vadd.f32 %v9047, %v9145
      %v9244 = vadd.f32 %v9048, %v9146
      %v9245 = vadd.f32 %v9049, %v9147
      %v9246 = vadd.f32 %v9050, %v9148
      %v9247 = vadd.f32 %v9051, %v9149
      %v9248 = vadd.f32 %v9052, %v9150
      %v9249 = vadd.f32 %v9053, %v9151
      %v9250 = vadd.f32 %v9054, %v9152
      %v9251 = vadd.f32 %v9055, %v9153
      %v9252 = vadd.f32 %v9056, %v9154
      %v9253 = vadd.f32 %v9057, %v9155
      %v9254 = vadd.f32 %v9058, %v9156
      %v9255 = vadd.f32 %v9059, %v9157
      %v9256 = vadd.f32 %v9060, %v9158
      %v9257 = vadd.f32 %v9061, %v9159
      %v9258 = vadd.f32 %v9062, %v9160
      %v9259 = vadd.f32 %v9063, %v9161
      %v9260 = vadd.f32 %v9064, %v9162
      %v9261 = vadd.f32 %v9065, %v9163
      %v9262 = vadd.f32 %v9066, %v9164
      %v9263 = vadd.f32 %v9067, %v9165
      %v9264 = vadd.f32 %v9068, %v9166
      %v9265 = vadd.f32 %v9069, %v9167
      %v9266 = vadd.f32 %v9070, %v9168
      %v9267 = vadd.f32 %v9071, %v9169
      %v9268 = vadd.f32 %v9072, %v9170
      %v9269 = vadd.f32 %v9073, %v9171
      %v9270 = vadd.f32 %v9074, %v9172
      %v9271 = vadd.f32 %v9075, %v9173
      %v9272 = vadd.f32 %v9076, %v9174
      %v9273 = vadd.f32 %v9077, %v9175
      %v9274 = vadd.f32 %v9078, %v9176
      %v9275 = vadd.f32 %v9079, %v9177
      %v9276 = vadd.f32 %v9080, %v9178
      %v9277 = vmul.f32 %v8332, %v2860
      %v9278 = vmul.f32 %v8334, %v2862
      %v9279 = vmul.f32 %v8338, %v2864
      %v9280 = vmul.f32 %v8340, %v2866
      %v9281 = vmul.f32 %v8344, %v2870
      %v9282 = vmul.f32 %v8346, %v2872
      %v9283 = vmul.f32 %v8350, %v2874
      %v9284 = vmul.f32 %v8352, %v2876
      %v9285 = vmul.f32 %v8356, %v2880
      %v9286 = vmul.f32 %v8358, %v2882
      %v9287 = vmul.f32 %v8362, %v2884
      %v9288 = vmul.f32 %v8364, %v2886
      %v9289 = vmul.f32 %v8368, %v2890
      %v9290 = vmul.f32 %v8370, %v2892
      %v9291 = vmul.f32 %v8374, %v2894
      %v9292 = vmul.f32 %v8376, %v2896
      %v9293 = vmul.f32 %v8380, %v2900
      %v9294 = vmul.f32 %v8382, %v2902
      %v9295 = vmul.f32 %v8386, %v2904
      %v9296 = vmul.f32 %v8388, %v2906
      %v9297 = vmul.f32 %v8392, %v2910
      %v9298 = vmul.f32 %v8394, %v2912
      %v9299 = vmul.f32 %v8398, %v2914
      %v9300 = vmul.f32 %v8400, %v2916
      %v9301 = vmul.f32 %v8404, %v2920
      %v9302 = vmul.f32 %v8406, %v2922
      %v9303 = vmul.f32 %v8410, %v2924
      %v9304 = vmul.f32 %v8412, %v2926
      %v9305 = vmul.f32 %v8416, %v2930
      %v9306 = vmul.f32 %v8418, %v2932
      %v9307 = vmul.f32 %v8422, %v2934
      %v9308 = vmul.f32 %v8424, %v2936
      %v9309 = vmul.f32 %v8428, %v2940
      %v9310 = vmul.f32 %v8430, %v2942
      %v9311 = vmul.f32 %v8434, %v2944
      %v9312 = vmul.f32 %v8436, %v2946
      %v9313 = vmul.f32 %v8440, %v2950
      %v9314 = vmul.f32 %v8442, %v2952
      %v9315 = vmul.f32 %v8446, %v2954
      %v9316 = vmul.f32 %v8448, %v2956
      %v9317 = vmul.f32 %v8452, %v2960
      %v9318 = vmul.f32 %v8454, %v2962
      %v9319 = vmul.f32 %v8458, %v2964
      %v9320 = vmul.f32 %v8460, %v2966
      %v9321 = vmul.f32 %v8464, %v2970
      %v9322 = vmul.f32 %v8466, %v2972
      %v9323 = vmul.f32 %v8470, %v2974
      %v9324 = vmul.f32 %v8472, %v2976
      %v9325 = vmul.f32 %v8476, %v2980
      %v9326 = vmul.f32 %v8478, %v2982
      %v9327 = vmul.f32 %v8482, %v2984
      %v9328 = vmul.f32 %v8484, %v2986
      %v9329 = vmul.f32 %v8488, %v2990
      %v9330 = vmul.f32 %v8490, %v2992
      %v9331 = vmul.f32 %v8494, %v2994
      %v9332 = vmul.f32 %v8496, %v2996
      %v9333 = vmul.f32 %v8500, %v3000
      %v9334 = vmul.f32 %v8502, %v3002
      %v9335 = vmul.f32 %v8506, %v3004
      %v9336 = vmul.f32 %v8508, %v3006
      %v9337 = vmul.f32 %v8512, %v3010
      %v9338 = vmul.f32 %v8514, %v3012
      %v9339 = vmul.f32 %v8518, %v3014
      %v9340 = vmul.f32 %v8520, %v3016
      %v9341 = vmul.f32 %v8524, %v3020
      %v9342 = vmul.f32 %v8526, %v3022
      %v9343 = vmul.f32 %v8530, %v3024
      %v9344 = vmul.f32 %v8532, %v3026
      %v9345 = vmul.f32 %v8536, %v3030
      %v9346 = vmul.f32 %v8538, %v3032
      %v9347 = vmul.f32 %v8542, %v3034
      %v9348 = vmul.f32 %v8544, %v3036
      %v9349 = vmul.f32 %v8548, %v3040
      %v9350 = vmul.f32 %v8550, %v3042
      %v9351 = vmul.f32 %v8554, %v3044
      %v9352 = vmul.f32 %v8556, %v3046
      %v9353 = vmul.f32 %v8560, %v3050
      %v9354 = vmul.f32 %v8562, %v3052
      %v9355 = vmul.f32 %v8566, %v3054
      %v9356 = vmul.f32 %v8568, %v3056
      %v9357 = vmul.f32 %v8572, %v3060
      %v9358 = vmul.f32 %v8574, %v3062
      %v9359 = vmul.f32 %v8578, %v3064
      %v9360 = vmul.f32 %v8580, %v3066
      %v9361 = vmul.f32 %v8584, %v3070
      %v9362 = vmul.f32 %v8586, %v3072
      %v9363 = vmul.f32 %v8590, %v3074
      %v9364 = vmul.f32 %v8592, %v3076
      %v9365 = vmul.f32 %v8596, %v3080
      %v9366 = vmul.f32 %v8598, %v3082
      %v9367 = vmul.f32 %v8602, %v3084
      %v9368 = vmul.f32 %v8604, %v3086
      %v9369 = vmul.f32 %v8608, %v3090
      %v9370 = vmul.f32 %v8610, %v3092
      %v9371 = vmul.f32 %v8614, %v3094
      %v9372 = vmul.f32 %v8616, %v3096
      %v9373 = vmul.f32 %v8620, %v3100
      %v9374 = vmul.f32 %v8622, %v3102
      %v9375 = vadd.f32 %v9179, %v9277
      %v9376 = vadd.f32 %v9180, %v9278
      %v9377 = vadd.f32 %v9181, %v9279
      %v9378 = vadd.f32 %v9182, %v9280
      %v9379 = vadd.f32 %v9183, %v9281
      %v9380 = vadd.f32 %v9184, %v9282
      %v9381 = vadd.f32 %v9185, %v9283
      %v9382 = vadd.f32 %v9186, %v9284
      %v9383 = vadd.f32 %v9187, %v9285
      %v9384 = vadd.f32 %v9188, %v9286
      %v9385 = vadd.f32 %v9189, %v9287
      %v9386 = vadd.f32 %v9190, %v9288
      %v9387 = vadd.f32 %v9191, %v9289
      %v9388 = vadd.f32 %v9192, %v9290
      %v9389 = vadd.f32 %v9193, %v9291
      %v9390 = vadd.f32 %v9194, %v9292
      %v9391 = vadd.f32 %v9195, %v9293
      %v9392 = vadd.f32 %v9196, %v9294
      %v9393 = vadd.f32 %v9197, %v9295
      %v9394 = vadd.f32 %v9198, %v9296
      %v9395 = vadd.f32 %v9199, %v9297
      %v9396 = vadd.f32 %v9200, %v9298
      %v9397 = vadd.f32 %v9201, %v9299
      %v9398 = vadd.f32 %v9202, %v9300
      %v9399 = vadd.f32 %v9203, %v9301
      %v9400 = vadd.f32 %v9204, %v9302
      %v9401 = vadd.f32 %v9205, %v9303
      %v9402 = vadd.f32 %v9206, %v9304
      %v9403 = vadd.f32 %v9207, %v9305
      %v9404 = vadd.f32 %v9208, %v9306
      %v9405 = vadd.f32 %v9209, %v9307
      %v9406 = vadd.f32 %v9210, %v9308
      %v9407 = vadd.f32 %v9211, %v9309
      %v9408 = vadd.f32 %v9212, %v9310
      %v9409 = vadd.f32 %v9213, %v9311
      %v9410 = vadd.f32 %v9214, %v9312
      %v9411 = vadd.f32 %v9215, %v9313
      %v9412 = vadd.f32 %v9216, %v9314
      %v9413 = vadd.f32 %v9217, %v9315
      %v9414 = vadd.f32 %v9218, %v9316
      %v9415 = vadd.f32 %v9219, %v9317
      %v9416 = vadd.f32 %v9220, %v9318
      %v9417 = vadd.f32 %v9221, %v9319
      %v9418 = vadd.f32 %v9222, %v9320
      %v9419 = vadd.f32 %v9223, %v9321
      %v9420 = vadd.f32 %v9224, %v9322
      %v9421 = vadd.f32 %v9225, %v9323
      %v9422 = vadd.f32 %v9226, %v9324
      %v9423 = vadd.f32 %v9227, %v9325
      %v9424 = vadd.f32 %v9228, %v9326
      %v9425 = vadd.f32 %v9229, %v9327
      %v9426 = vadd.f32 %v9230, %v9328
      %v9427 = vadd.f32 %v9231, %v9329
      %v9428 = vadd.f32 %v9232, %v9330
      %v9429 = vadd.f32 %v9233, %v9331
      %v9430 = vadd.f32 %v9234, %v9332
      %v9431 = vadd.f32 %v9235, %v9333
      %v9432 = vadd.f32 %v9236, %v9334
      %v9433 = vadd.f32 %v9237, %v9335
      %v9434 = vadd.f32 %v9238, %v9336
      %v9435 = vadd.f32 %v9239, %v9337
      %v9436 = vadd.f32 %v9240, %v9338
      %v9437 = vadd.f32 %v9241, %v9339
      %v9438 = vadd.f32 %v9242, %v9340
      %v9439 = vadd.f32 %v9243, %v9341
      %v9440 = vadd.f32 %v9244, %v9342
      %v9441 = vadd.f32 %v9245, %v9343
      %v9442 = vadd.f32 %v9246, %v9344
      %v9443 = vadd.f32 %v9247, %v9345
      %v9444 = vadd.f32 %v9248, %v9346
      %v9445 = vadd.f32 %v9249, %v9347
      %v9446 = vadd.f32 %v9250, %v9348
      %v9447 = vadd.f32 %v9251, %v9349
      %v9448 = vadd.f32 %v9252, %v9350
      %v9449 = vadd.f32 %v9253, %v9351
      %v9450 = vadd.f32 %v9254, %v9352
      %v9451 = vadd.f32 %v9255, %v9353
      %v9452 = vadd.f32 %v9256, %v9354
      %v9453 = vadd.f32 %v9257, %v9355
      %v9454 = vadd.f32 %v9258, %v9356
      %v9455 = vadd.f32 %v9259, %v9357
      %v9456 = vadd.f32 %v9260, %v9358
      %v9457 = vadd.f32 %v9261, %v9359
      %v9458 = vadd.f32 %v9262, %v9360
      %v9459 = vadd.f32 %v9263, %v9361
      %v9460 = vadd.f32 %v9264, %v9362
      %v9461 = vadd.f32 %v9265, %v9363
      %v9462 = vadd.f32 %v9266, %v9364
      %v9463 = vadd.f32 %v9267, %v9365
      %v9464 = vadd.f32 %v9268, %v9366
      %v9465 = vadd.f32 %v9269, %v9367
      %v9466 = vadd.f32 %v9270, %v9368
      %v9467 = vadd.f32 %v9271, %v9369
      %v9468 = vadd.f32 %v9272, %v9370
      %v9469 = vadd.f32 %v9273, %v9371
      %v9470 = vadd.f32 %v9274, %v9372
      %v9471 = vadd.f32 %v9275, %v9373
      %v9472 = vadd.f32 %v9276, %v9374
      %v9473 = vadd.f32 %v9375, %v8691
      %v9474 = vadd.f32 %v9376, %v8693
      %v9475 = vadd.f32 %v9377, %v8697
      %v9476 = vadd.f32 %v9378, %v8699
      %v9477 = vadd.f32 %v9379, %v8703
      %v9478 = vadd.f32 %v9380, %v8705
      %v9479 = vadd.f32 %v9381, %v8709
      %v9480 = vadd.f32 %v9382, %v8711
      %v9481 = vadd.f32 %v9383, %v8715
      %v9482 = vadd.f32 %v9384, %v8717
      %v9483 = vadd.f32 %v9385, %v8721
      %v9484 = vadd.f32 %v9386, %v8723
      %v9485 = vadd.f32 %v9387, %v8727
      %v9486 = vadd.f32 %v9388, %v8729
      %v9487 = vadd.f32 %v9389, %v8733
      %v9488 = vadd.f32 %v9390, %v8735
      %v9489 = vadd.f32 %v9391, %v8739
      %v9490 = vadd.f32 %v9392, %v8741
      %v9491 = vadd.f32 %v9393, %v8745
      %v9492 = vadd.f32 %v9394, %v8747
      %v9493 = vadd.f32 %v9395, %v8751
      %v9494 = vadd.f32 %v9396, %v8753
      %v9495 = vadd.f32 %v9397, %v8757
      %v9496 = vadd.f32 %v9398, %v8759
      %v9497 = vadd.f32 %v9399, %v8763
      %v9498 = vadd.f32 %v9400, %v8765
      %v9499 = vadd.f32 %v9401, %v8769
      %v9500 = vadd.f32 %v9402, %v8771
      %v9501 = vadd.f32 %v9403, %v8775
      %v9502 = vadd.f32 %v9404, %v8777
      %v9503 = vadd.f32 %v9405, %v8781
      %v9504 = vadd.f32 %v9406, %v8783
      %v9505 = vadd.f32 %v9407, %v8787
      %v9506 = vadd.f32 %v9408, %v8789
      %v9507 = vadd.f32 %v9409, %v8793
      %v9508 = vadd.f32 %v9410, %v8795
      %v9509 = vadd.f32 %v9411, %v8799
      %v9510 = vadd.f32 %v9412, %v8801
      %v9511 = vadd.f32 %v9413, %v8805
      %v9512 = vadd.f32 %v9414, %v8807
      %v9513 = vadd.f32 %v9415, %v8811
      %v9514 = vadd.f32 %v9416, %v8813
      %v9515 = vadd.f32 %v9417, %v8817
      %v9516 = vadd.f32 %v9418, %v8819
      %v9517 = vadd.f32 %v9419, %v8823
      %v9518 = vadd.f32 %v9420, %v8825
      %v9519 = vadd.f32 %v9421, %v8829
      %v9520 = vadd.f32 %v9422, %v8831
      %v9521 = vadd.f32 %v9423, %v8835
      %v9522 = vadd.f32 %v9424, %v8837
      %v9523 = vadd.f32 %v9425, %v8841
      %v9524 = vadd.f32 %v9426, %v8843
      %v9525 = vadd.f32 %v9427, %v8847
      %v9526 = vadd.f32 %v9428, %v8849
      %v9527 = vadd.f32 %v9429, %v8853
      %v9528 = vadd.f32 %v9430, %v8855
      %v9529 = vadd.f32 %v9431, %v8859
      %v9530 = vadd.f32 %v9432, %v8861
      %v9531 = vadd.f32 %v9433, %v8865
      %v9532 = vadd.f32 %v9434, %v8867
      %v9533 = vadd.f32 %v9435, %v8871
      %v9534 = vadd.f32 %v9436, %v8873
      %v9535 = vadd.f32 %v9437, %v8877
      %v9536 = vadd.f32 %v9438, %v8879
      %v9537 = vadd.f32 %v9439, %v8883
      %v9538 = vadd.f32 %v9440, %v8885
      %v9539 = vadd.f32 %v9441, %v8889
      %v9540 = vadd.f32 %v9442, %v8891
      %v9541 = vadd.f32 %v9443, %v8895
      %v9542 = vadd.f32 %v9444, %v8897
      %v9543 = vadd.f32 %v9445, %v8901
      %v9544 = vadd.f32 %v9446, %v8903
      %v9545 = vadd.f32 %v9447, %v8907
      %v9546 = vadd.f32 %v9448, %v8909
      %v9547 = vadd.f32 %v9449, %v8913
      %v9548 = vadd.f32 %v9450, %v8915
      %v9549 = vadd.f32 %v9451, %v8919
      %v9550 = vadd.f32 %v9452, %v8921
      %v9551 = vadd.f32 %v9453, %v8925
      %v9552 = vadd.f32 %v9454, %v8927
      %v9553 = vadd.f32 %v9455, %v8931
      %v9554 = vadd.f32 %v9456, %v8933
      %v9555 = vadd.f32 %v9457, %v8937
      %v9556 = vadd.f32 %v9458, %v8939
      %v9557 = vadd.f32 %v9459, %v8943
      %v9558 = vadd.f32 %v9460, %v8945
      %v9559 = vadd.f32 %v9461, %v8949
      %v9560 = vadd.f32 %v9462, %v8951
      %v9561 = vadd.f32 %v9463, %v8955
      %v9562 = vadd.f32 %v9464, %v8957
      %v9563 = vadd.f32 %v9465, %v8961
      %v9564 = vadd.f32 %v9466, %v8963
      %v9565 = vadd.f32 %v9467, %v8967
      %v9566 = vadd.f32 %v9468, %v8969
      %v9567 = vadd.f32 %v9469, %v8973
      %v9568 = vadd.f32 %v9470, %v8975
      %v9569 = vadd.f32 %v9471, %v8979
      %v9570 = vadd.f32 %v9472, %v8981
      %9571 = vst [vmem:[%s328 + $0x620] sm:$0xff] %v9473
      %9572 = vst [vmem:[%s328 + $0x628] sm:$0xff] %v9474
      %9573 = vst [vmem:[%s328 + $0x630] sm:$0xff] %v9475
      %9574 = vst [vmem:[%s328 + $0x638] sm:$0xff] %v9476
      %9575 = vst [vmem:[%s328 + $0x640] sm:$0xff] %v9477
      %9576 = vst [vmem:[%s328 + $0x648] sm:$0xff] %v9478
      %9577 = vst [vmem:[%s328 + $0x650] sm:$0xff] %v9479
      %9578 = vst [vmem:[%s328 + $0x658] sm:$0xff] %v9480
      %9579 = vst [vmem:[%s328 + $0x660] sm:$0xff] %v9481
      %9580 = vst [vmem:[%s328 + $0x668] sm:$0xff] %v9482
      %9581 = vst [vmem:[%s328 + $0x670] sm:$0xff] %v9483
      %9582 = vst [vmem:[%s328 + $0x678] sm:$0xff] %v9484
      %9583 = vst [vmem:[%s328 + $0x680] sm:$0xff] %v9485
      %9584 = vst [vmem:[%s328 + $0x688] sm:$0xff] %v9486
      %9585 = vst [vmem:[%s328 + $0x690] sm:$0xff] %v9487
      %9586 = vst [vmem:[%s328 + $0x698] sm:$0xff] %v9488
      %9587 = vst [vmem:[%s328 + $0x6a0] sm:$0xff] %v9489
      %9588 = vst [vmem:[%s328 + $0x6a8] sm:$0xff] %v9490
      %9589 = vst [vmem:[%s328 + $0x6b0] sm:$0xff] %v9491
      %9590 = vst [vmem:[%s328 + $0x6b8] sm:$0xff] %v9492
      %9591 = vst [vmem:[%s328 + $0x6c0] sm:$0xff] %v9493
      %9592 = vst [vmem:[%s328 + $0x6c8] sm:$0xff] %v9494
      %9593 = vst [vmem:[%s328 + $0x6d0] sm:$0xff] %v9495
      %9594 = vst [vmem:[%s328 + $0x6d8] sm:$0xff] %v9496
      %9595 = vst [vmem:[%s328 + $0x6e0] sm:$0xff] %v9497
      %9596 = vst [vmem:[%s328 + $0x6e8] sm:$0xff] %v9498
      %9597 = vst [vmem:[%s328 + $0x6f0] sm:$0xff] %v9499
      %9598 = vst [vmem:[%s328 + $0x6f8] sm:$0xff] %v9500
      %9599 = vst [vmem:[%s328 + $0x700] sm:$0xff] %v9501
      %9600 = vst [vmem:[%s328 + $0x708] sm:$0xff] %v9502
      %9601 = vst [vmem:[%s328 + $0x710] sm:$0xff] %v9503
      %9602 = vst [vmem:[%s328 + $0x718] sm:$0xff] %v9504
      %9603 = vst [vmem:[%s328 + $0x720] sm:$0xff] %v9505
      %9604 = vst [vmem:[%s328 + $0x728] sm:$0xff] %v9506
      %9605 = vst [vmem:[%s328 + $0x730] sm:$0xff] %v9507
      %9606 = vst [vmem:[%s328 + $0x738] sm:$0xff] %v9508
      %9607 = vst [vmem:[%s328 + $0x740] sm:$0xff] %v9509
      %9608 = vst [vmem:[%s328 + $0x748] sm:$0xff] %v9510
      %9609 = vst [vmem:[%s328 + $0x750] sm:$0xff] %v9511
      %9610 = vst [vmem:[%s328 + $0x758] sm:$0xff] %v9512
      %9611 = vst [vmem:[%s328 + $0x760] sm:$0xff] %v9513
      %9612 = vst [vmem:[%s328 + $0x768] sm:$0xff] %v9514
      %9613 = vst [vmem:[%s328 + $0x770] sm:$0xff] %v9515
      %9614 = vst [vmem:[%s328 + $0x778] sm:$0xff] %v9516
      %9615 = vst [vmem:[%s328 + $0x780] sm:$0xff] %v9517
      %9616 = vst [vmem:[%s328 + $0x788] sm:$0xff] %v9518
      %9617 = vst [vmem:[%s328 + $0x790] sm:$0xff] %v9519
      %9618 = vst [vmem:[%s328 + $0x798] sm:$0xff] %v9520
      %9619 = vst [vmem:[%s328 + $0x7a0] sm:$0xff] %v9521
      %9620 = vst [vmem:[%s328 + $0x7a8] sm:$0xff] %v9522
      %9621 = vst [vmem:[%s328 + $0x7b0] sm:$0xff] %v9523
      %9622 = vst [vmem:[%s328 + $0x7b8] sm:$0xff] %v9524
      %9623 = vst [vmem:[%s328 + $0x7c0] sm:$0xff] %v9525
      %9624 = vst [vmem:[%s328 + $0x7c8] sm:$0xff] %v9526
      %9625 = vst [vmem:[%s328 + $0x7d0] sm:$0xff] %v9527
      %9626 = vst [vmem:[%s328 + $0x7d8] sm:$0xff] %v9528
      %9627 = vst [vmem:[%s328 + $0x7e0] sm:$0xff] %v9529
      %9628 = vst [vmem:[%s328 + $0x7e8] sm:$0xff] %v9530
      %9629 = vst [vmem:[%s328 + $0x7f0] sm:$0xff] %v9531
      %9630 = vst [vmem:[%s328 + $0x7f8] sm:$0xff] %v9532
      %9631 = vst [vmem:[%s328 + $0x800] sm:$0xff] %v9533
      %9632 = vst [vmem:[%s328 + $0x808] sm:$0xff] %v9534
      %9633 = vst [vmem:[%s328 + $0x810] sm:$0xff] %v9535
      %9634 = vst [vmem:[%s328 + $0x818] sm:$0xff] %v9536
      %9635 = vst [vmem:[%s328 + $0x820] sm:$0xff] %v9537
      %9636 = vst [vmem:[%s328 + $0x828] sm:$0xff] %v9538
      %9637 = vst [vmem:[%s328 + $0x830] sm:$0xff] %v9539
      %9638 = vst [vmem:[%s328 + $0x838] sm:$0xff] %v9540
      %9639 = vst [vmem:[%s328 + $0x840] sm:$0xff] %v9541
      %9640 = vst [vmem:[%s328 + $0x848] sm:$0xff] %v9542
      %9641 = vst [vmem:[%s328 + $0x850] sm:$0xff] %v9543
      %9642 = vst [vmem:[%s328 + $0x858] sm:$0xff] %v9544
      %9643 = vst [vmem:[%s328 + $0x860] sm:$0xff] %v9545
      %9644 = vst [vmem:[%s328 + $0x868] sm:$0xff] %v9546
      %9645 = vst [vmem:[%s328 + $0x870] sm:$0xff] %v9547
      %9646 = vst [vmem:[%s328 + $0x878] sm:$0xff] %v9548
      %9647 = vst [vmem:[%s328 + $0x880] sm:$0xff] %v9549
      %9648 = vst [vmem:[%s328 + $0x888] sm:$0xff] %v9550
      %9649 = vst [vmem:[%s328 + $0x890] sm:$0xff] %v9551
      %9650 = vst [vmem:[%s328 + $0x898] sm:$0xff] %v9552
      %9651 = vst [vmem:[%s328 + $0x8a0] sm:$0xff] %v9553
      %9652 = vst [vmem:[%s328 + $0x8a8] sm:$0xff] %v9554
      %9653 = vst [vmem:[%s328 + $0x8b0] sm:$0xff] %v9555
      %9654 = vst [vmem:[%s328 + $0x8b8] sm:$0xff] %v9556
      %9655 = vst [vmem:[%s328 + $0x8c0] sm:$0xff] %v9557
      %9656 = vst [vmem:[%s328 + $0x8c8] sm:$0xff] %v9558
      %9657 = vst [vmem:[%s328 + $0x8d0] sm:$0xff] %v9559
      %9658 = vst [vmem:[%s328 + $0x8d8] sm:$0xff] %v9560
      %9659 = vst [vmem:[%s328 + $0x8e0] sm:$0xff] %v9561
      %9660 = vst [vmem:[%s328 + $0x8e8] sm:$0xff] %v9562
      %9661 = vst [vmem:[%s328 + $0x8f0] sm:$0xff] %v9563
      %9662 = vst [vmem:[%s328 + $0x8f8] sm:$0xff] %v9564
      %9663 = vst [vmem:[%s328 + $0x900] sm:$0xff] %v9565
      %9664 = vst [vmem:[%s328 + $0x908] sm:$0xff] %v9566
      %9665 = vst [vmem:[%s328 + $0x910] sm:$0xff] %v9567
      %9666 = vst [vmem:[%s328 + $0x918] sm:$0xff] %v9568
      %9667 = vst [vmem:[%s328 + $0x920] sm:$0xff] %v9569
      %9668 = vst [vmem:[%s328 + $0x928] sm:$0xff] %v9570
      %p9669 = scmp.lt.s32.totalorder %s21, 0
      %s9670 = scalar_select %p9669, %s21, 0
      %p9671 = scmp.lt.s32.totalorder %s20, 1
      %s9672 = scalar_select %p9671, %s20, 1
      %s9673 = smul.addr %s9672, 294
      %s9674 = smul.addr %s9670, 588
      %s9675 = sadd.s32 %s9673, %s9674
      %s9676 = smul.addr %s9675, 8
      %s9677 = scalar_lea.vmem %s5, %s9676
      // Predicated region
      $region41: #{mano_forward.1} parent=39 // pred_check
        %p9678 = pneg %p178
      $region42: #{mano_forward.1} parent=39 // pred_check_branch
        %9680 = sbr.rel (%p9678) target = $region44
      $region43: #{mano_forward.1} parent=39 // pred_region
        _
      $region44: #{mano_forward.1} parent=39 // pred_fallthru
        _
    $region40: #{mano_forward.1} parent=5 // pred_fallthru
      _
    %p9681 = scmp.le.s32.totalorder 2, %s11
    // Predicated region
    $region45: #{mano_forward.1} parent=5 // pred_check
      %p9682 = pneg %p9681
    $region46: #{mano_forward.1} parent=5 // pred_check_branch
      %9684 = sbr.rel (%p9682) target = $region48
    $region47: #{mano_forward.1} parent=5 // pred_region
      %s9685 = ssub.s32 %s11, 2
      // Predicated region
      $region49: #{mano_forward.1} parent=47 // pred_check
        %p9686 = pneg %p184
      $region50: #{mano_forward.1} parent=47 // pred_check_branch
        %9688 = sbr.rel (%p9686) target = $region52
      $region51: #{mano_forward.1} parent=47 // pred_region
        %p9689 = scmp.lt.s32.totalorder %s23, 0
        %s9690 = scalar_select %p9689, %s23, 0
        %p9691 = scmp.lt.s32.totalorder %s22, 1
        %s9692 = scalar_select %p9691, %s22, 1
        %s9693 = smul.addr %s9692, 294
        %s9694 = smul.addr %s9690, 588
        %s9695 = sadd.s32 %s9693, %s9694
        %s9696 = smul.addr %s9695, 8
        %s9697 = scalar_lea.vmem %s5, %s9696
      $region52: #{mano_forward.1} parent=47 // pred_fallthru
        _
    $region48: #{mano_forward.1} parent=5 // pred_fallthru
      _
  $region6: #{mano_forward.1} parent=0 // loop_footer
    %s15 = sadd.s32 1, %s11
  $region7: #{mano_forward.1} parent=0 // loop_footer_branch
    %10 = sbr.rel target = $region3
  $region8: #{mano_forward.1} parent=0 // loop_exit
    _

</llo_original>
